<compile_context>
chip_gen: v7x
topology: tpu7x:2x2x1
jax: 0.10.0
libtpu: 0.0.40
codegen_flags: <defaults>
</compile_context>

<pallas_src>
import functools

import numpy as np
import jax
import jax.numpy as jnp
from jax.experimental import pallas as pl
from jax.experimental.pallas import tpu as pltpu


# ----------------------------------------------------------------------------
# Anchor generation (pure numpy, identical math to the PyTorch reference)
# ----------------------------------------------------------------------------
def generate_anchor(feat_h, feat_w, feature_stride=16):
    base_size = 16
    ratios = [0.5, 1, 2]
    anchor_scales = [8, 16, 32]
    py = base_size / 2.0
    px = base_size / 2.0
    anchor_base = np.zeros((len(ratios) * len(anchor_scales), 4), dtype=np.float32)
    for i in range(len(ratios)):
        for j in range(len(anchor_scales)):
            h = base_size * anchor_scales[j] * np.sqrt(ratios[i])
            w = base_size * anchor_scales[j] * np.sqrt(1.0 / ratios[i])
            index = i * len(anchor_scales) + j
            anchor_base[index, 0] = py - h / 2.0
            anchor_base[index, 1] = px - w / 2.0
            anchor_base[index, 2] = py + h / 2.0
            anchor_base[index, 3] = px + w / 2.0
    shift_y = np.arange(0, feat_h * feature_stride, feature_stride)
    shift_x = np.arange(0, feat_w * feature_stride, feature_stride)
    shift_x, shift_y = np.meshgrid(shift_x, shift_y)
    shift = np.stack(
        (shift_y.ravel(), shift_x.ravel(), shift_y.ravel(), shift_x.ravel()), axis=1
    )
    A = anchor_base.shape[0]
    K = shift.shape[0]
    anchor = anchor_base.reshape((1, A, 4)) + shift.reshape((1, K, 4)).transpose((1, 0, 2))
    anchor = anchor.reshape((K * A, 4)).astype(np.float32)
    return anchor


# ----------------------------------------------------------------------------
# Pallas kernel: 3x3 conv (9 shifted matmuls) + ReLU + fused 1x1 heads + fg
# ----------------------------------------------------------------------------
def rpn_kernel(x_ref, w1_ref, b1_ref, wh_ref, bh_ref, out_ref, acc_ref, *,
               tap_offsets, rows, fg_lo, fg_hi):
    # Row-tile of the "wide" output handled by this grid step.
    base = pl.program_id(0) * rows
    if rows % 8 == 0:
        base = pl.multiple_of(base, 8)

    # 3x3 / pad=1 conv: 9 accumulating [rows, Cin] x [Cin, 512] bf16 MXU matmuls
    # over row-shifted views of the flat padded feature map (no HBM im2col).
    acc_ref[...] = jnp.zeros_like(acc_ref)
    for t, off in enumerate(tap_offsets):
        xs = x_ref[pl.ds(base + off, rows), :].astype(jnp.bfloat16)
        acc_ref[...] += jnp.dot(xs, w1_ref[t], preferred_element_type=jnp.float32)

    # bias + ReLU on the VPU, cast to bf16 for the fused head matmul.
    h = jnp.maximum(acc_ref[...] + b1_ref[...], 0.0).astype(jnp.bfloat16)

    # Single fused head matmul [rows, 512] x [512, 64]:
    #   cols [0, 2A)   : clf logits   (native channel order 2a+c)
    #   cols [2A, 6A)  : bbox deltas  (native channel order 4a+k)
    #   cols [6A, 7A)  : fg logit diff (c1 - c0) -> sigmoid below
    heads = jnp.dot(h, wh_ref[...], preferred_element_type=jnp.float32) + bh_ref[...]

    # softmax over 2 classes == sigmoid(c1 - c0); apply only to the fg columns.
    col = jax.lax.broadcasted_iota(jnp.int32, heads.shape, dimension=1)
    fg = pl.reciprocal(1.0 + jnp.exp(-heads), approx=True)
    out_ref[...] = jnp.where((col >= fg_lo) & (col < fg_hi), fg, heads)


# ----------------------------------------------------------------------------
# Wrapper: padding / weight fusion / final reshapes (glue-level JAX)
# ----------------------------------------------------------------------------
def rpn_forward(features, params, feature_stride=16, row_tiles=None):
    n, cin, H, W = features.shape
    assert n == 1, "the PyTorch forward's reshape implies batch=1"
    A = params["num_anchors"]
    w1 = params["w1"]                      # [512, Cin, 3, 3]
    mid = w1.shape[0]
    Wp = W + 2                             # "wide" row width (2 garbage cols/row)
    n_out = 7 * A                          # 2A clf + 4A bbox + A fg
    n_out_pad = ((n_out + 63) // 64) * 64  # lane-dense output slab width

    # Grid over feature-map row tiles; >=2 tiles lets v7x's two TensorCores
    # split the work (pure "parallel" axis; ~0.35us/step cost on 1-TC chips).
    if row_tiles is None:
        row_tiles = 2 if H % 2 == 0 else 1
    if H % row_tiles != 0 or (H // row_tiles) * Wp % 8 != 0:
        row_tiles = 1
    TH = H // row_tiles
    rows = TH * Wp                         # wide-output rows per grid step
    m_wide = H * Wp

    # --- input: zero-pad the raw feature map once and flatten ----------------
    # (top 1 / bottom 2 / left 1 / right 1) so every 3x3 tap is a pure row shift
    # of the flat [(H+3)*Wp, Cin] array and the last tap never reads OOB.
    x = jnp.transpose(features[0], (1, 2, 0)).astype(jnp.float32)   # [H, W, Cin]
    xpad = jnp.pad(x, ((1, 2), (1, 1), (0, 0)))                     # [H+3, Wp, Cin]
    xflat = xpad.reshape((H + 3) * Wp, cin)   # kept f32; cast to bf16 in-kernel

    # --- weights: per-tap conv weights (bf16) + fused lane-dense head RHS ----
    w1_taps = jnp.transpose(w1, (2, 3, 1, 0)).reshape(9, cin, mid).astype(jnp.bfloat16)
    b1 = params["b1"].reshape(1, mid).astype(jnp.float32)

    wc, bc = params["wc"], params["bc"]    # [2A, 512], [2A]  (channel 2a+c)
    wb, bb = params["wb"], params["bb"]    # [4A, 512], [4A]  (channel 4a+k)
    w_fg = wc[1::2] - wc[0::2]             # [A, 512]  fg-vs-bg logit difference
    b_fg = bc[1::2] - bc[0::2]
    wh = jnp.concatenate(
        [wc.T, wb.T, w_fg.T, jnp.zeros((mid, n_out_pad - n_out), jnp.float32)],
        axis=1).astype(jnp.bfloat16)                                # [512, n_out_pad]
    bh = jnp.concatenate(
        [bc, bb, b_fg, jnp.zeros((n_out_pad - n_out,), jnp.float32)]
    ).reshape(1, n_out_pad).astype(jnp.float32)

    tap_offsets = tuple(ky * Wp + kx for ky in range(3) for kx in range(3))
    kernel = functools.partial(
        rpn_kernel, tap_offsets=tap_offsets, rows=rows, fg_lo=6 * A, fg_hi=7 * A)

    out = pl.pallas_call(
        kernel,
        out_shape=jax.ShapeDtypeStruct((m_wide, n_out_pad), jnp.float32),
        grid_spec=pltpu.PrefetchScalarGridSpec(
            num_scalar_prefetch=0,
            grid=(row_tiles,),
            in_specs=[
                pl.BlockSpec(((H + 3) * Wp, cin), lambda i: (0, 0)),   # full map
                pl.BlockSpec((9, cin, mid), lambda i: (0, 0, 0)),      # conv taps
                pl.BlockSpec((1, mid), lambda i: (0, 0)),              # conv bias
                pl.BlockSpec((mid, n_out_pad), lambda i: (0, 0)),      # fused heads
                pl.BlockSpec((1, n_out_pad), lambda i: (0, 0)),        # head bias
            ],
            out_specs=pl.BlockSpec((rows, n_out_pad), lambda i: (i, 0)),
            scratch_shapes=[pltpu.VMEM((rows, mid), jnp.float32)],
        ),
        compiler_params=pltpu.CompilerParams(dimension_semantics=("parallel",)),
    )(xflat, w1_taps, b1, wh, bh)

    # --- drop the 2 garbage columns per row, then pure reshapes --------------
    flat = out.reshape(H, Wp, n_out_pad)[:, :W, :].reshape(H * W, n_out_pad)
    rpn_clf_score = flat[:, :2 * A].reshape(-1, 2)          # [H*W*A, 2]
    rpn_bbox_reg_score = flat[:, 2 * A:6 * A].reshape(-1, 4)  # [H*W*A, 4]
    rpn_fg_scores = flat[:, 6 * A:7 * A].reshape(-1)          # [H*W*A]
    anchors = jnp.asarray(generate_anchor(H, W, feature_stride))

    # Training path of the reference returns (clf, bbox_reg, anchors); fg
    # softmax scores are also computed by the forward, returned here as well.
    # TODO(synk): ProposalCreator/NMS branch (IS_NOT_TRAINING_RPN) not translated.
    return rpn_clf_score, rpn_bbox_reg_score, anchors, rpn_fg_scores


# ----------------------------------------------------------------------------
# Deterministic parameter init (normal(0, 0.01) weights, zero biases)
# ----------------------------------------------------------------------------
def init_params(key, in_channels, num_anchors=9, mid_channels=512):
    k1, k2, k3 = jax.random.split(key, 3)
    return {
        "num_anchors": num_anchors,
        "w1": 0.01 * jax.random.normal(k1, (mid_channels, in_channels, 3, 3), jnp.float32),
        "b1": jnp.zeros((mid_channels,), jnp.float32),
        "wc": 0.01 * jax.random.normal(k2, (2 * num_anchors, mid_channels), jnp.float32),
        "bc": jnp.zeros((2 * num_anchors,), jnp.float32),
        "wb": 0.01 * jax.random.normal(k3, (4 * num_anchors, mid_channels), jnp.float32),
        "bb": jnp.zeros((4 * num_anchors,), jnp.float32),
    }


# ----------------------------------------------------------------------------
# Pure-JAX f32 reference (for a tolerance check; bf16 kernel won't bit-match)
# ----------------------------------------------------------------------------
def rpn_reference(features, params):
    h = jax.lax.conv_general_dilated(
        features, params["w1"], window_strides=(1, 1), padding="SAME",
        dimension_numbers=("NCHW", "OIHW", "NCHW"))
    h = jnp.maximum(h + params["b1"][None, :, None, None], 0.0)
    clf = jnp.einsum("nchw,oc->nohw", h, params["wc"]) + params["bc"][None, :, None, None]
    bbox = jnp.einsum("nchw,oc->nohw", h, params["wb"]) + params["bb"][None, :, None, None]
    clf_score = jnp.transpose(clf, (0, 2, 3, 1)).reshape(-1, 2)
    bbox_score = jnp.transpose(bbox, (0, 2, 3, 1)).reshape(-1, 4)
    ex = jnp.exp(clf_score - clf_score.max(axis=1, keepdims=True))
    fg = ex[:, 1] / ex.sum(axis=1)
    return clf_score, bbox_score, fg


if __name__ == "__main__":
    key = jax.random.PRNGKey(0)
    kp, kx = jax.random.split(key)

    IN_CHANNELS, H, W = 64, 16, 16
    params = init_params(kp, IN_CHANNELS)
    features = jax.random.normal(kx, (1, IN_CHANNELS, H, W), jnp.float32)  # NCHW

    clf, bbox, anchors, fg = rpn_forward(features, params, feature_stride=16)
    jax.block_until_ready((clf, bbox, anchors, fg))

    assert clf.shape == (H * W * 9, 2)
    assert bbox.shape == (H * W * 9, 4)
    assert anchors.shape == (H * W * 9, 4)
    assert fg.shape == (H * W * 9,)

    # Loose-tolerance parity check vs f32 reference (kernel uses bf16 weights).
    ref_clf, ref_bbox, ref_fg = rpn_reference(features, params)
    np.testing.assert_allclose(np.asarray(clf), np.asarray(ref_clf), rtol=5e-2, atol=1e-2)
    np.testing.assert_allclose(np.asarray(bbox), np.asarray(ref_bbox), rtol=5e-2, atol=1e-2)
    np.testing.assert_allclose(np.asarray(fg), np.asarray(ref_fg), rtol=5e-2, atol=1e-2)

    print("KERNEL_OK")
</pallas_src>

<mosaic_0001>
module attributes {stable_mosaic.version = 11 : i64} {
  func.func @rpn_kernel(%arg0: i32, %arg1: memref<342x64xf32, #tpu.memory_space<vmem>>, %arg2: memref<9x64x512xbf16, #tpu.memory_space<vmem>>, %arg3: memref<1x512xf32, #tpu.memory_space<vmem>>, %arg4: memref<512x64xbf16, #tpu.memory_space<vmem>>, %arg5: memref<1x64xf32, #tpu.memory_space<vmem>>, %arg6: memref<144x64xf32, #tpu.memory_space<vmem>>, %arg7: memref<144x512xf32, #tpu.memory_space<vmem>>) attributes {dimension_semantics = [#tpu.dimension_semantics<parallel>], iteration_bounds = array<i64: 2>, scalar_prefetch = 0 : i64, scratch_operands = 1 : i64, tpu.core_type = #tpu.core_type<tc>, window_params = [{pipeline_mode = #tpu.pipeline_mode<synchronous>, transform_indices = @transform_0, window_bounds = array<i64: 342, 64>}, {pipeline_mode = #tpu.pipeline_mode<synchronous>, transform_indices = @transform_1, window_bounds = array<i64: 9, 64, 512>}, {pipeline_mode = #tpu.pipeline_mode<synchronous>, transform_indices = @transform_2, window_bounds = array<i64: 1, 512>}, {pipeline_mode = #tpu.pipeline_mode<synchronous>, transform_indices = @transform_3, window_bounds = array<i64: 512, 64>}, {pipeline_mode = #tpu.pipeline_mode<synchronous>, transform_indices = @transform_4, window_bounds = array<i64: 1, 64>}, {transform_indices = @transform_5, window_bounds = array<i64: 144, 64>}]} {
    %c144_i32 = arith.constant 144 : i32
    %0 = arith.muli %arg0, %c144_i32 : i32
    %1 = tpu.assume_multiple %0, 8 : i32
    %cst = arith.constant 0.000000e+00 : f32
    %2 = vector.broadcast %cst : f32 to vector<144x512xf32>
    %c0 = arith.constant 0 : index
    %c0_0 = arith.constant 0 : index
    %3 = vector.load %arg7[%c0, %c0_0] : memref<144x512xf32, #tpu.memory_space<vmem>>, vector<144x512xf32>
    tpu.vector_store %arg7[%c0, %c0_0], %2 {strides = array<i32>} : memref<144x512xf32, #tpu.memory_space<vmem>>, vector<144x512xf32>,
    %c0_i32 = arith.constant 0 : i32
    %4 = arith.addi %1, %c0_i32 : i32
    %5 = arith.index_cast %4 : i32 to index
    %c0_1 = arith.constant 0 : index
    %6 = vector.load %arg1[%5, %c0_1] : memref<342x64xf32, #tpu.memory_space<vmem>>, vector<144x64xf32>
    %7 = arith.truncf %6 : vector<144x64xf32> to vector<144x64xbf16>
    %c0_2 = arith.constant 0 : index
    %c0_3 = arith.constant 0 : index
    %8 = vector.load %arg7[%c0_2, %c0_3] : memref<144x512xf32, #tpu.memory_space<vmem>>, vector<144x512xf32>
    %c0_4 = arith.constant 0 : index
    %c0_5 = arith.constant 0 : index
    %c0_6 = arith.constant 0 : index
    %9 = vector.load %arg2[%c0_4, %c0_5, %c0_6] : memref<9x64x512xbf16, #tpu.memory_space<vmem>>, vector<1x64x512xbf16>
    %10 = vector.shape_cast %9 : vector<1x64x512xbf16> to vector<64x512xbf16>
    %cst_7 = arith.constant dense<0.000000e+00> : vector<144x512xf32>
    %11 = tpu.matmul %7, %10, %cst_7 {dimension_numbers = #tpu.dot_dimension_numbers<[1], [0], [0], [1], [0, 0, 1, 1], [], []>} : vector<144x64xbf16>, vector<64x512xbf16>, vector<144x512xf32> -> vector<144x512xf32>
    %12 = arith.addf %8, %11 : vector<144x512xf32>
    %c0_8 = arith.constant 0 : index
    %c0_9 = arith.constant 0 : index
    %13 = vector.load %arg7[%c0_8, %c0_9] : memref<144x512xf32, #tpu.memory_space<vmem>>, vector<144x512xf32>
    tpu.vector_store %arg7[%c0_8, %c0_9], %12 {strides = array<i32>} : memref<144x512xf32, #tpu.memory_space<vmem>>, vector<144x512xf32>,
    %c1_i32 = arith.constant 1 : i32
    %14 = arith.addi %1, %c1_i32 : i32
    %15 = arith.index_cast %14 : i32 to index
    %c0_10 = arith.constant 0 : index
    %16 = vector.load %arg1[%15, %c0_10] : memref<342x64xf32, #tpu.memory_space<vmem>>, vector<144x64xf32>
    %17 = arith.truncf %16 : vector<144x64xf32> to vector<144x64xbf16>
    %c0_11 = arith.constant 0 : index
    %c0_12 = arith.constant 0 : index
    %18 = vector.load %arg7[%c0_11, %c0_12] : memref<144x512xf32, #tpu.memory_space<vmem>>, vector<144x512xf32>
    %c1 = arith.constant 1 : index
    %c0_13 = arith.constant 0 : index
    %c0_14 = arith.constant 0 : index
    %19 = vector.load %arg2[%c1, %c0_13, %c0_14] : memref<9x64x512xbf16, #tpu.memory_space<vmem>>, vector<1x64x512xbf16>
    %20 = vector.shape_cast %19 : vector<1x64x512xbf16> to vector<64x512xbf16>
    %cst_15 = arith.constant dense<0.000000e+00> : vector<144x512xf32>
    %21 = tpu.matmul %17, %20, %cst_15 {dimension_numbers = #tpu.dot_dimension_numbers<[1], [0], [0], [1], [0, 0, 1, 1], [], []>} : vector<144x64xbf16>, vector<64x512xbf16>, vector<144x512xf32> -> vector<144x512xf32>
    %22 = arith.addf %18, %21 : vector<144x512xf32>
    %c0_16 = arith.constant 0 : index
    %c0_17 = arith.constant 0 : index
    %23 = vector.load %arg7[%c0_16, %c0_17] : memref<144x512xf32, #tpu.memory_space<vmem>>, vector<144x512xf32>
    tpu.vector_store %arg7[%c0_16, %c0_17], %22 {strides = array<i32>} : memref<144x512xf32, #tpu.memory_space<vmem>>, vector<144x512xf32>,
    %c2_i32 = arith.constant 2 : i32
    %24 = arith.addi %1, %c2_i32 : i32
    %25 = arith.index_cast %24 : i32 to index
    %c0_18 = arith.constant 0 : index
    %26 = vector.load %arg1[%25, %c0_18] : memref<342x64xf32, #tpu.memory_space<vmem>>, vector<144x64xf32>
    %27 = arith.truncf %26 : vector<144x64xf32> to vector<144x64xbf16>
    %c0_19 = arith.constant 0 : index
    %c0_20 = arith.constant 0 : index
    %28 = vector.load %arg7[%c0_19, %c0_20] : memref<144x512xf32, #tpu.memory_space<vmem>>, vector<144x512xf32>
    %c2 = arith.constant 2 : index
    %c0_21 = arith.constant 0 : index
    %c0_22 = arith.constant 0 : index
    %29 = vector.load %arg2[%c2, %c0_21, %c0_22] : memref<9x64x512xbf16, #tpu.memory_space<vmem>>, vector<1x64x512xbf16>
    %30 = vector.shape_cast %29 : vector<1x64x512xbf16> to vector<64x512xbf16>
    %cst_23 = arith.constant dense<0.000000e+00> : vector<144x512xf32>
    %31 = tpu.matmul %27, %30, %cst_23 {dimension_numbers = #tpu.dot_dimension_numbers<[1], [0], [0], [1], [0, 0, 1, 1], [], []>} : vector<144x64xbf16>, vector<64x512xbf16>, vector<144x512xf32> -> vector<144x512xf32>
    %32 = arith.addf %28, %31 : vector<144x512xf32>
    %c0_24 = arith.constant 0 : index
    %c0_25 = arith.constant 0 : index
    %33 = vector.load %arg7[%c0_24, %c0_25] : memref<144x512xf32, #tpu.memory_space<vmem>>, vector<144x512xf32>
    tpu.vector_store %arg7[%c0_24, %c0_25], %32 {strides = array<i32>} : memref<144x512xf32, #tpu.memory_space<vmem>>, vector<144x512xf32>,
    %c18_i32 = arith.constant 18 : i32
    %34 = arith.addi %1, %c18_i32 : i32
    %35 = arith.index_cast %34 : i32 to index
    %c0_26 = arith.constant 0 : index
    %36 = vector.load %arg1[%35, %c0_26] : memref<342x64xf32, #tpu.memory_space<vmem>>, vector<144x64xf32>
    %37 = arith.truncf %36 : vector<144x64xf32> to vector<144x64xbf16>
    %c0_27 = arith.constant 0 : index
    %c0_28 = arith.constant 0 : index
    %38 = vector.load %arg7[%c0_27, %c0_28] : memref<144x512xf32, #tpu.memory_space<vmem>>, vector<144x512xf32>
    %c3 = arith.constant 3 : index
    %c0_29 = arith.constant 0 : index
    %c0_30 = arith.constant 0 : index
    %39 = vector.load %arg2[%c3, %c0_29, %c0_30] : memref<9x64x512xbf16, #tpu.memory_space<vmem>>, vector<1x64x512xbf16>
    %40 = vector.shape_cast %39 : vector<1x64x512xbf16> to vector<64x512xbf16>
    %cst_31 = arith.constant dense<0.000000e+00> : vector<144x512xf32>
    %41 = tpu.matmul %37, %40, %cst_31 {dimension_numbers = #tpu.dot_dimension_numbers<[1], [0], [0], [1], [0, 0, 1, 1], [], []>} : vector<144x64xbf16>, vector<64x512xbf16>, vector<144x512xf32> -> vector<144x512xf32>
    %42 = arith.addf %38, %41 : vector<144x512xf32>
    %c0_32 = arith.constant 0 : index
    %c0_33 = arith.constant 0 : index
    %43 = vector.load %arg7[%c0_32, %c0_33] : memref<144x512xf32, #tpu.memory_space<vmem>>, vector<144x512xf32>
    tpu.vector_store %arg7[%c0_32, %c0_33], %42 {strides = array<i32>} : memref<144x512xf32, #tpu.memory_space<vmem>>, vector<144x512xf32>,
    %c19_i32 = arith.constant 19 : i32
    %44 = arith.addi %1, %c19_i32 : i32
    %45 = arith.index_cast %44 : i32 to index
    %c0_34 = arith.constant 0 : index
    %46 = vector.load %arg1[%45, %c0_34] : memref<342x64xf32, #tpu.memory_space<vmem>>, vector<144x64xf32>
    %47 = arith.truncf %46 : vector<144x64xf32> to vector<144x64xbf16>
    %c0_35 = arith.constant 0 : index
    %c0_36 = arith.constant 0 : index
    %48 = vector.load %arg7[%c0_35, %c0_36] : memref<144x512xf32, #tpu.memory_space<vmem>>, vector<144x512xf32>
    %c4 = arith.constant 4 : index
    %c0_37 = arith.constant 0 : index
    %c0_38 = arith.constant 0 : index
    %49 = vector.load %arg2[%c4, %c0_37, %c0_38] : memref<9x64x512xbf16, #tpu.memory_space<vmem>>, vector<1x64x512xbf16>
    %50 = vector.shape_cast %49 : vector<1x64x512xbf16> to vector<64x512xbf16>
    %cst_39 = arith.constant dense<0.000000e+00> : vector<144x512xf32>
    %51 = tpu.matmul %47, %50, %cst_39 {dimension_numbers = #tpu.dot_dimension_numbers<[1], [0], [0], [1], [0, 0, 1, 1], [], []>} : vector<144x64xbf16>, vector<64x512xbf16>, vector<144x512xf32> -> vector<144x512xf32>
    %52 = arith.addf %48, %51 : vector<144x512xf32>
    %c0_40 = arith.constant 0 : index
    %c0_41 = arith.constant 0 : index
    %53 = vector.load %arg7[%c0_40, %c0_41] : memref<144x512xf32, #tpu.memory_space<vmem>>, vector<144x512xf32>
    tpu.vector_store %arg7[%c0_40, %c0_41], %52 {strides = array<i32>} : memref<144x512xf32, #tpu.memory_space<vmem>>, vector<144x512xf32>,
    %c20_i32 = arith.constant 20 : i32
    %54 = arith.addi %1, %c20_i32 : i32
    %55 = arith.index_cast %54 : i32 to index
    %c0_42 = arith.constant 0 : index
    %56 = vector.load %arg1[%55, %c0_42] : memref<342x64xf32, #tpu.memory_space<vmem>>, vector<144x64xf32>
    %57 = arith.truncf %56 : vector<144x64xf32> to vector<144x64xbf16>
    %c0_43 = arith.constant 0 : index
    %c0_44 = arith.constant 0 : index
    %58 = vector.load %arg7[%c0_43, %c0_44] : memref<144x512xf32, #tpu.memory_space<vmem>>, vector<144x512xf32>
    %c5 = arith.constant 5 : index
    %c0_45 = arith.constant 0 : index
    %c0_46 = arith.constant 0 : index
    %59 = vector.load %arg2[%c5, %c0_45, %c0_46] : memref<9x64x512xbf16, #tpu.memory_space<vmem>>, vector<1x64x512xbf16>
    %60 = vector.shape_cast %59 : vector<1x64x512xbf16> to vector<64x512xbf16>
    %cst_47 = arith.constant dense<0.000000e+00> : vector<144x512xf32>
    %61 = tpu.matmul %57, %60, %cst_47 {dimension_numbers = #tpu.dot_dimension_numbers<[1], [0], [0], [1], [0, 0, 1, 1], [], []>} : vector<144x64xbf16>, vector<64x512xbf16>, vector<144x512xf32> -> vector<144x512xf32>
    %62 = arith.addf %58, %61 : vector<144x512xf32>
    %c0_48 = arith.constant 0 : index
    %c0_49 = arith.constant 0 : index
    %63 = vector.load %arg7[%c0_48, %c0_49] : memref<144x512xf32, #tpu.memory_space<vmem>>, vector<144x512xf32>
    tpu.vector_store %arg7[%c0_48, %c0_49], %62 {strides = array<i32>} : memref<144x512xf32, #tpu.memory_space<vmem>>, vector<144x512xf32>,
    %c36_i32 = arith.constant 36 : i32
    %64 = arith.addi %1, %c36_i32 : i32
    %65 = arith.index_cast %64 : i32 to index
    %c0_50 = arith.constant 0 : index
    %66 = vector.load %arg1[%65, %c0_50] : memref<342x64xf32, #tpu.memory_space<vmem>>, vector<144x64xf32>
    %67 = arith.truncf %66 : vector<144x64xf32> to vector<144x64xbf16>
    %c0_51 = arith.constant 0 : index
    %c0_52 = arith.constant 0 : index
    %68 = vector.load %arg7[%c0_51, %c0_52] : memref<144x512xf32, #tpu.memory_space<vmem>>, vector<144x512xf32>
    %c6 = arith.constant 6 : index
    %c0_53 = arith.constant 0 : index
    %c0_54 = arith.constant 0 : index
    %69 = vector.load %arg2[%c6, %c0_53, %c0_54] : memref<9x64x512xbf16, #tpu.memory_space<vmem>>, vector<1x64x512xbf16>
    %70 = vector.shape_cast %69 : vector<1x64x512xbf16> to vector<64x512xbf16>
    %cst_55 = arith.constant dense<0.000000e+00> : vector<144x512xf32>
    %71 = tpu.matmul %67, %70, %cst_55 {dimension_numbers = #tpu.dot_dimension_numbers<[1], [0], [0], [1], [0, 0, 1, 1], [], []>} : vector<144x64xbf16>, vector<64x512xbf16>, vector<144x512xf32> -> vector<144x512xf32>
    %72 = arith.addf %68, %71 : vector<144x512xf32>
    %c0_56 = arith.constant 0 : index
    %c0_57 = arith.constant 0 : index
    %73 = vector.load %arg7[%c0_56, %c0_57] : memref<144x512xf32, #tpu.memory_space<vmem>>, vector<144x512xf32>
    tpu.vector_store %arg7[%c0_56, %c0_57], %72 {strides = array<i32>} : memref<144x512xf32, #tpu.memory_space<vmem>>, vector<144x512xf32>,
    %c37_i32 = arith.constant 37 : i32
    %74 = arith.addi %1, %c37_i32 : i32
    %75 = arith.index_cast %74 : i32 to index
    %c0_58 = arith.constant 0 : index
    %76 = vector.load %arg1[%75, %c0_58] : memref<342x64xf32, #tpu.memory_space<vmem>>, vector<144x64xf32>
    %77 = arith.truncf %76 : vector<144x64xf32> to vector<144x64xbf16>
    %c0_59 = arith.constant 0 : index
    %c0_60 = arith.constant 0 : index
    %78 = vector.load %arg7[%c0_59, %c0_60] : memref<144x512xf32, #tpu.memory_space<vmem>>, vector<144x512xf32>
    %c7 = arith.constant 7 : index
    %c0_61 = arith.constant 0 : index
    %c0_62 = arith.constant 0 : index
    %79 = vector.load %arg2[%c7, %c0_61, %c0_62] : memref<9x64x512xbf16, #tpu.memory_space<vmem>>, vector<1x64x512xbf16>
    %80 = vector.shape_cast %79 : vector<1x64x512xbf16> to vector<64x512xbf16>
    %cst_63 = arith.constant dense<0.000000e+00> : vector<144x512xf32>
    %81 = tpu.matmul %77, %80, %cst_63 {dimension_numbers = #tpu.dot_dimension_numbers<[1], [0], [0], [1], [0, 0, 1, 1], [], []>} : vector<144x64xbf16>, vector<64x512xbf16>, vector<144x512xf32> -> vector<144x512xf32>
    %82 = arith.addf %78, %81 : vector<144x512xf32>
    %c0_64 = arith.constant 0 : index
    %c0_65 = arith.constant 0 : index
    %83 = vector.load %arg7[%c0_64, %c0_65] : memref<144x512xf32, #tpu.memory_space<vmem>>, vector<144x512xf32>
    tpu.vector_store %arg7[%c0_64, %c0_65], %82 {strides = array<i32>} : memref<144x512xf32, #tpu.memory_space<vmem>>, vector<144x512xf32>,
    %c38_i32 = arith.constant 38 : i32
    %84 = arith.addi %1, %c38_i32 : i32
    %85 = arith.index_cast %84 : i32 to index
    %c0_66 = arith.constant 0 : index
    %86 = vector.load %arg1[%85, %c0_66] : memref<342x64xf32, #tpu.memory_space<vmem>>, vector<144x64xf32>
    %87 = arith.truncf %86 : vector<144x64xf32> to vector<144x64xbf16>
    %c0_67 = arith.constant 0 : index
    %c0_68 = arith.constant 0 : index
    %88 = vector.load %arg7[%c0_67, %c0_68] : memref<144x512xf32, #tpu.memory_space<vmem>>, vector<144x512xf32>
    %c8 = arith.constant 8 : index
    %c0_69 = arith.constant 0 : index
    %c0_70 = arith.constant 0 : index
    %89 = vector.load %arg2[%c8, %c0_69, %c0_70] : memref<9x64x512xbf16, #tpu.memory_space<vmem>>, vector<1x64x512xbf16>
    %90 = vector.shape_cast %89 : vector<1x64x512xbf16> to vector<64x512xbf16>
    %cst_71 = arith.constant dense<0.000000e+00> : vector<144x512xf32>
    %91 = tpu.matmul %87, %90, %cst_71 {dimension_numbers = #tpu.dot_dimension_numbers<[1], [0], [0], [1], [0, 0, 1, 1], [], []>} : vector<144x64xbf16>, vector<64x512xbf16>, vector<144x512xf32> -> vector<144x512xf32>
    %92 = arith.addf %88, %91 : vector<144x512xf32>
    %c0_72 = arith.constant 0 : index
    %c0_73 = arith.constant 0 : index
    %93 = vector.load %arg7[%c0_72, %c0_73] : memref<144x512xf32, #tpu.memory_space<vmem>>, vector<144x512xf32>
    tpu.vector_store %arg7[%c0_72, %c0_73], %92 {strides = array<i32>} : memref<144x512xf32, #tpu.memory_space<vmem>>, vector<144x512xf32>,
    %c0_74 = arith.constant 0 : index
    %c0_75 = arith.constant 0 : index
    %94 = vector.load %arg7[%c0_74, %c0_75] : memref<144x512xf32, #tpu.memory_space<vmem>>, vector<144x512xf32>
    %c0_76 = arith.constant 0 : index
    %c0_77 = arith.constant 0 : index
    %95 = vector.load %arg3[%c0_76, %c0_77] : memref<1x512xf32, #tpu.memory_space<vmem>>, vector<1x512xf32>
    %96 = vector.broadcast %95 : vector<1x512xf32> to vector<144x512xf32>
    %97 = arith.addf %94, %96 : vector<144x512xf32>
    %cst_78 = arith.constant 0.000000e+00 : f32
    %98 = vector.broadcast %cst_78 : f32 to vector<144x512xf32>
    %99 = arith.maximumf %97, %98 : vector<144x512xf32>
    %100 = arith.truncf %99 : vector<144x512xf32> to vector<144x512xbf16>
    %c0_79 = arith.constant 0 : index
    %c0_80 = arith.constant 0 : index
    %101 = vector.load %arg4[%c0_79, %c0_80] : memref<512x64xbf16, #tpu.memory_space<vmem>>, vector<512x64xbf16>
    %cst_81 = arith.constant dense<0.000000e+00> : vector<144x64xf32>
    %102 = tpu.matmul %100, %101, %cst_81 {dimension_numbers = #tpu.dot_dimension_numbers<[1], [0], [0], [1], [0, 0, 1, 1], [], []>} : vector<144x512xbf16>, vector<512x64xbf16>, vector<144x64xf32> -> vector<144x64xf32>
    %c0_82 = arith.constant 0 : index
    %c0_83 = arith.constant 0 : index
    %103 = vector.load %arg5[%c0_82, %c0_83] : memref<1x64xf32, #tpu.memory_space<vmem>>, vector<1x64xf32>
    %104 = vector.broadcast %103 : vector<1x64xf32> to vector<144x64xf32>
    %105 = arith.addf %102, %104 : vector<144x64xf32>
    %106 = tpu.iota {dimensions = array<i32: 1>} : vector<144x64xi32>
    %cst_84 = arith.constant 0.000000e+00 : f32
    %107 = vector.broadcast %cst_84 : f32 to vector<144x64xf32>
    %108 = arith.subf %107, %105 : vector<144x64xf32>
    %109 = math.exp %108 : vector<144x64xf32>
    %cst_85 = arith.constant 1.000000e+00 : f32
    %110 = vector.broadcast %cst_85 : f32 to vector<144x64xf32>
    %111 = arith.addf %110, %109 : vector<144x64xf32>
    %112 = tpu.reciprocal %111 {approx = true} : vector<144x64xf32> -> vector<144x64xf32>
    %c54_i32 = arith.constant 54 : i32
    %113 = vector.broadcast %c54_i32 : i32 to vector<144x64xi32>
    %114 = arith.cmpi sge, %106, %113 : vector<144x64xi32>
    %c63_i32 = arith.constant 63 : i32
    %115 = vector.broadcast %c63_i32 : i32 to vector<144x64xi32>
    %116 = arith.cmpi slt, %106, %115 : vector<144x64xi32>
    %117 = arith.andi %114, %116 : vector<144x64xi1>
    %118 = arith.select %117, %112, %105 : vector<144x64xi1>, vector<144x64xf32>
    %c0_86 = arith.constant 0 : index
    %c0_87 = arith.constant 0 : index
    %119 = vector.load %arg6[%c0_86, %c0_87] : memref<144x64xf32, #tpu.memory_space<vmem>>, vector<144x64xf32>
    tpu.vector_store %arg6[%c0_86, %c0_87], %118 {strides = array<i32>} : memref<144x64xf32, #tpu.memory_space<vmem>>, vector<144x64xf32>,
    return
  }
  func.func @transform_0(%arg0: i32) -> (i32, i32) {
    %c0_i32 = arith.constant 0 : i32
    %c0_i32_0 = arith.constant 0 : i32
    %c0_i32_1 = arith.constant 0 : i32
    return %c0_i32, %c0_i32_0 : i32, i32
  }
  func.func @transform_1(%arg0: i32) -> (i32, i32, i32) {
    %c0_i32 = arith.constant 0 : i32
    %c0_i32_0 = arith.constant 0 : i32
    %c0_i32_1 = arith.constant 0 : i32
    %c0_i32_2 = arith.constant 0 : i32
    return %c0_i32, %c0_i32_0, %c0_i32_1 : i32, i32, i32
  }
  func.func @transform_2(%arg0: i32) -> (i32, i32) {
    %c0_i32 = arith.constant 0 : i32
    %c0_i32_0 = arith.constant 0 : i32
    %c0_i32_1 = arith.constant 0 : i32
    return %c0_i32, %c0_i32_0 : i32, i32
  }
  func.func @transform_3(%arg0: i32) -> (i32, i32) {
    %c0_i32 = arith.constant 0 : i32
    %c0_i32_0 = arith.constant 0 : i32
    %c0_i32_1 = arith.constant 0 : i32
    return %c0_i32, %c0_i32_0 : i32, i32
  }
  func.func @transform_4(%arg0: i32) -> (i32, i32) {
    %c0_i32 = arith.constant 0 : i32
    %c0_i32_0 = arith.constant 0 : i32
    %c0_i32_1 = arith.constant 0 : i32
    return %c0_i32, %c0_i32_0 : i32, i32
  }
  func.func @transform_5(%arg0: i32) -> (i32, i32) {
    %c0_i32 = arith.constant 0 : i32
    %c0_i32_0 = arith.constant 0 : i32
    return %arg0, %c0_i32 : i32, i32
  }
}

</mosaic_0001>

<llo_original>
// kernel: tpu_custom_call.1
$region0: #{tpu_custom_call.1}
  #allocation0 [shape = 'u32[]', space=smem, size = 0x4, offset = 0x4, fixed_abs, tag = 'smem constant byte address 0x4 - core index']
  #allocation1 [shape = 'u32[144,128]{1,0:T(1,128)}', space=vmem, size = 0x12000, scoped, tag = 'internal scratch']
  #allocation2 [shape = 'f32[144,512]{1,0:T(8,128)}', space=vmem, size = 0x48000, scoped, tag = 'scratch operand']
  %s0 = inlined_call_operand.vmem [shape: f32[342,64], index: 0, kind: input, shape index: {}]
  %s1 = inlined_call_operand.hbm [shape: bf16[9,64,512], index: 1, kind: input, shape index: {}]
  %s2 = inlined_call_operand.vmem [shape: f32[1,512], index: 2, kind: input, shape index: {}]
  %s3 = inlined_call_operand.vmem [shape: bf16[512,64], index: 3, kind: input, shape index: {}]
  %s4 = inlined_call_operand.vmem [shape: f32[1,64], index: 4, kind: input, shape index: {}]
  %s5 = inlined_call_operand.vmem [shape: f32[288,64], index: 5, kind: output, shape index: {}]
  %s6 = sld [smem:[#allocation0]]
  $region57: #{tpu_custom_call.1} parent=0
    _
  %s8 = ssub.s32 1, %s6
  %s9 = scalar_select 0, %s8, %s6
  $region1: #{tpu_custom_call.1} parent=0
    #allocation3 [shape = 'u8[589824]{0}', space=vmem, size = 0x90000, scoped, tag = 'input window, operand 1, single buffered']
    #allocation4 [shape = 's32[2]{0}', space=sflag, size = 0x8, scoped, tag = 'scoped memory for tpu_custom_call.1']
    %10 = vsyncpa [#allocation4], 0
    loop: start=0, step=1, limit=4
    $region2: #{tpu_custom_call.1} parent=1 // loop_pre_header
      _
    $region3: #{tpu_custom_call.1} parent=1 // loop_header
      %s12 = sphi 0, %s16
      %p13 = scmp.ge.s32.totalorder %s12, 4
      %s20 = sphi 0, %s20
      %s22 = sphi 0, %s20
      %s23 = sphi 0, %s22
      %s37 = sphi 0, %s23
      %s41 = sphi 0, %s41
      %s43 = sphi 0, %s41
      %s44 = sphi 0, %s43
      %s58 = sphi 0, %s44
      %s62 = sphi 0, %s62
      %s64 = sphi 0, %s62
      %s65 = sphi 0, %s64
      %s79 = sphi 0, %s65
      %s83 = sphi 0, %s83
      %s85 = sphi 0, %s83
      %s86 = sphi 0, %s85
      %s100 = sphi 0, %s86
      %s104 = sphi 0, %s104
      %s106 = sphi 0, %s104
      %s107 = sphi 0, %s106
      %s121 = sphi 0, %s107
      %s127 = sphi 0, %s129
      %s130 = sphi 0, %s127
      %s131 = sphi 0, %s130
      %s147 = sphi 0, %s131
    $region4: #{tpu_custom_call.1} parent=1 // loop_header_branch
      %15 = sbr.rel (%p13) target = $region8
    $region5: #{tpu_custom_call.1} parent=1 // loop_body
      %s17 = ssub.s32 %s12, 1
      %s18 = ssub.s32 %s12, 2
      %s19 = sadd.s32 %s12, 1
      %s21 = sadd.s32 %s20, 1
      %p24 = scmp.eq.s32.totalorder %s12, 1
      %p25 = scmp.ne.s32.totalorder %s20, %s22
      %p26 = scmp.eq.s32.totalorder %s12, 0
      %p27 = por %p25, %p26
      %p28 = scmp.ne.s32.totalorder %s20, %s22
      %p29 = scmp.eq.s32.totalorder %s17, 1
      %p30 = por %p28, %p29
      %p31 = scmp.ne.s32.totalorder %s22, %s23
      %p32 = scmp.eq.s32.totalorder %s17, 0
      %p33 = por %p31, %p32
      %p34 = scmp.ne.s32.totalorder %s22, %s23
      %p35 = scmp.eq.s32.totalorder %s18, 1
      %p36 = por %p34, %p35
      %p38 = scmp.ne.s32.totalorder %s23, %s37
      %p39 = scmp.eq.s32.totalorder %s18, 0
      %p40 = por %p38, %p39
      %s42 = sadd.s32 %s41, 1
      %p45 = scmp.eq.s32.totalorder %s12, 1
      %p46 = scmp.ne.s32.totalorder %s41, %s43
      %p47 = scmp.eq.s32.totalorder %s12, 0
      %p48 = por %p46, %p47
      %p49 = scmp.ne.s32.totalorder %s41, %s43
      %p50 = scmp.eq.s32.totalorder %s17, 1
      %p51 = por %p49, %p50
      %p52 = scmp.ne.s32.totalorder %s43, %s44
      %p53 = scmp.eq.s32.totalorder %s17, 0
      %p54 = por %p52, %p53
      %p55 = scmp.ne.s32.totalorder %s43, %s44
      %p56 = scmp.eq.s32.totalorder %s18, 1
      %p57 = por %p55, %p56
      %p59 = scmp.ne.s32.totalorder %s44, %s58
      %p60 = scmp.eq.s32.totalorder %s18, 0
      %p61 = por %p59, %p60
      %s63 = sadd.s32 %s62, 1
      %p66 = scmp.eq.s32.totalorder %s12, 1
      %p67 = scmp.ne.s32.totalorder %s62, %s64
      %p68 = scmp.eq.s32.totalorder %s12, 0
      %p69 = por %p67, %p68
      %p70 = scmp.ne.s32.totalorder %s62, %s64
      %p71 = scmp.eq.s32.totalorder %s17, 1
      %p72 = por %p70, %p71
      %p73 = scmp.ne.s32.totalorder %s64, %s65
      %p74 = scmp.eq.s32.totalorder %s17, 0
      %p75 = por %p73, %p74
      %p76 = scmp.ne.s32.totalorder %s64, %s65
      %p77 = scmp.eq.s32.totalorder %s18, 1
      %p78 = por %p76, %p77
      %p80 = scmp.ne.s32.totalorder %s65, %s79
      %p81 = scmp.eq.s32.totalorder %s18, 0
      %p82 = por %p80, %p81
      %s84 = sadd.s32 %s83, 1
      %p87 = scmp.eq.s32.totalorder %s12, 1
      %p88 = scmp.ne.s32.totalorder %s83, %s85
      %p89 = scmp.eq.s32.totalorder %s12, 0
      %p90 = por %p88, %p89
      %p91 = scmp.ne.s32.totalorder %s83, %s85
      %p92 = scmp.eq.s32.totalorder %s17, 1
      %p93 = por %p91, %p92
      %p94 = scmp.ne.s32.totalorder %s85, %s86
      %p95 = scmp.eq.s32.totalorder %s17, 0
      %p96 = por %p94, %p95
      %p97 = scmp.ne.s32.totalorder %s85, %s86
      %p98 = scmp.eq.s32.totalorder %s18, 1
      %p99 = por %p97, %p98
      %p101 = scmp.ne.s32.totalorder %s86, %s100
      %p102 = scmp.eq.s32.totalorder %s18, 0
      %p103 = por %p101, %p102
      %s105 = sadd.s32 %s104, 1
      %p108 = scmp.eq.s32.totalorder %s12, 1
      %p109 = scmp.ne.s32.totalorder %s104, %s106
      %p110 = scmp.eq.s32.totalorder %s12, 0
      %p111 = por %p109, %p110
      %p112 = scmp.ne.s32.totalorder %s104, %s106
      %p113 = scmp.eq.s32.totalorder %s17, 1
      %p114 = por %p112, %p113
      %p115 = scmp.ne.s32.totalorder %s106, %s107
      %p116 = scmp.eq.s32.totalorder %s17, 0
      %p117 = por %p115, %p116
      %p118 = scmp.ne.s32.totalorder %s106, %s107
      %p119 = scmp.eq.s32.totalorder %s18, 1
      %p120 = por %p118, %p119
      %p122 = scmp.ne.s32.totalorder %s107, %s121
      %p123 = scmp.eq.s32.totalorder %s18, 0
      %p124 = por %p122, %p123
      %s125 = ssub.s32 %s12, %s19
      %p126 = scmp.eq.s32.totalorder %s125, 0
      %s128 = sadd.s32 %s127, 1
      %s129 = scalar_select %p126, %s127, %s128
      %p132 = pneg %p126
      %p133 = scmp.eq.s32.totalorder %s12, 1
      %p134 = por %p132, %p133
      %p135 = scmp.ne.s32.totalorder %s127, %s130
      %p136 = scmp.eq.s32.totalorder %s12, 0
      %p137 = por %p135, %p136
      %p138 = scmp.ne.s32.totalorder %s127, %s130
      %p139 = scmp.eq.s32.totalorder %s17, 1
      %p140 = por %p138, %p139
      %p141 = scmp.ne.s32.totalorder %s130, %s131
      %p142 = scmp.eq.s32.totalorder %s17, 0
      %p143 = por %p141, %p142
      %p144 = scmp.ne.s32.totalorder %s130, %s131
      %p145 = scmp.eq.s32.totalorder %s18, 1
      %p146 = por %p144, %p145
      %p148 = scmp.ne.s32.totalorder %s131, %s147
      %p149 = scmp.eq.s32.totalorder %s18, 0
      %p150 = por %p148, %p149
      %p151 = scmp.le.s32.totalorder 1, %s12
      %p152 = scmp.lt.s32.totalorder %s12, 3
      %p153 = pnand %p151, %p152
      %p154 = pneg %p153
      // Predicated region
      $region9: #{tpu_custom_call.1} parent=5 // pred_check
        _
      $region10: #{tpu_custom_call.1} parent=5 // pred_check_branch
        %156 = sbr.rel (%p153) target = $region12
      $region11: #{tpu_custom_call.1} parent=5 // pred_region
        %s157 = ssub.s32 %s12, 1
        // Predicated region
        $region13: #{tpu_custom_call.1} parent=11 // pred_check
          %p158 = pneg %p33
        $region14: #{tpu_custom_call.1} parent=11 // pred_check_branch
          %160 = sbr.rel (%p158) target = $region16
        $region15: #{tpu_custom_call.1} parent=11 // pred_region
          _
        $region16: #{tpu_custom_call.1} parent=11 // pred_fallthru
          _
        // Predicated region
        $region17: #{tpu_custom_call.1} parent=11 // pred_check
          %p161 = pneg %p54
        $region18: #{tpu_custom_call.1} parent=11 // pred_check_branch
          %163 = sbr.rel (%p161) target = $region20
        $region19: #{tpu_custom_call.1} parent=11 // pred_region
          %s165 = ssub.s32 18432, 18432
          %166 = vsyncadd [#allocation4], %s165
          %s167 = sshll.u32 [#allocation3], 4
          %s168 = int_to_ptr.vmem [resolvable:$true] %s167
          %173 = dma.hbm_to_vmem [thread:$0]  %s1, 18432, %s168, [#allocation4], 256, 256, 16
        $region20: #{tpu_custom_call.1} parent=11 // pred_fallthru
          _
        // Predicated region
        $region21: #{tpu_custom_call.1} parent=11 // pred_check
          %p174 = pneg %p75
        $region22: #{tpu_custom_call.1} parent=11 // pred_check_branch
          %176 = sbr.rel (%p174) target = $region24
        $region23: #{tpu_custom_call.1} parent=11 // pred_region
          _
        $region24: #{tpu_custom_call.1} parent=11 // pred_fallthru
          _
        // Predicated region
        $region25: #{tpu_custom_call.1} parent=11 // pred_check
          %p177 = pneg %p96
        $region26: #{tpu_custom_call.1} parent=11 // pred_check_branch
          %179 = sbr.rel (%p177) target = $region28
        $region27: #{tpu_custom_call.1} parent=11 // pred_region
          _
        $region28: #{tpu_custom_call.1} parent=11 // pred_fallthru
          _
        // Predicated region
        $region29: #{tpu_custom_call.1} parent=11 // pred_check
          %p180 = pneg %p117
        $region30: #{tpu_custom_call.1} parent=11 // pred_check_branch
          %182 = sbr.rel (%p180) target = $region32
        $region31: #{tpu_custom_call.1} parent=11 // pred_region
          _
        $region32: #{tpu_custom_call.1} parent=11 // pred_fallthru
          _
      $region12: #{tpu_custom_call.1} parent=5 // pred_fallthru
        _
      %p183 = scmp.lt.s32.totalorder %s12, 2
      // Predicated region
      $region33: #{tpu_custom_call.1} parent=5 // pred_check
        %p184 = pneg %p183
      $region34: #{tpu_custom_call.1} parent=5 // pred_check_branch
        %186 = sbr.rel (%p184) target = $region36
      $region35: #{tpu_custom_call.1} parent=5 // pred_region
        _
      $region36: #{tpu_custom_call.1} parent=5 // pred_fallthru
        _
      %p187 = scmp.le.s32.totalorder 1, %s12
      %p188 = scmp.lt.s32.totalorder %s12, 3
      %p189 = pnand %p187, %p188
      %p190 = pneg %p189
      // Predicated region
      $region37: #{tpu_custom_call.1} parent=5 // pred_check
        _
      $region38: #{tpu_custom_call.1} parent=5 // pred_check_branch
        %192 = sbr.rel (%p189) target = $region40
      $region39: #{tpu_custom_call.1} parent=5 // pred_region
        %s193 = ssub.s32 %s12, 1
        // Predicated region
        $region41: #{tpu_custom_call.1} parent=39 // pred_check
          %p194 = pneg %p54
        $region42: #{tpu_custom_call.1} parent=39 // pred_check_branch
          %196 = sbr.rel (%p194) target = $region44
        $region43: #{tpu_custom_call.1} parent=39 // pred_region
          %197 = dma.done [#allocation4], 18432
        $region44: #{tpu_custom_call.1} parent=39 // pred_fallthru
          _
        %p198 = pneg %p33
        %p199 = pneg %p30
        %p200 = pneg %p54
        %p201 = pneg %p51
        %p202 = pneg %p75
        %p203 = pneg %p72
        %p204 = pneg %p96
        %p205 = pneg %p93
        %p206 = pneg %p117
        %p207 = pneg %p114
        %p208 = pneg %p143
        %p209 = pneg %p140
        %s210 = smul.u32 18, %s17
        %p211 = scmp.lt.s32.totalorder %s210, 35
        %s212 = scalar_select %p211, %s210, 35
        %s213 = smul.addr %s212, 8
        %s214 = scalar_lea.vmem %s5, %s213
        %s215 = smul.u32 18, %s17
        %p216 = scmp.lt.s32.totalorder %s215, 35
        %s217 = scalar_select %p216, %s215, 35
        %s218 = smul.addr %s217, 8
        %s219 = scalar_lea.vmem %s5, %s218
        %s220 = smul.u32 18, %s17
        %s222 = smul.u32 %s17, 144
        %223 = vst [vmem:[#allocation2] sm:$0xff] 0.0
        %224 = vst [vmem:[#allocation2 + $0x8] sm:$0xff] 0.0
        %225 = vst [vmem:[#allocation2 + $0x10] sm:$0xff] 0.0
        %226 = vst [vmem:[#allocation2 + $0x18] sm:$0xff] 0.0
        %227 = vst [vmem:[#allocation2 + $0x20] sm:$0xff] 0.0
        %228 = vst [vmem:[#allocation2 + $0x28] sm:$0xff] 0.0
        %229 = vst [vmem:[#allocation2 + $0x30] sm:$0xff] 0.0
        %230 = vst [vmem:[#allocation2 + $0x38] sm:$0xff] 0.0
        %231 = vst [vmem:[#allocation2 + $0x40] sm:$0xff] 0.0
        %232 = vst [vmem:[#allocation2 + $0x48] sm:$0xff] 0.0
        %233 = vst [vmem:[#allocation2 + $0x50] sm:$0xff] 0.0
        %234 = vst [vmem:[#allocation2 + $0x58] sm:$0xff] 0.0
        %235 = vst [vmem:[#allocation2 + $0x60] sm:$0xff] 0.0
        %236 = vst [vmem:[#allocation2 + $0x68] sm:$0xff] 0.0
        %237 = vst [vmem:[#allocation2 + $0x70] sm:$0xff] 0.0
        %238 = vst [vmem:[#allocation2 + $0x78] sm:$0xff] 0.0
        %239 = vst [vmem:[#allocation2 + $0x80] sm:$0xff] 0.0
        %240 = vst [vmem:[#allocation2 + $0x88] sm:$0xff] 0.0
        %241 = vst [vmem:[#allocation2 + $0x90] sm:$0xff] 0.0
        %242 = vst [vmem:[#allocation2 + $0x98] sm:$0xff] 0.0
        %243 = vst [vmem:[#allocation2 + $0xa0] sm:$0xff] 0.0
        %244 = vst [vmem:[#allocation2 + $0xa8] sm:$0xff] 0.0
        %245 = vst [vmem:[#allocation2 + $0xb0] sm:$0xff] 0.0
        %246 = vst [vmem:[#allocation2 + $0xb8] sm:$0xff] 0.0
        %247 = vst [vmem:[#allocation2 + $0xc0] sm:$0xff] 0.0
        %248 = vst [vmem:[#allocation2 + $0xc8] sm:$0xff] 0.0
        %249 = vst [vmem:[#allocation2 + $0xd0] sm:$0xff] 0.0
        %250 = vst [vmem:[#allocation2 + $0xd8] sm:$0xff] 0.0
        %251 = vst [vmem:[#allocation2 + $0xe0] sm:$0xff] 0.0
        %252 = vst [vmem:[#allocation2 + $0xe8] sm:$0xff] 0.0
        %253 = vst [vmem:[#allocation2 + $0xf0] sm:$0xff] 0.0
        %254 = vst [vmem:[#allocation2 + $0xf8] sm:$0xff] 0.0
        %255 = vst [vmem:[#allocation2 + $0x100] sm:$0xff] 0.0
        %256 = vst [vmem:[#allocation2 + $0x108] sm:$0xff] 0.0
        %257 = vst [vmem:[#allocation2 + $0x110] sm:$0xff] 0.0
        %258 = vst [vmem:[#allocation2 + $0x118] sm:$0xff] 0.0
        %259 = vst [vmem:[#allocation2 + $0x120] sm:$0xff] 0.0
        %260 = vst [vmem:[#allocation2 + $0x128] sm:$0xff] 0.0
        %261 = vst [vmem:[#allocation2 + $0x130] sm:$0xff] 0.0
        %262 = vst [vmem:[#allocation2 + $0x138] sm:$0xff] 0.0
        %263 = vst [vmem:[#allocation2 + $0x140] sm:$0xff] 0.0
        %264 = vst [vmem:[#allocation2 + $0x148] sm:$0xff] 0.0
        %265 = vst [vmem:[#allocation2 + $0x150] sm:$0xff] 0.0
        %266 = vst [vmem:[#allocation2 + $0x158] sm:$0xff] 0.0
        %267 = vst [vmem:[#allocation2 + $0x160] sm:$0xff] 0.0
        %268 = vst [vmem:[#allocation2 + $0x168] sm:$0xff] 0.0
        %269 = vst [vmem:[#allocation2 + $0x170] sm:$0xff] 0.0
        %270 = vst [vmem:[#allocation2 + $0x178] sm:$0xff] 0.0
        %271 = vst [vmem:[#allocation2 + $0x180] sm:$0xff] 0.0
        %272 = vst [vmem:[#allocation2 + $0x188] sm:$0xff] 0.0
        %273 = vst [vmem:[#allocation2 + $0x190] sm:$0xff] 0.0
        %274 = vst [vmem:[#allocation2 + $0x198] sm:$0xff] 0.0
        %275 = vst [vmem:[#allocation2 + $0x1a0] sm:$0xff] 0.0
        %276 = vst [vmem:[#allocation2 + $0x1a8] sm:$0xff] 0.0
        %277 = vst [vmem:[#allocation2 + $0x1b0] sm:$0xff] 0.0
        %278 = vst [vmem:[#allocation2 + $0x1b8] sm:$0xff] 0.0
        %279 = vst [vmem:[#allocation2 + $0x1c0] sm:$0xff] 0.0
        %280 = vst [vmem:[#allocation2 + $0x1c8] sm:$0xff] 0.0
        %281 = vst [vmem:[#allocation2 + $0x1d0] sm:$0xff] 0.0
        %282 = vst [vmem:[#allocation2 + $0x1d8] sm:$0xff] 0.0
        %283 = vst [vmem:[#allocation2 + $0x1e0] sm:$0xff] 0.0
        %284 = vst [vmem:[#allocation2 + $0x1e8] sm:$0xff] 0.0
        %285 = vst [vmem:[#allocation2 + $0x1f0] sm:$0xff] 0.0
        %286 = vst [vmem:[#allocation2 + $0x1f8] sm:$0xff] 0.0
        %287 = vst [vmem:[#allocation2 + $0x200] sm:$0xff] 0.0
        %288 = vst [vmem:[#allocation2 + $0x208] sm:$0xff] 0.0
        %289 = vst [vmem:[#allocation2 + $0x210] sm:$0xff] 0.0
        %290 = vst [vmem:[#allocation2 + $0x218] sm:$0xff] 0.0
        %291 = vst [vmem:[#allocation2 + $0x220] sm:$0xff] 0.0
        %292 = vst [vmem:[#allocation2 + $0x228] sm:$0xff] 0.0
        %293 = vst [vmem:[#allocation2 + $0x230] sm:$0xff] 0.0
        %294 = vst [vmem:[#allocation2 + $0x238] sm:$0xff] 0.0
        %s295 = scalar_lea.vmem %s0, %s222
        %v296 = vld [vmem:[%s295] sm:$0xff]
        %v297 = vld [vmem:[%s295 + $0x8] sm:$0xff]
        %v298 = vld [vmem:[%s295 + $0x10] sm:$0xff]
        %v299 = vld [vmem:[%s295 + $0x18] sm:$0xff]
        %v300 = vld [vmem:[%s295 + $0x20] sm:$0xff]
        %v301 = vld [vmem:[%s295 + $0x28] sm:$0xff]
        %v302 = vld [vmem:[%s295 + $0x30] sm:$0xff]
        %v303 = vld [vmem:[%s295 + $0x38] sm:$0xff]
        %v304 = vld [vmem:[%s295 + $0x40] sm:$0xff]
        %v305 = vld [vmem:[%s295 + $0x48] sm:$0xff]
        %v306 = vld [vmem:[%s295 + $0x50] sm:$0xff]
        %v307 = vld [vmem:[%s295 + $0x58] sm:$0xff]
        %v308 = vld [vmem:[%s295 + $0x60] sm:$0xff]
        %v309 = vld [vmem:[%s295 + $0x68] sm:$0xff]
        %v310 = vld [vmem:[%s295 + $0x70] sm:$0xff]
        %v311 = vld [vmem:[%s295 + $0x78] sm:$0xff]
        %v312 = vld [vmem:[%s295 + $0x80] sm:$0xff]
        %v313 = vld [vmem:[%s295 + $0x88] sm:$0xff]
        %v314 = vpack.c.bf16 %v297, %v296
        %v315 = vpack.c.bf16 %v299, %v298
        %v316 = vpack.c.bf16 %v301, %v300
        %v317 = vpack.c.bf16 %v303, %v302
        %v318 = vpack.c.bf16 %v305, %v304
        %v319 = vpack.c.bf16 %v307, %v306
        %v320 = vpack.c.bf16 %v309, %v308
        %v321 = vpack.c.bf16 %v311, %v310
        %v322 = vpack.c.bf16 %v313, %v312
        %v323 = vld [vmem:[#allocation2] sm:$0xff]
        %v324 = vld [vmem:[#allocation2 + $0x8] sm:$0xff]
        %v325 = vld [vmem:[#allocation2 + $0x10] sm:$0xff]
        %v326 = vld [vmem:[#allocation2 + $0x18] sm:$0xff]
        %v327 = vld [vmem:[#allocation2 + $0x20] sm:$0xff]
        %v328 = vld [vmem:[#allocation2 + $0x28] sm:$0xff]
        %v329 = vld [vmem:[#allocation2 + $0x30] sm:$0xff]
        %v330 = vld [vmem:[#allocation2 + $0x38] sm:$0xff]
        %v331 = vld [vmem:[#allocation2 + $0x40] sm:$0xff]
        %v332 = vld [vmem:[#allocation2 + $0x48] sm:$0xff]
        %v333 = vld [vmem:[#allocation2 + $0x50] sm:$0xff]
        %v334 = vld [vmem:[#allocation2 + $0x58] sm:$0xff]
        %v335 = vld [vmem:[#allocation2 + $0x60] sm:$0xff]
        %v336 = vld [vmem:[#allocation2 + $0x68] sm:$0xff]
        %v337 = vld [vmem:[#allocation2 + $0x70] sm:$0xff]
        %v338 = vld [vmem:[#allocation2 + $0x78] sm:$0xff]
        %v339 = vld [vmem:[#allocation2 + $0x80] sm:$0xff]
        %v340 = vld [vmem:[#allocation2 + $0x88] sm:$0xff]
        %v341 = vld [vmem:[#allocation2 + $0x90] sm:$0xff]
        %v342 = vld [vmem:[#allocation2 + $0x98] sm:$0xff]
        %v343 = vld [vmem:[#allocation2 + $0xa0] sm:$0xff]
        %v344 = vld [vmem:[#allocation2 + $0xa8] sm:$0xff]
        %v345 = vld [vmem:[#allocation2 + $0xb0] sm:$0xff]
        %v346 = vld [vmem:[#allocation2 + $0xb8] sm:$0xff]
        %v347 = vld [vmem:[#allocation2 + $0xc0] sm:$0xff]
        %v348 = vld [vmem:[#allocation2 + $0xc8] sm:$0xff]
        %v349 = vld [vmem:[#allocation2 + $0xd0] sm:$0xff]
        %v350 = vld [vmem:[#allocation2 + $0xd8] sm:$0xff]
        %v351 = vld [vmem:[#allocation2 + $0xe0] sm:$0xff]
        %v352 = vld [vmem:[#allocation2 + $0xe8] sm:$0xff]
        %v353 = vld [vmem:[#allocation2 + $0xf0] sm:$0xff]
        %v354 = vld [vmem:[#allocation2 + $0xf8] sm:$0xff]
        %v355 = vld [vmem:[#allocation2 + $0x100] sm:$0xff]
        %v356 = vld [vmem:[#allocation2 + $0x108] sm:$0xff]
        %v357 = vld [vmem:[#allocation2 + $0x110] sm:$0xff]
        %v358 = vld [vmem:[#allocation2 + $0x118] sm:$0xff]
        %v359 = vld [vmem:[#allocation2 + $0x120] sm:$0xff]
        %v360 = vld [vmem:[#allocation2 + $0x128] sm:$0xff]
        %v361 = vld [vmem:[#allocation2 + $0x130] sm:$0xff]
        %v362 = vld [vmem:[#allocation2 + $0x138] sm:$0xff]
        %v363 = vld [vmem:[#allocation2 + $0x140] sm:$0xff]
        %v364 = vld [vmem:[#allocation2 + $0x148] sm:$0xff]
        %v365 = vld [vmem:[#allocation2 + $0x150] sm:$0xff]
        %v366 = vld [vmem:[#allocation2 + $0x158] sm:$0xff]
        %v367 = vld [vmem:[#allocation2 + $0x160] sm:$0xff]
        %v368 = vld [vmem:[#allocation2 + $0x168] sm:$0xff]
        %v369 = vld [vmem:[#allocation2 + $0x170] sm:$0xff]
        %v370 = vld [vmem:[#allocation2 + $0x178] sm:$0xff]
        %v371 = vld [vmem:[#allocation2 + $0x180] sm:$0xff]
        %v372 = vld [vmem:[#allocation2 + $0x188] sm:$0xff]
        %v373 = vld [vmem:[#allocation2 + $0x190] sm:$0xff]
        %v374 = vld [vmem:[#allocation2 + $0x198] sm:$0xff]
        %v375 = vld [vmem:[#allocation2 + $0x1a0] sm:$0xff]
        %v376 = vld [vmem:[#allocation2 + $0x1a8] sm:$0xff]
        %v377 = vld [vmem:[#allocation2 + $0x1b0] sm:$0xff]
        %v378 = vld [vmem:[#allocation2 + $0x1b8] sm:$0xff]
        %v379 = vld [vmem:[#allocation2 + $0x1c0] sm:$0xff]
        %v380 = vld [vmem:[#allocation2 + $0x1c8] sm:$0xff]
        %v381 = vld [vmem:[#allocation2 + $0x1d0] sm:$0xff]
        %v382 = vld [vmem:[#allocation2 + $0x1d8] sm:$0xff]
        %v383 = vld [vmem:[#allocation2 + $0x1e0] sm:$0xff]
        %v384 = vld [vmem:[#allocation2 + $0x1e8] sm:$0xff]
        %v385 = vld [vmem:[#allocation2 + $0x1f0] sm:$0xff]
        %v386 = vld [vmem:[#allocation2 + $0x1f8] sm:$0xff]
        %v387 = vld [vmem:[#allocation2 + $0x200] sm:$0xff]
        %v388 = vld [vmem:[#allocation2 + $0x208] sm:$0xff]
        %v389 = vld [vmem:[#allocation2 + $0x210] sm:$0xff]
        %v390 = vld [vmem:[#allocation2 + $0x218] sm:$0xff]
        %v391 = vld [vmem:[#allocation2 + $0x220] sm:$0xff]
        %v392 = vld [vmem:[#allocation2 + $0x228] sm:$0xff]
        %v393 = vld [vmem:[#allocation2 + $0x230] sm:$0xff]
        %v394 = vld [vmem:[#allocation2 + $0x238] sm:$0xff]
        %v395 = vld [vmem:[#allocation3] sm:$0xff]
        %v396 = vld [vmem:[#allocation3 + $0x8] sm:$0xff]
        %v397 = vld [vmem:[#allocation3 + $0x10] sm:$0xff]
        %v398 = vld [vmem:[#allocation3 + $0x18] sm:$0xff]
        %v399 = vld [vmem:[#allocation3 + $0x20] sm:$0xff]
        %v400 = vld [vmem:[#allocation3 + $0x28] sm:$0xff]
        %v401 = vld [vmem:[#allocation3 + $0x30] sm:$0xff]
        %v402 = vld [vmem:[#allocation3 + $0x38] sm:$0xff]
        %v403 = vld [vmem:[#allocation3 + $0x40] sm:$0xff]
        %v404 = vld [vmem:[#allocation3 + $0x48] sm:$0xff]
        %v405 = vld [vmem:[#allocation3 + $0x50] sm:$0xff]
        %v406 = vld [vmem:[#allocation3 + $0x58] sm:$0xff]
        %v407 = vld [vmem:[#allocation3 + $0x60] sm:$0xff]
        %v408 = vld [vmem:[#allocation3 + $0x68] sm:$0xff]
        %v409 = vld [vmem:[#allocation3 + $0x70] sm:$0xff]
        %v410 = vld [vmem:[#allocation3 + $0x78] sm:$0xff]
        %v427 = vunpack.c.l.b16 %v395
        %v428 = vunpack.c.h.b16 %v395
        %v429 = vunpack.c.l.b16 %v396
        %v430 = vunpack.c.h.b16 %v396
        %v431 = vunpack.c.l.b16 %v397
        %v432 = vunpack.c.h.b16 %v397
        %v433 = vunpack.c.l.b16 %v398
        %v434 = vunpack.c.h.b16 %v398
        %v435 = vunpack.c.l.b16 %v399
        %v436 = vunpack.c.h.b16 %v399
        %v437 = vunpack.c.l.b16 %v400
        %v438 = vunpack.c.h.b16 %v400
        %v439 = vunpack.c.l.b16 %v401
        %v440 = vunpack.c.h.b16 %v401
        %v441 = vunpack.c.l.b16 %v402
        %v442 = vunpack.c.h.b16 %v402
        %v443 = vunpack.c.l.b16 %v403
        %v444 = vunpack.c.h.b16 %v403
        %v445 = vunpack.c.l.b16 %v404
        %v446 = vunpack.c.h.b16 %v404
        %v447 = vunpack.c.l.b16 %v405
        %v448 = vunpack.c.h.b16 %v405
        %v449 = vunpack.c.l.b16 %v406
        %v450 = vunpack.c.h.b16 %v406
        %v451 = vunpack.c.l.b16 %v407
        %v452 = vunpack.c.h.b16 %v407
        %v453 = vunpack.c.l.b16 %v408
        %v454 = vunpack.c.h.b16 %v408
        %v455 = vunpack.c.l.b16 %v409
        %v456 = vunpack.c.h.b16 %v409
        %v457 = vunpack.c.l.b16 %v410
        %v458 = vunpack.c.h.b16 %v410
        %v459 = vpack.c.b16 %v431, %v427
        %v460 = vpack.c.b16 %v432, %v428
        %v461 = vpack.c.b16 %v433, %v429
        %v462 = vpack.c.b16 %v434, %v430
        %v463 = vpack.c.b16 %v439, %v435
        %v464 = vpack.c.b16 %v440, %v436
        %v465 = vpack.c.b16 %v441, %v437
        %v466 = vpack.c.b16 %v442, %v438
        %v467 = vpack.c.b16 %v447, %v443
        %v468 = vpack.c.b16 %v448, %v444
        %v469 = vpack.c.b16 %v449, %v445
        %v470 = vpack.c.b16 %v450, %v446
        %v471 = vpack.c.b16 %v455, %v451
        %v472 = vpack.c.b16 %v456, %v452
        %v473 = vpack.c.b16 %v457, %v453
        %v474 = vpack.c.b16 %v458, %v454
        %vm491 = vcmask 523264
        %v493 = vsel %vm491, %v314, 0
        %v496 = vsel %vm491, %v315, 0
        %v499 = vsel %vm491, %v316, 0
        %v502 = vsel %vm491, %v317, 0
        %v505 = vsel %vm491, %v318, 0
        %v508 = vsel %vm491, %v319, 0
        %v511 = vsel %vm491, %v320, 0
        %v514 = vsel %vm491, %v321, 0
        %v517 = vsel %vm491, %v322, 0
        %519 = vmatprep.subr.bf16.mxu0 %v460
        %520 = vmatpush1.bf16.msra.mxu0 %v459
        %521 = vmatprep.subr.bf16.mxu0 %v464
        %522 = vmatpush1.bf16.msra.mxu0 %v463
        %523 = vmatprep.subr.bf16.mxu0 %v468
        %524 = vmatpush1.bf16.msra.mxu0 %v467
        %525 = vmatprep.subr.bf16.mxu0 %v472
        %526 = vmatpush1.bf16.msra.mxu0 %v471
        %527 = vmatprep.subr.bf16.mxu0 0
        %528 = vmatpush1.bf16.msra.mxu0 0
        %529 = vmatprep.subr.bf16.mxu0 0
        %530 = vmatpush1.bf16.msra.mxu0 0
        %531 = vmatprep.subr.bf16.mxu0 0
        %532 = vmatpush1.bf16.msra.mxu0 0
        %533 = vmatprep.subr.bf16.mxu0 0
        %534 = vmatpush1.bf16.msra.mxu0 0
        %535 = vmatprep.subr.bf16.mxu0 0
        %536 = vmatpush1.bf16.msra.mxu0 0
        %537 = vmatprep.subr.bf16.mxu0 0
        %538 = vmatpush1.bf16.msra.mxu0 0
        %539 = vmatprep.subr.bf16.mxu0 0
        %540 = vmatpush1.bf16.msra.mxu0 0
        %541 = vmatprep.subr.bf16.mxu0 0
        %542 = vmatpush1.bf16.msra.mxu0 0
        %543 = vmatprep.subr.bf16.mxu0 0
        %544 = vmatpush1.bf16.msra.mxu0 0
        %545 = vmatprep.subr.bf16.mxu0 0
        %546 = vmatpush1.bf16.msra.mxu0 0
        %547 = vmatprep.subr.bf16.mxu0 0
        %548 = vmatpush1.bf16.msra.mxu0 0
        %549 = vmatprep.subr.bf16.mxu0 0
        %550 = vmatpush1.bf16.msra.mxu0 0
        %551 = vmatprep.mubr.bf16.mxu0 0
        %552 = vmatmul.mubr.bf16.gmra.mrb[0].mxu0 %v493
        %v553 = vpop.f32.mrb[0].mxu0
        %v554 = vadd.f32 0.0, %v553
        %v555 = vpop.f32.mrb[0].mxu0
        %v556 = vadd.f32 0.0, %v555
        %v557 = vpop.f32.mrb[0].mxu0
        %v558 = vadd.f32 0.0, %v557
        %v559 = vpop.f32.mrb[0].mxu0
        %v560 = vadd.f32 0.0, %v559
        %561 = vmatprep.mubr.bf16.mxu0 0
        %562 = vmatmul.mubr.bf16.gmra.mrb[0].mxu0 %v496
        %v563 = vpop.f32.mrb[0].mxu0
        %v564 = vadd.f32 0.0, %v563
        %v565 = vpop.f32.mrb[0].mxu0
        %v566 = vadd.f32 0.0, %v565
        %v567 = vpop.f32.mrb[0].mxu0
        %v568 = vadd.f32 0.0, %v567
        %v569 = vpop.f32.mrb[0].mxu0
        %v570 = vadd.f32 0.0, %v569
        %571 = vmatprep.mubr.bf16.mxu0 0
        %572 = vmatmul.mubr.bf16.gmra.mrb[0].mxu0 %v499
        %v573 = vpop.f32.mrb[0].mxu0
        %v574 = vadd.f32 0.0, %v573
        %v575 = vpop.f32.mrb[0].mxu0
        %v576 = vadd.f32 0.0, %v575
        %v577 = vpop.f32.mrb[0].mxu0
        %v578 = vadd.f32 0.0, %v577
        %v579 = vpop.f32.mrb[0].mxu0
        %v580 = vadd.f32 0.0, %v579
        %581 = vmatprep.mubr.bf16.mxu0 0
        %582 = vmatmul.mubr.bf16.gmra.mrb[0].mxu0 %v502
        %v583 = vpop.f32.mrb[0].mxu0
        %v584 = vadd.f32 0.0, %v583
        %v585 = vpop.f32.mrb[0].mxu0
        %v586 = vadd.f32 0.0, %v585
        %v587 = vpop.f32.mrb[0].mxu0
        %v588 = vadd.f32 0.0, %v587
        %v589 = vpop.f32.mrb[0].mxu0
        %v590 = vadd.f32 0.0, %v589
        %591 = vmatprep.mubr.bf16.mxu0 0
        %592 = vmatmul.mubr.bf16.gmra.mrb[0].mxu0 %v505
        %v593 = vpop.f32.mrb[0].mxu0
        %v594 = vadd.f32 0.0, %v593
        %v595 = vpop.f32.mrb[0].mxu0
        %v596 = vadd.f32 0.0, %v595
        %v597 = vpop.f32.mrb[0].mxu0
        %v598 = vadd.f32 0.0, %v597
        %v599 = vpop.f32.mrb[0].mxu0
        %v600 = vadd.f32 0.0, %v599
        %601 = vmatprep.mubr.bf16.mxu0 0
        %602 = vmatmul.mubr.bf16.gmra.mrb[0].mxu0 %v508
        %v603 = vpop.f32.mrb[0].mxu0
        %v604 = vadd.f32 0.0, %v603
        %v605 = vpop.f32.mrb[0].mxu0
        %v606 = vadd.f32 0.0, %v605
        %v607 = vpop.f32.mrb[0].mxu0
        %v608 = vadd.f32 0.0, %v607
        %v609 = vpop.f32.mrb[0].mxu0
        %v610 = vadd.f32 0.0, %v609
        %611 = vmatprep.mubr.bf16.mxu0 0
        %612 = vmatmul.mubr.bf16.gmra.mrb[0].mxu0 %v511
        %v613 = vpop.f32.mrb[0].mxu0
        %v614 = vadd.f32 0.0, %v613
        %v615 = vpop.f32.mrb[0].mxu0
        %v616 = vadd.f32 0.0, %v615
        %v617 = vpop.f32.mrb[0].mxu0
        %v618 = vadd.f32 0.0, %v617
        %v619 = vpop.f32.mrb[0].mxu0
        %v620 = vadd.f32 0.0, %v619
        %621 = vmatprep.mubr.bf16.mxu0 0
        %622 = vmatmul.mubr.bf16.gmra.mrb[0].mxu0 %v514
        %v623 = vpop.f32.mrb[0].mxu0
        %v624 = vadd.f32 0.0, %v623
        %v625 = vpop.f32.mrb[0].mxu0
        %v626 = vadd.f32 0.0, %v625
        %v627 = vpop.f32.mrb[0].mxu0
        %v628 = vadd.f32 0.0, %v627
        %v629 = vpop.f32.mrb[0].mxu0
        %v630 = vadd.f32 0.0, %v629
        %631 = vmatprep.mubr.bf16.mxu0 0
        %632 = vmatmul.mubr.bf16.gmra.mrb[0].mxu0 %v517
        %v633 = vpop.f32.mrb[0].mxu0
        %v634 = vadd.f32 0.0, %v633
        %v635 = vpop.f32.mrb[0].mxu0
        %v636 = vadd.f32 0.0, %v635
        %v637 = vpop.f32.mrb[0].mxu0
        %v638 = vadd.f32 0.0, %v637
        %v639 = vpop.f32.mrb[0].mxu0
        %v640 = vadd.f32 0.0, %v639
        %641 = vdwg.mxu0
        %642 = vmatprep.subr.bf16.mxu0 %v462
        %643 = vmatpush1.bf16.msra.mxu0 %v461
        %644 = vmatprep.subr.bf16.mxu0 %v466
        %645 = vmatpush1.bf16.msra.mxu0 %v465
        %646 = vmatprep.subr.bf16.mxu0 %v470
        %647 = vmatpush1.bf16.msra.mxu0 %v469
        %648 = vmatprep.subr.bf16.mxu0 %v474
        %649 = vmatpush1.bf16.msra.mxu0 %v473
        %650 = vmatprep.subr.bf16.mxu0 0
        %651 = vmatpush1.bf16.msra.mxu0 0
        %652 = vmatprep.subr.bf16.mxu0 0
        %653 = vmatpush1.bf16.msra.mxu0 0
        %654 = vmatprep.subr.bf16.mxu0 0
        %655 = vmatpush1.bf16.msra.mxu0 0
        %656 = vmatprep.subr.bf16.mxu0 0
        %657 = vmatpush1.bf16.msra.mxu0 0
        %658 = vmatprep.subr.bf16.mxu0 0
        %659 = vmatpush1.bf16.msra.mxu0 0
        %660 = vmatprep.subr.bf16.mxu0 0
        %661 = vmatpush1.bf16.msra.mxu0 0
        %662 = vmatprep.subr.bf16.mxu0 0
        %663 = vmatpush1.bf16.msra.mxu0 0
        %664 = vmatprep.subr.bf16.mxu0 0
        %665 = vmatpush1.bf16.msra.mxu0 0
        %666 = vmatprep.subr.bf16.mxu0 0
        %667 = vmatpush1.bf16.msra.mxu0 0
        %668 = vmatprep.subr.bf16.mxu0 0
        %669 = vmatpush1.bf16.msra.mxu0 0
        %670 = vmatprep.subr.bf16.mxu0 0
        %671 = vmatpush1.bf16.msra.mxu0 0
        %672 = vmatprep.subr.bf16.mxu0 0
        %673 = vmatpush1.bf16.msra.mxu0 0
        %674 = vmatprep.mubr.bf16.mxu0 0
        %675 = vmatmul.mubr.bf16.gmra.mrb[0].mxu0 %v493
        %v676 = vpop.f32.mrb[0].mxu0
        %v677 = vadd.f32 0.0, %v676
        %v678 = vpop.f32.mrb[0].mxu0
        %v679 = vadd.f32 0.0, %v678
        %v680 = vpop.f32.mrb[0].mxu0
        %v681 = vadd.f32 0.0, %v680
        %v682 = vpop.f32.mrb[0].mxu0
        %v683 = vadd.f32 0.0, %v682
        %684 = vmatprep.mubr.bf16.mxu0 0
        %685 = vmatmul.mubr.bf16.gmra.mrb[0].mxu0 %v496
        %v686 = vpop.f32.mrb[0].mxu0
        %v687 = vadd.f32 0.0, %v686
        %v688 = vpop.f32.mrb[0].mxu0
        %v689 = vadd.f32 0.0, %v688
        %v690 = vpop.f32.mrb[0].mxu0
        %v691 = vadd.f32 0.0, %v690
        %v692 = vpop.f32.mrb[0].mxu0
        %v693 = vadd.f32 0.0, %v692
        %694 = vmatprep.mubr.bf16.mxu0 0
        %695 = vmatmul.mubr.bf16.gmra.mrb[0].mxu0 %v499
        %v696 = vpop.f32.mrb[0].mxu0
        %v697 = vadd.f32 0.0, %v696
        %v698 = vpop.f32.mrb[0].mxu0
        %v699 = vadd.f32 0.0, %v698
        %v700 = vpop.f32.mrb[0].mxu0
        %v701 = vadd.f32 0.0, %v700
        %v702 = vpop.f32.mrb[0].mxu0
        %v703 = vadd.f32 0.0, %v702
        %704 = vmatprep.mubr.bf16.mxu0 0
        %705 = vmatmul.mubr.bf16.gmra.mrb[0].mxu0 %v502
        %v706 = vpop.f32.mrb[0].mxu0
        %v707 = vadd.f32 0.0, %v706
        %v708 = vpop.f32.mrb[0].mxu0
        %v709 = vadd.f32 0.0, %v708
        %v710 = vpop.f32.mrb[0].mxu0
        %v711 = vadd.f32 0.0, %v710
        %v712 = vpop.f32.mrb[0].mxu0
        %v713 = vadd.f32 0.0, %v712
        %714 = vmatprep.mubr.bf16.mxu0 0
        %715 = vmatmul.mubr.bf16.gmra.mrb[0].mxu0 %v505
        %v716 = vpop.f32.mrb[0].mxu0
        %v717 = vadd.f32 0.0, %v716
        %v718 = vpop.f32.mrb[0].mxu0
        %v719 = vadd.f32 0.0, %v718
        %v720 = vpop.f32.mrb[0].mxu0
        %v721 = vadd.f32 0.0, %v720
        %v722 = vpop.f32.mrb[0].mxu0
        %v723 = vadd.f32 0.0, %v722
        %724 = vmatprep.mubr.bf16.mxu0 0
        %725 = vmatmul.mubr.bf16.gmra.mrb[0].mxu0 %v508
        %v726 = vpop.f32.mrb[0].mxu0
        %v727 = vadd.f32 0.0, %v726
        %v728 = vpop.f32.mrb[0].mxu0
        %v729 = vadd.f32 0.0, %v728
        %v730 = vpop.f32.mrb[0].mxu0
        %v731 = vadd.f32 0.0, %v730
        %v732 = vpop.f32.mrb[0].mxu0
        %v733 = vadd.f32 0.0, %v732
        %734 = vmatprep.mubr.bf16.mxu0 0
        %735 = vmatmul.mubr.bf16.gmra.mrb[0].mxu0 %v511
        %v736 = vpop.f32.mrb[0].mxu0
        %v737 = vadd.f32 0.0, %v736
        %v738 = vpop.f32.mrb[0].mxu0
        %v739 = vadd.f32 0.0, %v738
        %v740 = vpop.f32.mrb[0].mxu0
        %v741 = vadd.f32 0.0, %v740
        %v742 = vpop.f32.mrb[0].mxu0
        %v743 = vadd.f32 0.0, %v742
        %744 = vmatprep.mubr.bf16.mxu0 0
        %745 = vmatmul.mubr.bf16.gmra.mrb[0].mxu0 %v514
        %v746 = vpop.f32.mrb[0].mxu0
        %v747 = vadd.f32 0.0, %v746
        %v748 = vpop.f32.mrb[0].mxu0
        %v749 = vadd.f32 0.0, %v748
        %v750 = vpop.f32.mrb[0].mxu0
        %v751 = vadd.f32 0.0, %v750
        %v752 = vpop.f32.mrb[0].mxu0
        %v753 = vadd.f32 0.0, %v752
        %754 = vmatprep.mubr.bf16.mxu0 0
        %755 = vmatmul.mubr.bf16.gmra.mrb[0].mxu0 %v517
        %v756 = vpop.f32.mrb[0].mxu0
        %v757 = vadd.f32 0.0, %v756
        %v758 = vpop.f32.mrb[0].mxu0
        %v759 = vadd.f32 0.0, %v758
        %v760 = vpop.f32.mrb[0].mxu0
        %v761 = vadd.f32 0.0, %v760
        %v762 = vpop.f32.mrb[0].mxu0
        %v763 = vadd.f32 0.0, %v762
        %764 = vdwg.mxu0
        %v765 = vadd.f32 %v323, %v554
        %v766 = vadd.f32 %v324, %v556
        %v767 = vadd.f32 %v325, %v677
        %v768 = vadd.f32 %v326, %v679
        %v769 = vadd.f32 %v327, %v558
        %v770 = vadd.f32 %v328, %v560
        %v771 = vadd.f32 %v329, %v681
        %v772 = vadd.f32 %v330, %v683
        %v773 = vadd.f32 %v331, %v564
        %v774 = vadd.f32 %v332, %v566
        %v775 = vadd.f32 %v333, %v687
        %v776 = vadd.f32 %v334, %v689
        %v777 = vadd.f32 %v335, %v568
        %v778 = vadd.f32 %v336, %v570
        %v779 = vadd.f32 %v337, %v691
        %v780 = vadd.f32 %v338, %v693
        %v781 = vadd.f32 %v339, %v574
        %v782 = vadd.f32 %v340, %v576
        %v783 = vadd.f32 %v341, %v697
        %v784 = vadd.f32 %v342, %v699
        %v785 = vadd.f32 %v343, %v578
        %v786 = vadd.f32 %v344, %v580
        %v787 = vadd.f32 %v345, %v701
        %v788 = vadd.f32 %v346, %v703
        %v789 = vadd.f32 %v347, %v584
        %v790 = vadd.f32 %v348, %v586
        %v791 = vadd.f32 %v349, %v707
        %v792 = vadd.f32 %v350, %v709
        %v793 = vadd.f32 %v351, %v588
        %v794 = vadd.f32 %v352, %v590
        %v795 = vadd.f32 %v353, %v711
        %v796 = vadd.f32 %v354, %v713
        %v797 = vadd.f32 %v355, %v594
        %v798 = vadd.f32 %v356, %v596
        %v799 = vadd.f32 %v357, %v717
        %v800 = vadd.f32 %v358, %v719
        %v801 = vadd.f32 %v359, %v598
        %v802 = vadd.f32 %v360, %v600
        %v803 = vadd.f32 %v361, %v721
        %v804 = vadd.f32 %v362, %v723
        %v805 = vadd.f32 %v363, %v604
        %v806 = vadd.f32 %v364, %v606
        %v807 = vadd.f32 %v365, %v727
        %v808 = vadd.f32 %v366, %v729
        %v809 = vadd.f32 %v367, %v608
        %v810 = vadd.f32 %v368, %v610
        %v811 = vadd.f32 %v369, %v731
        %v812 = vadd.f32 %v370, %v733
        %v813 = vadd.f32 %v371, %v614
        %v814 = vadd.f32 %v372, %v616
        %v815 = vadd.f32 %v373, %v737
        %v816 = vadd.f32 %v374, %v739
        %v817 = vadd.f32 %v375, %v618
        %v818 = vadd.f32 %v376, %v620
        %v819 = vadd.f32 %v377, %v741
        %v820 = vadd.f32 %v378, %v743
        %v821 = vadd.f32 %v379, %v624
        %v822 = vadd.f32 %v380, %v626
        %v823 = vadd.f32 %v381, %v747
        %v824 = vadd.f32 %v382, %v749
        %v825 = vadd.f32 %v383, %v628
        %v826 = vadd.f32 %v384, %v630
        %v827 = vadd.f32 %v385, %v751
        %v828 = vadd.f32 %v386, %v753
        %v829 = vadd.f32 %v387, %v634
        %v830 = vadd.f32 %v388, %v636
        %v831 = vadd.f32 %v389, %v757
        %v832 = vadd.f32 %v390, %v759
        %v833 = vadd.f32 %v391, %v638
        %v834 = vadd.f32 %v392, %v640
        %v835 = vadd.f32 %v393, %v761
        %v836 = vadd.f32 %v394, %v763
        %837 = vst [vmem:[#allocation2] sm:$0xff] %v765
        %838 = vst [vmem:[#allocation2 + $0x8] sm:$0xff] %v766
        %839 = vst [vmem:[#allocation2 + $0x10] sm:$0xff] %v767
        %840 = vst [vmem:[#allocation2 + $0x18] sm:$0xff] %v768
        %841 = vst [vmem:[#allocation2 + $0x20] sm:$0xff] %v769
        %842 = vst [vmem:[#allocation2 + $0x28] sm:$0xff] %v770
        %843 = vst [vmem:[#allocation2 + $0x30] sm:$0xff] %v771
        %844 = vst [vmem:[#allocation2 + $0x38] sm:$0xff] %v772
        %845 = vst [vmem:[#allocation2 + $0x40] sm:$0xff] %v773
        %846 = vst [vmem:[#allocation2 + $0x48] sm:$0xff] %v774
        %847 = vst [vmem:[#allocation2 + $0x50] sm:$0xff] %v775
        %848 = vst [vmem:[#allocation2 + $0x58] sm:$0xff] %v776
        %849 = vst [vmem:[#allocation2 + $0x60] sm:$0xff] %v777
        %850 = vst [vmem:[#allocation2 + $0x68] sm:$0xff] %v778
        %851 = vst [vmem:[#allocation2 + $0x70] sm:$0xff] %v779
        %852 = vst [vmem:[#allocation2 + $0x78] sm:$0xff] %v780
        %853 = vst [vmem:[#allocation2 + $0x80] sm:$0xff] %v781
        %854 = vst [vmem:[#allocation2 + $0x88] sm:$0xff] %v782
        %855 = vst [vmem:[#allocation2 + $0x90] sm:$0xff] %v783
        %856 = vst [vmem:[#allocation2 + $0x98] sm:$0xff] %v784
        %857 = vst [vmem:[#allocation2 + $0xa0] sm:$0xff] %v785
        %858 = vst [vmem:[#allocation2 + $0xa8] sm:$0xff] %v786
        %859 = vst [vmem:[#allocation2 + $0xb0] sm:$0xff] %v787
        %860 = vst [vmem:[#allocation2 + $0xb8] sm:$0xff] %v788
        %861 = vst [vmem:[#allocation2 + $0xc0] sm:$0xff] %v789
        %862 = vst [vmem:[#allocation2 + $0xc8] sm:$0xff] %v790
        %863 = vst [vmem:[#allocation2 + $0xd0] sm:$0xff] %v791
        %864 = vst [vmem:[#allocation2 + $0xd8] sm:$0xff] %v792
        %865 = vst [vmem:[#allocation2 + $0xe0] sm:$0xff] %v793
        %866 = vst [vmem:[#allocation2 + $0xe8] sm:$0xff] %v794
        %867 = vst [vmem:[#allocation2 + $0xf0] sm:$0xff] %v795
        %868 = vst [vmem:[#allocation2 + $0xf8] sm:$0xff] %v796
        %869 = vst [vmem:[#allocation2 + $0x100] sm:$0xff] %v797
        %870 = vst [vmem:[#allocation2 + $0x108] sm:$0xff] %v798
        %871 = vst [vmem:[#allocation2 + $0x110] sm:$0xff] %v799
        %872 = vst [vmem:[#allocation2 + $0x118] sm:$0xff] %v800
        %873 = vst [vmem:[#allocation2 + $0x120] sm:$0xff] %v801
        %874 = vst [vmem:[#allocation2 + $0x128] sm:$0xff] %v802
        %875 = vst [vmem:[#allocation2 + $0x130] sm:$0xff] %v803
        %876 = vst [vmem:[#allocation2 + $0x138] sm:$0xff] %v804
        %877 = vst [vmem:[#allocation2 + $0x140] sm:$0xff] %v805
        %878 = vst [vmem:[#allocation2 + $0x148] sm:$0xff] %v806
        %879 = vst [vmem:[#allocation2 + $0x150] sm:$0xff] %v807
        %880 = vst [vmem:[#allocation2 + $0x158] sm:$0xff] %v808
        %881 = vst [vmem:[#allocation2 + $0x160] sm:$0xff] %v809
        %882 = vst [vmem:[#allocation2 + $0x168] sm:$0xff] %v810
        %883 = vst [vmem:[#allocation2 + $0x170] sm:$0xff] %v811
        %884 = vst [vmem:[#allocation2 + $0x178] sm:$0xff] %v812
        %885 = vst [vmem:[#allocation2 + $0x180] sm:$0xff] %v813
        %886 = vst [vmem:[#allocation2 + $0x188] sm:$0xff] %v814
        %887 = vst [vmem:[#allocation2 + $0x190] sm:$0xff] %v815
        %888 = vst [vmem:[#allocation2 + $0x198] sm:$0xff] %v816
        %889 = vst [vmem:[#allocation2 + $0x1a0] sm:$0xff] %v817
        %890 = vst [vmem:[#allocation2 + $0x1a8] sm:$0xff] %v818
        %891 = vst [vmem:[#allocation2 + $0x1b0] sm:$0xff] %v819
        %892 = vst [vmem:[#allocation2 + $0x1b8] sm:$0xff] %v820
        %893 = vst [vmem:[#allocation2 + $0x1c0] sm:$0xff] %v821
        %894 = vst [vmem:[#allocation2 + $0x1c8] sm:$0xff] %v822
        %895 = vst [vmem:[#allocation2 + $0x1d0] sm:$0xff] %v823
        %896 = vst [vmem:[#allocation2 + $0x1d8] sm:$0xff] %v824
        %897 = vst [vmem:[#allocation2 + $0x1e0] sm:$0xff] %v825
        %898 = vst [vmem:[#allocation2 + $0x1e8] sm:$0xff] %v826
        %899 = vst [vmem:[#allocation2 + $0x1f0] sm:$0xff] %v827
        %900 = vst [vmem:[#allocation2 + $0x1f8] sm:$0xff] %v828
        %901 = vst [vmem:[#allocation2 + $0x200] sm:$0xff] %v829
        %902 = vst [vmem:[#allocation2 + $0x208] sm:$0xff] %v830
        %903 = vst [vmem:[#allocation2 + $0x210] sm:$0xff] %v831
        %904 = vst [vmem:[#allocation2 + $0x218] sm:$0xff] %v832
        %905 = vst [vmem:[#allocation2 + $0x220] sm:$0xff] %v833
        %906 = vst [vmem:[#allocation2 + $0x228] sm:$0xff] %v834
        %907 = vst [vmem:[#allocation2 + $0x230] sm:$0xff] %v835
        %908 = vst [vmem:[#allocation2 + $0x238] sm:$0xff] %v836
        %s909 = sadd.s32 %s222, 1
        %s910 = scalar_lea.vmem %s0, %s909
        %v911 = vld [vmem:[%s910] sm:$0xff]
        %v912 = vld [vmem:[%s910 + $0x8] sm:$0xff]
        %v913 = vld [vmem:[%s910 + $0x10] sm:$0xff]
        %v914 = vld [vmem:[%s910 + $0x18] sm:$0xff]
        %v915 = vld [vmem:[%s910 + $0x20] sm:$0xff]
        %v916 = vld [vmem:[%s910 + $0x28] sm:$0xff]
        %v917 = vld [vmem:[%s910 + $0x30] sm:$0xff]
        %v918 = vld [vmem:[%s910 + $0x38] sm:$0xff]
        %v919 = vld [vmem:[%s910 + $0x40] sm:$0xff]
        %v920 = vld [vmem:[%s910 + $0x48] sm:$0xff]
        %v921 = vld [vmem:[%s910 + $0x50] sm:$0xff]
        %v922 = vld [vmem:[%s910 + $0x58] sm:$0xff]
        %v923 = vld [vmem:[%s910 + $0x60] sm:$0xff]
        %v924 = vld [vmem:[%s910 + $0x68] sm:$0xff]
        %v925 = vld [vmem:[%s910 + $0x70] sm:$0xff]
        %v926 = vld [vmem:[%s910 + $0x78] sm:$0xff]
        %v927 = vld [vmem:[%s910 + $0x80] sm:$0xff]
        %v928 = vld [vmem:[%s910 + $0x88] sm:$0xff]
        %v929 = vpack.c.bf16 %v912, %v911
        %v930 = vpack.c.bf16 %v914, %v913
        %v931 = vpack.c.bf16 %v916, %v915
        %v932 = vpack.c.bf16 %v918, %v917
        %v933 = vpack.c.bf16 %v920, %v919
        %v934 = vpack.c.bf16 %v922, %v921
        %v935 = vpack.c.bf16 %v924, %v923
        %v936 = vpack.c.bf16 %v926, %v925
        %v937 = vpack.c.bf16 %v928, %v927
        %v938 = vld [vmem:[#allocation2] sm:$0xff]
        %v939 = vld [vmem:[#allocation2 + $0x8] sm:$0xff]
        %v940 = vld [vmem:[#allocation2 + $0x10] sm:$0xff]
        %v941 = vld [vmem:[#allocation2 + $0x18] sm:$0xff]
        %v942 = vld [vmem:[#allocation2 + $0x20] sm:$0xff]
        %v943 = vld [vmem:[#allocation2 + $0x28] sm:$0xff]
        %v944 = vld [vmem:[#allocation2 + $0x30] sm:$0xff]
        %v945 = vld [vmem:[#allocation2 + $0x38] sm:$0xff]
        %v946 = vld [vmem:[#allocation2 + $0x40] sm:$0xff]
        %v947 = vld [vmem:[#allocation2 + $0x48] sm:$0xff]
        %v948 = vld [vmem:[#allocation2 + $0x50] sm:$0xff]
        %v949 = vld [vmem:[#allocation2 + $0x58] sm:$0xff]
        %v950 = vld [vmem:[#allocation2 + $0x60] sm:$0xff]
        %v951 = vld [vmem:[#allocation2 + $0x68] sm:$0xff]
        %v952 = vld [vmem:[#allocation2 + $0x70] sm:$0xff]
        %v953 = vld [vmem:[#allocation2 + $0x78] sm:$0xff]
        %v954 = vld [vmem:[#allocation2 + $0x80] sm:$0xff]
        %v955 = vld [vmem:[#allocation2 + $0x88] sm:$0xff]
        %v956 = vld [vmem:[#allocation2 + $0x90] sm:$0xff]
        %v957 = vld [vmem:[#allocation2 + $0x98] sm:$0xff]
        %v958 = vld [vmem:[#allocation2 + $0xa0] sm:$0xff]
        %v959 = vld [vmem:[#allocation2 + $0xa8] sm:$0xff]
        %v960 = vld [vmem:[#allocation2 + $0xb0] sm:$0xff]
        %v961 = vld [vmem:[#allocation2 + $0xb8] sm:$0xff]
        %v962 = vld [vmem:[#allocation2 + $0xc0] sm:$0xff]
        %v963 = vld [vmem:[#allocation2 + $0xc8] sm:$0xff]
        %v964 = vld [vmem:[#allocation2 + $0xd0] sm:$0xff]
        %v965 = vld [vmem:[#allocation2 + $0xd8] sm:$0xff]
        %v966 = vld [vmem:[#allocation2 + $0xe0] sm:$0xff]
        %v967 = vld [vmem:[#allocation2 + $0xe8] sm:$0xff]
        %v968 = vld [vmem:[#allocation2 + $0xf0] sm:$0xff]
        %v969 = vld [vmem:[#allocation2 + $0xf8] sm:$0xff]
        %v970 = vld [vmem:[#allocation2 + $0x100] sm:$0xff]
        %v971 = vld [vmem:[#allocation2 + $0x108] sm:$0xff]
        %v972 = vld [vmem:[#allocation2 + $0x110] sm:$0xff]
        %v973 = vld [vmem:[#allocation2 + $0x118] sm:$0xff]
        %v974 = vld [vmem:[#allocation2 + $0x120] sm:$0xff]
        %v975 = vld [vmem:[#allocation2 + $0x128] sm:$0xff]
        %v976 = vld [vmem:[#allocation2 + $0x130] sm:$0xff]
        %v977 = vld [vmem:[#allocation2 + $0x138] sm:$0xff]
        %v978 = vld [vmem:[#allocation2 + $0x140] sm:$0xff]
        %v979 = vld [vmem:[#allocation2 + $0x148] sm:$0xff]
        %v980 = vld [vmem:[#allocation2 + $0x150] sm:$0xff]
        %v981 = vld [vmem:[#allocation2 + $0x158] sm:$0xff]
        %v982 = vld [vmem:[#allocation2 + $0x160] sm:$0xff]
        %v983 = vld [vmem:[#allocation2 + $0x168] sm:$0xff]
        %v984 = vld [vmem:[#allocation2 + $0x170] sm:$0xff]
        %v985 = vld [vmem:[#allocation2 + $0x178] sm:$0xff]
        %v986 = vld [vmem:[#allocation2 + $0x180] sm:$0xff]
        %v987 = vld [vmem:[#allocation2 + $0x188] sm:$0xff]
        %v988 = vld [vmem:[#allocation2 + $0x190] sm:$0xff]
        %v989 = vld [vmem:[#allocation2 + $0x198] sm:$0xff]
        %v990 = vld [vmem:[#allocation2 + $0x1a0] sm:$0xff]
        %v991 = vld [vmem:[#allocation2 + $0x1a8] sm:$0xff]
        %v992 = vld [vmem:[#allocation2 + $0x1b0] sm:$0xff]
        %v993 = vld [vmem:[#allocation2 + $0x1b8] sm:$0xff]
        %v994 = vld [vmem:[#allocation2 + $0x1c0] sm:$0xff]
        %v995 = vld [vmem:[#allocation2 + $0x1c8] sm:$0xff]
        %v996 = vld [vmem:[#allocation2 + $0x1d0] sm:$0xff]
        %v997 = vld [vmem:[#allocation2 + $0x1d8] sm:$0xff]
        %v998 = vld [vmem:[#allocation2 + $0x1e0] sm:$0xff]
        %v999 = vld [vmem:[#allocation2 + $0x1e8] sm:$0xff]
        %v1000 = vld [vmem:[#allocation2 + $0x1f0] sm:$0xff]
        %v1001 = vld [vmem:[#allocation2 + $0x1f8] sm:$0xff]
        %v1002 = vld [vmem:[#allocation2 + $0x200] sm:$0xff]
        %v1003 = vld [vmem:[#allocation2 + $0x208] sm:$0xff]
        %v1004 = vld [vmem:[#allocation2 + $0x210] sm:$0xff]
        %v1005 = vld [vmem:[#allocation2 + $0x218] sm:$0xff]
        %v1006 = vld [vmem:[#allocation2 + $0x220] sm:$0xff]
        %v1007 = vld [vmem:[#allocation2 + $0x228] sm:$0xff]
        %v1008 = vld [vmem:[#allocation2 + $0x230] sm:$0xff]
        %v1009 = vld [vmem:[#allocation2 + $0x238] sm:$0xff]
        %s1010 = scalar_lea.vmem [#allocation3], 128
        %v1011 = vld [vmem:[%s1010] sm:$0xff]
        %v1012 = vld [vmem:[%s1010 + $0x8] sm:$0xff]
        %v1013 = vld [vmem:[%s1010 + $0x10] sm:$0xff]
        %v1014 = vld [vmem:[%s1010 + $0x18] sm:$0xff]
        %v1015 = vld [vmem:[%s1010 + $0x20] sm:$0xff]
        %v1016 = vld [vmem:[%s1010 + $0x28] sm:$0xff]
        %v1017 = vld [vmem:[%s1010 + $0x30] sm:$0xff]
        %v1018 = vld [vmem:[%s1010 + $0x38] sm:$0xff]
        %v1019 = vld [vmem:[%s1010 + $0x40] sm:$0xff]
        %v1020 = vld [vmem:[%s1010 + $0x48] sm:$0xff]
        %v1021 = vld [vmem:[%s1010 + $0x50] sm:$0xff]
        %v1022 = vld [vmem:[%s1010 + $0x58] sm:$0xff]
        %v1023 = vld [vmem:[%s1010 + $0x60] sm:$0xff]
        %v1024 = vld [vmem:[%s1010 + $0x68] sm:$0xff]
        %v1025 = vld [vmem:[%s1010 + $0x70] sm:$0xff]
        %v1026 = vld [vmem:[%s1010 + $0x78] sm:$0xff]
        %v1043 = vunpack.c.l.b16 %v1011
        %v1044 = vunpack.c.h.b16 %v1011
        %v1045 = vunpack.c.l.b16 %v1012
        %v1046 = vunpack.c.h.b16 %v1012
        %v1047 = vunpack.c.l.b16 %v1013
        %v1048 = vunpack.c.h.b16 %v1013
        %v1049 = vunpack.c.l.b16 %v1014
        %v1050 = vunpack.c.h.b16 %v1014
        %v1051 = vunpack.c.l.b16 %v1015
        %v1052 = vunpack.c.h.b16 %v1015
        %v1053 = vunpack.c.l.b16 %v1016
        %v1054 = vunpack.c.h.b16 %v1016
        %v1055 = vunpack.c.l.b16 %v1017
        %v1056 = vunpack.c.h.b16 %v1017
        %v1057 = vunpack.c.l.b16 %v1018
        %v1058 = vunpack.c.h.b16 %v1018
        %v1059 = vunpack.c.l.b16 %v1019
        %v1060 = vunpack.c.h.b16 %v1019
        %v1061 = vunpack.c.l.b16 %v1020
        %v1062 = vunpack.c.h.b16 %v1020
        %v1063 = vunpack.c.l.b16 %v1021
        %v1064 = vunpack.c.h.b16 %v1021
        %v1065 = vunpack.c.l.b16 %v1022
        %v1066 = vunpack.c.h.b16 %v1022
        %v1067 = vunpack.c.l.b16 %v1023
        %v1068 = vunpack.c.h.b16 %v1023
        %v1069 = vunpack.c.l.b16 %v1024
        %v1070 = vunpack.c.h.b16 %v1024
        %v1071 = vunpack.c.l.b16 %v1025
        %v1072 = vunpack.c.h.b16 %v1025
        %v1073 = vunpack.c.l.b16 %v1026
        %v1074 = vunpack.c.h.b16 %v1026
        %v1075 = vpack.c.b16 %v1047, %v1043
        %v1076 = vpack.c.b16 %v1048, %v1044
        %v1077 = vpack.c.b16 %v1049, %v1045
        %v1078 = vpack.c.b16 %v1050, %v1046
        %v1079 = vpack.c.b16 %v1055, %v1051
        %v1080 = vpack.c.b16 %v1056, %v1052
        %v1081 = vpack.c.b16 %v1057, %v1053
        %v1082 = vpack.c.b16 %v1058, %v1054
        %v1083 = vpack.c.b16 %v1063, %v1059
        %v1084 = vpack.c.b16 %v1064, %v1060
        %v1085 = vpack.c.b16 %v1065, %v1061
        %v1086 = vpack.c.b16 %v1066, %v1062
        %v1087 = vpack.c.b16 %v1071, %v1067
        %v1088 = vpack.c.b16 %v1072, %v1068
        %v1089 = vpack.c.b16 %v1073, %v1069
        %v1090 = vpack.c.b16 %v1074, %v1070
        %v1108 = vsel %vm491, %v929, 0
        %v1111 = vsel %vm491, %v930, 0
        %v1114 = vsel %vm491, %v931, 0
        %v1117 = vsel %vm491, %v932, 0
        %v1120 = vsel %vm491, %v933, 0
        %v1123 = vsel %vm491, %v934, 0
        %v1126 = vsel %vm491, %v935, 0
        %v1129 = vsel %vm491, %v936, 0
        %v1132 = vsel %vm491, %v937, 0
        %1134 = vmatprep.subr.bf16.mxu0 %v1076
        %1135 = vmatpush1.bf16.msra.mxu0 %v1075
        %1136 = vmatprep.subr.bf16.mxu0 %v1080
        %1137 = vmatpush1.bf16.msra.mxu0 %v1079
        %1138 = vmatprep.subr.bf16.mxu0 %v1084
        %1139 = vmatpush1.bf16.msra.mxu0 %v1083
        %1140 = vmatprep.subr.bf16.mxu0 %v1088
        %1141 = vmatpush1.bf16.msra.mxu0 %v1087
        %1142 = vmatprep.subr.bf16.mxu0 0
        %1143 = vmatpush1.bf16.msra.mxu0 0
        %1144 = vmatprep.subr.bf16.mxu0 0
        %1145 = vmatpush1.bf16.msra.mxu0 0
        %1146 = vmatprep.subr.bf16.mxu0 0
        %1147 = vmatpush1.bf16.msra.mxu0 0
        %1148 = vmatprep.subr.bf16.mxu0 0
        %1149 = vmatpush1.bf16.msra.mxu0 0
        %1150 = vmatprep.subr.bf16.mxu0 0
        %1151 = vmatpush1.bf16.msra.mxu0 0
        %1152 = vmatprep.subr.bf16.mxu0 0
        %1153 = vmatpush1.bf16.msra.mxu0 0
        %1154 = vmatprep.subr.bf16.mxu0 0
        %1155 = vmatpush1.bf16.msra.mxu0 0
        %1156 = vmatprep.subr.bf16.mxu0 0
        %1157 = vmatpush1.bf16.msra.mxu0 0
        %1158 = vmatprep.subr.bf16.mxu0 0
        %1159 = vmatpush1.bf16.msra.mxu0 0
        %1160 = vmatprep.subr.bf16.mxu0 0
        %1161 = vmatpush1.bf16.msra.mxu0 0
        %1162 = vmatprep.subr.bf16.mxu0 0
        %1163 = vmatpush1.bf16.msra.mxu0 0
        %1164 = vmatprep.subr.bf16.mxu0 0
        %1165 = vmatpush1.bf16.msra.mxu0 0
        %1166 = vmatprep.mubr.bf16.mxu0 0
        %1167 = vmatmul.mubr.bf16.gmra.mrb[0].mxu0 %v1108
        %v1168 = vpop.f32.mrb[0].mxu0
        %v1169 = vadd.f32 0.0, %v1168
        %v1170 = vpop.f32.mrb[0].mxu0
        %v1171 = vadd.f32 0.0, %v1170
        %v1172 = vpop.f32.mrb[0].mxu0
        %v1173 = vadd.f32 0.0, %v1172
        %v1174 = vpop.f32.mrb[0].mxu0
        %v1175 = vadd.f32 0.0, %v1174
        %1176 = vmatprep.mubr.bf16.mxu0 0
        %1177 = vmatmul.mubr.bf16.gmra.mrb[0].mxu0 %v1111
        %v1178 = vpop.f32.mrb[0].mxu0
        %v1179 = vadd.f32 0.0, %v1178
        %v1180 = vpop.f32.mrb[0].mxu0
        %v1181 = vadd.f32 0.0, %v1180
        %v1182 = vpop.f32.mrb[0].mxu0
        %v1183 = vadd.f32 0.0, %v1182
        %v1184 = vpop.f32.mrb[0].mxu0
        %v1185 = vadd.f32 0.0, %v1184
        %1186 = vmatprep.mubr.bf16.mxu0 0
        %1187 = vmatmul.mubr.bf16.gmra.mrb[0].mxu0 %v1114
        %v1188 = vpop.f32.mrb[0].mxu0
        %v1189 = vadd.f32 0.0, %v1188
        %v1190 = vpop.f32.mrb[0].mxu0
        %v1191 = vadd.f32 0.0, %v1190
        %v1192 = vpop.f32.mrb[0].mxu0
        %v1193 = vadd.f32 0.0, %v1192
        %v1194 = vpop.f32.mrb[0].mxu0
        %v1195 = vadd.f32 0.0, %v1194
        %1196 = vmatprep.mubr.bf16.mxu0 0
        %1197 = vmatmul.mubr.bf16.gmra.mrb[0].mxu0 %v1117
        %v1198 = vpop.f32.mrb[0].mxu0
        %v1199 = vadd.f32 0.0, %v1198
        %v1200 = vpop.f32.mrb[0].mxu0
        %v1201 = vadd.f32 0.0, %v1200
        %v1202 = vpop.f32.mrb[0].mxu0
        %v1203 = vadd.f32 0.0, %v1202
        %v1204 = vpop.f32.mrb[0].mxu0
        %v1205 = vadd.f32 0.0, %v1204
        %1206 = vmatprep.mubr.bf16.mxu0 0
        %1207 = vmatmul.mubr.bf16.gmra.mrb[0].mxu0 %v1120
        %v1208 = vpop.f32.mrb[0].mxu0
        %v1209 = vadd.f32 0.0, %v1208
        %v1210 = vpop.f32.mrb[0].mxu0
        %v1211 = vadd.f32 0.0, %v1210
        %v1212 = vpop.f32.mrb[0].mxu0
        %v1213 = vadd.f32 0.0, %v1212
        %v1214 = vpop.f32.mrb[0].mxu0
        %v1215 = vadd.f32 0.0, %v1214
        %1216 = vmatprep.mubr.bf16.mxu0 0
        %1217 = vmatmul.mubr.bf16.gmra.mrb[0].mxu0 %v1123
        %v1218 = vpop.f32.mrb[0].mxu0
        %v1219 = vadd.f32 0.0, %v1218
        %v1220 = vpop.f32.mrb[0].mxu0
        %v1221 = vadd.f32 0.0, %v1220
        %v1222 = vpop.f32.mrb[0].mxu0
        %v1223 = vadd.f32 0.0, %v1222
        %v1224 = vpop.f32.mrb[0].mxu0
        %v1225 = vadd.f32 0.0, %v1224
        %1226 = vmatprep.mubr.bf16.mxu0 0
        %1227 = vmatmul.mubr.bf16.gmra.mrb[0].mxu0 %v1126
        %v1228 = vpop.f32.mrb[0].mxu0
        %v1229 = vadd.f32 0.0, %v1228
        %v1230 = vpop.f32.mrb[0].mxu0
        %v1231 = vadd.f32 0.0, %v1230
        %v1232 = vpop.f32.mrb[0].mxu0
        %v1233 = vadd.f32 0.0, %v1232
        %v1234 = vpop.f32.mrb[0].mxu0
        %v1235 = vadd.f32 0.0, %v1234
        %1236 = vmatprep.mubr.bf16.mxu0 0
        %1237 = vmatmul.mubr.bf16.gmra.mrb[0].mxu0 %v1129
        %v1238 = vpop.f32.mrb[0].mxu0
        %v1239 = vadd.f32 0.0, %v1238
        %v1240 = vpop.f32.mrb[0].mxu0
        %v1241 = vadd.f32 0.0, %v1240
        %v1242 = vpop.f32.mrb[0].mxu0
        %v1243 = vadd.f32 0.0, %v1242
        %v1244 = vpop.f32.mrb[0].mxu0
        %v1245 = vadd.f32 0.0, %v1244
        %1246 = vmatprep.mubr.bf16.mxu0 0
        %1247 = vmatmul.mubr.bf16.gmra.mrb[0].mxu0 %v1132
        %v1248 = vpop.f32.mrb[0].mxu0
        %v1249 = vadd.f32 0.0, %v1248
        %v1250 = vpop.f32.mrb[0].mxu0
        %v1251 = vadd.f32 0.0, %v1250
        %v1252 = vpop.f32.mrb[0].mxu0
        %v1253 = vadd.f32 0.0, %v1252
        %v1254 = vpop.f32.mrb[0].mxu0
        %v1255 = vadd.f32 0.0, %v1254
        %1256 = vdwg.mxu0
        %1257 = vmatprep.subr.bf16.mxu0 %v1078
        %1258 = vmatpush1.bf16.msra.mxu0 %v1077
        %1259 = vmatprep.subr.bf16.mxu0 %v1082
        %1260 = vmatpush1.bf16.msra.mxu0 %v1081
        %1261 = vmatprep.subr.bf16.mxu0 %v1086
        %1262 = vmatpush1.bf16.msra.mxu0 %v1085
        %1263 = vmatprep.subr.bf16.mxu0 %v1090
        %1264 = vmatpush1.bf16.msra.mxu0 %v1089
        %1265 = vmatprep.subr.bf16.mxu0 0
        %1266 = vmatpush1.bf16.msra.mxu0 0
        %1267 = vmatprep.subr.bf16.mxu0 0
        %1268 = vmatpush1.bf16.msra.mxu0 0
        %1269 = vmatprep.subr.bf16.mxu0 0
        %1270 = vmatpush1.bf16.msra.mxu0 0
        %1271 = vmatprep.subr.bf16.mxu0 0
        %1272 = vmatpush1.bf16.msra.mxu0 0
        %1273 = vmatprep.subr.bf16.mxu0 0
        %1274 = vmatpush1.bf16.msra.mxu0 0
        %1275 = vmatprep.subr.bf16.mxu0 0
        %1276 = vmatpush1.bf16.msra.mxu0 0
        %1277 = vmatprep.subr.bf16.mxu0 0
        %1278 = vmatpush1.bf16.msra.mxu0 0
        %1279 = vmatprep.subr.bf16.mxu0 0
        %1280 = vmatpush1.bf16.msra.mxu0 0
        %1281 = vmatprep.subr.bf16.mxu0 0
        %1282 = vmatpush1.bf16.msra.mxu0 0
        %1283 = vmatprep.subr.bf16.mxu0 0
        %1284 = vmatpush1.bf16.msra.mxu0 0
        %1285 = vmatprep.subr.bf16.mxu0 0
        %1286 = vmatpush1.bf16.msra.mxu0 0
        %1287 = vmatprep.subr.bf16.mxu0 0
        %1288 = vmatpush1.bf16.msra.mxu0 0
        %1289 = vmatprep.mubr.bf16.mxu0 0
        %1290 = vmatmul.mubr.bf16.gmra.mrb[0].mxu0 %v1108
        %v1291 = vpop.f32.mrb[0].mxu0
        %v1292 = vadd.f32 0.0, %v1291
        %v1293 = vpop.f32.mrb[0].mxu0
        %v1294 = vadd.f32 0.0, %v1293
        %v1295 = vpop.f32.mrb[0].mxu0
        %v1296 = vadd.f32 0.0, %v1295
        %v1297 = vpop.f32.mrb[0].mxu0
        %v1298 = vadd.f32 0.0, %v1297
        %1299 = vmatprep.mubr.bf16.mxu0 0
        %1300 = vmatmul.mubr.bf16.gmra.mrb[0].mxu0 %v1111
        %v1301 = vpop.f32.mrb[0].mxu0
        %v1302 = vadd.f32 0.0, %v1301
        %v1303 = vpop.f32.mrb[0].mxu0
        %v1304 = vadd.f32 0.0, %v1303
        %v1305 = vpop.f32.mrb[0].mxu0
        %v1306 = vadd.f32 0.0, %v1305
        %v1307 = vpop.f32.mrb[0].mxu0
        %v1308 = vadd.f32 0.0, %v1307
        %1309 = vmatprep.mubr.bf16.mxu0 0
        %1310 = vmatmul.mubr.bf16.gmra.mrb[0].mxu0 %v1114
        %v1311 = vpop.f32.mrb[0].mxu0
        %v1312 = vadd.f32 0.0, %v1311
        %v1313 = vpop.f32.mrb[0].mxu0
        %v1314 = vadd.f32 0.0, %v1313
        %v1315 = vpop.f32.mrb[0].mxu0
        %v1316 = vadd.f32 0.0, %v1315
        %v1317 = vpop.f32.mrb[0].mxu0
        %v1318 = vadd.f32 0.0, %v1317
        %1319 = vmatprep.mubr.bf16.mxu0 0
        %1320 = vmatmul.mubr.bf16.gmra.mrb[0].mxu0 %v1117
        %v1321 = vpop.f32.mrb[0].mxu0
        %v1322 = vadd.f32 0.0, %v1321
        %v1323 = vpop.f32.mrb[0].mxu0
        %v1324 = vadd.f32 0.0, %v1323
        %v1325 = vpop.f32.mrb[0].mxu0
        %v1326 = vadd.f32 0.0, %v1325
        %v1327 = vpop.f32.mrb[0].mxu0
        %v1328 = vadd.f32 0.0, %v1327
        %1329 = vmatprep.mubr.bf16.mxu0 0
        %1330 = vmatmul.mubr.bf16.gmra.mrb[0].mxu0 %v1120
        %v1331 = vpop.f32.mrb[0].mxu0
        %v1332 = vadd.f32 0.0, %v1331
        %v1333 = vpop.f32.mrb[0].mxu0
        %v1334 = vadd.f32 0.0, %v1333
        %v1335 = vpop.f32.mrb[0].mxu0
        %v1336 = vadd.f32 0.0, %v1335
        %v1337 = vpop.f32.mrb[0].mxu0
        %v1338 = vadd.f32 0.0, %v1337
        %1339 = vmatprep.mubr.bf16.mxu0 0
        %1340 = vmatmul.mubr.bf16.gmra.mrb[0].mxu0 %v1123
        %v1341 = vpop.f32.mrb[0].mxu0
        %v1342 = vadd.f32 0.0, %v1341
        %v1343 = vpop.f32.mrb[0].mxu0
        %v1344 = vadd.f32 0.0, %v1343
        %v1345 = vpop.f32.mrb[0].mxu0
        %v1346 = vadd.f32 0.0, %v1345
        %v1347 = vpop.f32.mrb[0].mxu0
        %v1348 = vadd.f32 0.0, %v1347
        %1349 = vmatprep.mubr.bf16.mxu0 0
        %1350 = vmatmul.mubr.bf16.gmra.mrb[0].mxu0 %v1126
        %v1351 = vpop.f32.mrb[0].mxu0
        %v1352 = vadd.f32 0.0, %v1351
        %v1353 = vpop.f32.mrb[0].mxu0
        %v1354 = vadd.f32 0.0, %v1353
        %v1355 = vpop.f32.mrb[0].mxu0
        %v1356 = vadd.f32 0.0, %v1355
        %v1357 = vpop.f32.mrb[0].mxu0
        %v1358 = vadd.f32 0.0, %v1357
        %1359 = vmatprep.mubr.bf16.mxu0 0
        %1360 = vmatmul.mubr.bf16.gmra.mrb[0].mxu0 %v1129
        %v1361 = vpop.f32.mrb[0].mxu0
        %v1362 = vadd.f32 0.0, %v1361
        %v1363 = vpop.f32.mrb[0].mxu0
        %v1364 = vadd.f32 0.0, %v1363
        %v1365 = vpop.f32.mrb[0].mxu0
        %v1366 = vadd.f32 0.0, %v1365
        %v1367 = vpop.f32.mrb[0].mxu0
        %v1368 = vadd.f32 0.0, %v1367
        %1369 = vmatprep.mubr.bf16.mxu0 0
        %1370 = vmatmul.mubr.bf16.gmra.mrb[0].mxu0 %v1132
        %v1371 = vpop.f32.mrb[0].mxu0
        %v1372 = vadd.f32 0.0, %v1371
        %v1373 = vpop.f32.mrb[0].mxu0
        %v1374 = vadd.f32 0.0, %v1373
        %v1375 = vpop.f32.mrb[0].mxu0
        %v1376 = vadd.f32 0.0, %v1375
        %v1377 = vpop.f32.mrb[0].mxu0
        %v1378 = vadd.f32 0.0, %v1377
        %1379 = vdwg.mxu0
        %v1380 = vadd.f32 %v938, %v1169
        %v1381 = vadd.f32 %v939, %v1171
        %v1382 = vadd.f32 %v940, %v1292
        %v1383 = vadd.f32 %v941, %v1294
        %v1384 = vadd.f32 %v942, %v1173
        %v1385 = vadd.f32 %v943, %v1175
        %v1386 = vadd.f32 %v944, %v1296
        %v1387 = vadd.f32 %v945, %v1298
        %v1388 = vadd.f32 %v946, %v1179
        %v1389 = vadd.f32 %v947, %v1181
        %v1390 = vadd.f32 %v948, %v1302
        %v1391 = vadd.f32 %v949, %v1304
        %v1392 = vadd.f32 %v950, %v1183
        %v1393 = vadd.f32 %v951, %v1185
        %v1394 = vadd.f32 %v952, %v1306
        %v1395 = vadd.f32 %v953, %v1308
        %v1396 = vadd.f32 %v954, %v1189
        %v1397 = vadd.f32 %v955, %v1191
        %v1398 = vadd.f32 %v956, %v1312
        %v1399 = vadd.f32 %v957, %v1314
        %v1400 = vadd.f32 %v958, %v1193
        %v1401 = vadd.f32 %v959, %v1195
        %v1402 = vadd.f32 %v960, %v1316
        %v1403 = vadd.f32 %v961, %v1318
        %v1404 = vadd.f32 %v962, %v1199
        %v1405 = vadd.f32 %v963, %v1201
        %v1406 = vadd.f32 %v964, %v1322
        %v1407 = vadd.f32 %v965, %v1324
        %v1408 = vadd.f32 %v966, %v1203
        %v1409 = vadd.f32 %v967, %v1205
        %v1410 = vadd.f32 %v968, %v1326
        %v1411 = vadd.f32 %v969, %v1328
        %v1412 = vadd.f32 %v970, %v1209
        %v1413 = vadd.f32 %v971, %v1211
        %v1414 = vadd.f32 %v972, %v1332
        %v1415 = vadd.f32 %v973, %v1334
        %v1416 = vadd.f32 %v974, %v1213
        %v1417 = vadd.f32 %v975, %v1215
        %v1418 = vadd.f32 %v976, %v1336
        %v1419 = vadd.f32 %v977, %v1338
        %v1420 = vadd.f32 %v978, %v1219
        %v1421 = vadd.f32 %v979, %v1221
        %v1422 = vadd.f32 %v980, %v1342
        %v1423 = vadd.f32 %v981, %v1344
        %v1424 = vadd.f32 %v982, %v1223
        %v1425 = vadd.f32 %v983, %v1225
        %v1426 = vadd.f32 %v984, %v1346
        %v1427 = vadd.f32 %v985, %v1348
        %v1428 = vadd.f32 %v986, %v1229
        %v1429 = vadd.f32 %v987, %v1231
        %v1430 = vadd.f32 %v988, %v1352
        %v1431 = vadd.f32 %v989, %v1354
        %v1432 = vadd.f32 %v990, %v1233
        %v1433 = vadd.f32 %v991, %v1235
        %v1434 = vadd.f32 %v992, %v1356
        %v1435 = vadd.f32 %v993, %v1358
        %v1436 = vadd.f32 %v994, %v1239
        %v1437 = vadd.f32 %v995, %v1241
        %v1438 = vadd.f32 %v996, %v1362
        %v1439 = vadd.f32 %v997, %v1364
        %v1440 = vadd.f32 %v998, %v1243
        %v1441 = vadd.f32 %v999, %v1245
        %v1442 = vadd.f32 %v1000, %v1366
        %v1443 = vadd.f32 %v1001, %v1368
        %v1444 = vadd.f32 %v1002, %v1249
        %v1445 = vadd.f32 %v1003, %v1251
        %v1446 = vadd.f32 %v1004, %v1372
        %v1447 = vadd.f32 %v1005, %v1374
        %v1448 = vadd.f32 %v1006, %v1253
        %v1449 = vadd.f32 %v1007, %v1255
        %v1450 = vadd.f32 %v1008, %v1376
        %v1451 = vadd.f32 %v1009, %v1378
        %1452 = vst [vmem:[#allocation2] sm:$0xff] %v1380
        %1453 = vst [vmem:[#allocation2 + $0x8] sm:$0xff] %v1381
        %1454 = vst [vmem:[#allocation2 + $0x10] sm:$0xff] %v1382
        %1455 = vst [vmem:[#allocation2 + $0x18] sm:$0xff] %v1383
        %1456 = vst [vmem:[#allocation2 + $0x20] sm:$0xff] %v1384
        %1457 = vst [vmem:[#allocation2 + $0x28] sm:$0xff] %v1385
        %1458 = vst [vmem:[#allocation2 + $0x30] sm:$0xff] %v1386
        %1459 = vst [vmem:[#allocation2 + $0x38] sm:$0xff] %v1387
        %1460 = vst [vmem:[#allocation2 + $0x40] sm:$0xff] %v1388
        %1461 = vst [vmem:[#allocation2 + $0x48] sm:$0xff] %v1389
        %1462 = vst [vmem:[#allocation2 + $0x50] sm:$0xff] %v1390
        %1463 = vst [vmem:[#allocation2 + $0x58] sm:$0xff] %v1391
        %1464 = vst [vmem:[#allocation2 + $0x60] sm:$0xff] %v1392
        %1465 = vst [vmem:[#allocation2 + $0x68] sm:$0xff] %v1393
        %1466 = vst [vmem:[#allocation2 + $0x70] sm:$0xff] %v1394
        %1467 = vst [vmem:[#allocation2 + $0x78] sm:$0xff] %v1395
        %1468 = vst [vmem:[#allocation2 + $0x80] sm:$0xff] %v1396
        %1469 = vst [vmem:[#allocation2 + $0x88] sm:$0xff] %v1397
        %1470 = vst [vmem:[#allocation2 + $0x90] sm:$0xff] %v1398
        %1471 = vst [vmem:[#allocation2 + $0x98] sm:$0xff] %v1399
        %1472 = vst [vmem:[#allocation2 + $0xa0] sm:$0xff] %v1400
        %1473 = vst [vmem:[#allocation2 + $0xa8] sm:$0xff] %v1401
        %1474 = vst [vmem:[#allocation2 + $0xb0] sm:$0xff] %v1402
        %1475 = vst [vmem:[#allocation2 + $0xb8] sm:$0xff] %v1403
        %1476 = vst [vmem:[#allocation2 + $0xc0] sm:$0xff] %v1404
        %1477 = vst [vmem:[#allocation2 + $0xc8] sm:$0xff] %v1405
        %1478 = vst [vmem:[#allocation2 + $0xd0] sm:$0xff] %v1406
        %1479 = vst [vmem:[#allocation2 + $0xd8] sm:$0xff] %v1407
        %1480 = vst [vmem:[#allocation2 + $0xe0] sm:$0xff] %v1408
        %1481 = vst [vmem:[#allocation2 + $0xe8] sm:$0xff] %v1409
        %1482 = vst [vmem:[#allocation2 + $0xf0] sm:$0xff] %v1410
        %1483 = vst [vmem:[#allocation2 + $0xf8] sm:$0xff] %v1411
        %1484 = vst [vmem:[#allocation2 + $0x100] sm:$0xff] %v1412
        %1485 = vst [vmem:[#allocation2 + $0x108] sm:$0xff] %v1413
        %1486 = vst [vmem:[#allocation2 + $0x110] sm:$0xff] %v1414
        %1487 = vst [vmem:[#allocation2 + $0x118] sm:$0xff] %v1415
        %1488 = vst [vmem:[#allocation2 + $0x120] sm:$0xff] %v1416
        %1489 = vst [vmem:[#allocation2 + $0x128] sm:$0xff] %v1417
        %1490 = vst [vmem:[#allocation2 + $0x130] sm:$0xff] %v1418
        %1491 = vst [vmem:[#allocation2 + $0x138] sm:$0xff] %v1419
        %1492 = vst [vmem:[#allocation2 + $0x140] sm:$0xff] %v1420
        %1493 = vst [vmem:[#allocation2 + $0x148] sm:$0xff] %v1421
        %1494 = vst [vmem:[#allocation2 + $0x150] sm:$0xff] %v1422
        %1495 = vst [vmem:[#allocation2 + $0x158] sm:$0xff] %v1423
        %1496 = vst [vmem:[#allocation2 + $0x160] sm:$0xff] %v1424
        %1497 = vst [vmem:[#allocation2 + $0x168] sm:$0xff] %v1425
        %1498 = vst [vmem:[#allocation2 + $0x170] sm:$0xff] %v1426
        %1499 = vst [vmem:[#allocation2 + $0x178] sm:$0xff] %v1427
        %1500 = vst [vmem:[#allocation2 + $0x180] sm:$0xff] %v1428
        %1501 = vst [vmem:[#allocation2 + $0x188] sm:$0xff] %v1429
        %1502 = vst [vmem:[#allocation2 + $0x190] sm:$0xff] %v1430
        %1503 = vst [vmem:[#allocation2 + $0x198] sm:$0xff] %v1431
        %1504 = vst [vmem:[#allocation2 + $0x1a0] sm:$0xff] %v1432
        %1505 = vst [vmem:[#allocation2 + $0x1a8] sm:$0xff] %v1433
        %1506 = vst [vmem:[#allocation2 + $0x1b0] sm:$0xff] %v1434
        %1507 = vst [vmem:[#allocation2 + $0x1b8] sm:$0xff] %v1435
        %1508 = vst [vmem:[#allocation2 + $0x1c0] sm:$0xff] %v1436
        %1509 = vst [vmem:[#allocation2 + $0x1c8] sm:$0xff] %v1437
        %1510 = vst [vmem:[#allocation2 + $0x1d0] sm:$0xff] %v1438
        %1511 = vst [vmem:[#allocation2 + $0x1d8] sm:$0xff] %v1439
        %1512 = vst [vmem:[#allocation2 + $0x1e0] sm:$0xff] %v1440
        %1513 = vst [vmem:[#allocation2 + $0x1e8] sm:$0xff] %v1441
        %1514 = vst [vmem:[#allocation2 + $0x1f0] sm:$0xff] %v1442
        %1515 = vst [vmem:[#allocation2 + $0x1f8] sm:$0xff] %v1443
        %1516 = vst [vmem:[#allocation2 + $0x200] sm:$0xff] %v1444
        %1517 = vst [vmem:[#allocation2 + $0x208] sm:$0xff] %v1445
        %1518 = vst [vmem:[#allocation2 + $0x210] sm:$0xff] %v1446
        %1519 = vst [vmem:[#allocation2 + $0x218] sm:$0xff] %v1447
        %1520 = vst [vmem:[#allocation2 + $0x220] sm:$0xff] %v1448
        %1521 = vst [vmem:[#allocation2 + $0x228] sm:$0xff] %v1449
        %1522 = vst [vmem:[#allocation2 + $0x230] sm:$0xff] %v1450
        %1523 = vst [vmem:[#allocation2 + $0x238] sm:$0xff] %v1451
        %s1524 = sadd.s32 %s222, 2
        %s1525 = scalar_lea.vmem %s0, %s1524
        %v1526 = vld [vmem:[%s1525] sm:$0xff]
        %v1527 = vld [vmem:[%s1525 + $0x8] sm:$0xff]
        %v1528 = vld [vmem:[%s1525 + $0x10] sm:$0xff]
        %v1529 = vld [vmem:[%s1525 + $0x18] sm:$0xff]
        %v1530 = vld [vmem:[%s1525 + $0x20] sm:$0xff]
        %v1531 = vld [vmem:[%s1525 + $0x28] sm:$0xff]
        %v1532 = vld [vmem:[%s1525 + $0x30] sm:$0xff]
        %v1533 = vld [vmem:[%s1525 + $0x38] sm:$0xff]
        %v1534 = vld [vmem:[%s1525 + $0x40] sm:$0xff]
        %v1535 = vld [vmem:[%s1525 + $0x48] sm:$0xff]
        %v1536 = vld [vmem:[%s1525 + $0x50] sm:$0xff]
        %v1537 = vld [vmem:[%s1525 + $0x58] sm:$0xff]
        %v1538 = vld [vmem:[%s1525 + $0x60] sm:$0xff]
        %v1539 = vld [vmem:[%s1525 + $0x68] sm:$0xff]
        %v1540 = vld [vmem:[%s1525 + $0x70] sm:$0xff]
        %v1541 = vld [vmem:[%s1525 + $0x78] sm:$0xff]
        %v1542 = vld [vmem:[%s1525 + $0x80] sm:$0xff]
        %v1543 = vld [vmem:[%s1525 + $0x88] sm:$0xff]
        %v1544 = vpack.c.bf16 %v1527, %v1526
        %v1545 = vpack.c.bf16 %v1529, %v1528
        %v1546 = vpack.c.bf16 %v1531, %v1530
        %v1547 = vpack.c.bf16 %v1533, %v1532
        %v1548 = vpack.c.bf16 %v1535, %v1534
        %v1549 = vpack.c.bf16 %v1537, %v1536
        %v1550 = vpack.c.bf16 %v1539, %v1538
        %v1551 = vpack.c.bf16 %v1541, %v1540
        %v1552 = vpack.c.bf16 %v1543, %v1542
        %v1553 = vld [vmem:[#allocation2] sm:$0xff]
        %v1554 = vld [vmem:[#allocation2 + $0x8] sm:$0xff]
        %v1555 = vld [vmem:[#allocation2 + $0x10] sm:$0xff]
        %v1556 = vld [vmem:[#allocation2 + $0x18] sm:$0xff]
        %v1557 = vld [vmem:[#allocation2 + $0x20] sm:$0xff]
        %v1558 = vld [vmem:[#allocation2 + $0x28] sm:$0xff]
        %v1559 = vld [vmem:[#allocation2 + $0x30] sm:$0xff]
        %v1560 = vld [vmem:[#allocation2 + $0x38] sm:$0xff]
        %v1561 = vld [vmem:[#allocation2 + $0x40] sm:$0xff]
        %v1562 = vld [vmem:[#allocation2 + $0x48] sm:$0xff]
        %v1563 = vld [vmem:[#allocation2 + $0x50] sm:$0xff]
        %v1564 = vld [vmem:[#allocation2 + $0x58] sm:$0xff]
        %v1565 = vld [vmem:[#allocation2 + $0x60] sm:$0xff]
        %v1566 = vld [vmem:[#allocation2 + $0x68] sm:$0xff]
        %v1567 = vld [vmem:[#allocation2 + $0x70] sm:$0xff]
        %v1568 = vld [vmem:[#allocation2 + $0x78] sm:$0xff]
        %v1569 = vld [vmem:[#allocation2 + $0x80] sm:$0xff]
        %v1570 = vld [vmem:[#allocation2 + $0x88] sm:$0xff]
        %v1571 = vld [vmem:[#allocation2 + $0x90] sm:$0xff]
        %v1572 = vld [vmem:[#allocation2 + $0x98] sm:$0xff]
        %v1573 = vld [vmem:[#allocation2 + $0xa0] sm:$0xff]
        %v1574 = vld [vmem:[#allocation2 + $0xa8] sm:$0xff]
        %v1575 = vld [vmem:[#allocation2 + $0xb0] sm:$0xff]
        %v1576 = vld [vmem:[#allocation2 + $0xb8] sm:$0xff]
        %v1577 = vld [vmem:[#allocation2 + $0xc0] sm:$0xff]
        %v1578 = vld [vmem:[#allocation2 + $0xc8] sm:$0xff]
        %v1579 = vld [vmem:[#allocation2 + $0xd0] sm:$0xff]
        %v1580 = vld [vmem:[#allocation2 + $0xd8] sm:$0xff]
        %v1581 = vld [vmem:[#allocation2 + $0xe0] sm:$0xff]
        %v1582 = vld [vmem:[#allocation2 + $0xe8] sm:$0xff]
        %v1583 = vld [vmem:[#allocation2 + $0xf0] sm:$0xff]
        %v1584 = vld [vmem:[#allocation2 + $0xf8] sm:$0xff]
        %v1585 = vld [vmem:[#allocation2 + $0x100] sm:$0xff]
        %v1586 = vld [vmem:[#allocation2 + $0x108] sm:$0xff]
        %v1587 = vld [vmem:[#allocation2 + $0x110] sm:$0xff]
        %v1588 = vld [vmem:[#allocation2 + $0x118] sm:$0xff]
        %v1589 = vld [vmem:[#allocation2 + $0x120] sm:$0xff]
        %v1590 = vld [vmem:[#allocation2 + $0x128] sm:$0xff]
        %v1591 = vld [vmem:[#allocation2 + $0x130] sm:$0xff]
        %v1592 = vld [vmem:[#allocation2 + $0x138] sm:$0xff]
        %v1593 = vld [vmem:[#allocation2 + $0x140] sm:$0xff]
        %v1594 = vld [vmem:[#allocation2 + $0x148] sm:$0xff]
        %v1595 = vld [vmem:[#allocation2 + $0x150] sm:$0xff]
        %v1596 = vld [vmem:[#allocation2 + $0x158] sm:$0xff]
        %v1597 = vld [vmem:[#allocation2 + $0x160] sm:$0xff]
        %v1598 = vld [vmem:[#allocation2 + $0x168] sm:$0xff]
        %v1599 = vld [vmem:[#allocation2 + $0x170] sm:$0xff]
        %v1600 = vld [vmem:[#allocation2 + $0x178] sm:$0xff]
        %v1601 = vld [vmem:[#allocation2 + $0x180] sm:$0xff]
        %v1602 = vld [vmem:[#allocation2 + $0x188] sm:$0xff]
        %v1603 = vld [vmem:[#allocation2 + $0x190] sm:$0xff]
        %v1604 = vld [vmem:[#allocation2 + $0x198] sm:$0xff]
        %v1605 = vld [vmem:[#allocation2 + $0x1a0] sm:$0xff]
        %v1606 = vld [vmem:[#allocation2 + $0x1a8] sm:$0xff]
        %v1607 = vld [vmem:[#allocation2 + $0x1b0] sm:$0xff]
        %v1608 = vld [vmem:[#allocation2 + $0x1b8] sm:$0xff]
        %v1609 = vld [vmem:[#allocation2 + $0x1c0] sm:$0xff]
        %v1610 = vld [vmem:[#allocation2 + $0x1c8] sm:$0xff]
        %v1611 = vld [vmem:[#allocation2 + $0x1d0] sm:$0xff]
        %v1612 = vld [vmem:[#allocation2 + $0x1d8] sm:$0xff]
        %v1613 = vld [vmem:[#allocation2 + $0x1e0] sm:$0xff]
        %v1614 = vld [vmem:[#allocation2 + $0x1e8] sm:$0xff]
        %v1615 = vld [vmem:[#allocation2 + $0x1f0] sm:$0xff]
        %v1616 = vld [vmem:[#allocation2 + $0x1f8] sm:$0xff]
        %v1617 = vld [vmem:[#allocation2 + $0x200] sm:$0xff]
        %v1618 = vld [vmem:[#allocation2 + $0x208] sm:$0xff]
        %v1619 = vld [vmem:[#allocation2 + $0x210] sm:$0xff]
        %v1620 = vld [vmem:[#allocation2 + $0x218] sm:$0xff]
        %v1621 = vld [vmem:[#allocation2 + $0x220] sm:$0xff]
        %v1622 = vld [vmem:[#allocation2 + $0x228] sm:$0xff]
        %v1623 = vld [vmem:[#allocation2 + $0x230] sm:$0xff]
        %v1624 = vld [vmem:[#allocation2 + $0x238] sm:$0xff]
        %s1625 = scalar_lea.vmem [#allocation3], 256
        %v1626 = vld [vmem:[%s1625] sm:$0xff]
        %v1627 = vld [vmem:[%s1625 + $0x8] sm:$0xff]
        %v1628 = vld [vmem:[%s1625 + $0x10] sm:$0xff]
        %v1629 = vld [vmem:[%s1625 + $0x18] sm:$0xff]
        %v1630 = vld [vmem:[%s1625 + $0x20] sm:$0xff]
        %v1631 = vld [vmem:[%s1625 + $0x28] sm:$0xff]
        %v1632 = vld [vmem:[%s1625 + $0x30] sm:$0xff]
        %v1633 = vld [vmem:[%s1625 + $0x38] sm:$0xff]
        %v1634 = vld [vmem:[%s1625 + $0x40] sm:$0xff]
        %v1635 = vld [vmem:[%s1625 + $0x48] sm:$0xff]
        %v1636 = vld [vmem:[%s1625 + $0x50] sm:$0xff]
        %v1637 = vld [vmem:[%s1625 + $0x58] sm:$0xff]
        %v1638 = vld [vmem:[%s1625 + $0x60] sm:$0xff]
        %v1639 = vld [vmem:[%s1625 + $0x68] sm:$0xff]
        %v1640 = vld [vmem:[%s1625 + $0x70] sm:$0xff]
        %v1641 = vld [vmem:[%s1625 + $0x78] sm:$0xff]
        %v1658 = vunpack.c.l.b16 %v1626
        %v1659 = vunpack.c.h.b16 %v1626
        %v1660 = vunpack.c.l.b16 %v1627
        %v1661 = vunpack.c.h.b16 %v1627
        %v1662 = vunpack.c.l.b16 %v1628
        %v1663 = vunpack.c.h.b16 %v1628
        %v1664 = vunpack.c.l.b16 %v1629
        %v1665 = vunpack.c.h.b16 %v1629
        %v1666 = vunpack.c.l.b16 %v1630
        %v1667 = vunpack.c.h.b16 %v1630
        %v1668 = vunpack.c.l.b16 %v1631
        %v1669 = vunpack.c.h.b16 %v1631
        %v1670 = vunpack.c.l.b16 %v1632
        %v1671 = vunpack.c.h.b16 %v1632
        %v1672 = vunpack.c.l.b16 %v1633
        %v1673 = vunpack.c.h.b16 %v1633
        %v1674 = vunpack.c.l.b16 %v1634
        %v1675 = vunpack.c.h.b16 %v1634
        %v1676 = vunpack.c.l.b16 %v1635
        %v1677 = vunpack.c.h.b16 %v1635
        %v1678 = vunpack.c.l.b16 %v1636
        %v1679 = vunpack.c.h.b16 %v1636
        %v1680 = vunpack.c.l.b16 %v1637
        %v1681 = vunpack.c.h.b16 %v1637
        %v1682 = vunpack.c.l.b16 %v1638
        %v1683 = vunpack.c.h.b16 %v1638
        %v1684 = vunpack.c.l.b16 %v1639
        %v1685 = vunpack.c.h.b16 %v1639
        %v1686 = vunpack.c.l.b16 %v1640
        %v1687 = vunpack.c.h.b16 %v1640
        %v1688 = vunpack.c.l.b16 %v1641
        %v1689 = vunpack.c.h.b16 %v1641
        %v1690 = vpack.c.b16 %v1662, %v1658
        %v1691 = vpack.c.b16 %v1663, %v1659
        %v1692 = vpack.c.b16 %v1664, %v1660
        %v1693 = vpack.c.b16 %v1665, %v1661
        %v1694 = vpack.c.b16 %v1670, %v1666
        %v1695 = vpack.c.b16 %v1671, %v1667
        %v1696 = vpack.c.b16 %v1672, %v1668
        %v1697 = vpack.c.b16 %v1673, %v1669
        %v1698 = vpack.c.b16 %v1678, %v1674
        %v1699 = vpack.c.b16 %v1679, %v1675
        %v1700 = vpack.c.b16 %v1680, %v1676
        %v1701 = vpack.c.b16 %v1681, %v1677
        %v1702 = vpack.c.b16 %v1686, %v1682
        %v1703 = vpack.c.b16 %v1687, %v1683
        %v1704 = vpack.c.b16 %v1688, %v1684
        %v1705 = vpack.c.b16 %v1689, %v1685
        %v1723 = vsel %vm491, %v1544, 0
        %v1726 = vsel %vm491, %v1545, 0
        %v1729 = vsel %vm491, %v1546, 0
        %v1732 = vsel %vm491, %v1547, 0
        %v1735 = vsel %vm491, %v1548, 0
        %v1738 = vsel %vm491, %v1549, 0
        %v1741 = vsel %vm491, %v1550, 0
        %v1744 = vsel %vm491, %v1551, 0
        %v1747 = vsel %vm491, %v1552, 0
        %1749 = vmatprep.subr.bf16.mxu0 %v1691
        %1750 = vmatpush1.bf16.msra.mxu0 %v1690
        %1751 = vmatprep.subr.bf16.mxu0 %v1695
        %1752 = vmatpush1.bf16.msra.mxu0 %v1694
        %1753 = vmatprep.subr.bf16.mxu0 %v1699
        %1754 = vmatpush1.bf16.msra.mxu0 %v1698
        %1755 = vmatprep.subr.bf16.mxu0 %v1703
        %1756 = vmatpush1.bf16.msra.mxu0 %v1702
        %1757 = vmatprep.subr.bf16.mxu0 0
        %1758 = vmatpush1.bf16.msra.mxu0 0
        %1759 = vmatprep.subr.bf16.mxu0 0
        %1760 = vmatpush1.bf16.msra.mxu0 0
        %1761 = vmatprep.subr.bf16.mxu0 0
        %1762 = vmatpush1.bf16.msra.mxu0 0
        %1763 = vmatprep.subr.bf16.mxu0 0
        %1764 = vmatpush1.bf16.msra.mxu0 0
        %1765 = vmatprep.subr.bf16.mxu0 0
        %1766 = vmatpush1.bf16.msra.mxu0 0
        %1767 = vmatprep.subr.bf16.mxu0 0
        %1768 = vmatpush1.bf16.msra.mxu0 0
        %1769 = vmatprep.subr.bf16.mxu0 0
        %1770 = vmatpush1.bf16.msra.mxu0 0
        %1771 = vmatprep.subr.bf16.mxu0 0
        %1772 = vmatpush1.bf16.msra.mxu0 0
        %1773 = vmatprep.subr.bf16.mxu0 0
        %1774 = vmatpush1.bf16.msra.mxu0 0
        %1775 = vmatprep.subr.bf16.mxu0 0
        %1776 = vmatpush1.bf16.msra.mxu0 0
        %1777 = vmatprep.subr.bf16.mxu0 0
        %1778 = vmatpush1.bf16.msra.mxu0 0
        %1779 = vmatprep.subr.bf16.mxu0 0
        %1780 = vmatpush1.bf16.msra.mxu0 0
        %1781 = vmatprep.mubr.bf16.mxu0 0
        %1782 = vmatmul.mubr.bf16.gmra.mrb[0].mxu0 %v1723
        %v1783 = vpop.f32.mrb[0].mxu0
        %v1784 = vadd.f32 0.0, %v1783
        %v1785 = vpop.f32.mrb[0].mxu0
        %v1786 = vadd.f32 0.0, %v1785
        %v1787 = vpop.f32.mrb[0].mxu0
        %v1788 = vadd.f32 0.0, %v1787
        %v1789 = vpop.f32.mrb[0].mxu0
        %v1790 = vadd.f32 0.0, %v1789
        %1791 = vmatprep.mubr.bf16.mxu0 0
        %1792 = vmatmul.mubr.bf16.gmra.mrb[0].mxu0 %v1726
        %v1793 = vpop.f32.mrb[0].mxu0
        %v1794 = vadd.f32 0.0, %v1793
        %v1795 = vpop.f32.mrb[0].mxu0
        %v1796 = vadd.f32 0.0, %v1795
        %v1797 = vpop.f32.mrb[0].mxu0
        %v1798 = vadd.f32 0.0, %v1797
        %v1799 = vpop.f32.mrb[0].mxu0
        %v1800 = vadd.f32 0.0, %v1799
        %1801 = vmatprep.mubr.bf16.mxu0 0
        %1802 = vmatmul.mubr.bf16.gmra.mrb[0].mxu0 %v1729
        %v1803 = vpop.f32.mrb[0].mxu0
        %v1804 = vadd.f32 0.0, %v1803
        %v1805 = vpop.f32.mrb[0].mxu0
        %v1806 = vadd.f32 0.0, %v1805
        %v1807 = vpop.f32.mrb[0].mxu0
        %v1808 = vadd.f32 0.0, %v1807
        %v1809 = vpop.f32.mrb[0].mxu0
        %v1810 = vadd.f32 0.0, %v1809
        %1811 = vmatprep.mubr.bf16.mxu0 0
        %1812 = vmatmul.mubr.bf16.gmra.mrb[0].mxu0 %v1732
        %v1813 = vpop.f32.mrb[0].mxu0
        %v1814 = vadd.f32 0.0, %v1813
        %v1815 = vpop.f32.mrb[0].mxu0
        %v1816 = vadd.f32 0.0, %v1815
        %v1817 = vpop.f32.mrb[0].mxu0
        %v1818 = vadd.f32 0.0, %v1817
        %v1819 = vpop.f32.mrb[0].mxu0
        %v1820 = vadd.f32 0.0, %v1819
        %1821 = vmatprep.mubr.bf16.mxu0 0
        %1822 = vmatmul.mubr.bf16.gmra.mrb[0].mxu0 %v1735
        %v1823 = vpop.f32.mrb[0].mxu0
        %v1824 = vadd.f32 0.0, %v1823
        %v1825 = vpop.f32.mrb[0].mxu0
        %v1826 = vadd.f32 0.0, %v1825
        %v1827 = vpop.f32.mrb[0].mxu0
        %v1828 = vadd.f32 0.0, %v1827
        %v1829 = vpop.f32.mrb[0].mxu0
        %v1830 = vadd.f32 0.0, %v1829
        %1831 = vmatprep.mubr.bf16.mxu0 0
        %1832 = vmatmul.mubr.bf16.gmra.mrb[0].mxu0 %v1738
        %v1833 = vpop.f32.mrb[0].mxu0
        %v1834 = vadd.f32 0.0, %v1833
        %v1835 = vpop.f32.mrb[0].mxu0
        %v1836 = vadd.f32 0.0, %v1835
        %v1837 = vpop.f32.mrb[0].mxu0
        %v1838 = vadd.f32 0.0, %v1837
        %v1839 = vpop.f32.mrb[0].mxu0
        %v1840 = vadd.f32 0.0, %v1839
        %1841 = vmatprep.mubr.bf16.mxu0 0
        %1842 = vmatmul.mubr.bf16.gmra.mrb[0].mxu0 %v1741
        %v1843 = vpop.f32.mrb[0].mxu0
        %v1844 = vadd.f32 0.0, %v1843
        %v1845 = vpop.f32.mrb[0].mxu0
        %v1846 = vadd.f32 0.0, %v1845
        %v1847 = vpop.f32.mrb[0].mxu0
        %v1848 = vadd.f32 0.0, %v1847
        %v1849 = vpop.f32.mrb[0].mxu0
        %v1850 = vadd.f32 0.0, %v1849
        %1851 = vmatprep.mubr.bf16.mxu0 0
        %1852 = vmatmul.mubr.bf16.gmra.mrb[0].mxu0 %v1744
        %v1853 = vpop.f32.mrb[0].mxu0
        %v1854 = vadd.f32 0.0, %v1853
        %v1855 = vpop.f32.mrb[0].mxu0
        %v1856 = vadd.f32 0.0, %v1855
        %v1857 = vpop.f32.mrb[0].mxu0
        %v1858 = vadd.f32 0.0, %v1857
        %v1859 = vpop.f32.mrb[0].mxu0
        %v1860 = vadd.f32 0.0, %v1859
        %1861 = vmatprep.mubr.bf16.mxu0 0
        %1862 = vmatmul.mubr.bf16.gmra.mrb[0].mxu0 %v1747
        %v1863 = vpop.f32.mrb[0].mxu0
        %v1864 = vadd.f32 0.0, %v1863
        %v1865 = vpop.f32.mrb[0].mxu0
        %v1866 = vadd.f32 0.0, %v1865
        %v1867 = vpop.f32.mrb[0].mxu0
        %v1868 = vadd.f32 0.0, %v1867
        %v1869 = vpop.f32.mrb[0].mxu0
        %v1870 = vadd.f32 0.0, %v1869
        %1871 = vdwg.mxu0
        %1872 = vmatprep.subr.bf16.mxu0 %v1693
        %1873 = vmatpush1.bf16.msra.mxu0 %v1692
        %1874 = vmatprep.subr.bf16.mxu0 %v1697
        %1875 = vmatpush1.bf16.msra.mxu0 %v1696
        %1876 = vmatprep.subr.bf16.mxu0 %v1701
        %1877 = vmatpush1.bf16.msra.mxu0 %v1700
        %1878 = vmatprep.subr.bf16.mxu0 %v1705
        %1879 = vmatpush1.bf16.msra.mxu0 %v1704
        %1880 = vmatprep.subr.bf16.mxu0 0
        %1881 = vmatpush1.bf16.msra.mxu0 0
        %1882 = vmatprep.subr.bf16.mxu0 0
        %1883 = vmatpush1.bf16.msra.mxu0 0
        %1884 = vmatprep.subr.bf16.mxu0 0
        %1885 = vmatpush1.bf16.msra.mxu0 0
        %1886 = vmatprep.subr.bf16.mxu0 0
        %1887 = vmatpush1.bf16.msra.mxu0 0
        %1888 = vmatprep.subr.bf16.mxu0 0
        %1889 = vmatpush1.bf16.msra.mxu0 0
        %1890 = vmatprep.subr.bf16.mxu0 0
        %1891 = vmatpush1.bf16.msra.mxu0 0
        %1892 = vmatprep.subr.bf16.mxu0 0
        %1893 = vmatpush1.bf16.msra.mxu0 0
        %1894 = vmatprep.subr.bf16.mxu0 0
        %1895 = vmatpush1.bf16.msra.mxu0 0
        %1896 = vmatprep.subr.bf16.mxu0 0
        %1897 = vmatpush1.bf16.msra.mxu0 0
        %1898 = vmatprep.subr.bf16.mxu0 0
        %1899 = vmatpush1.bf16.msra.mxu0 0
        %1900 = vmatprep.subr.bf16.mxu0 0
        %1901 = vmatpush1.bf16.msra.mxu0 0
        %1902 = vmatprep.subr.bf16.mxu0 0
        %1903 = vmatpush1.bf16.msra.mxu0 0
        %1904 = vmatprep.mubr.bf16.mxu0 0
        %1905 = vmatmul.mubr.bf16.gmra.mrb[0].mxu0 %v1723
        %v1906 = vpop.f32.mrb[0].mxu0
        %v1907 = vadd.f32 0.0, %v1906
        %v1908 = vpop.f32.mrb[0].mxu0
        %v1909 = vadd.f32 0.0, %v1908
        %v1910 = vpop.f32.mrb[0].mxu0
        %v1911 = vadd.f32 0.0, %v1910
        %v1912 = vpop.f32.mrb[0].mxu0
        %v1913 = vadd.f32 0.0, %v1912
        %1914 = vmatprep.mubr.bf16.mxu0 0
        %1915 = vmatmul.mubr.bf16.gmra.mrb[0].mxu0 %v1726
        %v1916 = vpop.f32.mrb[0].mxu0
        %v1917 = vadd.f32 0.0, %v1916
        %v1918 = vpop.f32.mrb[0].mxu0
        %v1919 = vadd.f32 0.0, %v1918
        %v1920 = vpop.f32.mrb[0].mxu0
        %v1921 = vadd.f32 0.0, %v1920
        %v1922 = vpop.f32.mrb[0].mxu0
        %v1923 = vadd.f32 0.0, %v1922
        %1924 = vmatprep.mubr.bf16.mxu0 0
        %1925 = vmatmul.mubr.bf16.gmra.mrb[0].mxu0 %v1729
        %v1926 = vpop.f32.mrb[0].mxu0
        %v1927 = vadd.f32 0.0, %v1926
        %v1928 = vpop.f32.mrb[0].mxu0
        %v1929 = vadd.f32 0.0, %v1928
        %v1930 = vpop.f32.mrb[0].mxu0
        %v1931 = vadd.f32 0.0, %v1930
        %v1932 = vpop.f32.mrb[0].mxu0
        %v1933 = vadd.f32 0.0, %v1932
        %1934 = vmatprep.mubr.bf16.mxu0 0
        %1935 = vmatmul.mubr.bf16.gmra.mrb[0].mxu0 %v1732
        %v1936 = vpop.f32.mrb[0].mxu0
        %v1937 = vadd.f32 0.0, %v1936
        %v1938 = vpop.f32.mrb[0].mxu0
        %v1939 = vadd.f32 0.0, %v1938
        %v1940 = vpop.f32.mrb[0].mxu0
        %v1941 = vadd.f32 0.0, %v1940
        %v1942 = vpop.f32.mrb[0].mxu0
        %v1943 = vadd.f32 0.0, %v1942
        %1944 = vmatprep.mubr.bf16.mxu0 0
        %1945 = vmatmul.mubr.bf16.gmra.mrb[0].mxu0 %v1735
        %v1946 = vpop.f32.mrb[0].mxu0
        %v1947 = vadd.f32 0.0, %v1946
        %v1948 = vpop.f32.mrb[0].mxu0
        %v1949 = vadd.f32 0.0, %v1948
        %v1950 = vpop.f32.mrb[0].mxu0
        %v1951 = vadd.f32 0.0, %v1950
        %v1952 = vpop.f32.mrb[0].mxu0
        %v1953 = vadd.f32 0.0, %v1952
        %1954 = vmatprep.mubr.bf16.mxu0 0
        %1955 = vmatmul.mubr.bf16.gmra.mrb[0].mxu0 %v1738
        %v1956 = vpop.f32.mrb[0].mxu0
        %v1957 = vadd.f32 0.0, %v1956
        %v1958 = vpop.f32.mrb[0].mxu0
        %v1959 = vadd.f32 0.0, %v1958
        %v1960 = vpop.f32.mrb[0].mxu0
        %v1961 = vadd.f32 0.0, %v1960
        %v1962 = vpop.f32.mrb[0].mxu0
        %v1963 = vadd.f32 0.0, %v1962
        %1964 = vmatprep.mubr.bf16.mxu0 0
        %1965 = vmatmul.mubr.bf16.gmra.mrb[0].mxu0 %v1741
        %v1966 = vpop.f32.mrb[0].mxu0
        %v1967 = vadd.f32 0.0, %v1966
        %v1968 = vpop.f32.mrb[0].mxu0
        %v1969 = vadd.f32 0.0, %v1968
        %v1970 = vpop.f32.mrb[0].mxu0
        %v1971 = vadd.f32 0.0, %v1970
        %v1972 = vpop.f32.mrb[0].mxu0
        %v1973 = vadd.f32 0.0, %v1972
        %1974 = vmatprep.mubr.bf16.mxu0 0
        %1975 = vmatmul.mubr.bf16.gmra.mrb[0].mxu0 %v1744
        %v1976 = vpop.f32.mrb[0].mxu0
        %v1977 = vadd.f32 0.0, %v1976
        %v1978 = vpop.f32.mrb[0].mxu0
        %v1979 = vadd.f32 0.0, %v1978
        %v1980 = vpop.f32.mrb[0].mxu0
        %v1981 = vadd.f32 0.0, %v1980
        %v1982 = vpop.f32.mrb[0].mxu0
        %v1983 = vadd.f32 0.0, %v1982
        %1984 = vmatprep.mubr.bf16.mxu0 0
        %1985 = vmatmul.mubr.bf16.gmra.mrb[0].mxu0 %v1747
        %v1986 = vpop.f32.mrb[0].mxu0
        %v1987 = vadd.f32 0.0, %v1986
        %v1988 = vpop.f32.mrb[0].mxu0
        %v1989 = vadd.f32 0.0, %v1988
        %v1990 = vpop.f32.mrb[0].mxu0
        %v1991 = vadd.f32 0.0, %v1990
        %v1992 = vpop.f32.mrb[0].mxu0
        %v1993 = vadd.f32 0.0, %v1992
        %1994 = vdwg.mxu0
        %v1995 = vadd.f32 %v1553, %v1784
        %v1996 = vadd.f32 %v1554, %v1786
        %v1997 = vadd.f32 %v1555, %v1907
        %v1998 = vadd.f32 %v1556, %v1909
        %v1999 = vadd.f32 %v1557, %v1788
        %v2000 = vadd.f32 %v1558, %v1790
        %v2001 = vadd.f32 %v1559, %v1911
        %v2002 = vadd.f32 %v1560, %v1913
        %v2003 = vadd.f32 %v1561, %v1794
        %v2004 = vadd.f32 %v1562, %v1796
        %v2005 = vadd.f32 %v1563, %v1917
        %v2006 = vadd.f32 %v1564, %v1919
        %v2007 = vadd.f32 %v1565, %v1798
        %v2008 = vadd.f32 %v1566, %v1800
        %v2009 = vadd.f32 %v1567, %v1921
        %v2010 = vadd.f32 %v1568, %v1923
        %v2011 = vadd.f32 %v1569, %v1804
        %v2012 = vadd.f32 %v1570, %v1806
        %v2013 = vadd.f32 %v1571, %v1927
        %v2014 = vadd.f32 %v1572, %v1929
        %v2015 = vadd.f32 %v1573, %v1808
        %v2016 = vadd.f32 %v1574, %v1810
        %v2017 = vadd.f32 %v1575, %v1931
        %v2018 = vadd.f32 %v1576, %v1933
        %v2019 = vadd.f32 %v1577, %v1814
        %v2020 = vadd.f32 %v1578, %v1816
        %v2021 = vadd.f32 %v1579, %v1937
        %v2022 = vadd.f32 %v1580, %v1939
        %v2023 = vadd.f32 %v1581, %v1818
        %v2024 = vadd.f32 %v1582, %v1820
        %v2025 = vadd.f32 %v1583, %v1941
        %v2026 = vadd.f32 %v1584, %v1943
        %v2027 = vadd.f32 %v1585, %v1824
        %v2028 = vadd.f32 %v1586, %v1826
        %v2029 = vadd.f32 %v1587, %v1947
        %v2030 = vadd.f32 %v1588, %v1949
        %v2031 = vadd.f32 %v1589, %v1828
        %v2032 = vadd.f32 %v1590, %v1830
        %v2033 = vadd.f32 %v1591, %v1951
        %v2034 = vadd.f32 %v1592, %v1953
        %v2035 = vadd.f32 %v1593, %v1834
        %v2036 = vadd.f32 %v1594, %v1836
        %v2037 = vadd.f32 %v1595, %v1957
        %v2038 = vadd.f32 %v1596, %v1959
        %v2039 = vadd.f32 %v1597, %v1838
        %v2040 = vadd.f32 %v1598, %v1840
        %v2041 = vadd.f32 %v1599, %v1961
        %v2042 = vadd.f32 %v1600, %v1963
        %v2043 = vadd.f32 %v1601, %v1844
        %v2044 = vadd.f32 %v1602, %v1846
        %v2045 = vadd.f32 %v1603, %v1967
        %v2046 = vadd.f32 %v1604, %v1969
        %v2047 = vadd.f32 %v1605, %v1848
        %v2048 = vadd.f32 %v1606, %v1850
        %v2049 = vadd.f32 %v1607, %v1971
        %v2050 = vadd.f32 %v1608, %v1973
        %v2051 = vadd.f32 %v1609, %v1854
        %v2052 = vadd.f32 %v1610, %v1856
        %v2053 = vadd.f32 %v1611, %v1977
        %v2054 = vadd.f32 %v1612, %v1979
        %v2055 = vadd.f32 %v1613, %v1858
        %v2056 = vadd.f32 %v1614, %v1860
        %v2057 = vadd.f32 %v1615, %v1981
        %v2058 = vadd.f32 %v1616, %v1983
        %v2059 = vadd.f32 %v1617, %v1864
        %v2060 = vadd.f32 %v1618, %v1866
        %v2061 = vadd.f32 %v1619, %v1987
        %v2062 = vadd.f32 %v1620, %v1989
        %v2063 = vadd.f32 %v1621, %v1868
        %v2064 = vadd.f32 %v1622, %v1870
        %v2065 = vadd.f32 %v1623, %v1991
        %v2066 = vadd.f32 %v1624, %v1993
        %2067 = vst [vmem:[#allocation2] sm:$0xff] %v1995
        %2068 = vst [vmem:[#allocation2 + $0x8] sm:$0xff] %v1996
        %2069 = vst [vmem:[#allocation2 + $0x10] sm:$0xff] %v1997
        %2070 = vst [vmem:[#allocation2 + $0x18] sm:$0xff] %v1998
        %2071 = vst [vmem:[#allocation2 + $0x20] sm:$0xff] %v1999
        %2072 = vst [vmem:[#allocation2 + $0x28] sm:$0xff] %v2000
        %2073 = vst [vmem:[#allocation2 + $0x30] sm:$0xff] %v2001
        %2074 = vst [vmem:[#allocation2 + $0x38] sm:$0xff] %v2002
        %2075 = vst [vmem:[#allocation2 + $0x40] sm:$0xff] %v2003
        %2076 = vst [vmem:[#allocation2 + $0x48] sm:$0xff] %v2004
        %2077 = vst [vmem:[#allocation2 + $0x50] sm:$0xff] %v2005
        %2078 = vst [vmem:[#allocation2 + $0x58] sm:$0xff] %v2006
        %2079 = vst [vmem:[#allocation2 + $0x60] sm:$0xff] %v2007
        %2080 = vst [vmem:[#allocation2 + $0x68] sm:$0xff] %v2008
        %2081 = vst [vmem:[#allocation2 + $0x70] sm:$0xff] %v2009
        %2082 = vst [vmem:[#allocation2 + $0x78] sm:$0xff] %v2010
        %2083 = vst [vmem:[#allocation2 + $0x80] sm:$0xff] %v2011
        %2084 = vst [vmem:[#allocation2 + $0x88] sm:$0xff] %v2012
        %2085 = vst [vmem:[#allocation2 + $0x90] sm:$0xff] %v2013
        %2086 = vst [vmem:[#allocation2 + $0x98] sm:$0xff] %v2014
        %2087 = vst [vmem:[#allocation2 + $0xa0] sm:$0xff] %v2015
        %2088 = vst [vmem:[#allocation2 + $0xa8] sm:$0xff] %v2016
        %2089 = vst [vmem:[#allocation2 + $0xb0] sm:$0xff] %v2017
        %2090 = vst [vmem:[#allocation2 + $0xb8] sm:$0xff] %v2018
        %2091 = vst [vmem:[#allocation2 + $0xc0] sm:$0xff] %v2019
        %2092 = vst [vmem:[#allocation2 + $0xc8] sm:$0xff] %v2020
        %2093 = vst [vmem:[#allocation2 + $0xd0] sm:$0xff] %v2021
        %2094 = vst [vmem:[#allocation2 + $0xd8] sm:$0xff] %v2022
        %2095 = vst [vmem:[#allocation2 + $0xe0] sm:$0xff] %v2023
        %2096 = vst [vmem:[#allocation2 + $0xe8] sm:$0xff] %v2024
        %2097 = vst [vmem:[#allocation2 + $0xf0] sm:$0xff] %v2025
        %2098 = vst [vmem:[#allocation2 + $0xf8] sm:$0xff] %v2026
        %2099 = vst [vmem:[#allocation2 + $0x100] sm:$0xff] %v2027
        %2100 = vst [vmem:[#allocation2 + $0x108] sm:$0xff] %v2028
        %2101 = vst [vmem:[#allocation2 + $0x110] sm:$0xff] %v2029
        %2102 = vst [vmem:[#allocation2 + $0x118] sm:$0xff] %v2030
        %2103 = vst [vmem:[#allocation2 + $0x120] sm:$0xff] %v2031
        %2104 = vst [vmem:[#allocation2 + $0x128] sm:$0xff] %v2032
        %2105 = vst [vmem:[#allocation2 + $0x130] sm:$0xff] %v2033
        %2106 = vst [vmem:[#allocation2 + $0x138] sm:$0xff] %v2034
        %2107 = vst [vmem:[#allocation2 + $0x140] sm:$0xff] %v2035
        %2108 = vst [vmem:[#allocation2 + $0x148] sm:$0xff] %v2036
        %2109 = vst [vmem:[#allocation2 + $0x150] sm:$0xff] %v2037
        %2110 = vst [vmem:[#allocation2 + $0x158] sm:$0xff] %v2038
        %2111 = vst [vmem:[#allocation2 + $0x160] sm:$0xff] %v2039
        %2112 = vst [vmem:[#allocation2 + $0x168] sm:$0xff] %v2040
        %2113 = vst [vmem:[#allocation2 + $0x170] sm:$0xff] %v2041
        %2114 = vst [vmem:[#allocation2 + $0x178] sm:$0xff] %v2042
        %2115 = vst [vmem:[#allocation2 + $0x180] sm:$0xff] %v2043
        %2116 = vst [vmem:[#allocation2 + $0x188] sm:$0xff] %v2044
        %2117 = vst [vmem:[#allocation2 + $0x190] sm:$0xff] %v2045
        %2118 = vst [vmem:[#allocation2 + $0x198] sm:$0xff] %v2046
        %2119 = vst [vmem:[#allocation2 + $0x1a0] sm:$0xff] %v2047
        %2120 = vst [vmem:[#allocation2 + $0x1a8] sm:$0xff] %v2048
        %2121 = vst [vmem:[#allocation2 + $0x1b0] sm:$0xff] %v2049
        %2122 = vst [vmem:[#allocation2 + $0x1b8] sm:$0xff] %v2050
        %2123 = vst [vmem:[#allocation2 + $0x1c0] sm:$0xff] %v2051
        %2124 = vst [vmem:[#allocation2 + $0x1c8] sm:$0xff] %v2052
        %2125 = vst [vmem:[#allocation2 + $0x1d0] sm:$0xff] %v2053
        %2126 = vst [vmem:[#allocation2 + $0x1d8] sm:$0xff] %v2054
        %2127 = vst [vmem:[#allocation2 + $0x1e0] sm:$0xff] %v2055
        %2128 = vst [vmem:[#allocation2 + $0x1e8] sm:$0xff] %v2056
        %2129 = vst [vmem:[#allocation2 + $0x1f0] sm:$0xff] %v2057
        %2130 = vst [vmem:[#allocation2 + $0x1f8] sm:$0xff] %v2058
        %2131 = vst [vmem:[#allocation2 + $0x200] sm:$0xff] %v2059
        %2132 = vst [vmem:[#allocation2 + $0x208] sm:$0xff] %v2060
        %2133 = vst [vmem:[#allocation2 + $0x210] sm:$0xff] %v2061
        %2134 = vst [vmem:[#allocation2 + $0x218] sm:$0xff] %v2062
        %2135 = vst [vmem:[#allocation2 + $0x220] sm:$0xff] %v2063
        %2136 = vst [vmem:[#allocation2 + $0x228] sm:$0xff] %v2064
        %2137 = vst [vmem:[#allocation2 + $0x230] sm:$0xff] %v2065
        %2138 = vst [vmem:[#allocation2 + $0x238] sm:$0xff] %v2066
        %s2139 = sadd.s32 %s222, 18
        %s2140 = scalar_lea.vmem %s0, %s2139
        %v2141 = vld [vmem:[%s2140] sm:$0xff]
        %v2142 = vld [vmem:[%s2140 + $0x8] sm:$0xff]
        %v2143 = vld [vmem:[%s2140 + $0x10] sm:$0xff]
        %v2144 = vld [vmem:[%s2140 + $0x18] sm:$0xff]
        %v2145 = vld [vmem:[%s2140 + $0x20] sm:$0xff]
        %v2146 = vld [vmem:[%s2140 + $0x28] sm:$0xff]
        %v2147 = vld [vmem:[%s2140 + $0x30] sm:$0xff]
        %v2148 = vld [vmem:[%s2140 + $0x38] sm:$0xff]
        %v2149 = vld [vmem:[%s2140 + $0x40] sm:$0xff]
        %v2150 = vld [vmem:[%s2140 + $0x48] sm:$0xff]
        %v2151 = vld [vmem:[%s2140 + $0x50] sm:$0xff]
        %v2152 = vld [vmem:[%s2140 + $0x58] sm:$0xff]
        %v2153 = vld [vmem:[%s2140 + $0x60] sm:$0xff]
        %v2154 = vld [vmem:[%s2140 + $0x68] sm:$0xff]
        %v2155 = vld [vmem:[%s2140 + $0x70] sm:$0xff]
        %v2156 = vld [vmem:[%s2140 + $0x78] sm:$0xff]
        %v2157 = vld [vmem:[%s2140 + $0x80] sm:$0xff]
        %v2158 = vld [vmem:[%s2140 + $0x88] sm:$0xff]
        %v2159 = vpack.c.bf16 %v2142, %v2141
        %v2160 = vpack.c.bf16 %v2144, %v2143
        %v2161 = vpack.c.bf16 %v2146, %v2145
        %v2162 = vpack.c.bf16 %v2148, %v2147
        %v2163 = vpack.c.bf16 %v2150, %v2149
        %v2164 = vpack.c.bf16 %v2152, %v2151
        %v2165 = vpack.c.bf16 %v2154, %v2153
        %v2166 = vpack.c.bf16 %v2156, %v2155
        %v2167 = vpack.c.bf16 %v2158, %v2157
        %v2168 = vld [vmem:[#allocation2] sm:$0xff]
        %v2169 = vld [vmem:[#allocation2 + $0x8] sm:$0xff]
        %v2170 = vld [vmem:[#allocation2 + $0x10] sm:$0xff]
        %v2171 = vld [vmem:[#allocation2 + $0x18] sm:$0xff]
        %v2172 = vld [vmem:[#allocation2 + $0x20] sm:$0xff]
        %v2173 = vld [vmem:[#allocation2 + $0x28] sm:$0xff]
        %v2174 = vld [vmem:[#allocation2 + $0x30] sm:$0xff]
        %v2175 = vld [vmem:[#allocation2 + $0x38] sm:$0xff]
        %v2176 = vld [vmem:[#allocation2 + $0x40] sm:$0xff]
        %v2177 = vld [vmem:[#allocation2 + $0x48] sm:$0xff]
        %v2178 = vld [vmem:[#allocation2 + $0x50] sm:$0xff]
        %v2179 = vld [vmem:[#allocation2 + $0x58] sm:$0xff]
        %v2180 = vld [vmem:[#allocation2 + $0x60] sm:$0xff]
        %v2181 = vld [vmem:[#allocation2 + $0x68] sm:$0xff]
        %v2182 = vld [vmem:[#allocation2 + $0x70] sm:$0xff]
        %v2183 = vld [vmem:[#allocation2 + $0x78] sm:$0xff]
        %v2184 = vld [vmem:[#allocation2 + $0x80] sm:$0xff]
        %v2185 = vld [vmem:[#allocation2 + $0x88] sm:$0xff]
        %v2186 = vld [vmem:[#allocation2 + $0x90] sm:$0xff]
        %v2187 = vld [vmem:[#allocation2 + $0x98] sm:$0xff]
        %v2188 = vld [vmem:[#allocation2 + $0xa0] sm:$0xff]
        %v2189 = vld [vmem:[#allocation2 + $0xa8] sm:$0xff]
        %v2190 = vld [vmem:[#allocation2 + $0xb0] sm:$0xff]
        %v2191 = vld [vmem:[#allocation2 + $0xb8] sm:$0xff]
        %v2192 = vld [vmem:[#allocation2 + $0xc0] sm:$0xff]
        %v2193 = vld [vmem:[#allocation2 + $0xc8] sm:$0xff]
        %v2194 = vld [vmem:[#allocation2 + $0xd0] sm:$0xff]
        %v2195 = vld [vmem:[#allocation2 + $0xd8] sm:$0xff]
        %v2196 = vld [vmem:[#allocation2 + $0xe0] sm:$0xff]
        %v2197 = vld [vmem:[#allocation2 + $0xe8] sm:$0xff]
        %v2198 = vld [vmem:[#allocation2 + $0xf0] sm:$0xff]
        %v2199 = vld [vmem:[#allocation2 + $0xf8] sm:$0xff]
        %v2200 = vld [vmem:[#allocation2 + $0x100] sm:$0xff]
        %v2201 = vld [vmem:[#allocation2 + $0x108] sm:$0xff]
        %v2202 = vld [vmem:[#allocation2 + $0x110] sm:$0xff]
        %v2203 = vld [vmem:[#allocation2 + $0x118] sm:$0xff]
        %v2204 = vld [vmem:[#allocation2 + $0x120] sm:$0xff]
        %v2205 = vld [vmem:[#allocation2 + $0x128] sm:$0xff]
        %v2206 = vld [vmem:[#allocation2 + $0x130] sm:$0xff]
        %v2207 = vld [vmem:[#allocation2 + $0x138] sm:$0xff]
        %v2208 = vld [vmem:[#allocation2 + $0x140] sm:$0xff]
        %v2209 = vld [vmem:[#allocation2 + $0x148] sm:$0xff]
        %v2210 = vld [vmem:[#allocation2 + $0x150] sm:$0xff]
        %v2211 = vld [vmem:[#allocation2 + $0x158] sm:$0xff]
        %v2212 = vld [vmem:[#allocation2 + $0x160] sm:$0xff]
        %v2213 = vld [vmem:[#allocation2 + $0x168] sm:$0xff]
        %v2214 = vld [vmem:[#allocation2 + $0x170] sm:$0xff]
        %v2215 = vld [vmem:[#allocation2 + $0x178] sm:$0xff]
        %v2216 = vld [vmem:[#allocation2 + $0x180] sm:$0xff]
        %v2217 = vld [vmem:[#allocation2 + $0x188] sm:$0xff]
        %v2218 = vld [vmem:[#allocation2 + $0x190] sm:$0xff]
        %v2219 = vld [vmem:[#allocation2 + $0x198] sm:$0xff]
        %v2220 = vld [vmem:[#allocation2 + $0x1a0] sm:$0xff]
        %v2221 = vld [vmem:[#allocation2 + $0x1a8] sm:$0xff]
        %v2222 = vld [vmem:[#allocation2 + $0x1b0] sm:$0xff]
        %v2223 = vld [vmem:[#allocation2 + $0x1b8] sm:$0xff]
        %v2224 = vld [vmem:[#allocation2 + $0x1c0] sm:$0xff]
        %v2225 = vld [vmem:[#allocation2 + $0x1c8] sm:$0xff]
        %v2226 = vld [vmem:[#allocation2 + $0x1d0] sm:$0xff]
        %v2227 = vld [vmem:[#allocation2 + $0x1d8] sm:$0xff]
        %v2228 = vld [vmem:[#allocation2 + $0x1e0] sm:$0xff]
        %v2229 = vld [vmem:[#allocation2 + $0x1e8] sm:$0xff]
        %v2230 = vld [vmem:[#allocation2 + $0x1f0] sm:$0xff]
        %v2231 = vld [vmem:[#allocation2 + $0x1f8] sm:$0xff]
        %v2232 = vld [vmem:[#allocation2 + $0x200] sm:$0xff]
        %v2233 = vld [vmem:[#allocation2 + $0x208] sm:$0xff]
        %v2234 = vld [vmem:[#allocation2 + $0x210] sm:$0xff]
        %v2235 = vld [vmem:[#allocation2 + $0x218] sm:$0xff]
        %v2236 = vld [vmem:[#allocation2 + $0x220] sm:$0xff]
        %v2237 = vld [vmem:[#allocation2 + $0x228] sm:$0xff]
        %v2238 = vld [vmem:[#allocation2 + $0x230] sm:$0xff]
        %v2239 = vld [vmem:[#allocation2 + $0x238] sm:$0xff]
        %s2240 = scalar_lea.vmem [#allocation3], 384
        %v2241 = vld [vmem:[%s2240] sm:$0xff]
        %v2242 = vld [vmem:[%s2240 + $0x8] sm:$0xff]
        %v2243 = vld [vmem:[%s2240 + $0x10] sm:$0xff]
        %v2244 = vld [vmem:[%s2240 + $0x18] sm:$0xff]
        %v2245 = vld [vmem:[%s2240 + $0x20] sm:$0xff]
        %v2246 = vld [vmem:[%s2240 + $0x28] sm:$0xff]
        %v2247 = vld [vmem:[%s2240 + $0x30] sm:$0xff]
        %v2248 = vld [vmem:[%s2240 + $0x38] sm:$0xff]
        %v2249 = vld [vmem:[%s2240 + $0x40] sm:$0xff]
        %v2250 = vld [vmem:[%s2240 + $0x48] sm:$0xff]
        %v2251 = vld [vmem:[%s2240 + $0x50] sm:$0xff]
        %v2252 = vld [vmem:[%s2240 + $0x58] sm:$0xff]
        %v2253 = vld [vmem:[%s2240 + $0x60] sm:$0xff]
        %v2254 = vld [vmem:[%s2240 + $0x68] sm:$0xff]
        %v2255 = vld [vmem:[%s2240 + $0x70] sm:$0xff]
        %v2256 = vld [vmem:[%s2240 + $0x78] sm:$0xff]
        %v2273 = vunpack.c.l.b16 %v2241
        %v2274 = vunpack.c.h.b16 %v2241
        %v2275 = vunpack.c.l.b16 %v2242
        %v2276 = vunpack.c.h.b16 %v2242
        %v2277 = vunpack.c.l.b16 %v2243
        %v2278 = vunpack.c.h.b16 %v2243
        %v2279 = vunpack.c.l.b16 %v2244
        %v2280 = vunpack.c.h.b16 %v2244
        %v2281 = vunpack.c.l.b16 %v2245
        %v2282 = vunpack.c.h.b16 %v2245
        %v2283 = vunpack.c.l.b16 %v2246
        %v2284 = vunpack.c.h.b16 %v2246
        %v2285 = vunpack.c.l.b16 %v2247
        %v2286 = vunpack.c.h.b16 %v2247
        %v2287 = vunpack.c.l.b16 %v2248
        %v2288 = vunpack.c.h.b16 %v2248
        %v2289 = vunpack.c.l.b16 %v2249
        %v2290 = vunpack.c.h.b16 %v2249
        %v2291 = vunpack.c.l.b16 %v2250
        %v2292 = vunpack.c.h.b16 %v2250
        %v2293 = vunpack.c.l.b16 %v2251
        %v2294 = vunpack.c.h.b16 %v2251
        %v2295 = vunpack.c.l.b16 %v2252
        %v2296 = vunpack.c.h.b16 %v2252
        %v2297 = vunpack.c.l.b16 %v2253
        %v2298 = vunpack.c.h.b16 %v2253
        %v2299 = vunpack.c.l.b16 %v2254
        %v2300 = vunpack.c.h.b16 %v2254
        %v2301 = vunpack.c.l.b16 %v2255
        %v2302 = vunpack.c.h.b16 %v2255
        %v2303 = vunpack.c.l.b16 %v2256
        %v2304 = vunpack.c.h.b16 %v2256
        %v2305 = vpack.c.b16 %v2277, %v2273
        %v2306 = vpack.c.b16 %v2278, %v2274
        %v2307 = vpack.c.b16 %v2279, %v2275
        %v2308 = vpack.c.b16 %v2280, %v2276
        %v2309 = vpack.c.b16 %v2285, %v2281
        %v2310 = vpack.c.b16 %v2286, %v2282
        %v2311 = vpack.c.b16 %v2287, %v2283
        %v2312 = vpack.c.b16 %v2288, %v2284
        %v2313 = vpack.c.b16 %v2293, %v2289
        %v2314 = vpack.c.b16 %v2294, %v2290
        %v2315 = vpack.c.b16 %v2295, %v2291
        %v2316 = vpack.c.b16 %v2296, %v2292
        %v2317 = vpack.c.b16 %v2301, %v2297
        %v2318 = vpack.c.b16 %v2302, %v2298
        %v2319 = vpack.c.b16 %v2303, %v2299
        %v2320 = vpack.c.b16 %v2304, %v2300
        %v2338 = vsel %vm491, %v2159, 0
        %v2341 = vsel %vm491, %v2160, 0
        %v2344 = vsel %vm491, %v2161, 0
        %v2347 = vsel %vm491, %v2162, 0
        %v2350 = vsel %vm491, %v2163, 0
        %v2353 = vsel %vm491, %v2164, 0
        %v2356 = vsel %vm491, %v2165, 0
        %v2359 = vsel %vm491, %v2166, 0
        %v2362 = vsel %vm491, %v2167, 0
        %2364 = vmatprep.subr.bf16.mxu0 %v2306
        %2365 = vmatpush1.bf16.msra.mxu0 %v2305
        %2366 = vmatprep.subr.bf16.mxu0 %v2310
        %2367 = vmatpush1.bf16.msra.mxu0 %v2309
        %2368 = vmatprep.subr.bf16.mxu0 %v2314
        %2369 = vmatpush1.bf16.msra.mxu0 %v2313
        %2370 = vmatprep.subr.bf16.mxu0 %v2318
        %2371 = vmatpush1.bf16.msra.mxu0 %v2317
        %2372 = vmatprep.subr.bf16.mxu0 0
        %2373 = vmatpush1.bf16.msra.mxu0 0
        %2374 = vmatprep.subr.bf16.mxu0 0
        %2375 = vmatpush1.bf16.msra.mxu0 0
        %2376 = vmatprep.subr.bf16.mxu0 0
        %2377 = vmatpush1.bf16.msra.mxu0 0
        %2378 = vmatprep.subr.bf16.mxu0 0
        %2379 = vmatpush1.bf16.msra.mxu0 0
        %2380 = vmatprep.subr.bf16.mxu0 0
        %2381 = vmatpush1.bf16.msra.mxu0 0
        %2382 = vmatprep.subr.bf16.mxu0 0
        %2383 = vmatpush1.bf16.msra.mxu0 0
        %2384 = vmatprep.subr.bf16.mxu0 0
        %2385 = vmatpush1.bf16.msra.mxu0 0
        %2386 = vmatprep.subr.bf16.mxu0 0
        %2387 = vmatpush1.bf16.msra.mxu0 0
        %2388 = vmatprep.subr.bf16.mxu0 0
        %2389 = vmatpush1.bf16.msra.mxu0 0
        %2390 = vmatprep.subr.bf16.mxu0 0
        %2391 = vmatpush1.bf16.msra.mxu0 0
        %2392 = vmatprep.subr.bf16.mxu0 0
        %2393 = vmatpush1.bf16.msra.mxu0 0
        %2394 = vmatprep.subr.bf16.mxu0 0
        %2395 = vmatpush1.bf16.msra.mxu0 0
        %2396 = vmatprep.mubr.bf16.mxu0 0
        %2397 = vmatmul.mubr.bf16.gmra.mrb[0].mxu0 %v2338
        %v2398 = vpop.f32.mrb[0].mxu0
        %v2399 = vadd.f32 0.0, %v2398
        %v2400 = vpop.f32.mrb[0].mxu0
        %v2401 = vadd.f32 0.0, %v2400
        %v2402 = vpop.f32.mrb[0].mxu0
        %v2403 = vadd.f32 0.0, %v2402
        %v2404 = vpop.f32.mrb[0].mxu0
        %v2405 = vadd.f32 0.0, %v2404
        %2406 = vmatprep.mubr.bf16.mxu0 0
        %2407 = vmatmul.mubr.bf16.gmra.mrb[0].mxu0 %v2341
        %v2408 = vpop.f32.mrb[0].mxu0
        %v2409 = vadd.f32 0.0, %v2408
        %v2410 = vpop.f32.mrb[0].mxu0
        %v2411 = vadd.f32 0.0, %v2410
        %v2412 = vpop.f32.mrb[0].mxu0
        %v2413 = vadd.f32 0.0, %v2412
        %v2414 = vpop.f32.mrb[0].mxu0
        %v2415 = vadd.f32 0.0, %v2414
        %2416 = vmatprep.mubr.bf16.mxu0 0
        %2417 = vmatmul.mubr.bf16.gmra.mrb[0].mxu0 %v2344
        %v2418 = vpop.f32.mrb[0].mxu0
        %v2419 = vadd.f32 0.0, %v2418
        %v2420 = vpop.f32.mrb[0].mxu0
        %v2421 = vadd.f32 0.0, %v2420
        %v2422 = vpop.f32.mrb[0].mxu0
        %v2423 = vadd.f32 0.0, %v2422
        %v2424 = vpop.f32.mrb[0].mxu0
        %v2425 = vadd.f32 0.0, %v2424
        %2426 = vmatprep.mubr.bf16.mxu0 0
        %2427 = vmatmul.mubr.bf16.gmra.mrb[0].mxu0 %v2347
        %v2428 = vpop.f32.mrb[0].mxu0
        %v2429 = vadd.f32 0.0, %v2428
        %v2430 = vpop.f32.mrb[0].mxu0
        %v2431 = vadd.f32 0.0, %v2430
        %v2432 = vpop.f32.mrb[0].mxu0
        %v2433 = vadd.f32 0.0, %v2432
        %v2434 = vpop.f32.mrb[0].mxu0
        %v2435 = vadd.f32 0.0, %v2434
        %2436 = vmatprep.mubr.bf16.mxu0 0
        %2437 = vmatmul.mubr.bf16.gmra.mrb[0].mxu0 %v2350
        %v2438 = vpop.f32.mrb[0].mxu0
        %v2439 = vadd.f32 0.0, %v2438
        %v2440 = vpop.f32.mrb[0].mxu0
        %v2441 = vadd.f32 0.0, %v2440
        %v2442 = vpop.f32.mrb[0].mxu0
        %v2443 = vadd.f32 0.0, %v2442
        %v2444 = vpop.f32.mrb[0].mxu0
        %v2445 = vadd.f32 0.0, %v2444
        %2446 = vmatprep.mubr.bf16.mxu0 0
        %2447 = vmatmul.mubr.bf16.gmra.mrb[0].mxu0 %v2353
        %v2448 = vpop.f32.mrb[0].mxu0
        %v2449 = vadd.f32 0.0, %v2448
        %v2450 = vpop.f32.mrb[0].mxu0
        %v2451 = vadd.f32 0.0, %v2450
        %v2452 = vpop.f32.mrb[0].mxu0
        %v2453 = vadd.f32 0.0, %v2452
        %v2454 = vpop.f32.mrb[0].mxu0
        %v2455 = vadd.f32 0.0, %v2454
        %2456 = vmatprep.mubr.bf16.mxu0 0
        %2457 = vmatmul.mubr.bf16.gmra.mrb[0].mxu0 %v2356
        %v2458 = vpop.f32.mrb[0].mxu0
        %v2459 = vadd.f32 0.0, %v2458
        %v2460 = vpop.f32.mrb[0].mxu0
        %v2461 = vadd.f32 0.0, %v2460
        %v2462 = vpop.f32.mrb[0].mxu0
        %v2463 = vadd.f32 0.0, %v2462
        %v2464 = vpop.f32.mrb[0].mxu0
        %v2465 = vadd.f32 0.0, %v2464
        %2466 = vmatprep.mubr.bf16.mxu0 0
        %2467 = vmatmul.mubr.bf16.gmra.mrb[0].mxu0 %v2359
        %v2468 = vpop.f32.mrb[0].mxu0
        %v2469 = vadd.f32 0.0, %v2468
        %v2470 = vpop.f32.mrb[0].mxu0
        %v2471 = vadd.f32 0.0, %v2470
        %v2472 = vpop.f32.mrb[0].mxu0
        %v2473 = vadd.f32 0.0, %v2472
        %v2474 = vpop.f32.mrb[0].mxu0
        %v2475 = vadd.f32 0.0, %v2474
        %2476 = vmatprep.mubr.bf16.mxu0 0
        %2477 = vmatmul.mubr.bf16.gmra.mrb[0].mxu0 %v2362
        %v2478 = vpop.f32.mrb[0].mxu0
        %v2479 = vadd.f32 0.0, %v2478
        %v2480 = vpop.f32.mrb[0].mxu0
        %v2481 = vadd.f32 0.0, %v2480
        %v2482 = vpop.f32.mrb[0].mxu0
        %v2483 = vadd.f32 0.0, %v2482
        %v2484 = vpop.f32.mrb[0].mxu0
        %v2485 = vadd.f32 0.0, %v2484
        %2486 = vdwg.mxu0
        %2487 = vmatprep.subr.bf16.mxu0 %v2308
        %2488 = vmatpush1.bf16.msra.mxu0 %v2307
        %2489 = vmatprep.subr.bf16.mxu0 %v2312
        %2490 = vmatpush1.bf16.msra.mxu0 %v2311
        %2491 = vmatprep.subr.bf16.mxu0 %v2316
        %2492 = vmatpush1.bf16.msra.mxu0 %v2315
        %2493 = vmatprep.subr.bf16.mxu0 %v2320
        %2494 = vmatpush1.bf16.msra.mxu0 %v2319
        %2495 = vmatprep.subr.bf16.mxu0 0
        %2496 = vmatpush1.bf16.msra.mxu0 0
        %2497 = vmatprep.subr.bf16.mxu0 0
        %2498 = vmatpush1.bf16.msra.mxu0 0
        %2499 = vmatprep.subr.bf16.mxu0 0
        %2500 = vmatpush1.bf16.msra.mxu0 0
        %2501 = vmatprep.subr.bf16.mxu0 0
        %2502 = vmatpush1.bf16.msra.mxu0 0
        %2503 = vmatprep.subr.bf16.mxu0 0
        %2504 = vmatpush1.bf16.msra.mxu0 0
        %2505 = vmatprep.subr.bf16.mxu0 0
        %2506 = vmatpush1.bf16.msra.mxu0 0
        %2507 = vmatprep.subr.bf16.mxu0 0
        %2508 = vmatpush1.bf16.msra.mxu0 0
        %2509 = vmatprep.subr.bf16.mxu0 0
        %2510 = vmatpush1.bf16.msra.mxu0 0
        %2511 = vmatprep.subr.bf16.mxu0 0
        %2512 = vmatpush1.bf16.msra.mxu0 0
        %2513 = vmatprep.subr.bf16.mxu0 0
        %2514 = vmatpush1.bf16.msra.mxu0 0
        %2515 = vmatprep.subr.bf16.mxu0 0
        %2516 = vmatpush1.bf16.msra.mxu0 0
        %2517 = vmatprep.subr.bf16.mxu0 0
        %2518 = vmatpush1.bf16.msra.mxu0 0
        %2519 = vmatprep.mubr.bf16.mxu0 0
        %2520 = vmatmul.mubr.bf16.gmra.mrb[0].mxu0 %v2338
        %v2521 = vpop.f32.mrb[0].mxu0
        %v2522 = vadd.f32 0.0, %v2521
        %v2523 = vpop.f32.mrb[0].mxu0
        %v2524 = vadd.f32 0.0, %v2523
        %v2525 = vpop.f32.mrb[0].mxu0
        %v2526 = vadd.f32 0.0, %v2525
        %v2527 = vpop.f32.mrb[0].mxu0
        %v2528 = vadd.f32 0.0, %v2527
        %2529 = vmatprep.mubr.bf16.mxu0 0
        %2530 = vmatmul.mubr.bf16.gmra.mrb[0].mxu0 %v2341
        %v2531 = vpop.f32.mrb[0].mxu0
        %v2532 = vadd.f32 0.0, %v2531
        %v2533 = vpop.f32.mrb[0].mxu0
        %v2534 = vadd.f32 0.0, %v2533
        %v2535 = vpop.f32.mrb[0].mxu0
        %v2536 = vadd.f32 0.0, %v2535
        %v2537 = vpop.f32.mrb[0].mxu0
        %v2538 = vadd.f32 0.0, %v2537
        %2539 = vmatprep.mubr.bf16.mxu0 0
        %2540 = vmatmul.mubr.bf16.gmra.mrb[0].mxu0 %v2344
        %v2541 = vpop.f32.mrb[0].mxu0
        %v2542 = vadd.f32 0.0, %v2541
        %v2543 = vpop.f32.mrb[0].mxu0
        %v2544 = vadd.f32 0.0, %v2543
        %v2545 = vpop.f32.mrb[0].mxu0
        %v2546 = vadd.f32 0.0, %v2545
        %v2547 = vpop.f32.mrb[0].mxu0
        %v2548 = vadd.f32 0.0, %v2547
        %2549 = vmatprep.mubr.bf16.mxu0 0
        %2550 = vmatmul.mubr.bf16.gmra.mrb[0].mxu0 %v2347
        %v2551 = vpop.f32.mrb[0].mxu0
        %v2552 = vadd.f32 0.0, %v2551
        %v2553 = vpop.f32.mrb[0].mxu0
        %v2554 = vadd.f32 0.0, %v2553
        %v2555 = vpop.f32.mrb[0].mxu0
        %v2556 = vadd.f32 0.0, %v2555
        %v2557 = vpop.f32.mrb[0].mxu0
        %v2558 = vadd.f32 0.0, %v2557
        %2559 = vmatprep.mubr.bf16.mxu0 0
        %2560 = vmatmul.mubr.bf16.gmra.mrb[0].mxu0 %v2350
        %v2561 = vpop.f32.mrb[0].mxu0
        %v2562 = vadd.f32 0.0, %v2561
        %v2563 = vpop.f32.mrb[0].mxu0
        %v2564 = vadd.f32 0.0, %v2563
        %v2565 = vpop.f32.mrb[0].mxu0
        %v2566 = vadd.f32 0.0, %v2565
        %v2567 = vpop.f32.mrb[0].mxu0
        %v2568 = vadd.f32 0.0, %v2567
        %2569 = vmatprep.mubr.bf16.mxu0 0
        %2570 = vmatmul.mubr.bf16.gmra.mrb[0].mxu0 %v2353
        %v2571 = vpop.f32.mrb[0].mxu0
        %v2572 = vadd.f32 0.0, %v2571
        %v2573 = vpop.f32.mrb[0].mxu0
        %v2574 = vadd.f32 0.0, %v2573
        %v2575 = vpop.f32.mrb[0].mxu0
        %v2576 = vadd.f32 0.0, %v2575
        %v2577 = vpop.f32.mrb[0].mxu0
        %v2578 = vadd.f32 0.0, %v2577
        %2579 = vmatprep.mubr.bf16.mxu0 0
        %2580 = vmatmul.mubr.bf16.gmra.mrb[0].mxu0 %v2356
        %v2581 = vpop.f32.mrb[0].mxu0
        %v2582 = vadd.f32 0.0, %v2581
        %v2583 = vpop.f32.mrb[0].mxu0
        %v2584 = vadd.f32 0.0, %v2583
        %v2585 = vpop.f32.mrb[0].mxu0
        %v2586 = vadd.f32 0.0, %v2585
        %v2587 = vpop.f32.mrb[0].mxu0
        %v2588 = vadd.f32 0.0, %v2587
        %2589 = vmatprep.mubr.bf16.mxu0 0
        %2590 = vmatmul.mubr.bf16.gmra.mrb[0].mxu0 %v2359
        %v2591 = vpop.f32.mrb[0].mxu0
        %v2592 = vadd.f32 0.0, %v2591
        %v2593 = vpop.f32.mrb[0].mxu0
        %v2594 = vadd.f32 0.0, %v2593
        %v2595 = vpop.f32.mrb[0].mxu0
        %v2596 = vadd.f32 0.0, %v2595
        %v2597 = vpop.f32.mrb[0].mxu0
        %v2598 = vadd.f32 0.0, %v2597
        %2599 = vmatprep.mubr.bf16.mxu0 0
        %2600 = vmatmul.mubr.bf16.gmra.mrb[0].mxu0 %v2362
        %v2601 = vpop.f32.mrb[0].mxu0
        %v2602 = vadd.f32 0.0, %v2601
        %v2603 = vpop.f32.mrb[0].mxu0
        %v2604 = vadd.f32 0.0, %v2603
        %v2605 = vpop.f32.mrb[0].mxu0
        %v2606 = vadd.f32 0.0, %v2605
        %v2607 = vpop.f32.mrb[0].mxu0
        %v2608 = vadd.f32 0.0, %v2607
        %2609 = vdwg.mxu0
        %v2610 = vadd.f32 %v2168, %v2399
        %v2611 = vadd.f32 %v2169, %v2401
        %v2612 = vadd.f32 %v2170, %v2522
        %v2613 = vadd.f32 %v2171, %v2524
        %v2614 = vadd.f32 %v2172, %v2403
        %v2615 = vadd.f32 %v2173, %v2405
        %v2616 = vadd.f32 %v2174, %v2526
        %v2617 = vadd.f32 %v2175, %v2528
        %v2618 = vadd.f32 %v2176, %v2409
        %v2619 = vadd.f32 %v2177, %v2411
        %v2620 = vadd.f32 %v2178, %v2532
        %v2621 = vadd.f32 %v2179, %v2534
        %v2622 = vadd.f32 %v2180, %v2413
        %v2623 = vadd.f32 %v2181, %v2415
        %v2624 = vadd.f32 %v2182, %v2536
        %v2625 = vadd.f32 %v2183, %v2538
        %v2626 = vadd.f32 %v2184, %v2419
        %v2627 = vadd.f32 %v2185, %v2421
        %v2628 = vadd.f32 %v2186, %v2542
        %v2629 = vadd.f32 %v2187, %v2544
        %v2630 = vadd.f32 %v2188, %v2423
        %v2631 = vadd.f32 %v2189, %v2425
        %v2632 = vadd.f32 %v2190, %v2546
        %v2633 = vadd.f32 %v2191, %v2548
        %v2634 = vadd.f32 %v2192, %v2429
        %v2635 = vadd.f32 %v2193, %v2431
        %v2636 = vadd.f32 %v2194, %v2552
        %v2637 = vadd.f32 %v2195, %v2554
        %v2638 = vadd.f32 %v2196, %v2433
        %v2639 = vadd.f32 %v2197, %v2435
        %v2640 = vadd.f32 %v2198, %v2556
        %v2641 = vadd.f32 %v2199, %v2558
        %v2642 = vadd.f32 %v2200, %v2439
        %v2643 = vadd.f32 %v2201, %v2441
        %v2644 = vadd.f32 %v2202, %v2562
        %v2645 = vadd.f32 %v2203, %v2564
        %v2646 = vadd.f32 %v2204, %v2443
        %v2647 = vadd.f32 %v2205, %v2445
        %v2648 = vadd.f32 %v2206, %v2566
        %v2649 = vadd.f32 %v2207, %v2568
        %v2650 = vadd.f32 %v2208, %v2449
        %v2651 = vadd.f32 %v2209, %v2451
        %v2652 = vadd.f32 %v2210, %v2572
        %v2653 = vadd.f32 %v2211, %v2574
        %v2654 = vadd.f32 %v2212, %v2453
        %v2655 = vadd.f32 %v2213, %v2455
        %v2656 = vadd.f32 %v2214, %v2576
        %v2657 = vadd.f32 %v2215, %v2578
        %v2658 = vadd.f32 %v2216, %v2459
        %v2659 = vadd.f32 %v2217, %v2461
        %v2660 = vadd.f32 %v2218, %v2582
        %v2661 = vadd.f32 %v2219, %v2584
        %v2662 = vadd.f32 %v2220, %v2463
        %v2663 = vadd.f32 %v2221, %v2465
        %v2664 = vadd.f32 %v2222, %v2586
        %v2665 = vadd.f32 %v2223, %v2588
        %v2666 = vadd.f32 %v2224, %v2469
        %v2667 = vadd.f32 %v2225, %v2471
        %v2668 = vadd.f32 %v2226, %v2592
        %v2669 = vadd.f32 %v2227, %v2594
        %v2670 = vadd.f32 %v2228, %v2473
        %v2671 = vadd.f32 %v2229, %v2475
        %v2672 = vadd.f32 %v2230, %v2596
        %v2673 = vadd.f32 %v2231, %v2598
        %v2674 = vadd.f32 %v2232, %v2479
        %v2675 = vadd.f32 %v2233, %v2481
        %v2676 = vadd.f32 %v2234, %v2602
        %v2677 = vadd.f32 %v2235, %v2604
        %v2678 = vadd.f32 %v2236, %v2483
        %v2679 = vadd.f32 %v2237, %v2485
        %v2680 = vadd.f32 %v2238, %v2606
        %v2681 = vadd.f32 %v2239, %v2608
        %2682 = vst [vmem:[#allocation2] sm:$0xff] %v2610
        %2683 = vst [vmem:[#allocation2 + $0x8] sm:$0xff] %v2611
        %2684 = vst [vmem:[#allocation2 + $0x10] sm:$0xff] %v2612
        %2685 = vst [vmem:[#allocation2 + $0x18] sm:$0xff] %v2613
        %2686 = vst [vmem:[#allocation2 + $0x20] sm:$0xff] %v2614
        %2687 = vst [vmem:[#allocation2 + $0x28] sm:$0xff] %v2615
        %2688 = vst [vmem:[#allocation2 + $0x30] sm:$0xff] %v2616
        %2689 = vst [vmem:[#allocation2 + $0x38] sm:$0xff] %v2617
        %2690 = vst [vmem:[#allocation2 + $0x40] sm:$0xff] %v2618
        %2691 = vst [vmem:[#allocation2 + $0x48] sm:$0xff] %v2619
        %2692 = vst [vmem:[#allocation2 + $0x50] sm:$0xff] %v2620
        %2693 = vst [vmem:[#allocation2 + $0x58] sm:$0xff] %v2621
        %2694 = vst [vmem:[#allocation2 + $0x60] sm:$0xff] %v2622
        %2695 = vst [vmem:[#allocation2 + $0x68] sm:$0xff] %v2623
        %2696 = vst [vmem:[#allocation2 + $0x70] sm:$0xff] %v2624
        %2697 = vst [vmem:[#allocation2 + $0x78] sm:$0xff] %v2625
        %2698 = vst [vmem:[#allocation2 + $0x80] sm:$0xff] %v2626
        %2699 = vst [vmem:[#allocation2 + $0x88] sm:$0xff] %v2627
        %2700 = vst [vmem:[#allocation2 + $0x90] sm:$0xff] %v2628
        %2701 = vst [vmem:[#allocation2 + $0x98] sm:$0xff] %v2629
        %2702 = vst [vmem:[#allocation2 + $0xa0] sm:$0xff] %v2630
        %2703 = vst [vmem:[#allocation2 + $0xa8] sm:$0xff] %v2631
        %2704 = vst [vmem:[#allocation2 + $0xb0] sm:$0xff] %v2632
        %2705 = vst [vmem:[#allocation2 + $0xb8] sm:$0xff] %v2633
        %2706 = vst [vmem:[#allocation2 + $0xc0] sm:$0xff] %v2634
        %2707 = vst [vmem:[#allocation2 + $0xc8] sm:$0xff] %v2635
        %2708 = vst [vmem:[#allocation2 + $0xd0] sm:$0xff] %v2636
        %2709 = vst [vmem:[#allocation2 + $0xd8] sm:$0xff] %v2637
        %2710 = vst [vmem:[#allocation2 + $0xe0] sm:$0xff] %v2638
        %2711 = vst [vmem:[#allocation2 + $0xe8] sm:$0xff] %v2639
        %2712 = vst [vmem:[#allocation2 + $0xf0] sm:$0xff] %v2640
        %2713 = vst [vmem:[#allocation2 + $0xf8] sm:$0xff] %v2641
        %2714 = vst [vmem:[#allocation2 + $0x100] sm:$0xff] %v2642
        %2715 = vst [vmem:[#allocation2 + $0x108] sm:$0xff] %v2643
        %2716 = vst [vmem:[#allocation2 + $0x110] sm:$0xff] %v2644
        %2717 = vst [vmem:[#allocation2 + $0x118] sm:$0xff] %v2645
        %2718 = vst [vmem:[#allocation2 + $0x120] sm:$0xff] %v2646
        %2719 = vst [vmem:[#allocation2 + $0x128] sm:$0xff] %v2647
        %2720 = vst [vmem:[#allocation2 + $0x130] sm:$0xff] %v2648
        %2721 = vst [vmem:[#allocation2 + $0x138] sm:$0xff] %v2649
        %2722 = vst [vmem:[#allocation2 + $0x140] sm:$0xff] %v2650
        %2723 = vst [vmem:[#allocation2 + $0x148] sm:$0xff] %v2651
        %2724 = vst [vmem:[#allocation2 + $0x150] sm:$0xff] %v2652
        %2725 = vst [vmem:[#allocation2 + $0x158] sm:$0xff] %v2653
        %2726 = vst [vmem:[#allocation2 + $0x160] sm:$0xff] %v2654
        %2727 = vst [vmem:[#allocation2 + $0x168] sm:$0xff] %v2655
        %2728 = vst [vmem:[#allocation2 + $0x170] sm:$0xff] %v2656
        %2729 = vst [vmem:[#allocation2 + $0x178] sm:$0xff] %v2657
        %2730 = vst [vmem:[#allocation2 + $0x180] sm:$0xff] %v2658
        %2731 = vst [vmem:[#allocation2 + $0x188] sm:$0xff] %v2659
        %2732 = vst [vmem:[#allocation2 + $0x190] sm:$0xff] %v2660
        %2733 = vst [vmem:[#allocation2 + $0x198] sm:$0xff] %v2661
        %2734 = vst [vmem:[#allocation2 + $0x1a0] sm:$0xff] %v2662
        %2735 = vst [vmem:[#allocation2 + $0x1a8] sm:$0xff] %v2663
        %2736 = vst [vmem:[#allocation2 + $0x1b0] sm:$0xff] %v2664
        %2737 = vst [vmem:[#allocation2 + $0x1b8] sm:$0xff] %v2665
        %2738 = vst [vmem:[#allocation2 + $0x1c0] sm:$0xff] %v2666
        %2739 = vst [vmem:[#allocation2 + $0x1c8] sm:$0xff] %v2667
        %2740 = vst [vmem:[#allocation2 + $0x1d0] sm:$0xff] %v2668
        %2741 = vst [vmem:[#allocation2 + $0x1d8] sm:$0xff] %v2669
        %2742 = vst [vmem:[#allocation2 + $0x1e0] sm:$0xff] %v2670
        %2743 = vst [vmem:[#allocation2 + $0x1e8] sm:$0xff] %v2671
        %2744 = vst [vmem:[#allocation2 + $0x1f0] sm:$0xff] %v2672
        %2745 = vst [vmem:[#allocation2 + $0x1f8] sm:$0xff] %v2673
        %2746 = vst [vmem:[#allocation2 + $0x200] sm:$0xff] %v2674
        %2747 = vst [vmem:[#allocation2 + $0x208] sm:$0xff] %v2675
        %2748 = vst [vmem:[#allocation2 + $0x210] sm:$0xff] %v2676
        %2749 = vst [vmem:[#allocation2 + $0x218] sm:$0xff] %v2677
        %2750 = vst [vmem:[#allocation2 + $0x220] sm:$0xff] %v2678
        %2751 = vst [vmem:[#allocation2 + $0x228] sm:$0xff] %v2679
        %2752 = vst [vmem:[#allocation2 + $0x230] sm:$0xff] %v2680
        %2753 = vst [vmem:[#allocation2 + $0x238] sm:$0xff] %v2681
        %s2754 = sadd.s32 %s222, 19
        %s2755 = scalar_lea.vmem %s0, %s2754
        %v2756 = vld [vmem:[%s2755] sm:$0xff]
        %v2757 = vld [vmem:[%s2755 + $0x8] sm:$0xff]
        %v2758 = vld [vmem:[%s2755 + $0x10] sm:$0xff]
        %v2759 = vld [vmem:[%s2755 + $0x18] sm:$0xff]
        %v2760 = vld [vmem:[%s2755 + $0x20] sm:$0xff]
        %v2761 = vld [vmem:[%s2755 + $0x28] sm:$0xff]
        %v2762 = vld [vmem:[%s2755 + $0x30] sm:$0xff]
        %v2763 = vld [vmem:[%s2755 + $0x38] sm:$0xff]
        %v2764 = vld [vmem:[%s2755 + $0x40] sm:$0xff]
        %v2765 = vld [vmem:[%s2755 + $0x48] sm:$0xff]
        %v2766 = vld [vmem:[%s2755 + $0x50] sm:$0xff]
        %v2767 = vld [vmem:[%s2755 + $0x58] sm:$0xff]
        %v2768 = vld [vmem:[%s2755 + $0x60] sm:$0xff]
        %v2769 = vld [vmem:[%s2755 + $0x68] sm:$0xff]
        %v2770 = vld [vmem:[%s2755 + $0x70] sm:$0xff]
        %v2771 = vld [vmem:[%s2755 + $0x78] sm:$0xff]
        %v2772 = vld [vmem:[%s2755 + $0x80] sm:$0xff]
        %v2773 = vld [vmem:[%s2755 + $0x88] sm:$0xff]
        %v2774 = vpack.c.bf16 %v2757, %v2756
        %v2775 = vpack.c.bf16 %v2759, %v2758
        %v2776 = vpack.c.bf16 %v2761, %v2760
        %v2777 = vpack.c.bf16 %v2763, %v2762
        %v2778 = vpack.c.bf16 %v2765, %v2764
        %v2779 = vpack.c.bf16 %v2767, %v2766
        %v2780 = vpack.c.bf16 %v2769, %v2768
        %v2781 = vpack.c.bf16 %v2771, %v2770
        %v2782 = vpack.c.bf16 %v2773, %v2772
        %v2783 = vld [vmem:[#allocation2] sm:$0xff]
        %v2784 = vld [vmem:[#allocation2 + $0x8] sm:$0xff]
        %v2785 = vld [vmem:[#allocation2 + $0x10] sm:$0xff]
        %v2786 = vld [vmem:[#allocation2 + $0x18] sm:$0xff]
        %v2787 = vld [vmem:[#allocation2 + $0x20] sm:$0xff]
        %v2788 = vld [vmem:[#allocation2 + $0x28] sm:$0xff]
        %v2789 = vld [vmem:[#allocation2 + $0x30] sm:$0xff]
        %v2790 = vld [vmem:[#allocation2 + $0x38] sm:$0xff]
        %v2791 = vld [vmem:[#allocation2 + $0x40] sm:$0xff]
        %v2792 = vld [vmem:[#allocation2 + $0x48] sm:$0xff]
        %v2793 = vld [vmem:[#allocation2 + $0x50] sm:$0xff]
        %v2794 = vld [vmem:[#allocation2 + $0x58] sm:$0xff]
        %v2795 = vld [vmem:[#allocation2 + $0x60] sm:$0xff]
        %v2796 = vld [vmem:[#allocation2 + $0x68] sm:$0xff]
        %v2797 = vld [vmem:[#allocation2 + $0x70] sm:$0xff]
        %v2798 = vld [vmem:[#allocation2 + $0x78] sm:$0xff]
        %v2799 = vld [vmem:[#allocation2 + $0x80] sm:$0xff]
        %v2800 = vld [vmem:[#allocation2 + $0x88] sm:$0xff]
        %v2801 = vld [vmem:[#allocation2 + $0x90] sm:$0xff]
        %v2802 = vld [vmem:[#allocation2 + $0x98] sm:$0xff]
        %v2803 = vld [vmem:[#allocation2 + $0xa0] sm:$0xff]
        %v2804 = vld [vmem:[#allocation2 + $0xa8] sm:$0xff]
        %v2805 = vld [vmem:[#allocation2 + $0xb0] sm:$0xff]
        %v2806 = vld [vmem:[#allocation2 + $0xb8] sm:$0xff]
        %v2807 = vld [vmem:[#allocation2 + $0xc0] sm:$0xff]
        %v2808 = vld [vmem:[#allocation2 + $0xc8] sm:$0xff]
        %v2809 = vld [vmem:[#allocation2 + $0xd0] sm:$0xff]
        %v2810 = vld [vmem:[#allocation2 + $0xd8] sm:$0xff]
        %v2811 = vld [vmem:[#allocation2 + $0xe0] sm:$0xff]
        %v2812 = vld [vmem:[#allocation2 + $0xe8] sm:$0xff]
        %v2813 = vld [vmem:[#allocation2 + $0xf0] sm:$0xff]
        %v2814 = vld [vmem:[#allocation2 + $0xf8] sm:$0xff]
        %v2815 = vld [vmem:[#allocation2 + $0x100] sm:$0xff]
        %v2816 = vld [vmem:[#allocation2 + $0x108] sm:$0xff]
        %v2817 = vld [vmem:[#allocation2 + $0x110] sm:$0xff]
        %v2818 = vld [vmem:[#allocation2 + $0x118] sm:$0xff]
        %v2819 = vld [vmem:[#allocation2 + $0x120] sm:$0xff]
        %v2820 = vld [vmem:[#allocation2 + $0x128] sm:$0xff]
        %v2821 = vld [vmem:[#allocation2 + $0x130] sm:$0xff]
        %v2822 = vld [vmem:[#allocation2 + $0x138] sm:$0xff]
        %v2823 = vld [vmem:[#allocation2 + $0x140] sm:$0xff]
        %v2824 = vld [vmem:[#allocation2 + $0x148] sm:$0xff]
        %v2825 = vld [vmem:[#allocation2 + $0x150] sm:$0xff]
        %v2826 = vld [vmem:[#allocation2 + $0x158] sm:$0xff]
        %v2827 = vld [vmem:[#allocation2 + $0x160] sm:$0xff]
        %v2828 = vld [vmem:[#allocation2 + $0x168] sm:$0xff]
        %v2829 = vld [vmem:[#allocation2 + $0x170] sm:$0xff]
        %v2830 = vld [vmem:[#allocation2 + $0x178] sm:$0xff]
        %v2831 = vld [vmem:[#allocation2 + $0x180] sm:$0xff]
        %v2832 = vld [vmem:[#allocation2 + $0x188] sm:$0xff]
        %v2833 = vld [vmem:[#allocation2 + $0x190] sm:$0xff]
        %v2834 = vld [vmem:[#allocation2 + $0x198] sm:$0xff]
        %v2835 = vld [vmem:[#allocation2 + $0x1a0] sm:$0xff]
        %v2836 = vld [vmem:[#allocation2 + $0x1a8] sm:$0xff]
        %v2837 = vld [vmem:[#allocation2 + $0x1b0] sm:$0xff]
        %v2838 = vld [vmem:[#allocation2 + $0x1b8] sm:$0xff]
        %v2839 = vld [vmem:[#allocation2 + $0x1c0] sm:$0xff]
        %v2840 = vld [vmem:[#allocation2 + $0x1c8] sm:$0xff]
        %v2841 = vld [vmem:[#allocation2 + $0x1d0] sm:$0xff]
        %v2842 = vld [vmem:[#allocation2 + $0x1d8] sm:$0xff]
        %v2843 = vld [vmem:[#allocation2 + $0x1e0] sm:$0xff]
        %v2844 = vld [vmem:[#allocation2 + $0x1e8] sm:$0xff]
        %v2845 = vld [vmem:[#allocation2 + $0x1f0] sm:$0xff]
        %v2846 = vld [vmem:[#allocation2 + $0x1f8] sm:$0xff]
        %v2847 = vld [vmem:[#allocation2 + $0x200] sm:$0xff]
        %v2848 = vld [vmem:[#allocation2 + $0x208] sm:$0xff]
        %v2849 = vld [vmem:[#allocation2 + $0x210] sm:$0xff]
        %v2850 = vld [vmem:[#allocation2 + $0x218] sm:$0xff]
        %v2851 = vld [vmem:[#allocation2 + $0x220] sm:$0xff]
        %v2852 = vld [vmem:[#allocation2 + $0x228] sm:$0xff]
        %v2853 = vld [vmem:[#allocation2 + $0x230] sm:$0xff]
        %v2854 = vld [vmem:[#allocation2 + $0x238] sm:$0xff]
        %s2855 = scalar_lea.vmem [#allocation3], 512
        %v2856 = vld [vmem:[%s2855] sm:$0xff]
        %v2857 = vld [vmem:[%s2855 + $0x8] sm:$0xff]
        %v2858 = vld [vmem:[%s2855 + $0x10] sm:$0xff]
        %v2859 = vld [vmem:[%s2855 + $0x18] sm:$0xff]
        %v2860 = vld [vmem:[%s2855 + $0x20] sm:$0xff]
        %v2861 = vld [vmem:[%s2855 + $0x28] sm:$0xff]
        %v2862 = vld [vmem:[%s2855 + $0x30] sm:$0xff]
        %v2863 = vld [vmem:[%s2855 + $0x38] sm:$0xff]
        %v2864 = vld [vmem:[%s2855 + $0x40] sm:$0xff]
        %v2865 = vld [vmem:[%s2855 + $0x48] sm:$0xff]
        %v2866 = vld [vmem:[%s2855 + $0x50] sm:$0xff]
        %v2867 = vld [vmem:[%s2855 + $0x58] sm:$0xff]
        %v2868 = vld [vmem:[%s2855 + $0x60] sm:$0xff]
        %v2869 = vld [vmem:[%s2855 + $0x68] sm:$0xff]
        %v2870 = vld [vmem:[%s2855 + $0x70] sm:$0xff]
        %v2871 = vld [vmem:[%s2855 + $0x78] sm:$0xff]
        %v2888 = vunpack.c.l.b16 %v2856
        %v2889 = vunpack.c.h.b16 %v2856
        %v2890 = vunpack.c.l.b16 %v2857
        %v2891 = vunpack.c.h.b16 %v2857
        %v2892 = vunpack.c.l.b16 %v2858
        %v2893 = vunpack.c.h.b16 %v2858
        %v2894 = vunpack.c.l.b16 %v2859
        %v2895 = vunpack.c.h.b16 %v2859
        %v2896 = vunpack.c.l.b16 %v2860
        %v2897 = vunpack.c.h.b16 %v2860
        %v2898 = vunpack.c.l.b16 %v2861
        %v2899 = vunpack.c.h.b16 %v2861
        %v2900 = vunpack.c.l.b16 %v2862
        %v2901 = vunpack.c.h.b16 %v2862
        %v2902 = vunpack.c.l.b16 %v2863
        %v2903 = vunpack.c.h.b16 %v2863
        %v2904 = vunpack.c.l.b16 %v2864
        %v2905 = vunpack.c.h.b16 %v2864
        %v2906 = vunpack.c.l.b16 %v2865
        %v2907 = vunpack.c.h.b16 %v2865
        %v2908 = vunpack.c.l.b16 %v2866
        %v2909 = vunpack.c.h.b16 %v2866
        %v2910 = vunpack.c.l.b16 %v2867
        %v2911 = vunpack.c.h.b16 %v2867
        %v2912 = vunpack.c.l.b16 %v2868
        %v2913 = vunpack.c.h.b16 %v2868
        %v2914 = vunpack.c.l.b16 %v2869
        %v2915 = vunpack.c.h.b16 %v2869
        %v2916 = vunpack.c.l.b16 %v2870
        %v2917 = vunpack.c.h.b16 %v2870
        %v2918 = vunpack.c.l.b16 %v2871
        %v2919 = vunpack.c.h.b16 %v2871
        %v2920 = vpack.c.b16 %v2892, %v2888
        %v2921 = vpack.c.b16 %v2893, %v2889
        %v2922 = vpack.c.b16 %v2894, %v2890
        %v2923 = vpack.c.b16 %v2895, %v2891
        %v2924 = vpack.c.b16 %v2900, %v2896
        %v2925 = vpack.c.b16 %v2901, %v2897
        %v2926 = vpack.c.b16 %v2902, %v2898
        %v2927 = vpack.c.b16 %v2903, %v2899
        %v2928 = vpack.c.b16 %v2908, %v2904
        %v2929 = vpack.c.b16 %v2909, %v2905
        %v2930 = vpack.c.b16 %v2910, %v2906
        %v2931 = vpack.c.b16 %v2911, %v2907
        %v2932 = vpack.c.b16 %v2916, %v2912
        %v2933 = vpack.c.b16 %v2917, %v2913
        %v2934 = vpack.c.b16 %v2918, %v2914
        %v2935 = vpack.c.b16 %v2919, %v2915
        %v2953 = vsel %vm491, %v2774, 0
        %v2956 = vsel %vm491, %v2775, 0
        %v2959 = vsel %vm491, %v2776, 0
        %v2962 = vsel %vm491, %v2777, 0
        %v2965 = vsel %vm491, %v2778, 0
        %v2968 = vsel %vm491, %v2779, 0
        %v2971 = vsel %vm491, %v2780, 0
        %v2974 = vsel %vm491, %v2781, 0
        %v2977 = vsel %vm491, %v2782, 0
        %2979 = vmatprep.subr.bf16.mxu0 %v2921
        %2980 = vmatpush1.bf16.msra.mxu0 %v2920
        %2981 = vmatprep.subr.bf16.mxu0 %v2925
        %2982 = vmatpush1.bf16.msra.mxu0 %v2924
        %2983 = vmatprep.subr.bf16.mxu0 %v2929
        %2984 = vmatpush1.bf16.msra.mxu0 %v2928
        %2985 = vmatprep.subr.bf16.mxu0 %v2933
        %2986 = vmatpush1.bf16.msra.mxu0 %v2932
        %2987 = vmatprep.subr.bf16.mxu0 0
        %2988 = vmatpush1.bf16.msra.mxu0 0
        %2989 = vmatprep.subr.bf16.mxu0 0
        %2990 = vmatpush1.bf16.msra.mxu0 0
        %2991 = vmatprep.subr.bf16.mxu0 0
        %2992 = vmatpush1.bf16.msra.mxu0 0
        %2993 = vmatprep.subr.bf16.mxu0 0
        %2994 = vmatpush1.bf16.msra.mxu0 0
        %2995 = vmatprep.subr.bf16.mxu0 0
        %2996 = vmatpush1.bf16.msra.mxu0 0
        %2997 = vmatprep.subr.bf16.mxu0 0
        %2998 = vmatpush1.bf16.msra.mxu0 0
        %2999 = vmatprep.subr.bf16.mxu0 0
        %3000 = vmatpush1.bf16.msra.mxu0 0
        %3001 = vmatprep.subr.bf16.mxu0 0
        %3002 = vmatpush1.bf16.msra.mxu0 0
        %3003 = vmatprep.subr.bf16.mxu0 0
        %3004 = vmatpush1.bf16.msra.mxu0 0
        %3005 = vmatprep.subr.bf16.mxu0 0
        %3006 = vmatpush1.bf16.msra.mxu0 0
        %3007 = vmatprep.subr.bf16.mxu0 0
        %3008 = vmatpush1.bf16.msra.mxu0 0
        %3009 = vmatprep.subr.bf16.mxu0 0
        %3010 = vmatpush1.bf16.msra.mxu0 0
        %3011 = vmatprep.mubr.bf16.mxu0 0
        %3012 = vmatmul.mubr.bf16.gmra.mrb[0].mxu0 %v2953
        %v3013 = vpop.f32.mrb[0].mxu0
        %v3014 = vadd.f32 0.0, %v3013
        %v3015 = vpop.f32.mrb[0].mxu0
        %v3016 = vadd.f32 0.0, %v3015
        %v3017 = vpop.f32.mrb[0].mxu0
        %v3018 = vadd.f32 0.0, %v3017
        %v3019 = vpop.f32.mrb[0].mxu0
        %v3020 = vadd.f32 0.0, %v3019
        %3021 = vmatprep.mubr.bf16.mxu0 0
        %3022 = vmatmul.mubr.bf16.gmra.mrb[0].mxu0 %v2956
        %v3023 = vpop.f32.mrb[0].mxu0
        %v3024 = vadd.f32 0.0, %v3023
        %v3025 = vpop.f32.mrb[0].mxu0
        %v3026 = vadd.f32 0.0, %v3025
        %v3027 = vpop.f32.mrb[0].mxu0
        %v3028 = vadd.f32 0.0, %v3027
        %v3029 = vpop.f32.mrb[0].mxu0
        %v3030 = vadd.f32 0.0, %v3029
        %3031 = vmatprep.mubr.bf16.mxu0 0
        %3032 = vmatmul.mubr.bf16.gmra.mrb[0].mxu0 %v2959
        %v3033 = vpop.f32.mrb[0].mxu0
        %v3034 = vadd.f32 0.0, %v3033
        %v3035 = vpop.f32.mrb[0].mxu0
        %v3036 = vadd.f32 0.0, %v3035
        %v3037 = vpop.f32.mrb[0].mxu0
        %v3038 = vadd.f32 0.0, %v3037
        %v3039 = vpop.f32.mrb[0].mxu0
        %v3040 = vadd.f32 0.0, %v3039
        %3041 = vmatprep.mubr.bf16.mxu0 0
        %3042 = vmatmul.mubr.bf16.gmra.mrb[0].mxu0 %v2962
        %v3043 = vpop.f32.mrb[0].mxu0
        %v3044 = vadd.f32 0.0, %v3043
        %v3045 = vpop.f32.mrb[0].mxu0
        %v3046 = vadd.f32 0.0, %v3045
        %v3047 = vpop.f32.mrb[0].mxu0
        %v3048 = vadd.f32 0.0, %v3047
        %v3049 = vpop.f32.mrb[0].mxu0
        %v3050 = vadd.f32 0.0, %v3049
        %3051 = vmatprep.mubr.bf16.mxu0 0
        %3052 = vmatmul.mubr.bf16.gmra.mrb[0].mxu0 %v2965
        %v3053 = vpop.f32.mrb[0].mxu0
        %v3054 = vadd.f32 0.0, %v3053
        %v3055 = vpop.f32.mrb[0].mxu0
        %v3056 = vadd.f32 0.0, %v3055
        %v3057 = vpop.f32.mrb[0].mxu0
        %v3058 = vadd.f32 0.0, %v3057
        %v3059 = vpop.f32.mrb[0].mxu0
        %v3060 = vadd.f32 0.0, %v3059
        %3061 = vmatprep.mubr.bf16.mxu0 0
        %3062 = vmatmul.mubr.bf16.gmra.mrb[0].mxu0 %v2968
        %v3063 = vpop.f32.mrb[0].mxu0
        %v3064 = vadd.f32 0.0, %v3063
        %v3065 = vpop.f32.mrb[0].mxu0
        %v3066 = vadd.f32 0.0, %v3065
        %v3067 = vpop.f32.mrb[0].mxu0
        %v3068 = vadd.f32 0.0, %v3067
        %v3069 = vpop.f32.mrb[0].mxu0
        %v3070 = vadd.f32 0.0, %v3069
        %3071 = vmatprep.mubr.bf16.mxu0 0
        %3072 = vmatmul.mubr.bf16.gmra.mrb[0].mxu0 %v2971
        %v3073 = vpop.f32.mrb[0].mxu0
        %v3074 = vadd.f32 0.0, %v3073
        %v3075 = vpop.f32.mrb[0].mxu0
        %v3076 = vadd.f32 0.0, %v3075
        %v3077 = vpop.f32.mrb[0].mxu0
        %v3078 = vadd.f32 0.0, %v3077
        %v3079 = vpop.f32.mrb[0].mxu0
        %v3080 = vadd.f32 0.0, %v3079
        %3081 = vmatprep.mubr.bf16.mxu0 0
        %3082 = vmatmul.mubr.bf16.gmra.mrb[0].mxu0 %v2974
        %v3083 = vpop.f32.mrb[0].mxu0
        %v3084 = vadd.f32 0.0, %v3083
        %v3085 = vpop.f32.mrb[0].mxu0
        %v3086 = vadd.f32 0.0, %v3085
        %v3087 = vpop.f32.mrb[0].mxu0
        %v3088 = vadd.f32 0.0, %v3087
        %v3089 = vpop.f32.mrb[0].mxu0
        %v3090 = vadd.f32 0.0, %v3089
        %3091 = vmatprep.mubr.bf16.mxu0 0
        %3092 = vmatmul.mubr.bf16.gmra.mrb[0].mxu0 %v2977
        %v3093 = vpop.f32.mrb[0].mxu0
        %v3094 = vadd.f32 0.0, %v3093
        %v3095 = vpop.f32.mrb[0].mxu0
        %v3096 = vadd.f32 0.0, %v3095
        %v3097 = vpop.f32.mrb[0].mxu0
        %v3098 = vadd.f32 0.0, %v3097
        %v3099 = vpop.f32.mrb[0].mxu0
        %v3100 = vadd.f32 0.0, %v3099
        %3101 = vdwg.mxu0
        %3102 = vmatprep.subr.bf16.mxu0 %v2923
        %3103 = vmatpush1.bf16.msra.mxu0 %v2922
        %3104 = vmatprep.subr.bf16.mxu0 %v2927
        %3105 = vmatpush1.bf16.msra.mxu0 %v2926
        %3106 = vmatprep.subr.bf16.mxu0 %v2931
        %3107 = vmatpush1.bf16.msra.mxu0 %v2930
        %3108 = vmatprep.subr.bf16.mxu0 %v2935
        %3109 = vmatpush1.bf16.msra.mxu0 %v2934
        %3110 = vmatprep.subr.bf16.mxu0 0
        %3111 = vmatpush1.bf16.msra.mxu0 0
        %3112 = vmatprep.subr.bf16.mxu0 0
        %3113 = vmatpush1.bf16.msra.mxu0 0
        %3114 = vmatprep.subr.bf16.mxu0 0
        %3115 = vmatpush1.bf16.msra.mxu0 0
        %3116 = vmatprep.subr.bf16.mxu0 0
        %3117 = vmatpush1.bf16.msra.mxu0 0
        %3118 = vmatprep.subr.bf16.mxu0 0
        %3119 = vmatpush1.bf16.msra.mxu0 0
        %3120 = vmatprep.subr.bf16.mxu0 0
        %3121 = vmatpush1.bf16.msra.mxu0 0
        %3122 = vmatprep.subr.bf16.mxu0 0
        %3123 = vmatpush1.bf16.msra.mxu0 0
        %3124 = vmatprep.subr.bf16.mxu0 0
        %3125 = vmatpush1.bf16.msra.mxu0 0
        %3126 = vmatprep.subr.bf16.mxu0 0
        %3127 = vmatpush1.bf16.msra.mxu0 0
        %3128 = vmatprep.subr.bf16.mxu0 0
        %3129 = vmatpush1.bf16.msra.mxu0 0
        %3130 = vmatprep.subr.bf16.mxu0 0
        %3131 = vmatpush1.bf16.msra.mxu0 0
        %3132 = vmatprep.subr.bf16.mxu0 0
        %3133 = vmatpush1.bf16.msra.mxu0 0
        %3134 = vmatprep.mubr.bf16.mxu0 0
        %3135 = vmatmul.mubr.bf16.gmra.mrb[0].mxu0 %v2953
        %v3136 = vpop.f32.mrb[0].mxu0
        %v3137 = vadd.f32 0.0, %v3136
        %v3138 = vpop.f32.mrb[0].mxu0
        %v3139 = vadd.f32 0.0, %v3138
        %v3140 = vpop.f32.mrb[0].mxu0
        %v3141 = vadd.f32 0.0, %v3140
        %v3142 = vpop.f32.mrb[0].mxu0
        %v3143 = vadd.f32 0.0, %v3142
        %3144 = vmatprep.mubr.bf16.mxu0 0
        %3145 = vmatmul.mubr.bf16.gmra.mrb[0].mxu0 %v2956
        %v3146 = vpop.f32.mrb[0].mxu0
        %v3147 = vadd.f32 0.0, %v3146
        %v3148 = vpop.f32.mrb[0].mxu0
        %v3149 = vadd.f32 0.0, %v3148
        %v3150 = vpop.f32.mrb[0].mxu0
        %v3151 = vadd.f32 0.0, %v3150
        %v3152 = vpop.f32.mrb[0].mxu0
        %v3153 = vadd.f32 0.0, %v3152
        %3154 = vmatprep.mubr.bf16.mxu0 0
        %3155 = vmatmul.mubr.bf16.gmra.mrb[0].mxu0 %v2959
        %v3156 = vpop.f32.mrb[0].mxu0
        %v3157 = vadd.f32 0.0, %v3156
        %v3158 = vpop.f32.mrb[0].mxu0
        %v3159 = vadd.f32 0.0, %v3158
        %v3160 = vpop.f32.mrb[0].mxu0
        %v3161 = vadd.f32 0.0, %v3160
        %v3162 = vpop.f32.mrb[0].mxu0
        %v3163 = vadd.f32 0.0, %v3162
        %3164 = vmatprep.mubr.bf16.mxu0 0
        %3165 = vmatmul.mubr.bf16.gmra.mrb[0].mxu0 %v2962
        %v3166 = vpop.f32.mrb[0].mxu0
        %v3167 = vadd.f32 0.0, %v3166
        %v3168 = vpop.f32.mrb[0].mxu0
        %v3169 = vadd.f32 0.0, %v3168
        %v3170 = vpop.f32.mrb[0].mxu0
        %v3171 = vadd.f32 0.0, %v3170
        %v3172 = vpop.f32.mrb[0].mxu0
        %v3173 = vadd.f32 0.0, %v3172
        %3174 = vmatprep.mubr.bf16.mxu0 0
        %3175 = vmatmul.mubr.bf16.gmra.mrb[0].mxu0 %v2965
        %v3176 = vpop.f32.mrb[0].mxu0
        %v3177 = vadd.f32 0.0, %v3176
        %v3178 = vpop.f32.mrb[0].mxu0
        %v3179 = vadd.f32 0.0, %v3178
        %v3180 = vpop.f32.mrb[0].mxu0
        %v3181 = vadd.f32 0.0, %v3180
        %v3182 = vpop.f32.mrb[0].mxu0
        %v3183 = vadd.f32 0.0, %v3182
        %3184 = vmatprep.mubr.bf16.mxu0 0
        %3185 = vmatmul.mubr.bf16.gmra.mrb[0].mxu0 %v2968
        %v3186 = vpop.f32.mrb[0].mxu0
        %v3187 = vadd.f32 0.0, %v3186
        %v3188 = vpop.f32.mrb[0].mxu0
        %v3189 = vadd.f32 0.0, %v3188
        %v3190 = vpop.f32.mrb[0].mxu0
        %v3191 = vadd.f32 0.0, %v3190
        %v3192 = vpop.f32.mrb[0].mxu0
        %v3193 = vadd.f32 0.0, %v3192
        %3194 = vmatprep.mubr.bf16.mxu0 0
        %3195 = vmatmul.mubr.bf16.gmra.mrb[0].mxu0 %v2971
        %v3196 = vpop.f32.mrb[0].mxu0
        %v3197 = vadd.f32 0.0, %v3196
        %v3198 = vpop.f32.mrb[0].mxu0
        %v3199 = vadd.f32 0.0, %v3198
        %v3200 = vpop.f32.mrb[0].mxu0
        %v3201 = vadd.f32 0.0, %v3200
        %v3202 = vpop.f32.mrb[0].mxu0
        %v3203 = vadd.f32 0.0, %v3202
        %3204 = vmatprep.mubr.bf16.mxu0 0
        %3205 = vmatmul.mubr.bf16.gmra.mrb[0].mxu0 %v2974
        %v3206 = vpop.f32.mrb[0].mxu0
        %v3207 = vadd.f32 0.0, %v3206
        %v3208 = vpop.f32.mrb[0].mxu0
        %v3209 = vadd.f32 0.0, %v3208
        %v3210 = vpop.f32.mrb[0].mxu0
        %v3211 = vadd.f32 0.0, %v3210
        %v3212 = vpop.f32.mrb[0].mxu0
        %v3213 = vadd.f32 0.0, %v3212
        %3214 = vmatprep.mubr.bf16.mxu0 0
        %3215 = vmatmul.mubr.bf16.gmra.mrb[0].mxu0 %v2977
        %v3216 = vpop.f32.mrb[0].mxu0
        %v3217 = vadd.f32 0.0, %v3216
        %v3218 = vpop.f32.mrb[0].mxu0
        %v3219 = vadd.f32 0.0, %v3218
        %v3220 = vpop.f32.mrb[0].mxu0
        %v3221 = vadd.f32 0.0, %v3220
        %v3222 = vpop.f32.mrb[0].mxu0
        %v3223 = vadd.f32 0.0, %v3222
        %3224 = vdwg.mxu0
        %v3225 = vadd.f32 %v2783, %v3014
        %v3226 = vadd.f32 %v2784, %v3016
        %v3227 = vadd.f32 %v2785, %v3137
        %v3228 = vadd.f32 %v2786, %v3139
        %v3229 = vadd.f32 %v2787, %v3018
        %v3230 = vadd.f32 %v2788, %v3020
        %v3231 = vadd.f32 %v2789, %v3141
        %v3232 = vadd.f32 %v2790, %v3143
        %v3233 = vadd.f32 %v2791, %v3024
        %v3234 = vadd.f32 %v2792, %v3026
        %v3235 = vadd.f32 %v2793, %v3147
        %v3236 = vadd.f32 %v2794, %v3149
        %v3237 = vadd.f32 %v2795, %v3028
        %v3238 = vadd.f32 %v2796, %v3030
        %v3239 = vadd.f32 %v2797, %v3151
        %v3240 = vadd.f32 %v2798, %v3153
        %v3241 = vadd.f32 %v2799, %v3034
        %v3242 = vadd.f32 %v2800, %v3036
        %v3243 = vadd.f32 %v2801, %v3157
        %v3244 = vadd.f32 %v2802, %v3159
        %v3245 = vadd.f32 %v2803, %v3038
        %v3246 = vadd.f32 %v2804, %v3040
        %v3247 = vadd.f32 %v2805, %v3161
        %v3248 = vadd.f32 %v2806, %v3163
        %v3249 = vadd.f32 %v2807, %v3044
        %v3250 = vadd.f32 %v2808, %v3046
        %v3251 = vadd.f32 %v2809, %v3167
        %v3252 = vadd.f32 %v2810, %v3169
        %v3253 = vadd.f32 %v2811, %v3048
        %v3254 = vadd.f32 %v2812, %v3050
        %v3255 = vadd.f32 %v2813, %v3171
        %v3256 = vadd.f32 %v2814, %v3173
        %v3257 = vadd.f32 %v2815, %v3054
        %v3258 = vadd.f32 %v2816, %v3056
        %v3259 = vadd.f32 %v2817, %v3177
        %v3260 = vadd.f32 %v2818, %v3179
        %v3261 = vadd.f32 %v2819, %v3058
        %v3262 = vadd.f32 %v2820, %v3060
        %v3263 = vadd.f32 %v2821, %v3181
        %v3264 = vadd.f32 %v2822, %v3183
        %v3265 = vadd.f32 %v2823, %v3064
        %v3266 = vadd.f32 %v2824, %v3066
        %v3267 = vadd.f32 %v2825, %v3187
        %v3268 = vadd.f32 %v2826, %v3189
        %v3269 = vadd.f32 %v2827, %v3068
        %v3270 = vadd.f32 %v2828, %v3070
        %v3271 = vadd.f32 %v2829, %v3191
        %v3272 = vadd.f32 %v2830, %v3193
        %v3273 = vadd.f32 %v2831, %v3074
        %v3274 = vadd.f32 %v2832, %v3076
        %v3275 = vadd.f32 %v2833, %v3197
        %v3276 = vadd.f32 %v2834, %v3199
        %v3277 = vadd.f32 %v2835, %v3078
        %v3278 = vadd.f32 %v2836, %v3080
        %v3279 = vadd.f32 %v2837, %v3201
        %v3280 = vadd.f32 %v2838, %v3203
        %v3281 = vadd.f32 %v2839, %v3084
        %v3282 = vadd.f32 %v2840, %v3086
        %v3283 = vadd.f32 %v2841, %v3207
        %v3284 = vadd.f32 %v2842, %v3209
        %v3285 = vadd.f32 %v2843, %v3088
        %v3286 = vadd.f32 %v2844, %v3090
        %v3287 = vadd.f32 %v2845, %v3211
        %v3288 = vadd.f32 %v2846, %v3213
        %v3289 = vadd.f32 %v2847, %v3094
        %v3290 = vadd.f32 %v2848, %v3096
        %v3291 = vadd.f32 %v2849, %v3217
        %v3292 = vadd.f32 %v2850, %v3219
        %v3293 = vadd.f32 %v2851, %v3098
        %v3294 = vadd.f32 %v2852, %v3100
        %v3295 = vadd.f32 %v2853, %v3221
        %v3296 = vadd.f32 %v2854, %v3223
        %3297 = vst [vmem:[#allocation2] sm:$0xff] %v3225
        %3298 = vst [vmem:[#allocation2 + $0x8] sm:$0xff] %v3226
        %3299 = vst [vmem:[#allocation2 + $0x10] sm:$0xff] %v3227
        %3300 = vst [vmem:[#allocation2 + $0x18] sm:$0xff] %v3228
        %3301 = vst [vmem:[#allocation2 + $0x20] sm:$0xff] %v3229
        %3302 = vst [vmem:[#allocation2 + $0x28] sm:$0xff] %v3230
        %3303 = vst [vmem:[#allocation2 + $0x30] sm:$0xff] %v3231
        %3304 = vst [vmem:[#allocation2 + $0x38] sm:$0xff] %v3232
        %3305 = vst [vmem:[#allocation2 + $0x40] sm:$0xff] %v3233
        %3306 = vst [vmem:[#allocation2 + $0x48] sm:$0xff] %v3234
        %3307 = vst [vmem:[#allocation2 + $0x50] sm:$0xff] %v3235
        %3308 = vst [vmem:[#allocation2 + $0x58] sm:$0xff] %v3236
        %3309 = vst [vmem:[#allocation2 + $0x60] sm:$0xff] %v3237
        %3310 = vst [vmem:[#allocation2 + $0x68] sm:$0xff] %v3238
        %3311 = vst [vmem:[#allocation2 + $0x70] sm:$0xff] %v3239
        %3312 = vst [vmem:[#allocation2 + $0x78] sm:$0xff] %v3240
        %3313 = vst [vmem:[#allocation2 + $0x80] sm:$0xff] %v3241
        %3314 = vst [vmem:[#allocation2 + $0x88] sm:$0xff] %v3242
        %3315 = vst [vmem:[#allocation2 + $0x90] sm:$0xff] %v3243
        %3316 = vst [vmem:[#allocation2 + $0x98] sm:$0xff] %v3244
        %3317 = vst [vmem:[#allocation2 + $0xa0] sm:$0xff] %v3245
        %3318 = vst [vmem:[#allocation2 + $0xa8] sm:$0xff] %v3246
        %3319 = vst [vmem:[#allocation2 + $0xb0] sm:$0xff] %v3247
        %3320 = vst [vmem:[#allocation2 + $0xb8] sm:$0xff] %v3248
        %3321 = vst [vmem:[#allocation2 + $0xc0] sm:$0xff] %v3249
        %3322 = vst [vmem:[#allocation2 + $0xc8] sm:$0xff] %v3250
        %3323 = vst [vmem:[#allocation2 + $0xd0] sm:$0xff] %v3251
        %3324 = vst [vmem:[#allocation2 + $0xd8] sm:$0xff] %v3252
        %3325 = vst [vmem:[#allocation2 + $0xe0] sm:$0xff] %v3253
        %3326 = vst [vmem:[#allocation2 + $0xe8] sm:$0xff] %v3254
        %3327 = vst [vmem:[#allocation2 + $0xf0] sm:$0xff] %v3255
        %3328 = vst [vmem:[#allocation2 + $0xf8] sm:$0xff] %v3256
        %3329 = vst [vmem:[#allocation2 + $0x100] sm:$0xff] %v3257
        %3330 = vst [vmem:[#allocation2 + $0x108] sm:$0xff] %v3258
        %3331 = vst [vmem:[#allocation2 + $0x110] sm:$0xff] %v3259
        %3332 = vst [vmem:[#allocation2 + $0x118] sm:$0xff] %v3260
        %3333 = vst [vmem:[#allocation2 + $0x120] sm:$0xff] %v3261
        %3334 = vst [vmem:[#allocation2 + $0x128] sm:$0xff] %v3262
        %3335 = vst [vmem:[#allocation2 + $0x130] sm:$0xff] %v3263
        %3336 = vst [vmem:[#allocation2 + $0x138] sm:$0xff] %v3264
        %3337 = vst [vmem:[#allocation2 + $0x140] sm:$0xff] %v3265
        %3338 = vst [vmem:[#allocation2 + $0x148] sm:$0xff] %v3266
        %3339 = vst [vmem:[#allocation2 + $0x150] sm:$0xff] %v3267
        %3340 = vst [vmem:[#allocation2 + $0x158] sm:$0xff] %v3268
        %3341 = vst [vmem:[#allocation2 + $0x160] sm:$0xff] %v3269
        %3342 = vst [vmem:[#allocation2 + $0x168] sm:$0xff] %v3270
        %3343 = vst [vmem:[#allocation2 + $0x170] sm:$0xff] %v3271
        %3344 = vst [vmem:[#allocation2 + $0x178] sm:$0xff] %v3272
        %3345 = vst [vmem:[#allocation2 + $0x180] sm:$0xff] %v3273
        %3346 = vst [vmem:[#allocation2 + $0x188] sm:$0xff] %v3274
        %3347 = vst [vmem:[#allocation2 + $0x190] sm:$0xff] %v3275
        %3348 = vst [vmem:[#allocation2 + $0x198] sm:$0xff] %v3276
        %3349 = vst [vmem:[#allocation2 + $0x1a0] sm:$0xff] %v3277
        %3350 = vst [vmem:[#allocation2 + $0x1a8] sm:$0xff] %v3278
        %3351 = vst [vmem:[#allocation2 + $0x1b0] sm:$0xff] %v3279
        %3352 = vst [vmem:[#allocation2 + $0x1b8] sm:$0xff] %v3280
        %3353 = vst [vmem:[#allocation2 + $0x1c0] sm:$0xff] %v3281
        %3354 = vst [vmem:[#allocation2 + $0x1c8] sm:$0xff] %v3282
        %3355 = vst [vmem:[#allocation2 + $0x1d0] sm:$0xff] %v3283
        %3356 = vst [vmem:[#allocation2 + $0x1d8] sm:$0xff] %v3284
        %3357 = vst [vmem:[#allocation2 + $0x1e0] sm:$0xff] %v3285
        %3358 = vst [vmem:[#allocation2 + $0x1e8] sm:$0xff] %v3286
        %3359 = vst [vmem:[#allocation2 + $0x1f0] sm:$0xff] %v3287
        %3360 = vst [vmem:[#allocation2 + $0x1f8] sm:$0xff] %v3288
        %3361 = vst [vmem:[#allocation2 + $0x200] sm:$0xff] %v3289
        %3362 = vst [vmem:[#allocation2 + $0x208] sm:$0xff] %v3290
        %3363 = vst [vmem:[#allocation2 + $0x210] sm:$0xff] %v3291
        %3364 = vst [vmem:[#allocation2 + $0x218] sm:$0xff] %v3292
        %3365 = vst [vmem:[#allocation2 + $0x220] sm:$0xff] %v3293
        %3366 = vst [vmem:[#allocation2 + $0x228] sm:$0xff] %v3294
        %3367 = vst [vmem:[#allocation2 + $0x230] sm:$0xff] %v3295
        %3368 = vst [vmem:[#allocation2 + $0x238] sm:$0xff] %v3296
        %s3369 = sadd.s32 %s222, 20
        %s3370 = scalar_lea.vmem %s0, %s3369
        %v3371 = vld [vmem:[%s3370] sm:$0xff]
        %v3372 = vld [vmem:[%s3370 + $0x8] sm:$0xff]
        %v3373 = vld [vmem:[%s3370 + $0x10] sm:$0xff]
        %v3374 = vld [vmem:[%s3370 + $0x18] sm:$0xff]
        %v3375 = vld [vmem:[%s3370 + $0x20] sm:$0xff]
        %v3376 = vld [vmem:[%s3370 + $0x28] sm:$0xff]
        %v3377 = vld [vmem:[%s3370 + $0x30] sm:$0xff]
        %v3378 = vld [vmem:[%s3370 + $0x38] sm:$0xff]
        %v3379 = vld [vmem:[%s3370 + $0x40] sm:$0xff]
        %v3380 = vld [vmem:[%s3370 + $0x48] sm:$0xff]
        %v3381 = vld [vmem:[%s3370 + $0x50] sm:$0xff]
        %v3382 = vld [vmem:[%s3370 + $0x58] sm:$0xff]
        %v3383 = vld [vmem:[%s3370 + $0x60] sm:$0xff]
        %v3384 = vld [vmem:[%s3370 + $0x68] sm:$0xff]
        %v3385 = vld [vmem:[%s3370 + $0x70] sm:$0xff]
        %v3386 = vld [vmem:[%s3370 + $0x78] sm:$0xff]
        %v3387 = vld [vmem:[%s3370 + $0x80] sm:$0xff]
        %v3388 = vld [vmem:[%s3370 + $0x88] sm:$0xff]
        %v3389 = vpack.c.bf16 %v3372, %v3371
        %v3390 = vpack.c.bf16 %v3374, %v3373
        %v3391 = vpack.c.bf16 %v3376, %v3375
        %v3392 = vpack.c.bf16 %v3378, %v3377
        %v3393 = vpack.c.bf16 %v3380, %v3379
        %v3394 = vpack.c.bf16 %v3382, %v3381
        %v3395 = vpack.c.bf16 %v3384, %v3383
        %v3396 = vpack.c.bf16 %v3386, %v3385
        %v3397 = vpack.c.bf16 %v3388, %v3387
        %v3398 = vld [vmem:[#allocation2] sm:$0xff]
        %v3399 = vld [vmem:[#allocation2 + $0x8] sm:$0xff]
        %v3400 = vld [vmem:[#allocation2 + $0x10] sm:$0xff]
        %v3401 = vld [vmem:[#allocation2 + $0x18] sm:$0xff]
        %v3402 = vld [vmem:[#allocation2 + $0x20] sm:$0xff]
        %v3403 = vld [vmem:[#allocation2 + $0x28] sm:$0xff]
        %v3404 = vld [vmem:[#allocation2 + $0x30] sm:$0xff]
        %v3405 = vld [vmem:[#allocation2 + $0x38] sm:$0xff]
        %v3406 = vld [vmem:[#allocation2 + $0x40] sm:$0xff]
        %v3407 = vld [vmem:[#allocation2 + $0x48] sm:$0xff]
        %v3408 = vld [vmem:[#allocation2 + $0x50] sm:$0xff]
        %v3409 = vld [vmem:[#allocation2 + $0x58] sm:$0xff]
        %v3410 = vld [vmem:[#allocation2 + $0x60] sm:$0xff]
        %v3411 = vld [vmem:[#allocation2 + $0x68] sm:$0xff]
        %v3412 = vld [vmem:[#allocation2 + $0x70] sm:$0xff]
        %v3413 = vld [vmem:[#allocation2 + $0x78] sm:$0xff]
        %v3414 = vld [vmem:[#allocation2 + $0x80] sm:$0xff]
        %v3415 = vld [vmem:[#allocation2 + $0x88] sm:$0xff]
        %v3416 = vld [vmem:[#allocation2 + $0x90] sm:$0xff]
        %v3417 = vld [vmem:[#allocation2 + $0x98] sm:$0xff]
        %v3418 = vld [vmem:[#allocation2 + $0xa0] sm:$0xff]
        %v3419 = vld [vmem:[#allocation2 + $0xa8] sm:$0xff]
        %v3420 = vld [vmem:[#allocation2 + $0xb0] sm:$0xff]
        %v3421 = vld [vmem:[#allocation2 + $0xb8] sm:$0xff]
        %v3422 = vld [vmem:[#allocation2 + $0xc0] sm:$0xff]
        %v3423 = vld [vmem:[#allocation2 + $0xc8] sm:$0xff]
        %v3424 = vld [vmem:[#allocation2 + $0xd0] sm:$0xff]
        %v3425 = vld [vmem:[#allocation2 + $0xd8] sm:$0xff]
        %v3426 = vld [vmem:[#allocation2 + $0xe0] sm:$0xff]
        %v3427 = vld [vmem:[#allocation2 + $0xe8] sm:$0xff]
        %v3428 = vld [vmem:[#allocation2 + $0xf0] sm:$0xff]
        %v3429 = vld [vmem:[#allocation2 + $0xf8] sm:$0xff]
        %v3430 = vld [vmem:[#allocation2 + $0x100] sm:$0xff]
        %v3431 = vld [vmem:[#allocation2 + $0x108] sm:$0xff]
        %v3432 = vld [vmem:[#allocation2 + $0x110] sm:$0xff]
        %v3433 = vld [vmem:[#allocation2 + $0x118] sm:$0xff]
        %v3434 = vld [vmem:[#allocation2 + $0x120] sm:$0xff]
        %v3435 = vld [vmem:[#allocation2 + $0x128] sm:$0xff]
        %v3436 = vld [vmem:[#allocation2 + $0x130] sm:$0xff]
        %v3437 = vld [vmem:[#allocation2 + $0x138] sm:$0xff]
        %v3438 = vld [vmem:[#allocation2 + $0x140] sm:$0xff]
        %v3439 = vld [vmem:[#allocation2 + $0x148] sm:$0xff]
        %v3440 = vld [vmem:[#allocation2 + $0x150] sm:$0xff]
        %v3441 = vld [vmem:[#allocation2 + $0x158] sm:$0xff]
        %v3442 = vld [vmem:[#allocation2 + $0x160] sm:$0xff]
        %v3443 = vld [vmem:[#allocation2 + $0x168] sm:$0xff]
        %v3444 = vld [vmem:[#allocation2 + $0x170] sm:$0xff]
        %v3445 = vld [vmem:[#allocation2 + $0x178] sm:$0xff]
        %v3446 = vld [vmem:[#allocation2 + $0x180] sm:$0xff]
        %v3447 = vld [vmem:[#allocation2 + $0x188] sm:$0xff]
        %v3448 = vld [vmem:[#allocation2 + $0x190] sm:$0xff]
        %v3449 = vld [vmem:[#allocation2 + $0x198] sm:$0xff]
        %v3450 = vld [vmem:[#allocation2 + $0x1a0] sm:$0xff]
        %v3451 = vld [vmem:[#allocation2 + $0x1a8] sm:$0xff]
        %v3452 = vld [vmem:[#allocation2 + $0x1b0] sm:$0xff]
        %v3453 = vld [vmem:[#allocation2 + $0x1b8] sm:$0xff]
        %v3454 = vld [vmem:[#allocation2 + $0x1c0] sm:$0xff]
        %v3455 = vld [vmem:[#allocation2 + $0x1c8] sm:$0xff]
        %v3456 = vld [vmem:[#allocation2 + $0x1d0] sm:$0xff]
        %v3457 = vld [vmem:[#allocation2 + $0x1d8] sm:$0xff]
        %v3458 = vld [vmem:[#allocation2 + $0x1e0] sm:$0xff]
        %v3459 = vld [vmem:[#allocation2 + $0x1e8] sm:$0xff]
        %v3460 = vld [vmem:[#allocation2 + $0x1f0] sm:$0xff]
        %v3461 = vld [vmem:[#allocation2 + $0x1f8] sm:$0xff]
        %v3462 = vld [vmem:[#allocation2 + $0x200] sm:$0xff]
        %v3463 = vld [vmem:[#allocation2 + $0x208] sm:$0xff]
        %v3464 = vld [vmem:[#allocation2 + $0x210] sm:$0xff]
        %v3465 = vld [vmem:[#allocation2 + $0x218] sm:$0xff]
        %v3466 = vld [vmem:[#allocation2 + $0x220] sm:$0xff]
        %v3467 = vld [vmem:[#allocation2 + $0x228] sm:$0xff]
        %v3468 = vld [vmem:[#allocation2 + $0x230] sm:$0xff]
        %v3469 = vld [vmem:[#allocation2 + $0x238] sm:$0xff]
        %s3470 = scalar_lea.vmem [#allocation3], 640
        %v3471 = vld [vmem:[%s3470] sm:$0xff]
        %v3472 = vld [vmem:[%s3470 + $0x8] sm:$0xff]
        %v3473 = vld [vmem:[%s3470 + $0x10] sm:$0xff]
        %v3474 = vld [vmem:[%s3470 + $0x18] sm:$0xff]
        %v3475 = vld [vmem:[%s3470 + $0x20] sm:$0xff]
        %v3476 = vld [vmem:[%s3470 + $0x28] sm:$0xff]
        %v3477 = vld [vmem:[%s3470 + $0x30] sm:$0xff]
        %v3478 = vld [vmem:[%s3470 + $0x38] sm:$0xff]
        %v3479 = vld [vmem:[%s3470 + $0x40] sm:$0xff]
        %v3480 = vld [vmem:[%s3470 + $0x48] sm:$0xff]
        %v3481 = vld [vmem:[%s3470 + $0x50] sm:$0xff]
        %v3482 = vld [vmem:[%s3470 + $0x58] sm:$0xff]
        %v3483 = vld [vmem:[%s3470 + $0x60] sm:$0xff]
        %v3484 = vld [vmem:[%s3470 + $0x68] sm:$0xff]
        %v3485 = vld [vmem:[%s3470 + $0x70] sm:$0xff]
        %v3486 = vld [vmem:[%s3470 + $0x78] sm:$0xff]
        %v3503 = vunpack.c.l.b16 %v3471
        %v3504 = vunpack.c.h.b16 %v3471
        %v3505 = vunpack.c.l.b16 %v3472
        %v3506 = vunpack.c.h.b16 %v3472
        %v3507 = vunpack.c.l.b16 %v3473
        %v3508 = vunpack.c.h.b16 %v3473
        %v3509 = vunpack.c.l.b16 %v3474
        %v3510 = vunpack.c.h.b16 %v3474
        %v3511 = vunpack.c.l.b16 %v3475
        %v3512 = vunpack.c.h.b16 %v3475
        %v3513 = vunpack.c.l.b16 %v3476
        %v3514 = vunpack.c.h.b16 %v3476
        %v3515 = vunpack.c.l.b16 %v3477
        %v3516 = vunpack.c.h.b16 %v3477
        %v3517 = vunpack.c.l.b16 %v3478
        %v3518 = vunpack.c.h.b16 %v3478
        %v3519 = vunpack.c.l.b16 %v3479
        %v3520 = vunpack.c.h.b16 %v3479
        %v3521 = vunpack.c.l.b16 %v3480
        %v3522 = vunpack.c.h.b16 %v3480
        %v3523 = vunpack.c.l.b16 %v3481
        %v3524 = vunpack.c.h.b16 %v3481
        %v3525 = vunpack.c.l.b16 %v3482
        %v3526 = vunpack.c.h.b16 %v3482
        %v3527 = vunpack.c.l.b16 %v3483
        %v3528 = vunpack.c.h.b16 %v3483
        %v3529 = vunpack.c.l.b16 %v3484
        %v3530 = vunpack.c.h.b16 %v3484
        %v3531 = vunpack.c.l.b16 %v3485
        %v3532 = vunpack.c.h.b16 %v3485
        %v3533 = vunpack.c.l.b16 %v3486
        %v3534 = vunpack.c.h.b16 %v3486
        %v3535 = vpack.c.b16 %v3507, %v3503
        %v3536 = vpack.c.b16 %v3508, %v3504
        %v3537 = vpack.c.b16 %v3509, %v3505
        %v3538 = vpack.c.b16 %v3510, %v3506
        %v3539 = vpack.c.b16 %v3515, %v3511
        %v3540 = vpack.c.b16 %v3516, %v3512
        %v3541 = vpack.c.b16 %v3517, %v3513
        %v3542 = vpack.c.b16 %v3518, %v3514
        %v3543 = vpack.c.b16 %v3523, %v3519
        %v3544 = vpack.c.b16 %v3524, %v3520
        %v3545 = vpack.c.b16 %v3525, %v3521
        %v3546 = vpack.c.b16 %v3526, %v3522
        %v3547 = vpack.c.b16 %v3531, %v3527
        %v3548 = vpack.c.b16 %v3532, %v3528
        %v3549 = vpack.c.b16 %v3533, %v3529
        %v3550 = vpack.c.b16 %v3534, %v3530
        %v3568 = vsel %vm491, %v3389, 0
        %v3571 = vsel %vm491, %v3390, 0
        %v3574 = vsel %vm491, %v3391, 0
        %v3577 = vsel %vm491, %v3392, 0
        %v3580 = vsel %vm491, %v3393, 0
        %v3583 = vsel %vm491, %v3394, 0
        %v3586 = vsel %vm491, %v3395, 0
        %v3589 = vsel %vm491, %v3396, 0
        %v3592 = vsel %vm491, %v3397, 0
        %3594 = vmatprep.subr.bf16.mxu0 %v3536
        %3595 = vmatpush1.bf16.msra.mxu0 %v3535
        %3596 = vmatprep.subr.bf16.mxu0 %v3540
        %3597 = vmatpush1.bf16.msra.mxu0 %v3539
        %3598 = vmatprep.subr.bf16.mxu0 %v3544
        %3599 = vmatpush1.bf16.msra.mxu0 %v3543
        %3600 = vmatprep.subr.bf16.mxu0 %v3548
        %3601 = vmatpush1.bf16.msra.mxu0 %v3547
        %3602 = vmatprep.subr.bf16.mxu0 0
        %3603 = vmatpush1.bf16.msra.mxu0 0
        %3604 = vmatprep.subr.bf16.mxu0 0
        %3605 = vmatpush1.bf16.msra.mxu0 0
        %3606 = vmatprep.subr.bf16.mxu0 0
        %3607 = vmatpush1.bf16.msra.mxu0 0
        %3608 = vmatprep.subr.bf16.mxu0 0
        %3609 = vmatpush1.bf16.msra.mxu0 0
        %3610 = vmatprep.subr.bf16.mxu0 0
        %3611 = vmatpush1.bf16.msra.mxu0 0
        %3612 = vmatprep.subr.bf16.mxu0 0
        %3613 = vmatpush1.bf16.msra.mxu0 0
        %3614 = vmatprep.subr.bf16.mxu0 0
        %3615 = vmatpush1.bf16.msra.mxu0 0
        %3616 = vmatprep.subr.bf16.mxu0 0
        %3617 = vmatpush1.bf16.msra.mxu0 0
        %3618 = vmatprep.subr.bf16.mxu0 0
        %3619 = vmatpush1.bf16.msra.mxu0 0
        %3620 = vmatprep.subr.bf16.mxu0 0
        %3621 = vmatpush1.bf16.msra.mxu0 0
        %3622 = vmatprep.subr.bf16.mxu0 0
        %3623 = vmatpush1.bf16.msra.mxu0 0
        %3624 = vmatprep.subr.bf16.mxu0 0
        %3625 = vmatpush1.bf16.msra.mxu0 0
        %3626 = vmatprep.mubr.bf16.mxu0 0
        %3627 = vmatmul.mubr.bf16.gmra.mrb[0].mxu0 %v3568
        %v3628 = vpop.f32.mrb[0].mxu0
        %v3629 = vadd.f32 0.0, %v3628
        %v3630 = vpop.f32.mrb[0].mxu0
        %v3631 = vadd.f32 0.0, %v3630
        %v3632 = vpop.f32.mrb[0].mxu0
        %v3633 = vadd.f32 0.0, %v3632
        %v3634 = vpop.f32.mrb[0].mxu0
        %v3635 = vadd.f32 0.0, %v3634
        %3636 = vmatprep.mubr.bf16.mxu0 0
        %3637 = vmatmul.mubr.bf16.gmra.mrb[0].mxu0 %v3571
        %v3638 = vpop.f32.mrb[0].mxu0
        %v3639 = vadd.f32 0.0, %v3638
        %v3640 = vpop.f32.mrb[0].mxu0
        %v3641 = vadd.f32 0.0, %v3640
        %v3642 = vpop.f32.mrb[0].mxu0
        %v3643 = vadd.f32 0.0, %v3642
        %v3644 = vpop.f32.mrb[0].mxu0
        %v3645 = vadd.f32 0.0, %v3644
        %3646 = vmatprep.mubr.bf16.mxu0 0
        %3647 = vmatmul.mubr.bf16.gmra.mrb[0].mxu0 %v3574
        %v3648 = vpop.f32.mrb[0].mxu0
        %v3649 = vadd.f32 0.0, %v3648
        %v3650 = vpop.f32.mrb[0].mxu0
        %v3651 = vadd.f32 0.0, %v3650
        %v3652 = vpop.f32.mrb[0].mxu0
        %v3653 = vadd.f32 0.0, %v3652
        %v3654 = vpop.f32.mrb[0].mxu0
        %v3655 = vadd.f32 0.0, %v3654
        %3656 = vmatprep.mubr.bf16.mxu0 0
        %3657 = vmatmul.mubr.bf16.gmra.mrb[0].mxu0 %v3577
        %v3658 = vpop.f32.mrb[0].mxu0
        %v3659 = vadd.f32 0.0, %v3658
        %v3660 = vpop.f32.mrb[0].mxu0
        %v3661 = vadd.f32 0.0, %v3660
        %v3662 = vpop.f32.mrb[0].mxu0
        %v3663 = vadd.f32 0.0, %v3662
        %v3664 = vpop.f32.mrb[0].mxu0
        %v3665 = vadd.f32 0.0, %v3664
        %3666 = vmatprep.mubr.bf16.mxu0 0
        %3667 = vmatmul.mubr.bf16.gmra.mrb[0].mxu0 %v3580
        %v3668 = vpop.f32.mrb[0].mxu0
        %v3669 = vadd.f32 0.0, %v3668
        %v3670 = vpop.f32.mrb[0].mxu0
        %v3671 = vadd.f32 0.0, %v3670
        %v3672 = vpop.f32.mrb[0].mxu0
        %v3673 = vadd.f32 0.0, %v3672
        %v3674 = vpop.f32.mrb[0].mxu0
        %v3675 = vadd.f32 0.0, %v3674
        %3676 = vmatprep.mubr.bf16.mxu0 0
        %3677 = vmatmul.mubr.bf16.gmra.mrb[0].mxu0 %v3583
        %v3678 = vpop.f32.mrb[0].mxu0
        %v3679 = vadd.f32 0.0, %v3678
        %v3680 = vpop.f32.mrb[0].mxu0
        %v3681 = vadd.f32 0.0, %v3680
        %v3682 = vpop.f32.mrb[0].mxu0
        %v3683 = vadd.f32 0.0, %v3682
        %v3684 = vpop.f32.mrb[0].mxu0
        %v3685 = vadd.f32 0.0, %v3684
        %3686 = vmatprep.mubr.bf16.mxu0 0
        %3687 = vmatmul.mubr.bf16.gmra.mrb[0].mxu0 %v3586
        %v3688 = vpop.f32.mrb[0].mxu0
        %v3689 = vadd.f32 0.0, %v3688
        %v3690 = vpop.f32.mrb[0].mxu0
        %v3691 = vadd.f32 0.0, %v3690
        %v3692 = vpop.f32.mrb[0].mxu0
        %v3693 = vadd.f32 0.0, %v3692
        %v3694 = vpop.f32.mrb[0].mxu0
        %v3695 = vadd.f32 0.0, %v3694
        %3696 = vmatprep.mubr.bf16.mxu0 0
        %3697 = vmatmul.mubr.bf16.gmra.mrb[0].mxu0 %v3589
        %v3698 = vpop.f32.mrb[0].mxu0
        %v3699 = vadd.f32 0.0, %v3698
        %v3700 = vpop.f32.mrb[0].mxu0
        %v3701 = vadd.f32 0.0, %v3700
        %v3702 = vpop.f32.mrb[0].mxu0
        %v3703 = vadd.f32 0.0, %v3702
        %v3704 = vpop.f32.mrb[0].mxu0
        %v3705 = vadd.f32 0.0, %v3704
        %3706 = vmatprep.mubr.bf16.mxu0 0
        %3707 = vmatmul.mubr.bf16.gmra.mrb[0].mxu0 %v3592
        %v3708 = vpop.f32.mrb[0].mxu0
        %v3709 = vadd.f32 0.0, %v3708
        %v3710 = vpop.f32.mrb[0].mxu0
        %v3711 = vadd.f32 0.0, %v3710
        %v3712 = vpop.f32.mrb[0].mxu0
        %v3713 = vadd.f32 0.0, %v3712
        %v3714 = vpop.f32.mrb[0].mxu0
        %v3715 = vadd.f32 0.0, %v3714
        %3716 = vdwg.mxu0
        %3717 = vmatprep.subr.bf16.mxu0 %v3538
        %3718 = vmatpush1.bf16.msra.mxu0 %v3537
        %3719 = vmatprep.subr.bf16.mxu0 %v3542
        %3720 = vmatpush1.bf16.msra.mxu0 %v3541
        %3721 = vmatprep.subr.bf16.mxu0 %v3546
        %3722 = vmatpush1.bf16.msra.mxu0 %v3545
        %3723 = vmatprep.subr.bf16.mxu0 %v3550
        %3724 = vmatpush1.bf16.msra.mxu0 %v3549
        %3725 = vmatprep.subr.bf16.mxu0 0
        %3726 = vmatpush1.bf16.msra.mxu0 0
        %3727 = vmatprep.subr.bf16.mxu0 0
        %3728 = vmatpush1.bf16.msra.mxu0 0
        %3729 = vmatprep.subr.bf16.mxu0 0
        %3730 = vmatpush1.bf16.msra.mxu0 0
        %3731 = vmatprep.subr.bf16.mxu0 0
        %3732 = vmatpush1.bf16.msra.mxu0 0
        %3733 = vmatprep.subr.bf16.mxu0 0
        %3734 = vmatpush1.bf16.msra.mxu0 0
        %3735 = vmatprep.subr.bf16.mxu0 0
        %3736 = vmatpush1.bf16.msra.mxu0 0
        %3737 = vmatprep.subr.bf16.mxu0 0
        %3738 = vmatpush1.bf16.msra.mxu0 0
        %3739 = vmatprep.subr.bf16.mxu0 0
        %3740 = vmatpush1.bf16.msra.mxu0 0
        %3741 = vmatprep.subr.bf16.mxu0 0
        %3742 = vmatpush1.bf16.msra.mxu0 0
        %3743 = vmatprep.subr.bf16.mxu0 0
        %3744 = vmatpush1.bf16.msra.mxu0 0
        %3745 = vmatprep.subr.bf16.mxu0 0
        %3746 = vmatpush1.bf16.msra.mxu0 0
        %3747 = vmatprep.subr.bf16.mxu0 0
        %3748 = vmatpush1.bf16.msra.mxu0 0
        %3749 = vmatprep.mubr.bf16.mxu0 0
        %3750 = vmatmul.mubr.bf16.gmra.mrb[0].mxu0 %v3568
        %v3751 = vpop.f32.mrb[0].mxu0
        %v3752 = vadd.f32 0.0, %v3751
        %v3753 = vpop.f32.mrb[0].mxu0
        %v3754 = vadd.f32 0.0, %v3753
        %v3755 = vpop.f32.mrb[0].mxu0
        %v3756 = vadd.f32 0.0, %v3755
        %v3757 = vpop.f32.mrb[0].mxu0
        %v3758 = vadd.f32 0.0, %v3757
        %3759 = vmatprep.mubr.bf16.mxu0 0
        %3760 = vmatmul.mubr.bf16.gmra.mrb[0].mxu0 %v3571
        %v3761 = vpop.f32.mrb[0].mxu0
        %v3762 = vadd.f32 0.0, %v3761
        %v3763 = vpop.f32.mrb[0].mxu0
        %v3764 = vadd.f32 0.0, %v3763
        %v3765 = vpop.f32.mrb[0].mxu0
        %v3766 = vadd.f32 0.0, %v3765
        %v3767 = vpop.f32.mrb[0].mxu0
        %v3768 = vadd.f32 0.0, %v3767
        %3769 = vmatprep.mubr.bf16.mxu0 0
        %3770 = vmatmul.mubr.bf16.gmra.mrb[0].mxu0 %v3574
        %v3771 = vpop.f32.mrb[0].mxu0
        %v3772 = vadd.f32 0.0, %v3771
        %v3773 = vpop.f32.mrb[0].mxu0
        %v3774 = vadd.f32 0.0, %v3773
        %v3775 = vpop.f32.mrb[0].mxu0
        %v3776 = vadd.f32 0.0, %v3775
        %v3777 = vpop.f32.mrb[0].mxu0
        %v3778 = vadd.f32 0.0, %v3777
        %3779 = vmatprep.mubr.bf16.mxu0 0
        %3780 = vmatmul.mubr.bf16.gmra.mrb[0].mxu0 %v3577
        %v3781 = vpop.f32.mrb[0].mxu0
        %v3782 = vadd.f32 0.0, %v3781
        %v3783 = vpop.f32.mrb[0].mxu0
        %v3784 = vadd.f32 0.0, %v3783
        %v3785 = vpop.f32.mrb[0].mxu0
        %v3786 = vadd.f32 0.0, %v3785
        %v3787 = vpop.f32.mrb[0].mxu0
        %v3788 = vadd.f32 0.0, %v3787
        %3789 = vmatprep.mubr.bf16.mxu0 0
        %3790 = vmatmul.mubr.bf16.gmra.mrb[0].mxu0 %v3580
        %v3791 = vpop.f32.mrb[0].mxu0
        %v3792 = vadd.f32 0.0, %v3791
        %v3793 = vpop.f32.mrb[0].mxu0
        %v3794 = vadd.f32 0.0, %v3793
        %v3795 = vpop.f32.mrb[0].mxu0
        %v3796 = vadd.f32 0.0, %v3795
        %v3797 = vpop.f32.mrb[0].mxu0
        %v3798 = vadd.f32 0.0, %v3797
        %3799 = vmatprep.mubr.bf16.mxu0 0
        %3800 = vmatmul.mubr.bf16.gmra.mrb[0].mxu0 %v3583
        %v3801 = vpop.f32.mrb[0].mxu0
        %v3802 = vadd.f32 0.0, %v3801
        %v3803 = vpop.f32.mrb[0].mxu0
        %v3804 = vadd.f32 0.0, %v3803
        %v3805 = vpop.f32.mrb[0].mxu0
        %v3806 = vadd.f32 0.0, %v3805
        %v3807 = vpop.f32.mrb[0].mxu0
        %v3808 = vadd.f32 0.0, %v3807
        %3809 = vmatprep.mubr.bf16.mxu0 0
        %3810 = vmatmul.mubr.bf16.gmra.mrb[0].mxu0 %v3586
        %v3811 = vpop.f32.mrb[0].mxu0
        %v3812 = vadd.f32 0.0, %v3811
        %v3813 = vpop.f32.mrb[0].mxu0
        %v3814 = vadd.f32 0.0, %v3813
        %v3815 = vpop.f32.mrb[0].mxu0
        %v3816 = vadd.f32 0.0, %v3815
        %v3817 = vpop.f32.mrb[0].mxu0
        %v3818 = vadd.f32 0.0, %v3817
        %3819 = vmatprep.mubr.bf16.mxu0 0
        %3820 = vmatmul.mubr.bf16.gmra.mrb[0].mxu0 %v3589
        %v3821 = vpop.f32.mrb[0].mxu0
        %v3822 = vadd.f32 0.0, %v3821
        %v3823 = vpop.f32.mrb[0].mxu0
        %v3824 = vadd.f32 0.0, %v3823
        %v3825 = vpop.f32.mrb[0].mxu0
        %v3826 = vadd.f32 0.0, %v3825
        %v3827 = vpop.f32.mrb[0].mxu0
        %v3828 = vadd.f32 0.0, %v3827
        %3829 = vmatprep.mubr.bf16.mxu0 0
        %3830 = vmatmul.mubr.bf16.gmra.mrb[0].mxu0 %v3592
        %v3831 = vpop.f32.mrb[0].mxu0
        %v3832 = vadd.f32 0.0, %v3831
        %v3833 = vpop.f32.mrb[0].mxu0
        %v3834 = vadd.f32 0.0, %v3833
        %v3835 = vpop.f32.mrb[0].mxu0
        %v3836 = vadd.f32 0.0, %v3835
        %v3837 = vpop.f32.mrb[0].mxu0
        %v3838 = vadd.f32 0.0, %v3837
        %3839 = vdwg.mxu0
        %v3840 = vadd.f32 %v3398, %v3629
        %v3841 = vadd.f32 %v3399, %v3631
        %v3842 = vadd.f32 %v3400, %v3752
        %v3843 = vadd.f32 %v3401, %v3754
        %v3844 = vadd.f32 %v3402, %v3633
        %v3845 = vadd.f32 %v3403, %v3635
        %v3846 = vadd.f32 %v3404, %v3756
        %v3847 = vadd.f32 %v3405, %v3758
        %v3848 = vadd.f32 %v3406, %v3639
        %v3849 = vadd.f32 %v3407, %v3641
        %v3850 = vadd.f32 %v3408, %v3762
        %v3851 = vadd.f32 %v3409, %v3764
        %v3852 = vadd.f32 %v3410, %v3643
        %v3853 = vadd.f32 %v3411, %v3645
        %v3854 = vadd.f32 %v3412, %v3766
        %v3855 = vadd.f32 %v3413, %v3768
        %v3856 = vadd.f32 %v3414, %v3649
        %v3857 = vadd.f32 %v3415, %v3651
        %v3858 = vadd.f32 %v3416, %v3772
        %v3859 = vadd.f32 %v3417, %v3774
        %v3860 = vadd.f32 %v3418, %v3653
        %v3861 = vadd.f32 %v3419, %v3655
        %v3862 = vadd.f32 %v3420, %v3776
        %v3863 = vadd.f32 %v3421, %v3778
        %v3864 = vadd.f32 %v3422, %v3659
        %v3865 = vadd.f32 %v3423, %v3661
        %v3866 = vadd.f32 %v3424, %v3782
        %v3867 = vadd.f32 %v3425, %v3784
        %v3868 = vadd.f32 %v3426, %v3663
        %v3869 = vadd.f32 %v3427, %v3665
        %v3870 = vadd.f32 %v3428, %v3786
        %v3871 = vadd.f32 %v3429, %v3788
        %v3872 = vadd.f32 %v3430, %v3669
        %v3873 = vadd.f32 %v3431, %v3671
        %v3874 = vadd.f32 %v3432, %v3792
        %v3875 = vadd.f32 %v3433, %v3794
        %v3876 = vadd.f32 %v3434, %v3673
        %v3877 = vadd.f32 %v3435, %v3675
        %v3878 = vadd.f32 %v3436, %v3796
        %v3879 = vadd.f32 %v3437, %v3798
        %v3880 = vadd.f32 %v3438, %v3679
        %v3881 = vadd.f32 %v3439, %v3681
        %v3882 = vadd.f32 %v3440, %v3802
        %v3883 = vadd.f32 %v3441, %v3804
        %v3884 = vadd.f32 %v3442, %v3683
        %v3885 = vadd.f32 %v3443, %v3685
        %v3886 = vadd.f32 %v3444, %v3806
        %v3887 = vadd.f32 %v3445, %v3808
        %v3888 = vadd.f32 %v3446, %v3689
        %v3889 = vadd.f32 %v3447, %v3691
        %v3890 = vadd.f32 %v3448, %v3812
        %v3891 = vadd.f32 %v3449, %v3814
        %v3892 = vadd.f32 %v3450, %v3693
        %v3893 = vadd.f32 %v3451, %v3695
        %v3894 = vadd.f32 %v3452, %v3816
        %v3895 = vadd.f32 %v3453, %v3818
        %v3896 = vadd.f32 %v3454, %v3699
        %v3897 = vadd.f32 %v3455, %v3701
        %v3898 = vadd.f32 %v3456, %v3822
        %v3899 = vadd.f32 %v3457, %v3824
        %v3900 = vadd.f32 %v3458, %v3703
        %v3901 = vadd.f32 %v3459, %v3705
        %v3902 = vadd.f32 %v3460, %v3826
        %v3903 = vadd.f32 %v3461, %v3828
        %v3904 = vadd.f32 %v3462, %v3709
        %v3905 = vadd.f32 %v3463, %v3711
        %v3906 = vadd.f32 %v3464, %v3832
        %v3907 = vadd.f32 %v3465, %v3834
        %v3908 = vadd.f32 %v3466, %v3713
        %v3909 = vadd.f32 %v3467, %v3715
        %v3910 = vadd.f32 %v3468, %v3836
        %v3911 = vadd.f32 %v3469, %v3838
        %3912 = vst [vmem:[#allocation2] sm:$0xff] %v3840
        %3913 = vst [vmem:[#allocation2 + $0x8] sm:$0xff] %v3841
        %3914 = vst [vmem:[#allocation2 + $0x10] sm:$0xff] %v3842
        %3915 = vst [vmem:[#allocation2 + $0x18] sm:$0xff] %v3843
        %3916 = vst [vmem:[#allocation2 + $0x20] sm:$0xff] %v3844
        %3917 = vst [vmem:[#allocation2 + $0x28] sm:$0xff] %v3845
        %3918 = vst [vmem:[#allocation2 + $0x30] sm:$0xff] %v3846
        %3919 = vst [vmem:[#allocation2 + $0x38] sm:$0xff] %v3847
        %3920 = vst [vmem:[#allocation2 + $0x40] sm:$0xff] %v3848
        %3921 = vst [vmem:[#allocation2 + $0x48] sm:$0xff] %v3849
        %3922 = vst [vmem:[#allocation2 + $0x50] sm:$0xff] %v3850
        %3923 = vst [vmem:[#allocation2 + $0x58] sm:$0xff] %v3851
        %3924 = vst [vmem:[#allocation2 + $0x60] sm:$0xff] %v3852
        %3925 = vst [vmem:[#allocation2 + $0x68] sm:$0xff] %v3853
        %3926 = vst [vmem:[#allocation2 + $0x70] sm:$0xff] %v3854
        %3927 = vst [vmem:[#allocation2 + $0x78] sm:$0xff] %v3855
        %3928 = vst [vmem:[#allocation2 + $0x80] sm:$0xff] %v3856
        %3929 = vst [vmem:[#allocation2 + $0x88] sm:$0xff] %v3857
        %3930 = vst [vmem:[#allocation2 + $0x90] sm:$0xff] %v3858
        %3931 = vst [vmem:[#allocation2 + $0x98] sm:$0xff] %v3859
        %3932 = vst [vmem:[#allocation2 + $0xa0] sm:$0xff] %v3860
        %3933 = vst [vmem:[#allocation2 + $0xa8] sm:$0xff] %v3861
        %3934 = vst [vmem:[#allocation2 + $0xb0] sm:$0xff] %v3862
        %3935 = vst [vmem:[#allocation2 + $0xb8] sm:$0xff] %v3863
        %3936 = vst [vmem:[#allocation2 + $0xc0] sm:$0xff] %v3864
        %3937 = vst [vmem:[#allocation2 + $0xc8] sm:$0xff] %v3865
        %3938 = vst [vmem:[#allocation2 + $0xd0] sm:$0xff] %v3866
        %3939 = vst [vmem:[#allocation2 + $0xd8] sm:$0xff] %v3867
        %3940 = vst [vmem:[#allocation2 + $0xe0] sm:$0xff] %v3868
        %3941 = vst [vmem:[#allocation2 + $0xe8] sm:$0xff] %v3869
        %3942 = vst [vmem:[#allocation2 + $0xf0] sm:$0xff] %v3870
        %3943 = vst [vmem:[#allocation2 + $0xf8] sm:$0xff] %v3871
        %3944 = vst [vmem:[#allocation2 + $0x100] sm:$0xff] %v3872
        %3945 = vst [vmem:[#allocation2 + $0x108] sm:$0xff] %v3873
        %3946 = vst [vmem:[#allocation2 + $0x110] sm:$0xff] %v3874
        %3947 = vst [vmem:[#allocation2 + $0x118] sm:$0xff] %v3875
        %3948 = vst [vmem:[#allocation2 + $0x120] sm:$0xff] %v3876
        %3949 = vst [vmem:[#allocation2 + $0x128] sm:$0xff] %v3877
        %3950 = vst [vmem:[#allocation2 + $0x130] sm:$0xff] %v3878
        %3951 = vst [vmem:[#allocation2 + $0x138] sm:$0xff] %v3879
        %3952 = vst [vmem:[#allocation2 + $0x140] sm:$0xff] %v3880
        %3953 = vst [vmem:[#allocation2 + $0x148] sm:$0xff] %v3881
        %3954 = vst [vmem:[#allocation2 + $0x150] sm:$0xff] %v3882
        %3955 = vst [vmem:[#allocation2 + $0x158] sm:$0xff] %v3883
        %3956 = vst [vmem:[#allocation2 + $0x160] sm:$0xff] %v3884
        %3957 = vst [vmem:[#allocation2 + $0x168] sm:$0xff] %v3885
        %3958 = vst [vmem:[#allocation2 + $0x170] sm:$0xff] %v3886
        %3959 = vst [vmem:[#allocation2 + $0x178] sm:$0xff] %v3887
        %3960 = vst [vmem:[#allocation2 + $0x180] sm:$0xff] %v3888
        %3961 = vst [vmem:[#allocation2 + $0x188] sm:$0xff] %v3889
        %3962 = vst [vmem:[#allocation2 + $0x190] sm:$0xff] %v3890
        %3963 = vst [vmem:[#allocation2 + $0x198] sm:$0xff] %v3891
        %3964 = vst [vmem:[#allocation2 + $0x1a0] sm:$0xff] %v3892
        %3965 = vst [vmem:[#allocation2 + $0x1a8] sm:$0xff] %v3893
        %3966 = vst [vmem:[#allocation2 + $0x1b0] sm:$0xff] %v3894
        %3967 = vst [vmem:[#allocation2 + $0x1b8] sm:$0xff] %v3895
        %3968 = vst [vmem:[#allocation2 + $0x1c0] sm:$0xff] %v3896
        %3969 = vst [vmem:[#allocation2 + $0x1c8] sm:$0xff] %v3897
        %3970 = vst [vmem:[#allocation2 + $0x1d0] sm:$0xff] %v3898
        %3971 = vst [vmem:[#allocation2 + $0x1d8] sm:$0xff] %v3899
        %3972 = vst [vmem:[#allocation2 + $0x1e0] sm:$0xff] %v3900
        %3973 = vst [vmem:[#allocation2 + $0x1e8] sm:$0xff] %v3901
        %3974 = vst [vmem:[#allocation2 + $0x1f0] sm:$0xff] %v3902
        %3975 = vst [vmem:[#allocation2 + $0x1f8] sm:$0xff] %v3903
        %3976 = vst [vmem:[#allocation2 + $0x200] sm:$0xff] %v3904
        %3977 = vst [vmem:[#allocation2 + $0x208] sm:$0xff] %v3905
        %3978 = vst [vmem:[#allocation2 + $0x210] sm:$0xff] %v3906
        %3979 = vst [vmem:[#allocation2 + $0x218] sm:$0xff] %v3907
        %3980 = vst [vmem:[#allocation2 + $0x220] sm:$0xff] %v3908
        %3981 = vst [vmem:[#allocation2 + $0x228] sm:$0xff] %v3909
        %3982 = vst [vmem:[#allocation2 + $0x230] sm:$0xff] %v3910
        %3983 = vst [vmem:[#allocation2 + $0x238] sm:$0xff] %v3911
        %s3984 = sadd.s32 %s222, 36
        %s3985 = scalar_lea.vmem %s0, %s3984
        %v3986 = vld [vmem:[%s3985] sm:$0xff]
        %v3987 = vld [vmem:[%s3985 + $0x8] sm:$0xff]
        %v3988 = vld [vmem:[%s3985 + $0x10] sm:$0xff]
        %v3989 = vld [vmem:[%s3985 + $0x18] sm:$0xff]
        %v3990 = vld [vmem:[%s3985 + $0x20] sm:$0xff]
        %v3991 = vld [vmem:[%s3985 + $0x28] sm:$0xff]
        %v3992 = vld [vmem:[%s3985 + $0x30] sm:$0xff]
        %v3993 = vld [vmem:[%s3985 + $0x38] sm:$0xff]
        %v3994 = vld [vmem:[%s3985 + $0x40] sm:$0xff]
        %v3995 = vld [vmem:[%s3985 + $0x48] sm:$0xff]
        %v3996 = vld [vmem:[%s3985 + $0x50] sm:$0xff]
        %v3997 = vld [vmem:[%s3985 + $0x58] sm:$0xff]
        %v3998 = vld [vmem:[%s3985 + $0x60] sm:$0xff]
        %v3999 = vld [vmem:[%s3985 + $0x68] sm:$0xff]
        %v4000 = vld [vmem:[%s3985 + $0x70] sm:$0xff]
        %v4001 = vld [vmem:[%s3985 + $0x78] sm:$0xff]
        %v4002 = vld [vmem:[%s3985 + $0x80] sm:$0xff]
        %v4003 = vld [vmem:[%s3985 + $0x88] sm:$0xff]
        %v4004 = vpack.c.bf16 %v3987, %v3986
        %v4005 = vpack.c.bf16 %v3989, %v3988
        %v4006 = vpack.c.bf16 %v3991, %v3990
        %v4007 = vpack.c.bf16 %v3993, %v3992
        %v4008 = vpack.c.bf16 %v3995, %v3994
        %v4009 = vpack.c.bf16 %v3997, %v3996
        %v4010 = vpack.c.bf16 %v3999, %v3998
        %v4011 = vpack.c.bf16 %v4001, %v4000
        %v4012 = vpack.c.bf16 %v4003, %v4002
        %v4013 = vld [vmem:[#allocation2] sm:$0xff]
        %v4014 = vld [vmem:[#allocation2 + $0x8] sm:$0xff]
        %v4015 = vld [vmem:[#allocation2 + $0x10] sm:$0xff]
        %v4016 = vld [vmem:[#allocation2 + $0x18] sm:$0xff]
        %v4017 = vld [vmem:[#allocation2 + $0x20] sm:$0xff]
        %v4018 = vld [vmem:[#allocation2 + $0x28] sm:$0xff]
        %v4019 = vld [vmem:[#allocation2 + $0x30] sm:$0xff]
        %v4020 = vld [vmem:[#allocation2 + $0x38] sm:$0xff]
        %v4021 = vld [vmem:[#allocation2 + $0x40] sm:$0xff]
        %v4022 = vld [vmem:[#allocation2 + $0x48] sm:$0xff]
        %v4023 = vld [vmem:[#allocation2 + $0x50] sm:$0xff]
        %v4024 = vld [vmem:[#allocation2 + $0x58] sm:$0xff]
        %v4025 = vld [vmem:[#allocation2 + $0x60] sm:$0xff]
        %v4026 = vld [vmem:[#allocation2 + $0x68] sm:$0xff]
        %v4027 = vld [vmem:[#allocation2 + $0x70] sm:$0xff]
        %v4028 = vld [vmem:[#allocation2 + $0x78] sm:$0xff]
        %v4029 = vld [vmem:[#allocation2 + $0x80] sm:$0xff]
        %v4030 = vld [vmem:[#allocation2 + $0x88] sm:$0xff]
        %v4031 = vld [vmem:[#allocation2 + $0x90] sm:$0xff]
        %v4032 = vld [vmem:[#allocation2 + $0x98] sm:$0xff]
        %v4033 = vld [vmem:[#allocation2 + $0xa0] sm:$0xff]
        %v4034 = vld [vmem:[#allocation2 + $0xa8] sm:$0xff]
        %v4035 = vld [vmem:[#allocation2 + $0xb0] sm:$0xff]
        %v4036 = vld [vmem:[#allocation2 + $0xb8] sm:$0xff]
        %v4037 = vld [vmem:[#allocation2 + $0xc0] sm:$0xff]
        %v4038 = vld [vmem:[#allocation2 + $0xc8] sm:$0xff]
        %v4039 = vld [vmem:[#allocation2 + $0xd0] sm:$0xff]
        %v4040 = vld [vmem:[#allocation2 + $0xd8] sm:$0xff]
        %v4041 = vld [vmem:[#allocation2 + $0xe0] sm:$0xff]
        %v4042 = vld [vmem:[#allocation2 + $0xe8] sm:$0xff]
        %v4043 = vld [vmem:[#allocation2 + $0xf0] sm:$0xff]
        %v4044 = vld [vmem:[#allocation2 + $0xf8] sm:$0xff]
        %v4045 = vld [vmem:[#allocation2 + $0x100] sm:$0xff]
        %v4046 = vld [vmem:[#allocation2 + $0x108] sm:$0xff]
        %v4047 = vld [vmem:[#allocation2 + $0x110] sm:$0xff]
        %v4048 = vld [vmem:[#allocation2 + $0x118] sm:$0xff]
        %v4049 = vld [vmem:[#allocation2 + $0x120] sm:$0xff]
        %v4050 = vld [vmem:[#allocation2 + $0x128] sm:$0xff]
        %v4051 = vld [vmem:[#allocation2 + $0x130] sm:$0xff]
        %v4052 = vld [vmem:[#allocation2 + $0x138] sm:$0xff]
        %v4053 = vld [vmem:[#allocation2 + $0x140] sm:$0xff]
        %v4054 = vld [vmem:[#allocation2 + $0x148] sm:$0xff]
        %v4055 = vld [vmem:[#allocation2 + $0x150] sm:$0xff]
        %v4056 = vld [vmem:[#allocation2 + $0x158] sm:$0xff]
        %v4057 = vld [vmem:[#allocation2 + $0x160] sm:$0xff]
        %v4058 = vld [vmem:[#allocation2 + $0x168] sm:$0xff]
        %v4059 = vld [vmem:[#allocation2 + $0x170] sm:$0xff]
        %v4060 = vld [vmem:[#allocation2 + $0x178] sm:$0xff]
        %v4061 = vld [vmem:[#allocation2 + $0x180] sm:$0xff]
        %v4062 = vld [vmem:[#allocation2 + $0x188] sm:$0xff]
        %v4063 = vld [vmem:[#allocation2 + $0x190] sm:$0xff]
        %v4064 = vld [vmem:[#allocation2 + $0x198] sm:$0xff]
        %v4065 = vld [vmem:[#allocation2 + $0x1a0] sm:$0xff]
        %v4066 = vld [vmem:[#allocation2 + $0x1a8] sm:$0xff]
        %v4067 = vld [vmem:[#allocation2 + $0x1b0] sm:$0xff]
        %v4068 = vld [vmem:[#allocation2 + $0x1b8] sm:$0xff]
        %v4069 = vld [vmem:[#allocation2 + $0x1c0] sm:$0xff]
        %v4070 = vld [vmem:[#allocation2 + $0x1c8] sm:$0xff]
        %v4071 = vld [vmem:[#allocation2 + $0x1d0] sm:$0xff]
        %v4072 = vld [vmem:[#allocation2 + $0x1d8] sm:$0xff]
        %v4073 = vld [vmem:[#allocation2 + $0x1e0] sm:$0xff]
        %v4074 = vld [vmem:[#allocation2 + $0x1e8] sm:$0xff]
        %v4075 = vld [vmem:[#allocation2 + $0x1f0] sm:$0xff]
        %v4076 = vld [vmem:[#allocation2 + $0x1f8] sm:$0xff]
        %v4077 = vld [vmem:[#allocation2 + $0x200] sm:$0xff]
        %v4078 = vld [vmem:[#allocation2 + $0x208] sm:$0xff]
        %v4079 = vld [vmem:[#allocation2 + $0x210] sm:$0xff]
        %v4080 = vld [vmem:[#allocation2 + $0x218] sm:$0xff]
        %v4081 = vld [vmem:[#allocation2 + $0x220] sm:$0xff]
        %v4082 = vld [vmem:[#allocation2 + $0x228] sm:$0xff]
        %v4083 = vld [vmem:[#allocation2 + $0x230] sm:$0xff]
        %v4084 = vld [vmem:[#allocation2 + $0x238] sm:$0xff]
        %s4085 = scalar_lea.vmem [#allocation3], 768
        %v4086 = vld [vmem:[%s4085] sm:$0xff]
        %v4087 = vld [vmem:[%s4085 + $0x8] sm:$0xff]
        %v4088 = vld [vmem:[%s4085 + $0x10] sm:$0xff]
        %v4089 = vld [vmem:[%s4085 + $0x18] sm:$0xff]
        %v4090 = vld [vmem:[%s4085 + $0x20] sm:$0xff]
        %v4091 = vld [vmem:[%s4085 + $0x28] sm:$0xff]
        %v4092 = vld [vmem:[%s4085 + $0x30] sm:$0xff]
        %v4093 = vld [vmem:[%s4085 + $0x38] sm:$0xff]
        %v4094 = vld [vmem:[%s4085 + $0x40] sm:$0xff]
        %v4095 = vld [vmem:[%s4085 + $0x48] sm:$0xff]
        %v4096 = vld [vmem:[%s4085 + $0x50] sm:$0xff]
        %v4097 = vld [vmem:[%s4085 + $0x58] sm:$0xff]
        %v4098 = vld [vmem:[%s4085 + $0x60] sm:$0xff]
        %v4099 = vld [vmem:[%s4085 + $0x68] sm:$0xff]
        %v4100 = vld [vmem:[%s4085 + $0x70] sm:$0xff]
        %v4101 = vld [vmem:[%s4085 + $0x78] sm:$0xff]
        %v4118 = vunpack.c.l.b16 %v4086
        %v4119 = vunpack.c.h.b16 %v4086
        %v4120 = vunpack.c.l.b16 %v4087
        %v4121 = vunpack.c.h.b16 %v4087
        %v4122 = vunpack.c.l.b16 %v4088
        %v4123 = vunpack.c.h.b16 %v4088
        %v4124 = vunpack.c.l.b16 %v4089
        %v4125 = vunpack.c.h.b16 %v4089
        %v4126 = vunpack.c.l.b16 %v4090
        %v4127 = vunpack.c.h.b16 %v4090
        %v4128 = vunpack.c.l.b16 %v4091
        %v4129 = vunpack.c.h.b16 %v4091
        %v4130 = vunpack.c.l.b16 %v4092
        %v4131 = vunpack.c.h.b16 %v4092
        %v4132 = vunpack.c.l.b16 %v4093
        %v4133 = vunpack.c.h.b16 %v4093
        %v4134 = vunpack.c.l.b16 %v4094
        %v4135 = vunpack.c.h.b16 %v4094
        %v4136 = vunpack.c.l.b16 %v4095
        %v4137 = vunpack.c.h.b16 %v4095
        %v4138 = vunpack.c.l.b16 %v4096
        %v4139 = vunpack.c.h.b16 %v4096
        %v4140 = vunpack.c.l.b16 %v4097
        %v4141 = vunpack.c.h.b16 %v4097
        %v4142 = vunpack.c.l.b16 %v4098
        %v4143 = vunpack.c.h.b16 %v4098
        %v4144 = vunpack.c.l.b16 %v4099
        %v4145 = vunpack.c.h.b16 %v4099
        %v4146 = vunpack.c.l.b16 %v4100
        %v4147 = vunpack.c.h.b16 %v4100
        %v4148 = vunpack.c.l.b16 %v4101
        %v4149 = vunpack.c.h.b16 %v4101
        %v4150 = vpack.c.b16 %v4122, %v4118
        %v4151 = vpack.c.b16 %v4123, %v4119
        %v4152 = vpack.c.b16 %v4124, %v4120
        %v4153 = vpack.c.b16 %v4125, %v4121
        %v4154 = vpack.c.b16 %v4130, %v4126
        %v4155 = vpack.c.b16 %v4131, %v4127
        %v4156 = vpack.c.b16 %v4132, %v4128
        %v4157 = vpack.c.b16 %v4133, %v4129
        %v4158 = vpack.c.b16 %v4138, %v4134
        %v4159 = vpack.c.b16 %v4139, %v4135
        %v4160 = vpack.c.b16 %v4140, %v4136
        %v4161 = vpack.c.b16 %v4141, %v4137
        %v4162 = vpack.c.b16 %v4146, %v4142
        %v4163 = vpack.c.b16 %v4147, %v4143
        %v4164 = vpack.c.b16 %v4148, %v4144
        %v4165 = vpack.c.b16 %v4149, %v4145
        %v4183 = vsel %vm491, %v4004, 0
        %v4186 = vsel %vm491, %v4005, 0
        %v4189 = vsel %vm491, %v4006, 0
        %v4192 = vsel %vm491, %v4007, 0
        %v4195 = vsel %vm491, %v4008, 0
        %v4198 = vsel %vm491, %v4009, 0
        %v4201 = vsel %vm491, %v4010, 0
        %v4204 = vsel %vm491, %v4011, 0
        %v4207 = vsel %vm491, %v4012, 0
        %4209 = vmatprep.subr.bf16.mxu0 %v4151
        %4210 = vmatpush1.bf16.msra.mxu0 %v4150
        %4211 = vmatprep.subr.bf16.mxu0 %v4155
        %4212 = vmatpush1.bf16.msra.mxu0 %v4154
        %4213 = vmatprep.subr.bf16.mxu0 %v4159
        %4214 = vmatpush1.bf16.msra.mxu0 %v4158
        %4215 = vmatprep.subr.bf16.mxu0 %v4163
        %4216 = vmatpush1.bf16.msra.mxu0 %v4162
        %4217 = vmatprep.subr.bf16.mxu0 0
        %4218 = vmatpush1.bf16.msra.mxu0 0
        %4219 = vmatprep.subr.bf16.mxu0 0
        %4220 = vmatpush1.bf16.msra.mxu0 0
        %4221 = vmatprep.subr.bf16.mxu0 0
        %4222 = vmatpush1.bf16.msra.mxu0 0
        %4223 = vmatprep.subr.bf16.mxu0 0
        %4224 = vmatpush1.bf16.msra.mxu0 0
        %4225 = vmatprep.subr.bf16.mxu0 0
        %4226 = vmatpush1.bf16.msra.mxu0 0
        %4227 = vmatprep.subr.bf16.mxu0 0
        %4228 = vmatpush1.bf16.msra.mxu0 0
        %4229 = vmatprep.subr.bf16.mxu0 0
        %4230 = vmatpush1.bf16.msra.mxu0 0
        %4231 = vmatprep.subr.bf16.mxu0 0
        %4232 = vmatpush1.bf16.msra.mxu0 0
        %4233 = vmatprep.subr.bf16.mxu0 0
        %4234 = vmatpush1.bf16.msra.mxu0 0
        %4235 = vmatprep.subr.bf16.mxu0 0
        %4236 = vmatpush1.bf16.msra.mxu0 0
        %4237 = vmatprep.subr.bf16.mxu0 0
        %4238 = vmatpush1.bf16.msra.mxu0 0
        %4239 = vmatprep.subr.bf16.mxu0 0
        %4240 = vmatpush1.bf16.msra.mxu0 0
        %4241 = vmatprep.mubr.bf16.mxu0 0
        %4242 = vmatmul.mubr.bf16.gmra.mrb[0].mxu0 %v4183
        %v4243 = vpop.f32.mrb[0].mxu0
        %v4244 = vadd.f32 0.0, %v4243
        %v4245 = vpop.f32.mrb[0].mxu0
        %v4246 = vadd.f32 0.0, %v4245
        %v4247 = vpop.f32.mrb[0].mxu0
        %v4248 = vadd.f32 0.0, %v4247
        %v4249 = vpop.f32.mrb[0].mxu0
        %v4250 = vadd.f32 0.0, %v4249
        %4251 = vmatprep.mubr.bf16.mxu0 0
        %4252 = vmatmul.mubr.bf16.gmra.mrb[0].mxu0 %v4186
        %v4253 = vpop.f32.mrb[0].mxu0
        %v4254 = vadd.f32 0.0, %v4253
        %v4255 = vpop.f32.mrb[0].mxu0
        %v4256 = vadd.f32 0.0, %v4255
        %v4257 = vpop.f32.mrb[0].mxu0
        %v4258 = vadd.f32 0.0, %v4257
        %v4259 = vpop.f32.mrb[0].mxu0
        %v4260 = vadd.f32 0.0, %v4259
        %4261 = vmatprep.mubr.bf16.mxu0 0
        %4262 = vmatmul.mubr.bf16.gmra.mrb[0].mxu0 %v4189
        %v4263 = vpop.f32.mrb[0].mxu0
        %v4264 = vadd.f32 0.0, %v4263
        %v4265 = vpop.f32.mrb[0].mxu0
        %v4266 = vadd.f32 0.0, %v4265
        %v4267 = vpop.f32.mrb[0].mxu0
        %v4268 = vadd.f32 0.0, %v4267
        %v4269 = vpop.f32.mrb[0].mxu0
        %v4270 = vadd.f32 0.0, %v4269
        %4271 = vmatprep.mubr.bf16.mxu0 0
        %4272 = vmatmul.mubr.bf16.gmra.mrb[0].mxu0 %v4192
        %v4273 = vpop.f32.mrb[0].mxu0
        %v4274 = vadd.f32 0.0, %v4273
        %v4275 = vpop.f32.mrb[0].mxu0
        %v4276 = vadd.f32 0.0, %v4275
        %v4277 = vpop.f32.mrb[0].mxu0
        %v4278 = vadd.f32 0.0, %v4277
        %v4279 = vpop.f32.mrb[0].mxu0
        %v4280 = vadd.f32 0.0, %v4279
        %4281 = vmatprep.mubr.bf16.mxu0 0
        %4282 = vmatmul.mubr.bf16.gmra.mrb[0].mxu0 %v4195
        %v4283 = vpop.f32.mrb[0].mxu0
        %v4284 = vadd.f32 0.0, %v4283
        %v4285 = vpop.f32.mrb[0].mxu0
        %v4286 = vadd.f32 0.0, %v4285
        %v4287 = vpop.f32.mrb[0].mxu0
        %v4288 = vadd.f32 0.0, %v4287
        %v4289 = vpop.f32.mrb[0].mxu0
        %v4290 = vadd.f32 0.0, %v4289
        %4291 = vmatprep.mubr.bf16.mxu0 0
        %4292 = vmatmul.mubr.bf16.gmra.mrb[0].mxu0 %v4198
        %v4293 = vpop.f32.mrb[0].mxu0
        %v4294 = vadd.f32 0.0, %v4293
        %v4295 = vpop.f32.mrb[0].mxu0
        %v4296 = vadd.f32 0.0, %v4295
        %v4297 = vpop.f32.mrb[0].mxu0
        %v4298 = vadd.f32 0.0, %v4297
        %v4299 = vpop.f32.mrb[0].mxu0
        %v4300 = vadd.f32 0.0, %v4299
        %4301 = vmatprep.mubr.bf16.mxu0 0
        %4302 = vmatmul.mubr.bf16.gmra.mrb[0].mxu0 %v4201
        %v4303 = vpop.f32.mrb[0].mxu0
        %v4304 = vadd.f32 0.0, %v4303
        %v4305 = vpop.f32.mrb[0].mxu0
        %v4306 = vadd.f32 0.0, %v4305
        %v4307 = vpop.f32.mrb[0].mxu0
        %v4308 = vadd.f32 0.0, %v4307
        %v4309 = vpop.f32.mrb[0].mxu0
        %v4310 = vadd.f32 0.0, %v4309
        %4311 = vmatprep.mubr.bf16.mxu0 0
        %4312 = vmatmul.mubr.bf16.gmra.mrb[0].mxu0 %v4204
        %v4313 = vpop.f32.mrb[0].mxu0
        %v4314 = vadd.f32 0.0, %v4313
        %v4315 = vpop.f32.mrb[0].mxu0
        %v4316 = vadd.f32 0.0, %v4315
        %v4317 = vpop.f32.mrb[0].mxu0
        %v4318 = vadd.f32 0.0, %v4317
        %v4319 = vpop.f32.mrb[0].mxu0
        %v4320 = vadd.f32 0.0, %v4319
        %4321 = vmatprep.mubr.bf16.mxu0 0
        %4322 = vmatmul.mubr.bf16.gmra.mrb[0].mxu0 %v4207
        %v4323 = vpop.f32.mrb[0].mxu0
        %v4324 = vadd.f32 0.0, %v4323
        %v4325 = vpop.f32.mrb[0].mxu0
        %v4326 = vadd.f32 0.0, %v4325
        %v4327 = vpop.f32.mrb[0].mxu0
        %v4328 = vadd.f32 0.0, %v4327
        %v4329 = vpop.f32.mrb[0].mxu0
        %v4330 = vadd.f32 0.0, %v4329
        %4331 = vdwg.mxu0
        %4332 = vmatprep.subr.bf16.mxu0 %v4153
        %4333 = vmatpush1.bf16.msra.mxu0 %v4152
        %4334 = vmatprep.subr.bf16.mxu0 %v4157
        %4335 = vmatpush1.bf16.msra.mxu0 %v4156
        %4336 = vmatprep.subr.bf16.mxu0 %v4161
        %4337 = vmatpush1.bf16.msra.mxu0 %v4160
        %4338 = vmatprep.subr.bf16.mxu0 %v4165
        %4339 = vmatpush1.bf16.msra.mxu0 %v4164
        %4340 = vmatprep.subr.bf16.mxu0 0
        %4341 = vmatpush1.bf16.msra.mxu0 0
        %4342 = vmatprep.subr.bf16.mxu0 0
        %4343 = vmatpush1.bf16.msra.mxu0 0
        %4344 = vmatprep.subr.bf16.mxu0 0
        %4345 = vmatpush1.bf16.msra.mxu0 0
        %4346 = vmatprep.subr.bf16.mxu0 0
        %4347 = vmatpush1.bf16.msra.mxu0 0
        %4348 = vmatprep.subr.bf16.mxu0 0
        %4349 = vmatpush1.bf16.msra.mxu0 0
        %4350 = vmatprep.subr.bf16.mxu0 0
        %4351 = vmatpush1.bf16.msra.mxu0 0
        %4352 = vmatprep.subr.bf16.mxu0 0
        %4353 = vmatpush1.bf16.msra.mxu0 0
        %4354 = vmatprep.subr.bf16.mxu0 0
        %4355 = vmatpush1.bf16.msra.mxu0 0
        %4356 = vmatprep.subr.bf16.mxu0 0
        %4357 = vmatpush1.bf16.msra.mxu0 0
        %4358 = vmatprep.subr.bf16.mxu0 0
        %4359 = vmatpush1.bf16.msra.mxu0 0
        %4360 = vmatprep.subr.bf16.mxu0 0
        %4361 = vmatpush1.bf16.msra.mxu0 0
        %4362 = vmatprep.subr.bf16.mxu0 0
        %4363 = vmatpush1.bf16.msra.mxu0 0
        %4364 = vmatprep.mubr.bf16.mxu0 0
        %4365 = vmatmul.mubr.bf16.gmra.mrb[0].mxu0 %v4183
        %v4366 = vpop.f32.mrb[0].mxu0
        %v4367 = vadd.f32 0.0, %v4366
        %v4368 = vpop.f32.mrb[0].mxu0
        %v4369 = vadd.f32 0.0, %v4368
        %v4370 = vpop.f32.mrb[0].mxu0
        %v4371 = vadd.f32 0.0, %v4370
        %v4372 = vpop.f32.mrb[0].mxu0
        %v4373 = vadd.f32 0.0, %v4372
        %4374 = vmatprep.mubr.bf16.mxu0 0
        %4375 = vmatmul.mubr.bf16.gmra.mrb[0].mxu0 %v4186
        %v4376 = vpop.f32.mrb[0].mxu0
        %v4377 = vadd.f32 0.0, %v4376
        %v4378 = vpop.f32.mrb[0].mxu0
        %v4379 = vadd.f32 0.0, %v4378
        %v4380 = vpop.f32.mrb[0].mxu0
        %v4381 = vadd.f32 0.0, %v4380
        %v4382 = vpop.f32.mrb[0].mxu0
        %v4383 = vadd.f32 0.0, %v4382
        %4384 = vmatprep.mubr.bf16.mxu0 0
        %4385 = vmatmul.mubr.bf16.gmra.mrb[0].mxu0 %v4189
        %v4386 = vpop.f32.mrb[0].mxu0
        %v4387 = vadd.f32 0.0, %v4386
        %v4388 = vpop.f32.mrb[0].mxu0
        %v4389 = vadd.f32 0.0, %v4388
        %v4390 = vpop.f32.mrb[0].mxu0
        %v4391 = vadd.f32 0.0, %v4390
        %v4392 = vpop.f32.mrb[0].mxu0
        %v4393 = vadd.f32 0.0, %v4392
        %4394 = vmatprep.mubr.bf16.mxu0 0
        %4395 = vmatmul.mubr.bf16.gmra.mrb[0].mxu0 %v4192
        %v4396 = vpop.f32.mrb[0].mxu0
        %v4397 = vadd.f32 0.0, %v4396
        %v4398 = vpop.f32.mrb[0].mxu0
        %v4399 = vadd.f32 0.0, %v4398
        %v4400 = vpop.f32.mrb[0].mxu0
        %v4401 = vadd.f32 0.0, %v4400
        %v4402 = vpop.f32.mrb[0].mxu0
        %v4403 = vadd.f32 0.0, %v4402
        %4404 = vmatprep.mubr.bf16.mxu0 0
        %4405 = vmatmul.mubr.bf16.gmra.mrb[0].mxu0 %v4195
        %v4406 = vpop.f32.mrb[0].mxu0
        %v4407 = vadd.f32 0.0, %v4406
        %v4408 = vpop.f32.mrb[0].mxu0
        %v4409 = vadd.f32 0.0, %v4408
        %v4410 = vpop.f32.mrb[0].mxu0
        %v4411 = vadd.f32 0.0, %v4410
        %v4412 = vpop.f32.mrb[0].mxu0
        %v4413 = vadd.f32 0.0, %v4412
        %4414 = vmatprep.mubr.bf16.mxu0 0
        %4415 = vmatmul.mubr.bf16.gmra.mrb[0].mxu0 %v4198
        %v4416 = vpop.f32.mrb[0].mxu0
        %v4417 = vadd.f32 0.0, %v4416
        %v4418 = vpop.f32.mrb[0].mxu0
        %v4419 = vadd.f32 0.0, %v4418
        %v4420 = vpop.f32.mrb[0].mxu0
        %v4421 = vadd.f32 0.0, %v4420
        %v4422 = vpop.f32.mrb[0].mxu0
        %v4423 = vadd.f32 0.0, %v4422
        %4424 = vmatprep.mubr.bf16.mxu0 0
        %4425 = vmatmul.mubr.bf16.gmra.mrb[0].mxu0 %v4201
        %v4426 = vpop.f32.mrb[0].mxu0
        %v4427 = vadd.f32 0.0, %v4426
        %v4428 = vpop.f32.mrb[0].mxu0
        %v4429 = vadd.f32 0.0, %v4428
        %v4430 = vpop.f32.mrb[0].mxu0
        %v4431 = vadd.f32 0.0, %v4430
        %v4432 = vpop.f32.mrb[0].mxu0
        %v4433 = vadd.f32 0.0, %v4432
        %4434 = vmatprep.mubr.bf16.mxu0 0
        %4435 = vmatmul.mubr.bf16.gmra.mrb[0].mxu0 %v4204
        %v4436 = vpop.f32.mrb[0].mxu0
        %v4437 = vadd.f32 0.0, %v4436
        %v4438 = vpop.f32.mrb[0].mxu0
        %v4439 = vadd.f32 0.0, %v4438
        %v4440 = vpop.f32.mrb[0].mxu0
        %v4441 = vadd.f32 0.0, %v4440
        %v4442 = vpop.f32.mrb[0].mxu0
        %v4443 = vadd.f32 0.0, %v4442
        %4444 = vmatprep.mubr.bf16.mxu0 0
        %4445 = vmatmul.mubr.bf16.gmra.mrb[0].mxu0 %v4207
        %v4446 = vpop.f32.mrb[0].mxu0
        %v4447 = vadd.f32 0.0, %v4446
        %v4448 = vpop.f32.mrb[0].mxu0
        %v4449 = vadd.f32 0.0, %v4448
        %v4450 = vpop.f32.mrb[0].mxu0
        %v4451 = vadd.f32 0.0, %v4450
        %v4452 = vpop.f32.mrb[0].mxu0
        %v4453 = vadd.f32 0.0, %v4452
        %4454 = vdwg.mxu0
        %v4455 = vadd.f32 %v4013, %v4244
        %v4456 = vadd.f32 %v4014, %v4246
        %v4457 = vadd.f32 %v4015, %v4367
        %v4458 = vadd.f32 %v4016, %v4369
        %v4459 = vadd.f32 %v4017, %v4248
        %v4460 = vadd.f32 %v4018, %v4250
        %v4461 = vadd.f32 %v4019, %v4371
        %v4462 = vadd.f32 %v4020, %v4373
        %v4463 = vadd.f32 %v4021, %v4254
        %v4464 = vadd.f32 %v4022, %v4256
        %v4465 = vadd.f32 %v4023, %v4377
        %v4466 = vadd.f32 %v4024, %v4379
        %v4467 = vadd.f32 %v4025, %v4258
        %v4468 = vadd.f32 %v4026, %v4260
        %v4469 = vadd.f32 %v4027, %v4381
        %v4470 = vadd.f32 %v4028, %v4383
        %v4471 = vadd.f32 %v4029, %v4264
        %v4472 = vadd.f32 %v4030, %v4266
        %v4473 = vadd.f32 %v4031, %v4387
        %v4474 = vadd.f32 %v4032, %v4389
        %v4475 = vadd.f32 %v4033, %v4268
        %v4476 = vadd.f32 %v4034, %v4270
        %v4477 = vadd.f32 %v4035, %v4391
        %v4478 = vadd.f32 %v4036, %v4393
        %v4479 = vadd.f32 %v4037, %v4274
        %v4480 = vadd.f32 %v4038, %v4276
        %v4481 = vadd.f32 %v4039, %v4397
        %v4482 = vadd.f32 %v4040, %v4399
        %v4483 = vadd.f32 %v4041, %v4278
        %v4484 = vadd.f32 %v4042, %v4280
        %v4485 = vadd.f32 %v4043, %v4401
        %v4486 = vadd.f32 %v4044, %v4403
        %v4487 = vadd.f32 %v4045, %v4284
        %v4488 = vadd.f32 %v4046, %v4286
        %v4489 = vadd.f32 %v4047, %v4407
        %v4490 = vadd.f32 %v4048, %v4409
        %v4491 = vadd.f32 %v4049, %v4288
        %v4492 = vadd.f32 %v4050, %v4290
        %v4493 = vadd.f32 %v4051, %v4411
        %v4494 = vadd.f32 %v4052, %v4413
        %v4495 = vadd.f32 %v4053, %v4294
        %v4496 = vadd.f32 %v4054, %v4296
        %v4497 = vadd.f32 %v4055, %v4417
        %v4498 = vadd.f32 %v4056, %v4419
        %v4499 = vadd.f32 %v4057, %v4298
        %v4500 = vadd.f32 %v4058, %v4300
        %v4501 = vadd.f32 %v4059, %v4421
        %v4502 = vadd.f32 %v4060, %v4423
        %v4503 = vadd.f32 %v4061, %v4304
        %v4504 = vadd.f32 %v4062, %v4306
        %v4505 = vadd.f32 %v4063, %v4427
        %v4506 = vadd.f32 %v4064, %v4429
        %v4507 = vadd.f32 %v4065, %v4308
        %v4508 = vadd.f32 %v4066, %v4310
        %v4509 = vadd.f32 %v4067, %v4431
        %v4510 = vadd.f32 %v4068, %v4433
        %v4511 = vadd.f32 %v4069, %v4314
        %v4512 = vadd.f32 %v4070, %v4316
        %v4513 = vadd.f32 %v4071, %v4437
        %v4514 = vadd.f32 %v4072, %v4439
        %v4515 = vadd.f32 %v4073, %v4318
        %v4516 = vadd.f32 %v4074, %v4320
        %v4517 = vadd.f32 %v4075, %v4441
        %v4518 = vadd.f32 %v4076, %v4443
        %v4519 = vadd.f32 %v4077, %v4324
        %v4520 = vadd.f32 %v4078, %v4326
        %v4521 = vadd.f32 %v4079, %v4447
        %v4522 = vadd.f32 %v4080, %v4449
        %v4523 = vadd.f32 %v4081, %v4328
        %v4524 = vadd.f32 %v4082, %v4330
        %v4525 = vadd.f32 %v4083, %v4451
        %v4526 = vadd.f32 %v4084, %v4453
        %4527 = vst [vmem:[#allocation2] sm:$0xff] %v4455
        %4528 = vst [vmem:[#allocation2 + $0x8] sm:$0xff] %v4456
        %4529 = vst [vmem:[#allocation2 + $0x10] sm:$0xff] %v4457
        %4530 = vst [vmem:[#allocation2 + $0x18] sm:$0xff] %v4458
        %4531 = vst [vmem:[#allocation2 + $0x20] sm:$0xff] %v4459
        %4532 = vst [vmem:[#allocation2 + $0x28] sm:$0xff] %v4460
        %4533 = vst [vmem:[#allocation2 + $0x30] sm:$0xff] %v4461
        %4534 = vst [vmem:[#allocation2 + $0x38] sm:$0xff] %v4462
        %4535 = vst [vmem:[#allocation2 + $0x40] sm:$0xff] %v4463
        %4536 = vst [vmem:[#allocation2 + $0x48] sm:$0xff] %v4464
        %4537 = vst [vmem:[#allocation2 + $0x50] sm:$0xff] %v4465
        %4538 = vst [vmem:[#allocation2 + $0x58] sm:$0xff] %v4466
        %4539 = vst [vmem:[#allocation2 + $0x60] sm:$0xff] %v4467
        %4540 = vst [vmem:[#allocation2 + $0x68] sm:$0xff] %v4468
        %4541 = vst [vmem:[#allocation2 + $0x70] sm:$0xff] %v4469
        %4542 = vst [vmem:[#allocation2 + $0x78] sm:$0xff] %v4470
        %4543 = vst [vmem:[#allocation2 + $0x80] sm:$0xff] %v4471
        %4544 = vst [vmem:[#allocation2 + $0x88] sm:$0xff] %v4472
        %4545 = vst [vmem:[#allocation2 + $0x90] sm:$0xff] %v4473
        %4546 = vst [vmem:[#allocation2 + $0x98] sm:$0xff] %v4474
        %4547 = vst [vmem:[#allocation2 + $0xa0] sm:$0xff] %v4475
        %4548 = vst [vmem:[#allocation2 + $0xa8] sm:$0xff] %v4476
        %4549 = vst [vmem:[#allocation2 + $0xb0] sm:$0xff] %v4477
        %4550 = vst [vmem:[#allocation2 + $0xb8] sm:$0xff] %v4478
        %4551 = vst [vmem:[#allocation2 + $0xc0] sm:$0xff] %v4479
        %4552 = vst [vmem:[#allocation2 + $0xc8] sm:$0xff] %v4480
        %4553 = vst [vmem:[#allocation2 + $0xd0] sm:$0xff] %v4481
        %4554 = vst [vmem:[#allocation2 + $0xd8] sm:$0xff] %v4482
        %4555 = vst [vmem:[#allocation2 + $0xe0] sm:$0xff] %v4483
        %4556 = vst [vmem:[#allocation2 + $0xe8] sm:$0xff] %v4484
        %4557 = vst [vmem:[#allocation2 + $0xf0] sm:$0xff] %v4485
        %4558 = vst [vmem:[#allocation2 + $0xf8] sm:$0xff] %v4486
        %4559 = vst [vmem:[#allocation2 + $0x100] sm:$0xff] %v4487
        %4560 = vst [vmem:[#allocation2 + $0x108] sm:$0xff] %v4488
        %4561 = vst [vmem:[#allocation2 + $0x110] sm:$0xff] %v4489
        %4562 = vst [vmem:[#allocation2 + $0x118] sm:$0xff] %v4490
        %4563 = vst [vmem:[#allocation2 + $0x120] sm:$0xff] %v4491
        %4564 = vst [vmem:[#allocation2 + $0x128] sm:$0xff] %v4492
        %4565 = vst [vmem:[#allocation2 + $0x130] sm:$0xff] %v4493
        %4566 = vst [vmem:[#allocation2 + $0x138] sm:$0xff] %v4494
        %4567 = vst [vmem:[#allocation2 + $0x140] sm:$0xff] %v4495
        %4568 = vst [vmem:[#allocation2 + $0x148] sm:$0xff] %v4496
        %4569 = vst [vmem:[#allocation2 + $0x150] sm:$0xff] %v4497
        %4570 = vst [vmem:[#allocation2 + $0x158] sm:$0xff] %v4498
        %4571 = vst [vmem:[#allocation2 + $0x160] sm:$0xff] %v4499
        %4572 = vst [vmem:[#allocation2 + $0x168] sm:$0xff] %v4500
        %4573 = vst [vmem:[#allocation2 + $0x170] sm:$0xff] %v4501
        %4574 = vst [vmem:[#allocation2 + $0x178] sm:$0xff] %v4502
        %4575 = vst [vmem:[#allocation2 + $0x180] sm:$0xff] %v4503
        %4576 = vst [vmem:[#allocation2 + $0x188] sm:$0xff] %v4504
        %4577 = vst [vmem:[#allocation2 + $0x190] sm:$0xff] %v4505
        %4578 = vst [vmem:[#allocation2 + $0x198] sm:$0xff] %v4506
        %4579 = vst [vmem:[#allocation2 + $0x1a0] sm:$0xff] %v4507
        %4580 = vst [vmem:[#allocation2 + $0x1a8] sm:$0xff] %v4508
        %4581 = vst [vmem:[#allocation2 + $0x1b0] sm:$0xff] %v4509
        %4582 = vst [vmem:[#allocation2 + $0x1b8] sm:$0xff] %v4510
        %4583 = vst [vmem:[#allocation2 + $0x1c0] sm:$0xff] %v4511
        %4584 = vst [vmem:[#allocation2 + $0x1c8] sm:$0xff] %v4512
        %4585 = vst [vmem:[#allocation2 + $0x1d0] sm:$0xff] %v4513
        %4586 = vst [vmem:[#allocation2 + $0x1d8] sm:$0xff] %v4514
        %4587 = vst [vmem:[#allocation2 + $0x1e0] sm:$0xff] %v4515
        %4588 = vst [vmem:[#allocation2 + $0x1e8] sm:$0xff] %v4516
        %4589 = vst [vmem:[#allocation2 + $0x1f0] sm:$0xff] %v4517
        %4590 = vst [vmem:[#allocation2 + $0x1f8] sm:$0xff] %v4518
        %4591 = vst [vmem:[#allocation2 + $0x200] sm:$0xff] %v4519
        %4592 = vst [vmem:[#allocation2 + $0x208] sm:$0xff] %v4520
        %4593 = vst [vmem:[#allocation2 + $0x210] sm:$0xff] %v4521
        %4594 = vst [vmem:[#allocation2 + $0x218] sm:$0xff] %v4522
        %4595 = vst [vmem:[#allocation2 + $0x220] sm:$0xff] %v4523
        %4596 = vst [vmem:[#allocation2 + $0x228] sm:$0xff] %v4524
        %4597 = vst [vmem:[#allocation2 + $0x230] sm:$0xff] %v4525
        %4598 = vst [vmem:[#allocation2 + $0x238] sm:$0xff] %v4526
        %s4599 = sadd.s32 %s222, 37
        %s4600 = scalar_lea.vmem %s0, %s4599
        %v4601 = vld [vmem:[%s4600] sm:$0xff]
        %v4602 = vld [vmem:[%s4600 + $0x8] sm:$0xff]
        %v4603 = vld [vmem:[%s4600 + $0x10] sm:$0xff]
        %v4604 = vld [vmem:[%s4600 + $0x18] sm:$0xff]
        %v4605 = vld [vmem:[%s4600 + $0x20] sm:$0xff]
        %v4606 = vld [vmem:[%s4600 + $0x28] sm:$0xff]
        %v4607 = vld [vmem:[%s4600 + $0x30] sm:$0xff]
        %v4608 = vld [vmem:[%s4600 + $0x38] sm:$0xff]
        %v4609 = vld [vmem:[%s4600 + $0x40] sm:$0xff]
        %v4610 = vld [vmem:[%s4600 + $0x48] sm:$0xff]
        %v4611 = vld [vmem:[%s4600 + $0x50] sm:$0xff]
        %v4612 = vld [vmem:[%s4600 + $0x58] sm:$0xff]
        %v4613 = vld [vmem:[%s4600 + $0x60] sm:$0xff]
        %v4614 = vld [vmem:[%s4600 + $0x68] sm:$0xff]
        %v4615 = vld [vmem:[%s4600 + $0x70] sm:$0xff]
        %v4616 = vld [vmem:[%s4600 + $0x78] sm:$0xff]
        %v4617 = vld [vmem:[%s4600 + $0x80] sm:$0xff]
        %v4618 = vld [vmem:[%s4600 + $0x88] sm:$0xff]
        %v4619 = vpack.c.bf16 %v4602, %v4601
        %v4620 = vpack.c.bf16 %v4604, %v4603
        %v4621 = vpack.c.bf16 %v4606, %v4605
        %v4622 = vpack.c.bf16 %v4608, %v4607
        %v4623 = vpack.c.bf16 %v4610, %v4609
        %v4624 = vpack.c.bf16 %v4612, %v4611
        %v4625 = vpack.c.bf16 %v4614, %v4613
        %v4626 = vpack.c.bf16 %v4616, %v4615
        %v4627 = vpack.c.bf16 %v4618, %v4617
        %v4628 = vld [vmem:[#allocation2] sm:$0xff]
        %v4629 = vld [vmem:[#allocation2 + $0x8] sm:$0xff]
        %v4630 = vld [vmem:[#allocation2 + $0x10] sm:$0xff]
        %v4631 = vld [vmem:[#allocation2 + $0x18] sm:$0xff]
        %v4632 = vld [vmem:[#allocation2 + $0x20] sm:$0xff]
        %v4633 = vld [vmem:[#allocation2 + $0x28] sm:$0xff]
        %v4634 = vld [vmem:[#allocation2 + $0x30] sm:$0xff]
        %v4635 = vld [vmem:[#allocation2 + $0x38] sm:$0xff]
        %v4636 = vld [vmem:[#allocation2 + $0x40] sm:$0xff]
        %v4637 = vld [vmem:[#allocation2 + $0x48] sm:$0xff]
        %v4638 = vld [vmem:[#allocation2 + $0x50] sm:$0xff]
        %v4639 = vld [vmem:[#allocation2 + $0x58] sm:$0xff]
        %v4640 = vld [vmem:[#allocation2 + $0x60] sm:$0xff]
        %v4641 = vld [vmem:[#allocation2 + $0x68] sm:$0xff]
        %v4642 = vld [vmem:[#allocation2 + $0x70] sm:$0xff]
        %v4643 = vld [vmem:[#allocation2 + $0x78] sm:$0xff]
        %v4644 = vld [vmem:[#allocation2 + $0x80] sm:$0xff]
        %v4645 = vld [vmem:[#allocation2 + $0x88] sm:$0xff]
        %v4646 = vld [vmem:[#allocation2 + $0x90] sm:$0xff]
        %v4647 = vld [vmem:[#allocation2 + $0x98] sm:$0xff]
        %v4648 = vld [vmem:[#allocation2 + $0xa0] sm:$0xff]
        %v4649 = vld [vmem:[#allocation2 + $0xa8] sm:$0xff]
        %v4650 = vld [vmem:[#allocation2 + $0xb0] sm:$0xff]
        %v4651 = vld [vmem:[#allocation2 + $0xb8] sm:$0xff]
        %v4652 = vld [vmem:[#allocation2 + $0xc0] sm:$0xff]
        %v4653 = vld [vmem:[#allocation2 + $0xc8] sm:$0xff]
        %v4654 = vld [vmem:[#allocation2 + $0xd0] sm:$0xff]
        %v4655 = vld [vmem:[#allocation2 + $0xd8] sm:$0xff]
        %v4656 = vld [vmem:[#allocation2 + $0xe0] sm:$0xff]
        %v4657 = vld [vmem:[#allocation2 + $0xe8] sm:$0xff]
        %v4658 = vld [vmem:[#allocation2 + $0xf0] sm:$0xff]
        %v4659 = vld [vmem:[#allocation2 + $0xf8] sm:$0xff]
        %v4660 = vld [vmem:[#allocation2 + $0x100] sm:$0xff]
        %v4661 = vld [vmem:[#allocation2 + $0x108] sm:$0xff]
        %v4662 = vld [vmem:[#allocation2 + $0x110] sm:$0xff]
        %v4663 = vld [vmem:[#allocation2 + $0x118] sm:$0xff]
        %v4664 = vld [vmem:[#allocation2 + $0x120] sm:$0xff]
        %v4665 = vld [vmem:[#allocation2 + $0x128] sm:$0xff]
        %v4666 = vld [vmem:[#allocation2 + $0x130] sm:$0xff]
        %v4667 = vld [vmem:[#allocation2 + $0x138] sm:$0xff]
        %v4668 = vld [vmem:[#allocation2 + $0x140] sm:$0xff]
        %v4669 = vld [vmem:[#allocation2 + $0x148] sm:$0xff]
        %v4670 = vld [vmem:[#allocation2 + $0x150] sm:$0xff]
        %v4671 = vld [vmem:[#allocation2 + $0x158] sm:$0xff]
        %v4672 = vld [vmem:[#allocation2 + $0x160] sm:$0xff]
        %v4673 = vld [vmem:[#allocation2 + $0x168] sm:$0xff]
        %v4674 = vld [vmem:[#allocation2 + $0x170] sm:$0xff]
        %v4675 = vld [vmem:[#allocation2 + $0x178] sm:$0xff]
        %v4676 = vld [vmem:[#allocation2 + $0x180] sm:$0xff]
        %v4677 = vld [vmem:[#allocation2 + $0x188] sm:$0xff]
        %v4678 = vld [vmem:[#allocation2 + $0x190] sm:$0xff]
        %v4679 = vld [vmem:[#allocation2 + $0x198] sm:$0xff]
        %v4680 = vld [vmem:[#allocation2 + $0x1a0] sm:$0xff]
        %v4681 = vld [vmem:[#allocation2 + $0x1a8] sm:$0xff]
        %v4682 = vld [vmem:[#allocation2 + $0x1b0] sm:$0xff]
        %v4683 = vld [vmem:[#allocation2 + $0x1b8] sm:$0xff]
        %v4684 = vld [vmem:[#allocation2 + $0x1c0] sm:$0xff]
        %v4685 = vld [vmem:[#allocation2 + $0x1c8] sm:$0xff]
        %v4686 = vld [vmem:[#allocation2 + $0x1d0] sm:$0xff]
        %v4687 = vld [vmem:[#allocation2 + $0x1d8] sm:$0xff]
        %v4688 = vld [vmem:[#allocation2 + $0x1e0] sm:$0xff]
        %v4689 = vld [vmem:[#allocation2 + $0x1e8] sm:$0xff]
        %v4690 = vld [vmem:[#allocation2 + $0x1f0] sm:$0xff]
        %v4691 = vld [vmem:[#allocation2 + $0x1f8] sm:$0xff]
        %v4692 = vld [vmem:[#allocation2 + $0x200] sm:$0xff]
        %v4693 = vld [vmem:[#allocation2 + $0x208] sm:$0xff]
        %v4694 = vld [vmem:[#allocation2 + $0x210] sm:$0xff]
        %v4695 = vld [vmem:[#allocation2 + $0x218] sm:$0xff]
        %v4696 = vld [vmem:[#allocation2 + $0x220] sm:$0xff]
        %v4697 = vld [vmem:[#allocation2 + $0x228] sm:$0xff]
        %v4698 = vld [vmem:[#allocation2 + $0x230] sm:$0xff]
        %v4699 = vld [vmem:[#allocation2 + $0x238] sm:$0xff]
        %s4700 = scalar_lea.vmem [#allocation3], 896
        %v4701 = vld [vmem:[%s4700] sm:$0xff]
        %v4702 = vld [vmem:[%s4700 + $0x8] sm:$0xff]
        %v4703 = vld [vmem:[%s4700 + $0x10] sm:$0xff]
        %v4704 = vld [vmem:[%s4700 + $0x18] sm:$0xff]
        %v4705 = vld [vmem:[%s4700 + $0x20] sm:$0xff]
        %v4706 = vld [vmem:[%s4700 + $0x28] sm:$0xff]
        %v4707 = vld [vmem:[%s4700 + $0x30] sm:$0xff]
        %v4708 = vld [vmem:[%s4700 + $0x38] sm:$0xff]
        %v4709 = vld [vmem:[%s4700 + $0x40] sm:$0xff]
        %v4710 = vld [vmem:[%s4700 + $0x48] sm:$0xff]
        %v4711 = vld [vmem:[%s4700 + $0x50] sm:$0xff]
        %v4712 = vld [vmem:[%s4700 + $0x58] sm:$0xff]
        %v4713 = vld [vmem:[%s4700 + $0x60] sm:$0xff]
        %v4714 = vld [vmem:[%s4700 + $0x68] sm:$0xff]
        %v4715 = vld [vmem:[%s4700 + $0x70] sm:$0xff]
        %v4716 = vld [vmem:[%s4700 + $0x78] sm:$0xff]
        %v4733 = vunpack.c.l.b16 %v4701
        %v4734 = vunpack.c.h.b16 %v4701
        %v4735 = vunpack.c.l.b16 %v4702
        %v4736 = vunpack.c.h.b16 %v4702
        %v4737 = vunpack.c.l.b16 %v4703
        %v4738 = vunpack.c.h.b16 %v4703
        %v4739 = vunpack.c.l.b16 %v4704
        %v4740 = vunpack.c.h.b16 %v4704
        %v4741 = vunpack.c.l.b16 %v4705
        %v4742 = vunpack.c.h.b16 %v4705
        %v4743 = vunpack.c.l.b16 %v4706
        %v4744 = vunpack.c.h.b16 %v4706
        %v4745 = vunpack.c.l.b16 %v4707
        %v4746 = vunpack.c.h.b16 %v4707
        %v4747 = vunpack.c.l.b16 %v4708
        %v4748 = vunpack.c.h.b16 %v4708
        %v4749 = vunpack.c.l.b16 %v4709
        %v4750 = vunpack.c.h.b16 %v4709
        %v4751 = vunpack.c.l.b16 %v4710
        %v4752 = vunpack.c.h.b16 %v4710
        %v4753 = vunpack.c.l.b16 %v4711
        %v4754 = vunpack.c.h.b16 %v4711
        %v4755 = vunpack.c.l.b16 %v4712
        %v4756 = vunpack.c.h.b16 %v4712
        %v4757 = vunpack.c.l.b16 %v4713
        %v4758 = vunpack.c.h.b16 %v4713
        %v4759 = vunpack.c.l.b16 %v4714
        %v4760 = vunpack.c.h.b16 %v4714
        %v4761 = vunpack.c.l.b16 %v4715
        %v4762 = vunpack.c.h.b16 %v4715
        %v4763 = vunpack.c.l.b16 %v4716
        %v4764 = vunpack.c.h.b16 %v4716
        %v4765 = vpack.c.b16 %v4737, %v4733
        %v4766 = vpack.c.b16 %v4738, %v4734
        %v4767 = vpack.c.b16 %v4739, %v4735
        %v4768 = vpack.c.b16 %v4740, %v4736
        %v4769 = vpack.c.b16 %v4745, %v4741
        %v4770 = vpack.c.b16 %v4746, %v4742
        %v4771 = vpack.c.b16 %v4747, %v4743
        %v4772 = vpack.c.b16 %v4748, %v4744
        %v4773 = vpack.c.b16 %v4753, %v4749
        %v4774 = vpack.c.b16 %v4754, %v4750
        %v4775 = vpack.c.b16 %v4755, %v4751
        %v4776 = vpack.c.b16 %v4756, %v4752
        %v4777 = vpack.c.b16 %v4761, %v4757
        %v4778 = vpack.c.b16 %v4762, %v4758
        %v4779 = vpack.c.b16 %v4763, %v4759
        %v4780 = vpack.c.b16 %v4764, %v4760
        %v4798 = vsel %vm491, %v4619, 0
        %v4801 = vsel %vm491, %v4620, 0
        %v4804 = vsel %vm491, %v4621, 0
        %v4807 = vsel %vm491, %v4622, 0
        %v4810 = vsel %vm491, %v4623, 0
        %v4813 = vsel %vm491, %v4624, 0
        %v4816 = vsel %vm491, %v4625, 0
        %v4819 = vsel %vm491, %v4626, 0
        %v4822 = vsel %vm491, %v4627, 0
        %4824 = vmatprep.subr.bf16.mxu0 %v4766
        %4825 = vmatpush1.bf16.msra.mxu0 %v4765
        %4826 = vmatprep.subr.bf16.mxu0 %v4770
        %4827 = vmatpush1.bf16.msra.mxu0 %v4769
        %4828 = vmatprep.subr.bf16.mxu0 %v4774
        %4829 = vmatpush1.bf16.msra.mxu0 %v4773
        %4830 = vmatprep.subr.bf16.mxu0 %v4778
        %4831 = vmatpush1.bf16.msra.mxu0 %v4777
        %4832 = vmatprep.subr.bf16.mxu0 0
        %4833 = vmatpush1.bf16.msra.mxu0 0
        %4834 = vmatprep.subr.bf16.mxu0 0
        %4835 = vmatpush1.bf16.msra.mxu0 0
        %4836 = vmatprep.subr.bf16.mxu0 0
        %4837 = vmatpush1.bf16.msra.mxu0 0
        %4838 = vmatprep.subr.bf16.mxu0 0
        %4839 = vmatpush1.bf16.msra.mxu0 0
        %4840 = vmatprep.subr.bf16.mxu0 0
        %4841 = vmatpush1.bf16.msra.mxu0 0
        %4842 = vmatprep.subr.bf16.mxu0 0
        %4843 = vmatpush1.bf16.msra.mxu0 0
        %4844 = vmatprep.subr.bf16.mxu0 0
        %4845 = vmatpush1.bf16.msra.mxu0 0
        %4846 = vmatprep.subr.bf16.mxu0 0
        %4847 = vmatpush1.bf16.msra.mxu0 0
        %4848 = vmatprep.subr.bf16.mxu0 0
        %4849 = vmatpush1.bf16.msra.mxu0 0
        %4850 = vmatprep.subr.bf16.mxu0 0
        %4851 = vmatpush1.bf16.msra.mxu0 0
        %4852 = vmatprep.subr.bf16.mxu0 0
        %4853 = vmatpush1.bf16.msra.mxu0 0
        %4854 = vmatprep.subr.bf16.mxu0 0
        %4855 = vmatpush1.bf16.msra.mxu0 0
        %4856 = vmatprep.mubr.bf16.mxu0 0
        %4857 = vmatmul.mubr.bf16.gmra.mrb[0].mxu0 %v4798
        %v4858 = vpop.f32.mrb[0].mxu0
        %v4859 = vadd.f32 0.0, %v4858
        %v4860 = vpop.f32.mrb[0].mxu0
        %v4861 = vadd.f32 0.0, %v4860
        %v4862 = vpop.f32.mrb[0].mxu0
        %v4863 = vadd.f32 0.0, %v4862
        %v4864 = vpop.f32.mrb[0].mxu0
        %v4865 = vadd.f32 0.0, %v4864
        %4866 = vmatprep.mubr.bf16.mxu0 0
        %4867 = vmatmul.mubr.bf16.gmra.mrb[0].mxu0 %v4801
        %v4868 = vpop.f32.mrb[0].mxu0
        %v4869 = vadd.f32 0.0, %v4868
        %v4870 = vpop.f32.mrb[0].mxu0
        %v4871 = vadd.f32 0.0, %v4870
        %v4872 = vpop.f32.mrb[0].mxu0
        %v4873 = vadd.f32 0.0, %v4872
        %v4874 = vpop.f32.mrb[0].mxu0
        %v4875 = vadd.f32 0.0, %v4874
        %4876 = vmatprep.mubr.bf16.mxu0 0
        %4877 = vmatmul.mubr.bf16.gmra.mrb[0].mxu0 %v4804
        %v4878 = vpop.f32.mrb[0].mxu0
        %v4879 = vadd.f32 0.0, %v4878
        %v4880 = vpop.f32.mrb[0].mxu0
        %v4881 = vadd.f32 0.0, %v4880
        %v4882 = vpop.f32.mrb[0].mxu0
        %v4883 = vadd.f32 0.0, %v4882
        %v4884 = vpop.f32.mrb[0].mxu0
        %v4885 = vadd.f32 0.0, %v4884
        %4886 = vmatprep.mubr.bf16.mxu0 0
        %4887 = vmatmul.mubr.bf16.gmra.mrb[0].mxu0 %v4807
        %v4888 = vpop.f32.mrb[0].mxu0
        %v4889 = vadd.f32 0.0, %v4888
        %v4890 = vpop.f32.mrb[0].mxu0
        %v4891 = vadd.f32 0.0, %v4890
        %v4892 = vpop.f32.mrb[0].mxu0
        %v4893 = vadd.f32 0.0, %v4892
        %v4894 = vpop.f32.mrb[0].mxu0
        %v4895 = vadd.f32 0.0, %v4894
        %4896 = vmatprep.mubr.bf16.mxu0 0
        %4897 = vmatmul.mubr.bf16.gmra.mrb[0].mxu0 %v4810
        %v4898 = vpop.f32.mrb[0].mxu0
        %v4899 = vadd.f32 0.0, %v4898
        %v4900 = vpop.f32.mrb[0].mxu0
        %v4901 = vadd.f32 0.0, %v4900
        %v4902 = vpop.f32.mrb[0].mxu0
        %v4903 = vadd.f32 0.0, %v4902
        %v4904 = vpop.f32.mrb[0].mxu0
        %v4905 = vadd.f32 0.0, %v4904
        %4906 = vmatprep.mubr.bf16.mxu0 0
        %4907 = vmatmul.mubr.bf16.gmra.mrb[0].mxu0 %v4813
        %v4908 = vpop.f32.mrb[0].mxu0
        %v4909 = vadd.f32 0.0, %v4908
        %v4910 = vpop.f32.mrb[0].mxu0
        %v4911 = vadd.f32 0.0, %v4910
        %v4912 = vpop.f32.mrb[0].mxu0
        %v4913 = vadd.f32 0.0, %v4912
        %v4914 = vpop.f32.mrb[0].mxu0
        %v4915 = vadd.f32 0.0, %v4914
        %4916 = vmatprep.mubr.bf16.mxu0 0
        %4917 = vmatmul.mubr.bf16.gmra.mrb[0].mxu0 %v4816
        %v4918 = vpop.f32.mrb[0].mxu0
        %v4919 = vadd.f32 0.0, %v4918
        %v4920 = vpop.f32.mrb[0].mxu0
        %v4921 = vadd.f32 0.0, %v4920
        %v4922 = vpop.f32.mrb[0].mxu0
        %v4923 = vadd.f32 0.0, %v4922
        %v4924 = vpop.f32.mrb[0].mxu0
        %v4925 = vadd.f32 0.0, %v4924
        %4926 = vmatprep.mubr.bf16.mxu0 0
        %4927 = vmatmul.mubr.bf16.gmra.mrb[0].mxu0 %v4819
        %v4928 = vpop.f32.mrb[0].mxu0
        %v4929 = vadd.f32 0.0, %v4928
        %v4930 = vpop.f32.mrb[0].mxu0
        %v4931 = vadd.f32 0.0, %v4930
        %v4932 = vpop.f32.mrb[0].mxu0
        %v4933 = vadd.f32 0.0, %v4932
        %v4934 = vpop.f32.mrb[0].mxu0
        %v4935 = vadd.f32 0.0, %v4934
        %4936 = vmatprep.mubr.bf16.mxu0 0
        %4937 = vmatmul.mubr.bf16.gmra.mrb[0].mxu0 %v4822
        %v4938 = vpop.f32.mrb[0].mxu0
        %v4939 = vadd.f32 0.0, %v4938
        %v4940 = vpop.f32.mrb[0].mxu0
        %v4941 = vadd.f32 0.0, %v4940
        %v4942 = vpop.f32.mrb[0].mxu0
        %v4943 = vadd.f32 0.0, %v4942
        %v4944 = vpop.f32.mrb[0].mxu0
        %v4945 = vadd.f32 0.0, %v4944
        %4946 = vdwg.mxu0
        %4947 = vmatprep.subr.bf16.mxu0 %v4768
        %4948 = vmatpush1.bf16.msra.mxu0 %v4767
        %4949 = vmatprep.subr.bf16.mxu0 %v4772
        %4950 = vmatpush1.bf16.msra.mxu0 %v4771
        %4951 = vmatprep.subr.bf16.mxu0 %v4776
        %4952 = vmatpush1.bf16.msra.mxu0 %v4775
        %4953 = vmatprep.subr.bf16.mxu0 %v4780
        %4954 = vmatpush1.bf16.msra.mxu0 %v4779
        %4955 = vmatprep.subr.bf16.mxu0 0
        %4956 = vmatpush1.bf16.msra.mxu0 0
        %4957 = vmatprep.subr.bf16.mxu0 0
        %4958 = vmatpush1.bf16.msra.mxu0 0
        %4959 = vmatprep.subr.bf16.mxu0 0
        %4960 = vmatpush1.bf16.msra.mxu0 0
        %4961 = vmatprep.subr.bf16.mxu0 0
        %4962 = vmatpush1.bf16.msra.mxu0 0
        %4963 = vmatprep.subr.bf16.mxu0 0
        %4964 = vmatpush1.bf16.msra.mxu0 0
        %4965 = vmatprep.subr.bf16.mxu0 0
        %4966 = vmatpush1.bf16.msra.mxu0 0
        %4967 = vmatprep.subr.bf16.mxu0 0
        %4968 = vmatpush1.bf16.msra.mxu0 0
        %4969 = vmatprep.subr.bf16.mxu0 0
        %4970 = vmatpush1.bf16.msra.mxu0 0
        %4971 = vmatprep.subr.bf16.mxu0 0
        %4972 = vmatpush1.bf16.msra.mxu0 0
        %4973 = vmatprep.subr.bf16.mxu0 0
        %4974 = vmatpush1.bf16.msra.mxu0 0
        %4975 = vmatprep.subr.bf16.mxu0 0
        %4976 = vmatpush1.bf16.msra.mxu0 0
        %4977 = vmatprep.subr.bf16.mxu0 0
        %4978 = vmatpush1.bf16.msra.mxu0 0
        %4979 = vmatprep.mubr.bf16.mxu0 0
        %4980 = vmatmul.mubr.bf16.gmra.mrb[0].mxu0 %v4798
        %v4981 = vpop.f32.mrb[0].mxu0
        %v4982 = vadd.f32 0.0, %v4981
        %v4983 = vpop.f32.mrb[0].mxu0
        %v4984 = vadd.f32 0.0, %v4983
        %v4985 = vpop.f32.mrb[0].mxu0
        %v4986 = vadd.f32 0.0, %v4985
        %v4987 = vpop.f32.mrb[0].mxu0
        %v4988 = vadd.f32 0.0, %v4987
        %4989 = vmatprep.mubr.bf16.mxu0 0
        %4990 = vmatmul.mubr.bf16.gmra.mrb[0].mxu0 %v4801
        %v4991 = vpop.f32.mrb[0].mxu0
        %v4992 = vadd.f32 0.0, %v4991
        %v4993 = vpop.f32.mrb[0].mxu0
        %v4994 = vadd.f32 0.0, %v4993
        %v4995 = vpop.f32.mrb[0].mxu0
        %v4996 = vadd.f32 0.0, %v4995
        %v4997 = vpop.f32.mrb[0].mxu0
        %v4998 = vadd.f32 0.0, %v4997
        %4999 = vmatprep.mubr.bf16.mxu0 0
        %5000 = vmatmul.mubr.bf16.gmra.mrb[0].mxu0 %v4804
        %v5001 = vpop.f32.mrb[0].mxu0
        %v5002 = vadd.f32 0.0, %v5001
        %v5003 = vpop.f32.mrb[0].mxu0
        %v5004 = vadd.f32 0.0, %v5003
        %v5005 = vpop.f32.mrb[0].mxu0
        %v5006 = vadd.f32 0.0, %v5005
        %v5007 = vpop.f32.mrb[0].mxu0
        %v5008 = vadd.f32 0.0, %v5007
        %5009 = vmatprep.mubr.bf16.mxu0 0
        %5010 = vmatmul.mubr.bf16.gmra.mrb[0].mxu0 %v4807
        %v5011 = vpop.f32.mrb[0].mxu0
        %v5012 = vadd.f32 0.0, %v5011
        %v5013 = vpop.f32.mrb[0].mxu0
        %v5014 = vadd.f32 0.0, %v5013
        %v5015 = vpop.f32.mrb[0].mxu0
        %v5016 = vadd.f32 0.0, %v5015
        %v5017 = vpop.f32.mrb[0].mxu0
        %v5018 = vadd.f32 0.0, %v5017
        %5019 = vmatprep.mubr.bf16.mxu0 0
        %5020 = vmatmul.mubr.bf16.gmra.mrb[0].mxu0 %v4810
        %v5021 = vpop.f32.mrb[0].mxu0
        %v5022 = vadd.f32 0.0, %v5021
        %v5023 = vpop.f32.mrb[0].mxu0
        %v5024 = vadd.f32 0.0, %v5023
        %v5025 = vpop.f32.mrb[0].mxu0
        %v5026 = vadd.f32 0.0, %v5025
        %v5027 = vpop.f32.mrb[0].mxu0
        %v5028 = vadd.f32 0.0, %v5027
        %5029 = vmatprep.mubr.bf16.mxu0 0
        %5030 = vmatmul.mubr.bf16.gmra.mrb[0].mxu0 %v4813
        %v5031 = vpop.f32.mrb[0].mxu0
        %v5032 = vadd.f32 0.0, %v5031
        %v5033 = vpop.f32.mrb[0].mxu0
        %v5034 = vadd.f32 0.0, %v5033
        %v5035 = vpop.f32.mrb[0].mxu0
        %v5036 = vadd.f32 0.0, %v5035
        %v5037 = vpop.f32.mrb[0].mxu0
        %v5038 = vadd.f32 0.0, %v5037
        %5039 = vmatprep.mubr.bf16.mxu0 0
        %5040 = vmatmul.mubr.bf16.gmra.mrb[0].mxu0 %v4816
        %v5041 = vpop.f32.mrb[0].mxu0
        %v5042 = vadd.f32 0.0, %v5041
        %v5043 = vpop.f32.mrb[0].mxu0
        %v5044 = vadd.f32 0.0, %v5043
        %v5045 = vpop.f32.mrb[0].mxu0
        %v5046 = vadd.f32 0.0, %v5045
        %v5047 = vpop.f32.mrb[0].mxu0
        %v5048 = vadd.f32 0.0, %v5047
        %5049 = vmatprep.mubr.bf16.mxu0 0
        %5050 = vmatmul.mubr.bf16.gmra.mrb[0].mxu0 %v4819
        %v5051 = vpop.f32.mrb[0].mxu0
        %v5052 = vadd.f32 0.0, %v5051
        %v5053 = vpop.f32.mrb[0].mxu0
        %v5054 = vadd.f32 0.0, %v5053
        %v5055 = vpop.f32.mrb[0].mxu0
        %v5056 = vadd.f32 0.0, %v5055
        %v5057 = vpop.f32.mrb[0].mxu0
        %v5058 = vadd.f32 0.0, %v5057
        %5059 = vmatprep.mubr.bf16.mxu0 0
        %5060 = vmatmul.mubr.bf16.gmra.mrb[0].mxu0 %v4822
        %v5061 = vpop.f32.mrb[0].mxu0
        %v5062 = vadd.f32 0.0, %v5061
        %v5063 = vpop.f32.mrb[0].mxu0
        %v5064 = vadd.f32 0.0, %v5063
        %v5065 = vpop.f32.mrb[0].mxu0
        %v5066 = vadd.f32 0.0, %v5065
        %v5067 = vpop.f32.mrb[0].mxu0
        %v5068 = vadd.f32 0.0, %v5067
        %5069 = vdwg.mxu0
        %v5070 = vadd.f32 %v4628, %v4859
        %v5071 = vadd.f32 %v4629, %v4861
        %v5072 = vadd.f32 %v4630, %v4982
        %v5073 = vadd.f32 %v4631, %v4984
        %v5074 = vadd.f32 %v4632, %v4863
        %v5075 = vadd.f32 %v4633, %v4865
        %v5076 = vadd.f32 %v4634, %v4986
        %v5077 = vadd.f32 %v4635, %v4988
        %v5078 = vadd.f32 %v4636, %v4869
        %v5079 = vadd.f32 %v4637, %v4871
        %v5080 = vadd.f32 %v4638, %v4992
        %v5081 = vadd.f32 %v4639, %v4994
        %v5082 = vadd.f32 %v4640, %v4873
        %v5083 = vadd.f32 %v4641, %v4875
        %v5084 = vadd.f32 %v4642, %v4996
        %v5085 = vadd.f32 %v4643, %v4998
        %v5086 = vadd.f32 %v4644, %v4879
        %v5087 = vadd.f32 %v4645, %v4881
        %v5088 = vadd.f32 %v4646, %v5002
        %v5089 = vadd.f32 %v4647, %v5004
        %v5090 = vadd.f32 %v4648, %v4883
        %v5091 = vadd.f32 %v4649, %v4885
        %v5092 = vadd.f32 %v4650, %v5006
        %v5093 = vadd.f32 %v4651, %v5008
        %v5094 = vadd.f32 %v4652, %v4889
        %v5095 = vadd.f32 %v4653, %v4891
        %v5096 = vadd.f32 %v4654, %v5012
        %v5097 = vadd.f32 %v4655, %v5014
        %v5098 = vadd.f32 %v4656, %v4893
        %v5099 = vadd.f32 %v4657, %v4895
        %v5100 = vadd.f32 %v4658, %v5016
        %v5101 = vadd.f32 %v4659, %v5018
        %v5102 = vadd.f32 %v4660, %v4899
        %v5103 = vadd.f32 %v4661, %v4901
        %v5104 = vadd.f32 %v4662, %v5022
        %v5105 = vadd.f32 %v4663, %v5024
        %v5106 = vadd.f32 %v4664, %v4903
        %v5107 = vadd.f32 %v4665, %v4905
        %v5108 = vadd.f32 %v4666, %v5026
        %v5109 = vadd.f32 %v4667, %v5028
        %v5110 = vadd.f32 %v4668, %v4909
        %v5111 = vadd.f32 %v4669, %v4911
        %v5112 = vadd.f32 %v4670, %v5032
        %v5113 = vadd.f32 %v4671, %v5034
        %v5114 = vadd.f32 %v4672, %v4913
        %v5115 = vadd.f32 %v4673, %v4915
        %v5116 = vadd.f32 %v4674, %v5036
        %v5117 = vadd.f32 %v4675, %v5038
        %v5118 = vadd.f32 %v4676, %v4919
        %v5119 = vadd.f32 %v4677, %v4921
        %v5120 = vadd.f32 %v4678, %v5042
        %v5121 = vadd.f32 %v4679, %v5044
        %v5122 = vadd.f32 %v4680, %v4923
        %v5123 = vadd.f32 %v4681, %v4925
        %v5124 = vadd.f32 %v4682, %v5046
        %v5125 = vadd.f32 %v4683, %v5048
        %v5126 = vadd.f32 %v4684, %v4929
        %v5127 = vadd.f32 %v4685, %v4931
        %v5128 = vadd.f32 %v4686, %v5052
        %v5129 = vadd.f32 %v4687, %v5054
        %v5130 = vadd.f32 %v4688, %v4933
        %v5131 = vadd.f32 %v4689, %v4935
        %v5132 = vadd.f32 %v4690, %v5056
        %v5133 = vadd.f32 %v4691, %v5058
        %v5134 = vadd.f32 %v4692, %v4939
        %v5135 = vadd.f32 %v4693, %v4941
        %v5136 = vadd.f32 %v4694, %v5062
        %v5137 = vadd.f32 %v4695, %v5064
        %v5138 = vadd.f32 %v4696, %v4943
        %v5139 = vadd.f32 %v4697, %v4945
        %v5140 = vadd.f32 %v4698, %v5066
        %v5141 = vadd.f32 %v4699, %v5068
        %5142 = vst [vmem:[#allocation2] sm:$0xff] %v5070
        %5143 = vst [vmem:[#allocation2 + $0x8] sm:$0xff] %v5071
        %5144 = vst [vmem:[#allocation2 + $0x10] sm:$0xff] %v5072
        %5145 = vst [vmem:[#allocation2 + $0x18] sm:$0xff] %v5073
        %5146 = vst [vmem:[#allocation2 + $0x20] sm:$0xff] %v5074
        %5147 = vst [vmem:[#allocation2 + $0x28] sm:$0xff] %v5075
        %5148 = vst [vmem:[#allocation2 + $0x30] sm:$0xff] %v5076
        %5149 = vst [vmem:[#allocation2 + $0x38] sm:$0xff] %v5077
        %5150 = vst [vmem:[#allocation2 + $0x40] sm:$0xff] %v5078
        %5151 = vst [vmem:[#allocation2 + $0x48] sm:$0xff] %v5079
        %5152 = vst [vmem:[#allocation2 + $0x50] sm:$0xff] %v5080
        %5153 = vst [vmem:[#allocation2 + $0x58] sm:$0xff] %v5081
        %5154 = vst [vmem:[#allocation2 + $0x60] sm:$0xff] %v5082
        %5155 = vst [vmem:[#allocation2 + $0x68] sm:$0xff] %v5083
        %5156 = vst [vmem:[#allocation2 + $0x70] sm:$0xff] %v5084
        %5157 = vst [vmem:[#allocation2 + $0x78] sm:$0xff] %v5085
        %5158 = vst [vmem:[#allocation2 + $0x80] sm:$0xff] %v5086
        %5159 = vst [vmem:[#allocation2 + $0x88] sm:$0xff] %v5087
        %5160 = vst [vmem:[#allocation2 + $0x90] sm:$0xff] %v5088
        %5161 = vst [vmem:[#allocation2 + $0x98] sm:$0xff] %v5089
        %5162 = vst [vmem:[#allocation2 + $0xa0] sm:$0xff] %v5090
        %5163 = vst [vmem:[#allocation2 + $0xa8] sm:$0xff] %v5091
        %5164 = vst [vmem:[#allocation2 + $0xb0] sm:$0xff] %v5092
        %5165 = vst [vmem:[#allocation2 + $0xb8] sm:$0xff] %v5093
        %5166 = vst [vmem:[#allocation2 + $0xc0] sm:$0xff] %v5094
        %5167 = vst [vmem:[#allocation2 + $0xc8] sm:$0xff] %v5095
        %5168 = vst [vmem:[#allocation2 + $0xd0] sm:$0xff] %v5096
        %5169 = vst [vmem:[#allocation2 + $0xd8] sm:$0xff] %v5097
        %5170 = vst [vmem:[#allocation2 + $0xe0] sm:$0xff] %v5098
        %5171 = vst [vmem:[#allocation2 + $0xe8] sm:$0xff] %v5099
        %5172 = vst [vmem:[#allocation2 + $0xf0] sm:$0xff] %v5100
        %5173 = vst [vmem:[#allocation2 + $0xf8] sm:$0xff] %v5101
        %5174 = vst [vmem:[#allocation2 + $0x100] sm:$0xff] %v5102
        %5175 = vst [vmem:[#allocation2 + $0x108] sm:$0xff] %v5103
        %5176 = vst [vmem:[#allocation2 + $0x110] sm:$0xff] %v5104
        %5177 = vst [vmem:[#allocation2 + $0x118] sm:$0xff] %v5105
        %5178 = vst [vmem:[#allocation2 + $0x120] sm:$0xff] %v5106
        %5179 = vst [vmem:[#allocation2 + $0x128] sm:$0xff] %v5107
        %5180 = vst [vmem:[#allocation2 + $0x130] sm:$0xff] %v5108
        %5181 = vst [vmem:[#allocation2 + $0x138] sm:$0xff] %v5109
        %5182 = vst [vmem:[#allocation2 + $0x140] sm:$0xff] %v5110
        %5183 = vst [vmem:[#allocation2 + $0x148] sm:$0xff] %v5111
        %5184 = vst [vmem:[#allocation2 + $0x150] sm:$0xff] %v5112
        %5185 = vst [vmem:[#allocation2 + $0x158] sm:$0xff] %v5113
        %5186 = vst [vmem:[#allocation2 + $0x160] sm:$0xff] %v5114
        %5187 = vst [vmem:[#allocation2 + $0x168] sm:$0xff] %v5115
        %5188 = vst [vmem:[#allocation2 + $0x170] sm:$0xff] %v5116
        %5189 = vst [vmem:[#allocation2 + $0x178] sm:$0xff] %v5117
        %5190 = vst [vmem:[#allocation2 + $0x180] sm:$0xff] %v5118
        %5191 = vst [vmem:[#allocation2 + $0x188] sm:$0xff] %v5119
        %5192 = vst [vmem:[#allocation2 + $0x190] sm:$0xff] %v5120
        %5193 = vst [vmem:[#allocation2 + $0x198] sm:$0xff] %v5121
        %5194 = vst [vmem:[#allocation2 + $0x1a0] sm:$0xff] %v5122
        %5195 = vst [vmem:[#allocation2 + $0x1a8] sm:$0xff] %v5123
        %5196 = vst [vmem:[#allocation2 + $0x1b0] sm:$0xff] %v5124
        %5197 = vst [vmem:[#allocation2 + $0x1b8] sm:$0xff] %v5125
        %5198 = vst [vmem:[#allocation2 + $0x1c0] sm:$0xff] %v5126
        %5199 = vst [vmem:[#allocation2 + $0x1c8] sm:$0xff] %v5127
        %5200 = vst [vmem:[#allocation2 + $0x1d0] sm:$0xff] %v5128
        %5201 = vst [vmem:[#allocation2 + $0x1d8] sm:$0xff] %v5129
        %5202 = vst [vmem:[#allocation2 + $0x1e0] sm:$0xff] %v5130
        %5203 = vst [vmem:[#allocation2 + $0x1e8] sm:$0xff] %v5131
        %5204 = vst [vmem:[#allocation2 + $0x1f0] sm:$0xff] %v5132
        %5205 = vst [vmem:[#allocation2 + $0x1f8] sm:$0xff] %v5133
        %5206 = vst [vmem:[#allocation2 + $0x200] sm:$0xff] %v5134
        %5207 = vst [vmem:[#allocation2 + $0x208] sm:$0xff] %v5135
        %5208 = vst [vmem:[#allocation2 + $0x210] sm:$0xff] %v5136
        %5209 = vst [vmem:[#allocation2 + $0x218] sm:$0xff] %v5137
        %5210 = vst [vmem:[#allocation2 + $0x220] sm:$0xff] %v5138
        %5211 = vst [vmem:[#allocation2 + $0x228] sm:$0xff] %v5139
        %5212 = vst [vmem:[#allocation2 + $0x230] sm:$0xff] %v5140
        %5213 = vst [vmem:[#allocation2 + $0x238] sm:$0xff] %v5141
        %s5214 = sadd.s32 %s222, 38
        %s5215 = scalar_lea.vmem %s0, %s5214
        %v5216 = vld [vmem:[%s5215] sm:$0xff]
        %v5217 = vld [vmem:[%s5215 + $0x8] sm:$0xff]
        %v5218 = vld [vmem:[%s5215 + $0x10] sm:$0xff]
        %v5219 = vld [vmem:[%s5215 + $0x18] sm:$0xff]
        %v5220 = vld [vmem:[%s5215 + $0x20] sm:$0xff]
        %v5221 = vld [vmem:[%s5215 + $0x28] sm:$0xff]
        %v5222 = vld [vmem:[%s5215 + $0x30] sm:$0xff]
        %v5223 = vld [vmem:[%s5215 + $0x38] sm:$0xff]
        %v5224 = vld [vmem:[%s5215 + $0x40] sm:$0xff]
        %v5225 = vld [vmem:[%s5215 + $0x48] sm:$0xff]
        %v5226 = vld [vmem:[%s5215 + $0x50] sm:$0xff]
        %v5227 = vld [vmem:[%s5215 + $0x58] sm:$0xff]
        %v5228 = vld [vmem:[%s5215 + $0x60] sm:$0xff]
        %v5229 = vld [vmem:[%s5215 + $0x68] sm:$0xff]
        %v5230 = vld [vmem:[%s5215 + $0x70] sm:$0xff]
        %v5231 = vld [vmem:[%s5215 + $0x78] sm:$0xff]
        %v5232 = vld [vmem:[%s5215 + $0x80] sm:$0xff]
        %v5233 = vld [vmem:[%s5215 + $0x88] sm:$0xff]
        %v5234 = vpack.c.bf16 %v5217, %v5216
        %v5235 = vpack.c.bf16 %v5219, %v5218
        %v5236 = vpack.c.bf16 %v5221, %v5220
        %v5237 = vpack.c.bf16 %v5223, %v5222
        %v5238 = vpack.c.bf16 %v5225, %v5224
        %v5239 = vpack.c.bf16 %v5227, %v5226
        %v5240 = vpack.c.bf16 %v5229, %v5228
        %v5241 = vpack.c.bf16 %v5231, %v5230
        %v5242 = vpack.c.bf16 %v5233, %v5232
        %v5243 = vld [vmem:[#allocation2] sm:$0xff]
        %v5244 = vld [vmem:[#allocation2 + $0x8] sm:$0xff]
        %v5245 = vld [vmem:[#allocation2 + $0x10] sm:$0xff]
        %v5246 = vld [vmem:[#allocation2 + $0x18] sm:$0xff]
        %v5247 = vld [vmem:[#allocation2 + $0x20] sm:$0xff]
        %v5248 = vld [vmem:[#allocation2 + $0x28] sm:$0xff]
        %v5249 = vld [vmem:[#allocation2 + $0x30] sm:$0xff]
        %v5250 = vld [vmem:[#allocation2 + $0x38] sm:$0xff]
        %v5251 = vld [vmem:[#allocation2 + $0x40] sm:$0xff]
        %v5252 = vld [vmem:[#allocation2 + $0x48] sm:$0xff]
        %v5253 = vld [vmem:[#allocation2 + $0x50] sm:$0xff]
        %v5254 = vld [vmem:[#allocation2 + $0x58] sm:$0xff]
        %v5255 = vld [vmem:[#allocation2 + $0x60] sm:$0xff]
        %v5256 = vld [vmem:[#allocation2 + $0x68] sm:$0xff]
        %v5257 = vld [vmem:[#allocation2 + $0x70] sm:$0xff]
        %v5258 = vld [vmem:[#allocation2 + $0x78] sm:$0xff]
        %v5259 = vld [vmem:[#allocation2 + $0x80] sm:$0xff]
        %v5260 = vld [vmem:[#allocation2 + $0x88] sm:$0xff]
        %v5261 = vld [vmem:[#allocation2 + $0x90] sm:$0xff]
        %v5262 = vld [vmem:[#allocation2 + $0x98] sm:$0xff]
        %v5263 = vld [vmem:[#allocation2 + $0xa0] sm:$0xff]
        %v5264 = vld [vmem:[#allocation2 + $0xa8] sm:$0xff]
        %v5265 = vld [vmem:[#allocation2 + $0xb0] sm:$0xff]
        %v5266 = vld [vmem:[#allocation2 + $0xb8] sm:$0xff]
        %v5267 = vld [vmem:[#allocation2 + $0xc0] sm:$0xff]
        %v5268 = vld [vmem:[#allocation2 + $0xc8] sm:$0xff]
        %v5269 = vld [vmem:[#allocation2 + $0xd0] sm:$0xff]
        %v5270 = vld [vmem:[#allocation2 + $0xd8] sm:$0xff]
        %v5271 = vld [vmem:[#allocation2 + $0xe0] sm:$0xff]
        %v5272 = vld [vmem:[#allocation2 + $0xe8] sm:$0xff]
        %v5273 = vld [vmem:[#allocation2 + $0xf0] sm:$0xff]
        %v5274 = vld [vmem:[#allocation2 + $0xf8] sm:$0xff]
        %v5275 = vld [vmem:[#allocation2 + $0x100] sm:$0xff]
        %v5276 = vld [vmem:[#allocation2 + $0x108] sm:$0xff]
        %v5277 = vld [vmem:[#allocation2 + $0x110] sm:$0xff]
        %v5278 = vld [vmem:[#allocation2 + $0x118] sm:$0xff]
        %v5279 = vld [vmem:[#allocation2 + $0x120] sm:$0xff]
        %v5280 = vld [vmem:[#allocation2 + $0x128] sm:$0xff]
        %v5281 = vld [vmem:[#allocation2 + $0x130] sm:$0xff]
        %v5282 = vld [vmem:[#allocation2 + $0x138] sm:$0xff]
        %v5283 = vld [vmem:[#allocation2 + $0x140] sm:$0xff]
        %v5284 = vld [vmem:[#allocation2 + $0x148] sm:$0xff]
        %v5285 = vld [vmem:[#allocation2 + $0x150] sm:$0xff]
        %v5286 = vld [vmem:[#allocation2 + $0x158] sm:$0xff]
        %v5287 = vld [vmem:[#allocation2 + $0x160] sm:$0xff]
        %v5288 = vld [vmem:[#allocation2 + $0x168] sm:$0xff]
        %v5289 = vld [vmem:[#allocation2 + $0x170] sm:$0xff]
        %v5290 = vld [vmem:[#allocation2 + $0x178] sm:$0xff]
        %v5291 = vld [vmem:[#allocation2 + $0x180] sm:$0xff]
        %v5292 = vld [vmem:[#allocation2 + $0x188] sm:$0xff]
        %v5293 = vld [vmem:[#allocation2 + $0x190] sm:$0xff]
        %v5294 = vld [vmem:[#allocation2 + $0x198] sm:$0xff]
        %v5295 = vld [vmem:[#allocation2 + $0x1a0] sm:$0xff]
        %v5296 = vld [vmem:[#allocation2 + $0x1a8] sm:$0xff]
        %v5297 = vld [vmem:[#allocation2 + $0x1b0] sm:$0xff]
        %v5298 = vld [vmem:[#allocation2 + $0x1b8] sm:$0xff]
        %v5299 = vld [vmem:[#allocation2 + $0x1c0] sm:$0xff]
        %v5300 = vld [vmem:[#allocation2 + $0x1c8] sm:$0xff]
        %v5301 = vld [vmem:[#allocation2 + $0x1d0] sm:$0xff]
        %v5302 = vld [vmem:[#allocation2 + $0x1d8] sm:$0xff]
        %v5303 = vld [vmem:[#allocation2 + $0x1e0] sm:$0xff]
        %v5304 = vld [vmem:[#allocation2 + $0x1e8] sm:$0xff]
        %v5305 = vld [vmem:[#allocation2 + $0x1f0] sm:$0xff]
        %v5306 = vld [vmem:[#allocation2 + $0x1f8] sm:$0xff]
        %v5307 = vld [vmem:[#allocation2 + $0x200] sm:$0xff]
        %v5308 = vld [vmem:[#allocation2 + $0x208] sm:$0xff]
        %v5309 = vld [vmem:[#allocation2 + $0x210] sm:$0xff]
        %v5310 = vld [vmem:[#allocation2 + $0x218] sm:$0xff]
        %v5311 = vld [vmem:[#allocation2 + $0x220] sm:$0xff]
        %v5312 = vld [vmem:[#allocation2 + $0x228] sm:$0xff]
        %v5313 = vld [vmem:[#allocation2 + $0x230] sm:$0xff]
        %v5314 = vld [vmem:[#allocation2 + $0x238] sm:$0xff]
        %s5315 = scalar_lea.vmem [#allocation3], 1024
        %v5316 = vld [vmem:[%s5315] sm:$0xff]
        %v5317 = vld [vmem:[%s5315 + $0x8] sm:$0xff]
        %v5318 = vld [vmem:[%s5315 + $0x10] sm:$0xff]
        %v5319 = vld [vmem:[%s5315 + $0x18] sm:$0xff]
        %v5320 = vld [vmem:[%s5315 + $0x20] sm:$0xff]
        %v5321 = vld [vmem:[%s5315 + $0x28] sm:$0xff]
        %v5322 = vld [vmem:[%s5315 + $0x30] sm:$0xff]
        %v5323 = vld [vmem:[%s5315 + $0x38] sm:$0xff]
        %v5324 = vld [vmem:[%s5315 + $0x40] sm:$0xff]
        %v5325 = vld [vmem:[%s5315 + $0x48] sm:$0xff]
        %v5326 = vld [vmem:[%s5315 + $0x50] sm:$0xff]
        %v5327 = vld [vmem:[%s5315 + $0x58] sm:$0xff]
        %v5328 = vld [vmem:[%s5315 + $0x60] sm:$0xff]
        %v5329 = vld [vmem:[%s5315 + $0x68] sm:$0xff]
        %v5330 = vld [vmem:[%s5315 + $0x70] sm:$0xff]
        %v5331 = vld [vmem:[%s5315 + $0x78] sm:$0xff]
        %v5348 = vunpack.c.l.b16 %v5316
        %v5349 = vunpack.c.h.b16 %v5316
        %v5350 = vunpack.c.l.b16 %v5317
        %v5351 = vunpack.c.h.b16 %v5317
        %v5352 = vunpack.c.l.b16 %v5318
        %v5353 = vunpack.c.h.b16 %v5318
        %v5354 = vunpack.c.l.b16 %v5319
        %v5355 = vunpack.c.h.b16 %v5319
        %v5356 = vunpack.c.l.b16 %v5320
        %v5357 = vunpack.c.h.b16 %v5320
        %v5358 = vunpack.c.l.b16 %v5321
        %v5359 = vunpack.c.h.b16 %v5321
        %v5360 = vunpack.c.l.b16 %v5322
        %v5361 = vunpack.c.h.b16 %v5322
        %v5362 = vunpack.c.l.b16 %v5323
        %v5363 = vunpack.c.h.b16 %v5323
        %v5364 = vunpack.c.l.b16 %v5324
        %v5365 = vunpack.c.h.b16 %v5324
        %v5366 = vunpack.c.l.b16 %v5325
        %v5367 = vunpack.c.h.b16 %v5325
        %v5368 = vunpack.c.l.b16 %v5326
        %v5369 = vunpack.c.h.b16 %v5326
        %v5370 = vunpack.c.l.b16 %v5327
        %v5371 = vunpack.c.h.b16 %v5327
        %v5372 = vunpack.c.l.b16 %v5328
        %v5373 = vunpack.c.h.b16 %v5328
        %v5374 = vunpack.c.l.b16 %v5329
        %v5375 = vunpack.c.h.b16 %v5329
        %v5376 = vunpack.c.l.b16 %v5330
        %v5377 = vunpack.c.h.b16 %v5330
        %v5378 = vunpack.c.l.b16 %v5331
        %v5379 = vunpack.c.h.b16 %v5331
        %v5380 = vpack.c.b16 %v5352, %v5348
        %v5381 = vpack.c.b16 %v5353, %v5349
        %v5382 = vpack.c.b16 %v5354, %v5350
        %v5383 = vpack.c.b16 %v5355, %v5351
        %v5384 = vpack.c.b16 %v5360, %v5356
        %v5385 = vpack.c.b16 %v5361, %v5357
        %v5386 = vpack.c.b16 %v5362, %v5358
        %v5387 = vpack.c.b16 %v5363, %v5359
        %v5388 = vpack.c.b16 %v5368, %v5364
        %v5389 = vpack.c.b16 %v5369, %v5365
        %v5390 = vpack.c.b16 %v5370, %v5366
        %v5391 = vpack.c.b16 %v5371, %v5367
        %v5392 = vpack.c.b16 %v5376, %v5372
        %v5393 = vpack.c.b16 %v5377, %v5373
        %v5394 = vpack.c.b16 %v5378, %v5374
        %v5395 = vpack.c.b16 %v5379, %v5375
        %v5413 = vsel %vm491, %v5234, 0
        %v5416 = vsel %vm491, %v5235, 0
        %v5419 = vsel %vm491, %v5236, 0
        %v5422 = vsel %vm491, %v5237, 0
        %v5425 = vsel %vm491, %v5238, 0
        %v5428 = vsel %vm491, %v5239, 0
        %v5431 = vsel %vm491, %v5240, 0
        %v5434 = vsel %vm491, %v5241, 0
        %v5437 = vsel %vm491, %v5242, 0
        %5439 = vmatprep.subr.bf16.mxu0 %v5381
        %5440 = vmatpush1.bf16.msra.mxu0 %v5380
        %5441 = vmatprep.subr.bf16.mxu0 %v5385
        %5442 = vmatpush1.bf16.msra.mxu0 %v5384
        %5443 = vmatprep.subr.bf16.mxu0 %v5389
        %5444 = vmatpush1.bf16.msra.mxu0 %v5388
        %5445 = vmatprep.subr.bf16.mxu0 %v5393
        %5446 = vmatpush1.bf16.msra.mxu0 %v5392
        %5447 = vmatprep.subr.bf16.mxu0 0
        %5448 = vmatpush1.bf16.msra.mxu0 0
        %5449 = vmatprep.subr.bf16.mxu0 0
        %5450 = vmatpush1.bf16.msra.mxu0 0
        %5451 = vmatprep.subr.bf16.mxu0 0
        %5452 = vmatpush1.bf16.msra.mxu0 0
        %5453 = vmatprep.subr.bf16.mxu0 0
        %5454 = vmatpush1.bf16.msra.mxu0 0
        %5455 = vmatprep.subr.bf16.mxu0 0
        %5456 = vmatpush1.bf16.msra.mxu0 0
        %5457 = vmatprep.subr.bf16.mxu0 0
        %5458 = vmatpush1.bf16.msra.mxu0 0
        %5459 = vmatprep.subr.bf16.mxu0 0
        %5460 = vmatpush1.bf16.msra.mxu0 0
        %5461 = vmatprep.subr.bf16.mxu0 0
        %5462 = vmatpush1.bf16.msra.mxu0 0
        %5463 = vmatprep.subr.bf16.mxu0 0
        %5464 = vmatpush1.bf16.msra.mxu0 0
        %5465 = vmatprep.subr.bf16.mxu0 0
        %5466 = vmatpush1.bf16.msra.mxu0 0
        %5467 = vmatprep.subr.bf16.mxu0 0
        %5468 = vmatpush1.bf16.msra.mxu0 0
        %5469 = vmatprep.subr.bf16.mxu0 0
        %5470 = vmatpush1.bf16.msra.mxu0 0
        %5471 = vmatprep.mubr.bf16.mxu0 0
        %5472 = vmatmul.mubr.bf16.gmra.mrb[0].mxu0 %v5413
        %v5473 = vpop.f32.mrb[0].mxu0
        %v5474 = vadd.f32 0.0, %v5473
        %v5475 = vpop.f32.mrb[0].mxu0
        %v5476 = vadd.f32 0.0, %v5475
        %v5477 = vpop.f32.mrb[0].mxu0
        %v5478 = vadd.f32 0.0, %v5477
        %v5479 = vpop.f32.mrb[0].mxu0
        %v5480 = vadd.f32 0.0, %v5479
        %5481 = vmatprep.mubr.bf16.mxu0 0
        %5482 = vmatmul.mubr.bf16.gmra.mrb[0].mxu0 %v5416
        %v5483 = vpop.f32.mrb[0].mxu0
        %v5484 = vadd.f32 0.0, %v5483
        %v5485 = vpop.f32.mrb[0].mxu0
        %v5486 = vadd.f32 0.0, %v5485
        %v5487 = vpop.f32.mrb[0].mxu0
        %v5488 = vadd.f32 0.0, %v5487
        %v5489 = vpop.f32.mrb[0].mxu0
        %v5490 = vadd.f32 0.0, %v5489
        %5491 = vmatprep.mubr.bf16.mxu0 0
        %5492 = vmatmul.mubr.bf16.gmra.mrb[0].mxu0 %v5419
        %v5493 = vpop.f32.mrb[0].mxu0
        %v5494 = vadd.f32 0.0, %v5493
        %v5495 = vpop.f32.mrb[0].mxu0
        %v5496 = vadd.f32 0.0, %v5495
        %v5497 = vpop.f32.mrb[0].mxu0
        %v5498 = vadd.f32 0.0, %v5497
        %v5499 = vpop.f32.mrb[0].mxu0
        %v5500 = vadd.f32 0.0, %v5499
        %5501 = vmatprep.mubr.bf16.mxu0 0
        %5502 = vmatmul.mubr.bf16.gmra.mrb[0].mxu0 %v5422
        %v5503 = vpop.f32.mrb[0].mxu0
        %v5504 = vadd.f32 0.0, %v5503
        %v5505 = vpop.f32.mrb[0].mxu0
        %v5506 = vadd.f32 0.0, %v5505
        %v5507 = vpop.f32.mrb[0].mxu0
        %v5508 = vadd.f32 0.0, %v5507
        %v5509 = vpop.f32.mrb[0].mxu0
        %v5510 = vadd.f32 0.0, %v5509
        %5511 = vmatprep.mubr.bf16.mxu0 0
        %5512 = vmatmul.mubr.bf16.gmra.mrb[0].mxu0 %v5425
        %v5513 = vpop.f32.mrb[0].mxu0
        %v5514 = vadd.f32 0.0, %v5513
        %v5515 = vpop.f32.mrb[0].mxu0
        %v5516 = vadd.f32 0.0, %v5515
        %v5517 = vpop.f32.mrb[0].mxu0
        %v5518 = vadd.f32 0.0, %v5517
        %v5519 = vpop.f32.mrb[0].mxu0
        %v5520 = vadd.f32 0.0, %v5519
        %5521 = vmatprep.mubr.bf16.mxu0 0
        %5522 = vmatmul.mubr.bf16.gmra.mrb[0].mxu0 %v5428
        %v5523 = vpop.f32.mrb[0].mxu0
        %v5524 = vadd.f32 0.0, %v5523
        %v5525 = vpop.f32.mrb[0].mxu0
        %v5526 = vadd.f32 0.0, %v5525
        %v5527 = vpop.f32.mrb[0].mxu0
        %v5528 = vadd.f32 0.0, %v5527
        %v5529 = vpop.f32.mrb[0].mxu0
        %v5530 = vadd.f32 0.0, %v5529
        %5531 = vmatprep.mubr.bf16.mxu0 0
        %5532 = vmatmul.mubr.bf16.gmra.mrb[0].mxu0 %v5431
        %v5533 = vpop.f32.mrb[0].mxu0
        %v5534 = vadd.f32 0.0, %v5533
        %v5535 = vpop.f32.mrb[0].mxu0
        %v5536 = vadd.f32 0.0, %v5535
        %v5537 = vpop.f32.mrb[0].mxu0
        %v5538 = vadd.f32 0.0, %v5537
        %v5539 = vpop.f32.mrb[0].mxu0
        %v5540 = vadd.f32 0.0, %v5539
        %5541 = vmatprep.mubr.bf16.mxu0 0
        %5542 = vmatmul.mubr.bf16.gmra.mrb[0].mxu0 %v5434
        %v5543 = vpop.f32.mrb[0].mxu0
        %v5544 = vadd.f32 0.0, %v5543
        %v5545 = vpop.f32.mrb[0].mxu0
        %v5546 = vadd.f32 0.0, %v5545
        %v5547 = vpop.f32.mrb[0].mxu0
        %v5548 = vadd.f32 0.0, %v5547
        %v5549 = vpop.f32.mrb[0].mxu0
        %v5550 = vadd.f32 0.0, %v5549
        %5551 = vmatprep.mubr.bf16.mxu0 0
        %5552 = vmatmul.mubr.bf16.gmra.mrb[0].mxu0 %v5437
        %v5553 = vpop.f32.mrb[0].mxu0
        %v5554 = vadd.f32 0.0, %v5553
        %v5555 = vpop.f32.mrb[0].mxu0
        %v5556 = vadd.f32 0.0, %v5555
        %v5557 = vpop.f32.mrb[0].mxu0
        %v5558 = vadd.f32 0.0, %v5557
        %v5559 = vpop.f32.mrb[0].mxu0
        %v5560 = vadd.f32 0.0, %v5559
        %5561 = vdwg.mxu0
        %5562 = vmatprep.subr.bf16.mxu0 %v5383
        %5563 = vmatpush1.bf16.msra.mxu0 %v5382
        %5564 = vmatprep.subr.bf16.mxu0 %v5387
        %5565 = vmatpush1.bf16.msra.mxu0 %v5386
        %5566 = vmatprep.subr.bf16.mxu0 %v5391
        %5567 = vmatpush1.bf16.msra.mxu0 %v5390
        %5568 = vmatprep.subr.bf16.mxu0 %v5395
        %5569 = vmatpush1.bf16.msra.mxu0 %v5394
        %5570 = vmatprep.subr.bf16.mxu0 0
        %5571 = vmatpush1.bf16.msra.mxu0 0
        %5572 = vmatprep.subr.bf16.mxu0 0
        %5573 = vmatpush1.bf16.msra.mxu0 0
        %5574 = vmatprep.subr.bf16.mxu0 0
        %5575 = vmatpush1.bf16.msra.mxu0 0
        %5576 = vmatprep.subr.bf16.mxu0 0
        %5577 = vmatpush1.bf16.msra.mxu0 0
        %5578 = vmatprep.subr.bf16.mxu0 0
        %5579 = vmatpush1.bf16.msra.mxu0 0
        %5580 = vmatprep.subr.bf16.mxu0 0
        %5581 = vmatpush1.bf16.msra.mxu0 0
        %5582 = vmatprep.subr.bf16.mxu0 0
        %5583 = vmatpush1.bf16.msra.mxu0 0
        %5584 = vmatprep.subr.bf16.mxu0 0
        %5585 = vmatpush1.bf16.msra.mxu0 0
        %5586 = vmatprep.subr.bf16.mxu0 0
        %5587 = vmatpush1.bf16.msra.mxu0 0
        %5588 = vmatprep.subr.bf16.mxu0 0
        %5589 = vmatpush1.bf16.msra.mxu0 0
        %5590 = vmatprep.subr.bf16.mxu0 0
        %5591 = vmatpush1.bf16.msra.mxu0 0
        %5592 = vmatprep.subr.bf16.mxu0 0
        %5593 = vmatpush1.bf16.msra.mxu0 0
        %5594 = vmatprep.mubr.bf16.mxu0 0
        %5595 = vmatmul.mubr.bf16.gmra.mrb[0].mxu0 %v5413
        %v5596 = vpop.f32.mrb[0].mxu0
        %v5597 = vadd.f32 0.0, %v5596
        %v5598 = vpop.f32.mrb[0].mxu0
        %v5599 = vadd.f32 0.0, %v5598
        %v5600 = vpop.f32.mrb[0].mxu0
        %v5601 = vadd.f32 0.0, %v5600
        %v5602 = vpop.f32.mrb[0].mxu0
        %v5603 = vadd.f32 0.0, %v5602
        %5604 = vmatprep.mubr.bf16.mxu0 0
        %5605 = vmatmul.mubr.bf16.gmra.mrb[0].mxu0 %v5416
        %v5606 = vpop.f32.mrb[0].mxu0
        %v5607 = vadd.f32 0.0, %v5606
        %v5608 = vpop.f32.mrb[0].mxu0
        %v5609 = vadd.f32 0.0, %v5608
        %v5610 = vpop.f32.mrb[0].mxu0
        %v5611 = vadd.f32 0.0, %v5610
        %v5612 = vpop.f32.mrb[0].mxu0
        %v5613 = vadd.f32 0.0, %v5612
        %5614 = vmatprep.mubr.bf16.mxu0 0
        %5615 = vmatmul.mubr.bf16.gmra.mrb[0].mxu0 %v5419
        %v5616 = vpop.f32.mrb[0].mxu0
        %v5617 = vadd.f32 0.0, %v5616
        %v5618 = vpop.f32.mrb[0].mxu0
        %v5619 = vadd.f32 0.0, %v5618
        %v5620 = vpop.f32.mrb[0].mxu0
        %v5621 = vadd.f32 0.0, %v5620
        %v5622 = vpop.f32.mrb[0].mxu0
        %v5623 = vadd.f32 0.0, %v5622
        %5624 = vmatprep.mubr.bf16.mxu0 0
        %5625 = vmatmul.mubr.bf16.gmra.mrb[0].mxu0 %v5422
        %v5626 = vpop.f32.mrb[0].mxu0
        %v5627 = vadd.f32 0.0, %v5626
        %v5628 = vpop.f32.mrb[0].mxu0
        %v5629 = vadd.f32 0.0, %v5628
        %v5630 = vpop.f32.mrb[0].mxu0
        %v5631 = vadd.f32 0.0, %v5630
        %v5632 = vpop.f32.mrb[0].mxu0
        %v5633 = vadd.f32 0.0, %v5632
        %5634 = vmatprep.mubr.bf16.mxu0 0
        %5635 = vmatmul.mubr.bf16.gmra.mrb[0].mxu0 %v5425
        %v5636 = vpop.f32.mrb[0].mxu0
        %v5637 = vadd.f32 0.0, %v5636
        %v5638 = vpop.f32.mrb[0].mxu0
        %v5639 = vadd.f32 0.0, %v5638
        %v5640 = vpop.f32.mrb[0].mxu0
        %v5641 = vadd.f32 0.0, %v5640
        %v5642 = vpop.f32.mrb[0].mxu0
        %v5643 = vadd.f32 0.0, %v5642
        %5644 = vmatprep.mubr.bf16.mxu0 0
        %5645 = vmatmul.mubr.bf16.gmra.mrb[0].mxu0 %v5428
        %v5646 = vpop.f32.mrb[0].mxu0
        %v5647 = vadd.f32 0.0, %v5646
        %v5648 = vpop.f32.mrb[0].mxu0
        %v5649 = vadd.f32 0.0, %v5648
        %v5650 = vpop.f32.mrb[0].mxu0
        %v5651 = vadd.f32 0.0, %v5650
        %v5652 = vpop.f32.mrb[0].mxu0
        %v5653 = vadd.f32 0.0, %v5652
        %5654 = vmatprep.mubr.bf16.mxu0 0
        %5655 = vmatmul.mubr.bf16.gmra.mrb[0].mxu0 %v5431
        %v5656 = vpop.f32.mrb[0].mxu0
        %v5657 = vadd.f32 0.0, %v5656
        %v5658 = vpop.f32.mrb[0].mxu0
        %v5659 = vadd.f32 0.0, %v5658
        %v5660 = vpop.f32.mrb[0].mxu0
        %v5661 = vadd.f32 0.0, %v5660
        %v5662 = vpop.f32.mrb[0].mxu0
        %v5663 = vadd.f32 0.0, %v5662
        %5664 = vmatprep.mubr.bf16.mxu0 0
        %5665 = vmatmul.mubr.bf16.gmra.mrb[0].mxu0 %v5434
        %v5666 = vpop.f32.mrb[0].mxu0
        %v5667 = vadd.f32 0.0, %v5666
        %v5668 = vpop.f32.mrb[0].mxu0
        %v5669 = vadd.f32 0.0, %v5668
        %v5670 = vpop.f32.mrb[0].mxu0
        %v5671 = vadd.f32 0.0, %v5670
        %v5672 = vpop.f32.mrb[0].mxu0
        %v5673 = vadd.f32 0.0, %v5672
        %5674 = vmatprep.mubr.bf16.mxu0 0
        %5675 = vmatmul.mubr.bf16.gmra.mrb[0].mxu0 %v5437
        %v5676 = vpop.f32.mrb[0].mxu0
        %v5677 = vadd.f32 0.0, %v5676
        %v5678 = vpop.f32.mrb[0].mxu0
        %v5679 = vadd.f32 0.0, %v5678
        %v5680 = vpop.f32.mrb[0].mxu0
        %v5681 = vadd.f32 0.0, %v5680
        %v5682 = vpop.f32.mrb[0].mxu0
        %v5683 = vadd.f32 0.0, %v5682
        %5684 = vdwg.mxu0
        %v5685 = vadd.f32 %v5243, %v5474
        %v5686 = vadd.f32 %v5244, %v5476
        %v5687 = vadd.f32 %v5245, %v5597
        %v5688 = vadd.f32 %v5246, %v5599
        %v5689 = vadd.f32 %v5247, %v5478
        %v5690 = vadd.f32 %v5248, %v5480
        %v5691 = vadd.f32 %v5249, %v5601
        %v5692 = vadd.f32 %v5250, %v5603
        %v5693 = vadd.f32 %v5251, %v5484
        %v5694 = vadd.f32 %v5252, %v5486
        %v5695 = vadd.f32 %v5253, %v5607
        %v5696 = vadd.f32 %v5254, %v5609
        %v5697 = vadd.f32 %v5255, %v5488
        %v5698 = vadd.f32 %v5256, %v5490
        %v5699 = vadd.f32 %v5257, %v5611
        %v5700 = vadd.f32 %v5258, %v5613
        %v5701 = vadd.f32 %v5259, %v5494
        %v5702 = vadd.f32 %v5260, %v5496
        %v5703 = vadd.f32 %v5261, %v5617
        %v5704 = vadd.f32 %v5262, %v5619
        %v5705 = vadd.f32 %v5263, %v5498
        %v5706 = vadd.f32 %v5264, %v5500
        %v5707 = vadd.f32 %v5265, %v5621
        %v5708 = vadd.f32 %v5266, %v5623
        %v5709 = vadd.f32 %v5267, %v5504
        %v5710 = vadd.f32 %v5268, %v5506
        %v5711 = vadd.f32 %v5269, %v5627
        %v5712 = vadd.f32 %v5270, %v5629
        %v5713 = vadd.f32 %v5271, %v5508
        %v5714 = vadd.f32 %v5272, %v5510
        %v5715 = vadd.f32 %v5273, %v5631
        %v5716 = vadd.f32 %v5274, %v5633
        %v5717 = vadd.f32 %v5275, %v5514
        %v5718 = vadd.f32 %v5276, %v5516
        %v5719 = vadd.f32 %v5277, %v5637
        %v5720 = vadd.f32 %v5278, %v5639
        %v5721 = vadd.f32 %v5279, %v5518
        %v5722 = vadd.f32 %v5280, %v5520
        %v5723 = vadd.f32 %v5281, %v5641
        %v5724 = vadd.f32 %v5282, %v5643
        %v5725 = vadd.f32 %v5283, %v5524
        %v5726 = vadd.f32 %v5284, %v5526
        %v5727 = vadd.f32 %v5285, %v5647
        %v5728 = vadd.f32 %v5286, %v5649
        %v5729 = vadd.f32 %v5287, %v5528
        %v5730 = vadd.f32 %v5288, %v5530
        %v5731 = vadd.f32 %v5289, %v5651
        %v5732 = vadd.f32 %v5290, %v5653
        %v5733 = vadd.f32 %v5291, %v5534
        %v5734 = vadd.f32 %v5292, %v5536
        %v5735 = vadd.f32 %v5293, %v5657
        %v5736 = vadd.f32 %v5294, %v5659
        %v5737 = vadd.f32 %v5295, %v5538
        %v5738 = vadd.f32 %v5296, %v5540
        %v5739 = vadd.f32 %v5297, %v5661
        %v5740 = vadd.f32 %v5298, %v5663
        %v5741 = vadd.f32 %v5299, %v5544
        %v5742 = vadd.f32 %v5300, %v5546
        %v5743 = vadd.f32 %v5301, %v5667
        %v5744 = vadd.f32 %v5302, %v5669
        %v5745 = vadd.f32 %v5303, %v5548
        %v5746 = vadd.f32 %v5304, %v5550
        %v5747 = vadd.f32 %v5305, %v5671
        %v5748 = vadd.f32 %v5306, %v5673
        %v5749 = vadd.f32 %v5307, %v5554
        %v5750 = vadd.f32 %v5308, %v5556
        %v5751 = vadd.f32 %v5309, %v5677
        %v5752 = vadd.f32 %v5310, %v5679
        %v5753 = vadd.f32 %v5311, %v5558
        %v5754 = vadd.f32 %v5312, %v5560
        %v5755 = vadd.f32 %v5313, %v5681
        %v5756 = vadd.f32 %v5314, %v5683
        %5757 = vst [vmem:[#allocation2] sm:$0xff] %v5685
        %5758 = vst [vmem:[#allocation2 + $0x8] sm:$0xff] %v5686
        %5759 = vst [vmem:[#allocation2 + $0x10] sm:$0xff] %v5687
        %5760 = vst [vmem:[#allocation2 + $0x18] sm:$0xff] %v5688
        %5761 = vst [vmem:[#allocation2 + $0x20] sm:$0xff] %v5689
        %5762 = vst [vmem:[#allocation2 + $0x28] sm:$0xff] %v5690
        %5763 = vst [vmem:[#allocation2 + $0x30] sm:$0xff] %v5691
        %5764 = vst [vmem:[#allocation2 + $0x38] sm:$0xff] %v5692
        %5765 = vst [vmem:[#allocation2 + $0x40] sm:$0xff] %v5693
        %5766 = vst [vmem:[#allocation2 + $0x48] sm:$0xff] %v5694
        %5767 = vst [vmem:[#allocation2 + $0x50] sm:$0xff] %v5695
        %5768 = vst [vmem:[#allocation2 + $0x58] sm:$0xff] %v5696
        %5769 = vst [vmem:[#allocation2 + $0x60] sm:$0xff] %v5697
        %5770 = vst [vmem:[#allocation2 + $0x68] sm:$0xff] %v5698
        %5771 = vst [vmem:[#allocation2 + $0x70] sm:$0xff] %v5699
        %5772 = vst [vmem:[#allocation2 + $0x78] sm:$0xff] %v5700
        %5773 = vst [vmem:[#allocation2 + $0x80] sm:$0xff] %v5701
        %5774 = vst [vmem:[#allocation2 + $0x88] sm:$0xff] %v5702
        %5775 = vst [vmem:[#allocation2 + $0x90] sm:$0xff] %v5703
        %5776 = vst [vmem:[#allocation2 + $0x98] sm:$0xff] %v5704
        %5777 = vst [vmem:[#allocation2 + $0xa0] sm:$0xff] %v5705
        %5778 = vst [vmem:[#allocation2 + $0xa8] sm:$0xff] %v5706
        %5779 = vst [vmem:[#allocation2 + $0xb0] sm:$0xff] %v5707
        %5780 = vst [vmem:[#allocation2 + $0xb8] sm:$0xff] %v5708
        %5781 = vst [vmem:[#allocation2 + $0xc0] sm:$0xff] %v5709
        %5782 = vst [vmem:[#allocation2 + $0xc8] sm:$0xff] %v5710
        %5783 = vst [vmem:[#allocation2 + $0xd0] sm:$0xff] %v5711
        %5784 = vst [vmem:[#allocation2 + $0xd8] sm:$0xff] %v5712
        %5785 = vst [vmem:[#allocation2 + $0xe0] sm:$0xff] %v5713
        %5786 = vst [vmem:[#allocation2 + $0xe8] sm:$0xff] %v5714
        %5787 = vst [vmem:[#allocation2 + $0xf0] sm:$0xff] %v5715
        %5788 = vst [vmem:[#allocation2 + $0xf8] sm:$0xff] %v5716
        %5789 = vst [vmem:[#allocation2 + $0x100] sm:$0xff] %v5717
        %5790 = vst [vmem:[#allocation2 + $0x108] sm:$0xff] %v5718
        %5791 = vst [vmem:[#allocation2 + $0x110] sm:$0xff] %v5719
        %5792 = vst [vmem:[#allocation2 + $0x118] sm:$0xff] %v5720
        %5793 = vst [vmem:[#allocation2 + $0x120] sm:$0xff] %v5721
        %5794 = vst [vmem:[#allocation2 + $0x128] sm:$0xff] %v5722
        %5795 = vst [vmem:[#allocation2 + $0x130] sm:$0xff] %v5723
        %5796 = vst [vmem:[#allocation2 + $0x138] sm:$0xff] %v5724
        %5797 = vst [vmem:[#allocation2 + $0x140] sm:$0xff] %v5725
        %5798 = vst [vmem:[#allocation2 + $0x148] sm:$0xff] %v5726
        %5799 = vst [vmem:[#allocation2 + $0x150] sm:$0xff] %v5727
        %5800 = vst [vmem:[#allocation2 + $0x158] sm:$0xff] %v5728
        %5801 = vst [vmem:[#allocation2 + $0x160] sm:$0xff] %v5729
        %5802 = vst [vmem:[#allocation2 + $0x168] sm:$0xff] %v5730
        %5803 = vst [vmem:[#allocation2 + $0x170] sm:$0xff] %v5731
        %5804 = vst [vmem:[#allocation2 + $0x178] sm:$0xff] %v5732
        %5805 = vst [vmem:[#allocation2 + $0x180] sm:$0xff] %v5733
        %5806 = vst [vmem:[#allocation2 + $0x188] sm:$0xff] %v5734
        %5807 = vst [vmem:[#allocation2 + $0x190] sm:$0xff] %v5735
        %5808 = vst [vmem:[#allocation2 + $0x198] sm:$0xff] %v5736
        %5809 = vst [vmem:[#allocation2 + $0x1a0] sm:$0xff] %v5737
        %5810 = vst [vmem:[#allocation2 + $0x1a8] sm:$0xff] %v5738
        %5811 = vst [vmem:[#allocation2 + $0x1b0] sm:$0xff] %v5739
        %5812 = vst [vmem:[#allocation2 + $0x1b8] sm:$0xff] %v5740
        %5813 = vst [vmem:[#allocation2 + $0x1c0] sm:$0xff] %v5741
        %5814 = vst [vmem:[#allocation2 + $0x1c8] sm:$0xff] %v5742
        %5815 = vst [vmem:[#allocation2 + $0x1d0] sm:$0xff] %v5743
        %5816 = vst [vmem:[#allocation2 + $0x1d8] sm:$0xff] %v5744
        %5817 = vst [vmem:[#allocation2 + $0x1e0] sm:$0xff] %v5745
        %5818 = vst [vmem:[#allocation2 + $0x1e8] sm:$0xff] %v5746
        %5819 = vst [vmem:[#allocation2 + $0x1f0] sm:$0xff] %v5747
        %5820 = vst [vmem:[#allocation2 + $0x1f8] sm:$0xff] %v5748
        %5821 = vst [vmem:[#allocation2 + $0x200] sm:$0xff] %v5749
        %5822 = vst [vmem:[#allocation2 + $0x208] sm:$0xff] %v5750
        %5823 = vst [vmem:[#allocation2 + $0x210] sm:$0xff] %v5751
        %5824 = vst [vmem:[#allocation2 + $0x218] sm:$0xff] %v5752
        %5825 = vst [vmem:[#allocation2 + $0x220] sm:$0xff] %v5753
        %5826 = vst [vmem:[#allocation2 + $0x228] sm:$0xff] %v5754
        %5827 = vst [vmem:[#allocation2 + $0x230] sm:$0xff] %v5755
        %5828 = vst [vmem:[#allocation2 + $0x238] sm:$0xff] %v5756
        %v5829 = vld [vmem:[#allocation2] sm:$0xff]
        %v5830 = vld [vmem:[#allocation2 + $0x8] sm:$0xff]
        %v5831 = vld [vmem:[#allocation2 + $0x10] sm:$0xff]
        %v5832 = vld [vmem:[#allocation2 + $0x18] sm:$0xff]
        %v5833 = vld [vmem:[#allocation2 + $0x20] sm:$0xff]
        %v5834 = vld [vmem:[#allocation2 + $0x28] sm:$0xff]
        %v5835 = vld [vmem:[#allocation2 + $0x30] sm:$0xff]
        %v5836 = vld [vmem:[#allocation2 + $0x38] sm:$0xff]
        %v5837 = vld [vmem:[#allocation2 + $0x40] sm:$0xff]
        %v5838 = vld [vmem:[#allocation2 + $0x48] sm:$0xff]
        %v5839 = vld [vmem:[#allocation2 + $0x50] sm:$0xff]
        %v5840 = vld [vmem:[#allocation2 + $0x58] sm:$0xff]
        %v5841 = vld [vmem:[#allocation2 + $0x60] sm:$0xff]
        %v5842 = vld [vmem:[#allocation2 + $0x68] sm:$0xff]
        %v5843 = vld [vmem:[#allocation2 + $0x70] sm:$0xff]
        %v5844 = vld [vmem:[#allocation2 + $0x78] sm:$0xff]
        %v5845 = vld [vmem:[#allocation2 + $0x80] sm:$0xff]
        %v5846 = vld [vmem:[#allocation2 + $0x88] sm:$0xff]
        %v5847 = vld [vmem:[#allocation2 + $0x90] sm:$0xff]
        %v5848 = vld [vmem:[#allocation2 + $0x98] sm:$0xff]
        %v5849 = vld [vmem:[#allocation2 + $0xa0] sm:$0xff]
        %v5850 = vld [vmem:[#allocation2 + $0xa8] sm:$0xff]
        %v5851 = vld [vmem:[#allocation2 + $0xb0] sm:$0xff]
        %v5852 = vld [vmem:[#allocation2 + $0xb8] sm:$0xff]
        %v5853 = vld [vmem:[#allocation2 + $0xc0] sm:$0xff]
        %v5854 = vld [vmem:[#allocation2 + $0xc8] sm:$0xff]
        %v5855 = vld [vmem:[#allocation2 + $0xd0] sm:$0xff]
        %v5856 = vld [vmem:[#allocation2 + $0xd8] sm:$0xff]
        %v5857 = vld [vmem:[#allocation2 + $0xe0] sm:$0xff]
        %v5858 = vld [vmem:[#allocation2 + $0xe8] sm:$0xff]
        %v5859 = vld [vmem:[#allocation2 + $0xf0] sm:$0xff]
        %v5860 = vld [vmem:[#allocation2 + $0xf8] sm:$0xff]
        %v5861 = vld [vmem:[#allocation2 + $0x100] sm:$0xff]
        %v5862 = vld [vmem:[#allocation2 + $0x108] sm:$0xff]
        %v5863 = vld [vmem:[#allocation2 + $0x110] sm:$0xff]
        %v5864 = vld [vmem:[#allocation2 + $0x118] sm:$0xff]
        %v5865 = vld [vmem:[#allocation2 + $0x120] sm:$0xff]
        %v5866 = vld [vmem:[#allocation2 + $0x128] sm:$0xff]
        %v5867 = vld [vmem:[#allocation2 + $0x130] sm:$0xff]
        %v5868 = vld [vmem:[#allocation2 + $0x138] sm:$0xff]
        %v5869 = vld [vmem:[#allocation2 + $0x140] sm:$0xff]
        %v5870 = vld [vmem:[#allocation2 + $0x148] sm:$0xff]
        %v5871 = vld [vmem:[#allocation2 + $0x150] sm:$0xff]
        %v5872 = vld [vmem:[#allocation2 + $0x158] sm:$0xff]
        %v5873 = vld [vmem:[#allocation2 + $0x160] sm:$0xff]
        %v5874 = vld [vmem:[#allocation2 + $0x168] sm:$0xff]
        %v5875 = vld [vmem:[#allocation2 + $0x170] sm:$0xff]
        %v5876 = vld [vmem:[#allocation2 + $0x178] sm:$0xff]
        %v5877 = vld [vmem:[#allocation2 + $0x180] sm:$0xff]
        %v5878 = vld [vmem:[#allocation2 + $0x188] sm:$0xff]
        %v5879 = vld [vmem:[#allocation2 + $0x190] sm:$0xff]
        %v5880 = vld [vmem:[#allocation2 + $0x198] sm:$0xff]
        %v5881 = vld [vmem:[#allocation2 + $0x1a0] sm:$0xff]
        %v5882 = vld [vmem:[#allocation2 + $0x1a8] sm:$0xff]
        %v5883 = vld [vmem:[#allocation2 + $0x1b0] sm:$0xff]
        %v5884 = vld [vmem:[#allocation2 + $0x1b8] sm:$0xff]
        %v5885 = vld [vmem:[#allocation2 + $0x1c0] sm:$0xff]
        %v5886 = vld [vmem:[#allocation2 + $0x1c8] sm:$0xff]
        %v5887 = vld [vmem:[#allocation2 + $0x1d0] sm:$0xff]
        %v5888 = vld [vmem:[#allocation2 + $0x1d8] sm:$0xff]
        %v5889 = vld [vmem:[#allocation2 + $0x1e0] sm:$0xff]
        %v5890 = vld [vmem:[#allocation2 + $0x1e8] sm:$0xff]
        %v5891 = vld [vmem:[#allocation2 + $0x1f0] sm:$0xff]
        %v5892 = vld [vmem:[#allocation2 + $0x1f8] sm:$0xff]
        %v5893 = vld [vmem:[#allocation2 + $0x200] sm:$0xff]
        %v5894 = vld [vmem:[#allocation2 + $0x208] sm:$0xff]
        %v5895 = vld [vmem:[#allocation2 + $0x210] sm:$0xff]
        %v5896 = vld [vmem:[#allocation2 + $0x218] sm:$0xff]
        %v5897 = vld [vmem:[#allocation2 + $0x220] sm:$0xff]
        %v5898 = vld [vmem:[#allocation2 + $0x228] sm:$0xff]
        %v5899 = vld [vmem:[#allocation2 + $0x230] sm:$0xff]
        %v5900 = vld [vmem:[#allocation2 + $0x238] sm:$0xff]
        %v5901 = vld [vmem:[%s2] sm:$0xf]
        %v5903 = vlaneseq
        %v5904 = vshrl.u32 %v5903, 7
        %v5905 = vsub.s32 0, %v5904
        %v5906 = vrot.slane %v5901, %v5905
        %v5907 = vlaneseq
        %v5908 = vshrl.u32 %v5907, 7
        %v5909 = vsub.s32 1, %v5908
        %v5910 = vrot.slane %v5901, %v5909
        %v5911 = vlaneseq
        %v5912 = vshrl.u32 %v5911, 7
        %v5913 = vsub.s32 2, %v5912
        %v5914 = vrot.slane %v5901, %v5913
        %v5915 = vlaneseq
        %v5916 = vshrl.u32 %v5915, 7
        %v5917 = vsub.s32 3, %v5916
        %v5918 = vrot.slane %v5901, %v5917
        %v5923 = vadd.f32 %v5829, %v5906
        %v5924 = vadd.f32 %v5830, %v5910
        %v5925 = vadd.f32 %v5831, %v5914
        %v5926 = vadd.f32 %v5832, %v5918
        %v5927 = vadd.f32 %v5833, %v5906
        %v5928 = vadd.f32 %v5834, %v5910
        %v5929 = vadd.f32 %v5835, %v5914
        %v5930 = vadd.f32 %v5836, %v5918
        %v5931 = vadd.f32 %v5837, %v5906
        %v5932 = vadd.f32 %v5838, %v5910
        %v5933 = vadd.f32 %v5839, %v5914
        %v5934 = vadd.f32 %v5840, %v5918
        %v5935 = vadd.f32 %v5841, %v5906
        %v5936 = vadd.f32 %v5842, %v5910
        %v5937 = vadd.f32 %v5843, %v5914
        %v5938 = vadd.f32 %v5844, %v5918
        %v5939 = vadd.f32 %v5845, %v5906
        %v5940 = vadd.f32 %v5846, %v5910
        %v5941 = vadd.f32 %v5847, %v5914
        %v5942 = vadd.f32 %v5848, %v5918
        %v5943 = vadd.f32 %v5849, %v5906
        %v5944 = vadd.f32 %v5850, %v5910
        %v5945 = vadd.f32 %v5851, %v5914
        %v5946 = vadd.f32 %v5852, %v5918
        %v5947 = vadd.f32 %v5853, %v5906
        %v5948 = vadd.f32 %v5854, %v5910
        %v5949 = vadd.f32 %v5855, %v5914
        %v5950 = vadd.f32 %v5856, %v5918
        %v5951 = vadd.f32 %v5857, %v5906
        %v5952 = vadd.f32 %v5858, %v5910
        %v5953 = vadd.f32 %v5859, %v5914
        %v5954 = vadd.f32 %v5860, %v5918
        %v5955 = vadd.f32 %v5861, %v5906
        %v5956 = vadd.f32 %v5862, %v5910
        %v5957 = vadd.f32 %v5863, %v5914
        %v5958 = vadd.f32 %v5864, %v5918
        %v5959 = vadd.f32 %v5865, %v5906
        %v5960 = vadd.f32 %v5866, %v5910
        %v5961 = vadd.f32 %v5867, %v5914
        %v5962 = vadd.f32 %v5868, %v5918
        %v5963 = vadd.f32 %v5869, %v5906
        %v5964 = vadd.f32 %v5870, %v5910
        %v5965 = vadd.f32 %v5871, %v5914
        %v5966 = vadd.f32 %v5872, %v5918
        %v5967 = vadd.f32 %v5873, %v5906
        %v5968 = vadd.f32 %v5874, %v5910
        %v5969 = vadd.f32 %v5875, %v5914
        %v5970 = vadd.f32 %v5876, %v5918
        %v5971 = vadd.f32 %v5877, %v5906
        %v5972 = vadd.f32 %v5878, %v5910
        %v5973 = vadd.f32 %v5879, %v5914
        %v5974 = vadd.f32 %v5880, %v5918
        %v5975 = vadd.f32 %v5881, %v5906
        %v5976 = vadd.f32 %v5882, %v5910
        %v5977 = vadd.f32 %v5883, %v5914
        %v5978 = vadd.f32 %v5884, %v5918
        %v5979 = vadd.f32 %v5885, %v5906
        %v5980 = vadd.f32 %v5886, %v5910
        %v5981 = vadd.f32 %v5887, %v5914
        %v5982 = vadd.f32 %v5888, %v5918
        %v5983 = vadd.f32 %v5889, %v5906
        %v5984 = vadd.f32 %v5890, %v5910
        %v5985 = vadd.f32 %v5891, %v5914
        %v5986 = vadd.f32 %v5892, %v5918
        %v5987 = vadd.f32 %v5893, %v5906
        %v5988 = vadd.f32 %v5894, %v5910
        %v5989 = vadd.f32 %v5895, %v5914
        %v5990 = vadd.f32 %v5896, %v5918
        %v5991 = vadd.f32 %v5897, %v5906
        %v5992 = vadd.f32 %v5898, %v5910
        %v5993 = vadd.f32 %v5899, %v5914
        %v5994 = vadd.f32 %v5900, %v5918
        %v5995 = vmax.f32 %v5923, 0.0
        %v5996 = vmax.f32 %v5924, 0.0
        %v5997 = vmax.f32 %v5925, 0.0
        %v5998 = vmax.f32 %v5926, 0.0
        %v5999 = vmax.f32 %v5927, 0.0
        %v6000 = vmax.f32 %v5928, 0.0
        %v6001 = vmax.f32 %v5929, 0.0
        %v6002 = vmax.f32 %v5930, 0.0
        %v6003 = vmax.f32 %v5931, 0.0
        %v6004 = vmax.f32 %v5932, 0.0
        %v6005 = vmax.f32 %v5933, 0.0
        %v6006 = vmax.f32 %v5934, 0.0
        %v6007 = vmax.f32 %v5935, 0.0
        %v6008 = vmax.f32 %v5936, 0.0
        %v6009 = vmax.f32 %v5937, 0.0
        %v6010 = vmax.f32 %v5938, 0.0
        %v6011 = vmax.f32 %v5939, 0.0
        %v6012 = vmax.f32 %v5940, 0.0
        %v6013 = vmax.f32 %v5941, 0.0
        %v6014 = vmax.f32 %v5942, 0.0
        %v6015 = vmax.f32 %v5943, 0.0
        %v6016 = vmax.f32 %v5944, 0.0
        %v6017 = vmax.f32 %v5945, 0.0
        %v6018 = vmax.f32 %v5946, 0.0
        %v6019 = vmax.f32 %v5947, 0.0
        %v6020 = vmax.f32 %v5948, 0.0
        %v6021 = vmax.f32 %v5949, 0.0
        %v6022 = vmax.f32 %v5950, 0.0
        %v6023 = vmax.f32 %v5951, 0.0
        %v6024 = vmax.f32 %v5952, 0.0
        %v6025 = vmax.f32 %v5953, 0.0
        %v6026 = vmax.f32 %v5954, 0.0
        %v6027 = vmax.f32 %v5955, 0.0
        %v6028 = vmax.f32 %v5956, 0.0
        %v6029 = vmax.f32 %v5957, 0.0
        %v6030 = vmax.f32 %v5958, 0.0
        %v6031 = vmax.f32 %v5959, 0.0
        %v6032 = vmax.f32 %v5960, 0.0
        %v6033 = vmax.f32 %v5961, 0.0
        %v6034 = vmax.f32 %v5962, 0.0
        %v6035 = vmax.f32 %v5963, 0.0
        %v6036 = vmax.f32 %v5964, 0.0
        %v6037 = vmax.f32 %v5965, 0.0
        %v6038 = vmax.f32 %v5966, 0.0
        %v6039 = vmax.f32 %v5967, 0.0
        %v6040 = vmax.f32 %v5968, 0.0
        %v6041 = vmax.f32 %v5969, 0.0
        %v6042 = vmax.f32 %v5970, 0.0
        %v6043 = vmax.f32 %v5971, 0.0
        %v6044 = vmax.f32 %v5972, 0.0
        %v6045 = vmax.f32 %v5973, 0.0
        %v6046 = vmax.f32 %v5974, 0.0
        %v6047 = vmax.f32 %v5975, 0.0
        %v6048 = vmax.f32 %v5976, 0.0
        %v6049 = vmax.f32 %v5977, 0.0
        %v6050 = vmax.f32 %v5978, 0.0
        %v6051 = vmax.f32 %v5979, 0.0
        %v6052 = vmax.f32 %v5980, 0.0
        %v6053 = vmax.f32 %v5981, 0.0
        %v6054 = vmax.f32 %v5982, 0.0
        %v6055 = vmax.f32 %v5983, 0.0
        %v6056 = vmax.f32 %v5984, 0.0
        %v6057 = vmax.f32 %v5985, 0.0
        %v6058 = vmax.f32 %v5986, 0.0
        %v6059 = vmax.f32 %v5987, 0.0
        %v6060 = vmax.f32 %v5988, 0.0
        %v6061 = vmax.f32 %v5989, 0.0
        %v6062 = vmax.f32 %v5990, 0.0
        %v6063 = vmax.f32 %v5991, 0.0
        %v6064 = vmax.f32 %v5992, 0.0
        %v6065 = vmax.f32 %v5993, 0.0
        %v6066 = vmax.f32 %v5994, 0.0
        %v6067 = vpack.c.bf16 %v5999, %v5995
        %v6068 = vpack.c.bf16 %v6000, %v5996
        %v6069 = vpack.c.bf16 %v6001, %v5997
        %v6070 = vpack.c.bf16 %v6002, %v5998
        %v6071 = vpack.c.bf16 %v6007, %v6003
        %v6072 = vpack.c.bf16 %v6008, %v6004
        %v6073 = vpack.c.bf16 %v6009, %v6005
        %v6074 = vpack.c.bf16 %v6010, %v6006
        %v6075 = vpack.c.bf16 %v6015, %v6011
        %v6076 = vpack.c.bf16 %v6016, %v6012
        %v6077 = vpack.c.bf16 %v6017, %v6013
        %v6078 = vpack.c.bf16 %v6018, %v6014
        %v6079 = vpack.c.bf16 %v6023, %v6019
        %v6080 = vpack.c.bf16 %v6024, %v6020
        %v6081 = vpack.c.bf16 %v6025, %v6021
        %v6082 = vpack.c.bf16 %v6026, %v6022
        %v6083 = vpack.c.bf16 %v6031, %v6027
        %v6084 = vpack.c.bf16 %v6032, %v6028
        %v6085 = vpack.c.bf16 %v6033, %v6029
        %v6086 = vpack.c.bf16 %v6034, %v6030
        %v6087 = vpack.c.bf16 %v6039, %v6035
        %v6088 = vpack.c.bf16 %v6040, %v6036
        %v6089 = vpack.c.bf16 %v6041, %v6037
        %v6090 = vpack.c.bf16 %v6042, %v6038
        %v6091 = vpack.c.bf16 %v6047, %v6043
        %v6092 = vpack.c.bf16 %v6048, %v6044
        %v6093 = vpack.c.bf16 %v6049, %v6045
        %v6094 = vpack.c.bf16 %v6050, %v6046
        %v6095 = vpack.c.bf16 %v6055, %v6051
        %v6096 = vpack.c.bf16 %v6056, %v6052
        %v6097 = vpack.c.bf16 %v6057, %v6053
        %v6098 = vpack.c.bf16 %v6058, %v6054
        %v6099 = vpack.c.bf16 %v6063, %v6059
        %v6100 = vpack.c.bf16 %v6064, %v6060
        %v6101 = vpack.c.bf16 %v6065, %v6061
        %v6102 = vpack.c.bf16 %v6066, %v6062
        %v6103 = vld [vmem:[%s3] sm:$0xf]
        %v6104 = vld [vmem:[%s3 + $0x4] sm:$0xf]
        %v6105 = vld [vmem:[%s3 + $0x8] sm:$0xf]
        %v6106 = vld [vmem:[%s3 + $0xc] sm:$0xf]
        %v6107 = vld [vmem:[%s3 + $0x10] sm:$0xf]
        %v6108 = vld [vmem:[%s3 + $0x14] sm:$0xf]
        %v6109 = vld [vmem:[%s3 + $0x18] sm:$0xf]
        %v6110 = vld [vmem:[%s3 + $0x1c] sm:$0xf]
        %v6111 = vld [vmem:[%s3 + $0x20] sm:$0xf]
        %v6112 = vld [vmem:[%s3 + $0x24] sm:$0xf]
        %v6113 = vld [vmem:[%s3 + $0x28] sm:$0xf]
        %v6114 = vld [vmem:[%s3 + $0x2c] sm:$0xf]
        %v6115 = vld [vmem:[%s3 + $0x30] sm:$0xf]
        %v6116 = vld [vmem:[%s3 + $0x34] sm:$0xf]
        %v6117 = vld [vmem:[%s3 + $0x38] sm:$0xf]
        %v6118 = vld [vmem:[%s3 + $0x3c] sm:$0xf]
        %v6119 = vld [vmem:[%s3 + $0x40] sm:$0xf]
        %v6120 = vld [vmem:[%s3 + $0x44] sm:$0xf]
        %v6121 = vld [vmem:[%s3 + $0x48] sm:$0xf]
        %v6122 = vld [vmem:[%s3 + $0x4c] sm:$0xf]
        %v6123 = vld [vmem:[%s3 + $0x50] sm:$0xf]
        %v6124 = vld [vmem:[%s3 + $0x54] sm:$0xf]
        %v6125 = vld [vmem:[%s3 + $0x58] sm:$0xf]
        %v6126 = vld [vmem:[%s3 + $0x5c] sm:$0xf]
        %v6127 = vld [vmem:[%s3 + $0x60] sm:$0xf]
        %v6128 = vld [vmem:[%s3 + $0x64] sm:$0xf]
        %v6129 = vld [vmem:[%s3 + $0x68] sm:$0xf]
        %v6130 = vld [vmem:[%s3 + $0x6c] sm:$0xf]
        %v6131 = vld [vmem:[%s3 + $0x70] sm:$0xf]
        %v6132 = vld [vmem:[%s3 + $0x74] sm:$0xf]
        %v6133 = vld [vmem:[%s3 + $0x78] sm:$0xf]
        %v6134 = vld [vmem:[%s3 + $0x7c] sm:$0xf]
        %v6135 = vld [vmem:[%s3 + $0x80] sm:$0xf]
        %v6136 = vld [vmem:[%s3 + $0x84] sm:$0xf]
        %v6137 = vld [vmem:[%s3 + $0x88] sm:$0xf]
        %v6138 = vld [vmem:[%s3 + $0x8c] sm:$0xf]
        %v6139 = vld [vmem:[%s3 + $0x90] sm:$0xf]
        %v6140 = vld [vmem:[%s3 + $0x94] sm:$0xf]
        %v6141 = vld [vmem:[%s3 + $0x98] sm:$0xf]
        %v6142 = vld [vmem:[%s3 + $0x9c] sm:$0xf]
        %v6143 = vld [vmem:[%s3 + $0xa0] sm:$0xf]
        %v6144 = vld [vmem:[%s3 + $0xa4] sm:$0xf]
        %v6145 = vld [vmem:[%s3 + $0xa8] sm:$0xf]
        %v6146 = vld [vmem:[%s3 + $0xac] sm:$0xf]
        %v6147 = vld [vmem:[%s3 + $0xb0] sm:$0xf]
        %v6148 = vld [vmem:[%s3 + $0xb4] sm:$0xf]
        %v6149 = vld [vmem:[%s3 + $0xb8] sm:$0xf]
        %v6150 = vld [vmem:[%s3 + $0xbc] sm:$0xf]
        %v6151 = vld [vmem:[%s3 + $0xc0] sm:$0xf]
        %v6152 = vld [vmem:[%s3 + $0xc4] sm:$0xf]
        %v6153 = vld [vmem:[%s3 + $0xc8] sm:$0xf]
        %v6154 = vld [vmem:[%s3 + $0xcc] sm:$0xf]
        %v6155 = vld [vmem:[%s3 + $0xd0] sm:$0xf]
        %v6156 = vld [vmem:[%s3 + $0xd4] sm:$0xf]
        %v6157 = vld [vmem:[%s3 + $0xd8] sm:$0xf]
        %v6158 = vld [vmem:[%s3 + $0xdc] sm:$0xf]
        %v6159 = vld [vmem:[%s3 + $0xe0] sm:$0xf]
        %v6160 = vld [vmem:[%s3 + $0xe4] sm:$0xf]
        %v6161 = vld [vmem:[%s3 + $0xe8] sm:$0xf]
        %v6162 = vld [vmem:[%s3 + $0xec] sm:$0xf]
        %v6163 = vld [vmem:[%s3 + $0xf0] sm:$0xf]
        %v6164 = vld [vmem:[%s3 + $0xf4] sm:$0xf]
        %v6165 = vld [vmem:[%s3 + $0xf8] sm:$0xf]
        %v6166 = vld [vmem:[%s3 + $0xfc] sm:$0xf]
        %v6167 = vld [vmem:[%s4] sm:$0x1]
        %v6169 = vlaneseq
        %v6170 = vshrl.u32 %v6169, 7
        %v6171 = vsub.s32 0, %v6170
        %v6172 = vrot.slane %v6167, %v6171
        %v6238 = vunpack.c.l.b16 %v6103
        %v6239 = vunpack.c.l.b16 %v6104
        %v6240 = vunpack.c.l.b16 %v6105
        %v6241 = vunpack.c.l.b16 %v6106
        %v6242 = vunpack.c.l.b16 %v6107
        %v6243 = vunpack.c.l.b16 %v6108
        %v6244 = vunpack.c.l.b16 %v6109
        %v6245 = vunpack.c.l.b16 %v6110
        %v6246 = vunpack.c.l.b16 %v6111
        %v6247 = vunpack.c.l.b16 %v6112
        %v6248 = vunpack.c.l.b16 %v6113
        %v6249 = vunpack.c.l.b16 %v6114
        %v6250 = vunpack.c.l.b16 %v6115
        %v6251 = vunpack.c.l.b16 %v6116
        %v6252 = vunpack.c.l.b16 %v6117
        %v6253 = vunpack.c.l.b16 %v6118
        %v6254 = vunpack.c.l.b16 %v6119
        %v6255 = vunpack.c.l.b16 %v6120
        %v6256 = vunpack.c.l.b16 %v6121
        %v6257 = vunpack.c.l.b16 %v6122
        %v6258 = vunpack.c.l.b16 %v6123
        %v6259 = vunpack.c.l.b16 %v6124
        %v6260 = vunpack.c.l.b16 %v6125
        %v6261 = vunpack.c.l.b16 %v6126
        %v6262 = vunpack.c.l.b16 %v6127
        %v6263 = vunpack.c.l.b16 %v6128
        %v6264 = vunpack.c.l.b16 %v6129
        %v6265 = vunpack.c.l.b16 %v6130
        %v6266 = vunpack.c.l.b16 %v6131
        %v6267 = vunpack.c.l.b16 %v6132
        %v6268 = vunpack.c.l.b16 %v6133
        %v6269 = vunpack.c.l.b16 %v6134
        %v6270 = vunpack.c.l.b16 %v6135
        %v6271 = vunpack.c.l.b16 %v6136
        %v6272 = vunpack.c.l.b16 %v6137
        %v6273 = vunpack.c.l.b16 %v6138
        %v6274 = vunpack.c.l.b16 %v6139
        %v6275 = vunpack.c.l.b16 %v6140
        %v6276 = vunpack.c.l.b16 %v6141
        %v6277 = vunpack.c.l.b16 %v6142
        %v6278 = vunpack.c.l.b16 %v6143
        %v6279 = vunpack.c.l.b16 %v6144
        %v6280 = vunpack.c.l.b16 %v6145
        %v6281 = vunpack.c.l.b16 %v6146
        %v6282 = vunpack.c.l.b16 %v6147
        %v6283 = vunpack.c.l.b16 %v6148
        %v6284 = vunpack.c.l.b16 %v6149
        %v6285 = vunpack.c.l.b16 %v6150
        %v6286 = vunpack.c.l.b16 %v6151
        %v6287 = vunpack.c.l.b16 %v6152
        %v6288 = vunpack.c.l.b16 %v6153
        %v6289 = vunpack.c.l.b16 %v6154
        %v6290 = vunpack.c.l.b16 %v6155
        %v6291 = vunpack.c.l.b16 %v6156
        %v6292 = vunpack.c.l.b16 %v6157
        %v6293 = vunpack.c.l.b16 %v6158
        %v6294 = vunpack.c.l.b16 %v6159
        %v6295 = vunpack.c.l.b16 %v6160
        %v6296 = vunpack.c.l.b16 %v6161
        %v6297 = vunpack.c.l.b16 %v6162
        %v6298 = vunpack.c.l.b16 %v6163
        %v6299 = vunpack.c.l.b16 %v6164
        %v6300 = vunpack.c.l.b16 %v6165
        %v6301 = vunpack.c.l.b16 %v6166
        %v6302 = vpack.c.b16 %v6239, %v6238
        %v6303 = vpack.c.b16 %v6241, %v6240
        %v6304 = vpack.c.b16 %v6243, %v6242
        %v6305 = vpack.c.b16 %v6245, %v6244
        %v6306 = vpack.c.b16 %v6247, %v6246
        %v6307 = vpack.c.b16 %v6249, %v6248
        %v6308 = vpack.c.b16 %v6251, %v6250
        %v6309 = vpack.c.b16 %v6253, %v6252
        %v6310 = vpack.c.b16 %v6255, %v6254
        %v6311 = vpack.c.b16 %v6257, %v6256
        %v6312 = vpack.c.b16 %v6259, %v6258
        %v6313 = vpack.c.b16 %v6261, %v6260
        %v6314 = vpack.c.b16 %v6263, %v6262
        %v6315 = vpack.c.b16 %v6265, %v6264
        %v6316 = vpack.c.b16 %v6267, %v6266
        %v6317 = vpack.c.b16 %v6269, %v6268
        %v6318 = vpack.c.b16 %v6271, %v6270
        %v6319 = vpack.c.b16 %v6273, %v6272
        %v6320 = vpack.c.b16 %v6275, %v6274
        %v6321 = vpack.c.b16 %v6277, %v6276
        %v6322 = vpack.c.b16 %v6279, %v6278
        %v6323 = vpack.c.b16 %v6281, %v6280
        %v6324 = vpack.c.b16 %v6283, %v6282
        %v6325 = vpack.c.b16 %v6285, %v6284
        %v6326 = vpack.c.b16 %v6287, %v6286
        %v6327 = vpack.c.b16 %v6289, %v6288
        %v6328 = vpack.c.b16 %v6291, %v6290
        %v6329 = vpack.c.b16 %v6293, %v6292
        %v6330 = vpack.c.b16 %v6295, %v6294
        %v6331 = vpack.c.b16 %v6297, %v6296
        %v6332 = vpack.c.b16 %v6299, %v6298
        %v6333 = vpack.c.b16 %v6301, %v6300
        %6366 = vmatprep.subr.bf16.mxu0 0
        %6367 = vmatpush1.bf16.msra.mxu0 %v6302
        %6368 = vmatprep.subr.bf16.mxu0 0
        %6369 = vmatpush1.bf16.msra.mxu0 %v6303
        %6370 = vmatprep.subr.bf16.mxu0 0
        %6371 = vmatpush1.bf16.msra.mxu0 %v6304
        %6372 = vmatprep.subr.bf16.mxu0 0
        %6373 = vmatpush1.bf16.msra.mxu0 %v6305
        %6374 = vmatprep.subr.bf16.mxu0 0
        %6375 = vmatpush1.bf16.msra.mxu0 %v6306
        %6376 = vmatprep.subr.bf16.mxu0 0
        %6377 = vmatpush1.bf16.msra.mxu0 %v6307
        %6378 = vmatprep.subr.bf16.mxu0 0
        %6379 = vmatpush1.bf16.msra.mxu0 %v6308
        %6380 = vmatprep.subr.bf16.mxu0 0
        %6381 = vmatpush1.bf16.msra.mxu0 %v6309
        %6382 = vmatprep.subr.bf16.mxu0 0
        %6383 = vmatpush1.bf16.msra.mxu0 %v6310
        %6384 = vmatprep.subr.bf16.mxu0 0
        %6385 = vmatpush1.bf16.msra.mxu0 %v6311
        %6386 = vmatprep.subr.bf16.mxu0 0
        %6387 = vmatpush1.bf16.msra.mxu0 %v6312
        %6388 = vmatprep.subr.bf16.mxu0 0
        %6389 = vmatpush1.bf16.msra.mxu0 %v6313
        %6390 = vmatprep.subr.bf16.mxu0 0
        %6391 = vmatpush1.bf16.msra.mxu0 %v6314
        %6392 = vmatprep.subr.bf16.mxu0 0
        %6393 = vmatpush1.bf16.msra.mxu0 %v6315
        %6394 = vmatprep.subr.bf16.mxu0 0
        %6395 = vmatpush1.bf16.msra.mxu0 %v6316
        %6396 = vmatprep.subr.bf16.mxu0 0
        %6397 = vmatpush1.bf16.msra.mxu0 %v6317
        %6398 = vmatprep.mubr.bf16.mxu0 %v6068
        %6399 = vmatmul.mubr.bf16.gmra.mrb[0].mxu0 %v6067
        %v6400 = vpop.f32.mrb[0].mxu0
        %v6401 = vadd.f32 %v6172, %v6400
        %v6402 = vpop.f32.mrb[0].mxu0
        %v6403 = vpop.f32.mrb[0].mxu0
        %v6404 = vadd.f32 %v6172, %v6403
        %v6405 = vpop.f32.mrb[0].mxu0
        %6406 = vmatprep.mubr.bf16.mxu0 %v6072
        %6407 = vmatmul.mubr.bf16.gmra.mrb[0].mxu0 %v6071
        %v6408 = vpop.f32.mrb[0].mxu0
        %v6409 = vadd.f32 %v6172, %v6408
        %v6410 = vpop.f32.mrb[0].mxu0
        %v6411 = vpop.f32.mrb[0].mxu0
        %v6412 = vadd.f32 %v6172, %v6411
        %v6413 = vpop.f32.mrb[0].mxu0
        %6414 = vmatprep.mubr.bf16.mxu0 %v6076
        %6415 = vmatmul.mubr.bf16.gmra.mrb[0].mxu0 %v6075
        %v6416 = vpop.f32.mrb[0].mxu0
        %v6417 = vadd.f32 %v6172, %v6416
        %v6418 = vpop.f32.mrb[0].mxu0
        %v6419 = vpop.f32.mrb[0].mxu0
        %v6420 = vadd.f32 %v6172, %v6419
        %v6421 = vpop.f32.mrb[0].mxu0
        %6422 = vmatprep.mubr.bf16.mxu0 %v6080
        %6423 = vmatmul.mubr.bf16.gmra.mrb[0].mxu0 %v6079
        %v6424 = vpop.f32.mrb[0].mxu0
        %v6425 = vadd.f32 %v6172, %v6424
        %v6426 = vpop.f32.mrb[0].mxu0
        %v6427 = vpop.f32.mrb[0].mxu0
        %v6428 = vadd.f32 %v6172, %v6427
        %v6429 = vpop.f32.mrb[0].mxu0
        %6430 = vmatprep.mubr.bf16.mxu0 %v6084
        %6431 = vmatmul.mubr.bf16.gmra.mrb[0].mxu0 %v6083
        %v6432 = vpop.f32.mrb[0].mxu0
        %v6433 = vadd.f32 %v6172, %v6432
        %v6434 = vpop.f32.mrb[0].mxu0
        %v6435 = vpop.f32.mrb[0].mxu0
        %v6436 = vadd.f32 %v6172, %v6435
        %v6437 = vpop.f32.mrb[0].mxu0
        %6438 = vmatprep.mubr.bf16.mxu0 %v6088
        %6439 = vmatmul.mubr.bf16.gmra.mrb[0].mxu0 %v6087
        %v6440 = vpop.f32.mrb[0].mxu0
        %v6441 = vadd.f32 %v6172, %v6440
        %v6442 = vpop.f32.mrb[0].mxu0
        %v6443 = vpop.f32.mrb[0].mxu0
        %v6444 = vadd.f32 %v6172, %v6443
        %v6445 = vpop.f32.mrb[0].mxu0
        %6446 = vmatprep.mubr.bf16.mxu0 %v6092
        %6447 = vmatmul.mubr.bf16.gmra.mrb[0].mxu0 %v6091
        %v6448 = vpop.f32.mrb[0].mxu0
        %v6449 = vadd.f32 %v6172, %v6448
        %v6450 = vpop.f32.mrb[0].mxu0
        %v6451 = vpop.f32.mrb[0].mxu0
        %v6452 = vadd.f32 %v6172, %v6451
        %v6453 = vpop.f32.mrb[0].mxu0
        %6454 = vmatprep.mubr.bf16.mxu0 %v6096
        %6455 = vmatmul.mubr.bf16.gmra.mrb[0].mxu0 %v6095
        %v6456 = vpop.f32.mrb[0].mxu0
        %v6457 = vadd.f32 %v6172, %v6456
        %v6458 = vpop.f32.mrb[0].mxu0
        %v6459 = vpop.f32.mrb[0].mxu0
        %v6460 = vadd.f32 %v6172, %v6459
        %v6461 = vpop.f32.mrb[0].mxu0
        %6462 = vmatprep.mubr.bf16.mxu0 %v6100
        %6463 = vmatmul.mubr.bf16.gmra.mrb[0].mxu0 %v6099
        %v6464 = vpop.f32.mrb[0].mxu0
        %v6465 = vadd.f32 %v6172, %v6464
        %v6466 = vpop.f32.mrb[0].mxu0
        %v6467 = vpop.f32.mrb[0].mxu0
        %v6468 = vadd.f32 %v6172, %v6467
        %v6469 = vpop.f32.mrb[0].mxu0
        %6470 = vdwg.mxu0
        %6471 = vmatprep.subr.bf16.mxu0 0
        %6472 = vmatpush1.bf16.msra.mxu0 %v6318
        %6473 = vmatprep.subr.bf16.mxu0 0
        %6474 = vmatpush1.bf16.msra.mxu0 %v6319
        %6475 = vmatprep.subr.bf16.mxu0 0
        %6476 = vmatpush1.bf16.msra.mxu0 %v6320
        %6477 = vmatprep.subr.bf16.mxu0 0
        %6478 = vmatpush1.bf16.msra.mxu0 %v6321
        %6479 = vmatprep.subr.bf16.mxu0 0
        %6480 = vmatpush1.bf16.msra.mxu0 %v6322
        %6481 = vmatprep.subr.bf16.mxu0 0
        %6482 = vmatpush1.bf16.msra.mxu0 %v6323
        %6483 = vmatprep.subr.bf16.mxu0 0
        %6484 = vmatpush1.bf16.msra.mxu0 %v6324
        %6485 = vmatprep.subr.bf16.mxu0 0
        %6486 = vmatpush1.bf16.msra.mxu0 %v6325
        %6487 = vmatprep.subr.bf16.mxu0 0
        %6488 = vmatpush1.bf16.msra.mxu0 %v6326
        %6489 = vmatprep.subr.bf16.mxu0 0
        %6490 = vmatpush1.bf16.msra.mxu0 %v6327
        %6491 = vmatprep.subr.bf16.mxu0 0
        %6492 = vmatpush1.bf16.msra.mxu0 %v6328
        %6493 = vmatprep.subr.bf16.mxu0 0
        %6494 = vmatpush1.bf16.msra.mxu0 %v6329
        %6495 = vmatprep.subr.bf16.mxu0 0
        %6496 = vmatpush1.bf16.msra.mxu0 %v6330
        %6497 = vmatprep.subr.bf16.mxu0 0
        %6498 = vmatpush1.bf16.msra.mxu0 %v6331
        %6499 = vmatprep.subr.bf16.mxu0 0
        %6500 = vmatpush1.bf16.msra.mxu0 %v6332
        %6501 = vmatprep.subr.bf16.mxu0 0
        %6502 = vmatpush1.bf16.msra.mxu0 %v6333
        %6503 = vmatprep.mubr.bf16.mxu0 %v6070
        %6504 = vmatmul.mubr.bf16.gmra.mrb[0].mxu0 %v6069
        %v6505 = vpop.f32.mrb[0].mxu0
        %v6506 = vadd.f32 %v6401, %v6505
        %v6507 = vpop.f32.mrb[0].mxu0
        %v6508 = vpop.f32.mrb[0].mxu0
        %v6509 = vadd.f32 %v6404, %v6508
        %v6510 = vpop.f32.mrb[0].mxu0
        %6511 = vmatprep.mubr.bf16.mxu0 %v6074
        %6512 = vmatmul.mubr.bf16.gmra.mrb[0].mxu0 %v6073
        %v6513 = vpop.f32.mrb[0].mxu0
        %v6514 = vadd.f32 %v6409, %v6513
        %v6515 = vpop.f32.mrb[0].mxu0
        %v6516 = vpop.f32.mrb[0].mxu0
        %v6517 = vadd.f32 %v6412, %v6516
        %v6518 = vpop.f32.mrb[0].mxu0
        %6519 = vmatprep.mubr.bf16.mxu0 %v6078
        %6520 = vmatmul.mubr.bf16.gmra.mrb[0].mxu0 %v6077
        %v6521 = vpop.f32.mrb[0].mxu0
        %v6522 = vadd.f32 %v6417, %v6521
        %v6523 = vpop.f32.mrb[0].mxu0
        %v6524 = vpop.f32.mrb[0].mxu0
        %v6525 = vadd.f32 %v6420, %v6524
        %v6526 = vpop.f32.mrb[0].mxu0
        %6527 = vmatprep.mubr.bf16.mxu0 %v6082
        %6528 = vmatmul.mubr.bf16.gmra.mrb[0].mxu0 %v6081
        %v6529 = vpop.f32.mrb[0].mxu0
        %v6530 = vadd.f32 %v6425, %v6529
        %v6531 = vpop.f32.mrb[0].mxu0
        %v6532 = vpop.f32.mrb[0].mxu0
        %v6533 = vadd.f32 %v6428, %v6532
        %v6534 = vpop.f32.mrb[0].mxu0
        %6535 = vmatprep.mubr.bf16.mxu0 %v6086
        %6536 = vmatmul.mubr.bf16.gmra.mrb[0].mxu0 %v6085
        %v6537 = vpop.f32.mrb[0].mxu0
        %v6538 = vadd.f32 %v6433, %v6537
        %v6539 = vpop.f32.mrb[0].mxu0
        %v6540 = vpop.f32.mrb[0].mxu0
        %v6541 = vadd.f32 %v6436, %v6540
        %v6542 = vpop.f32.mrb[0].mxu0
        %6543 = vmatprep.mubr.bf16.mxu0 %v6090
        %6544 = vmatmul.mubr.bf16.gmra.mrb[0].mxu0 %v6089
        %v6545 = vpop.f32.mrb[0].mxu0
        %v6546 = vadd.f32 %v6441, %v6545
        %v6547 = vpop.f32.mrb[0].mxu0
        %v6548 = vpop.f32.mrb[0].mxu0
        %v6549 = vadd.f32 %v6444, %v6548
        %v6550 = vpop.f32.mrb[0].mxu0
        %6551 = vmatprep.mubr.bf16.mxu0 %v6094
        %6552 = vmatmul.mubr.bf16.gmra.mrb[0].mxu0 %v6093
        %v6553 = vpop.f32.mrb[0].mxu0
        %v6554 = vadd.f32 %v6449, %v6553
        %v6555 = vpop.f32.mrb[0].mxu0
        %v6556 = vpop.f32.mrb[0].mxu0
        %v6557 = vadd.f32 %v6452, %v6556
        %v6558 = vpop.f32.mrb[0].mxu0
        %6559 = vmatprep.mubr.bf16.mxu0 %v6098
        %6560 = vmatmul.mubr.bf16.gmra.mrb[0].mxu0 %v6097
        %v6561 = vpop.f32.mrb[0].mxu0
        %v6562 = vadd.f32 %v6457, %v6561
        %v6563 = vpop.f32.mrb[0].mxu0
        %v6564 = vpop.f32.mrb[0].mxu0
        %v6565 = vadd.f32 %v6460, %v6564
        %v6566 = vpop.f32.mrb[0].mxu0
        %6567 = vmatprep.mubr.bf16.mxu0 %v6102
        %6568 = vmatmul.mubr.bf16.gmra.mrb[0].mxu0 %v6101
        %v6569 = vpop.f32.mrb[0].mxu0
        %v6570 = vadd.f32 %v6465, %v6569
        %v6571 = vpop.f32.mrb[0].mxu0
        %v6572 = vpop.f32.mrb[0].mxu0
        %v6573 = vadd.f32 %v6468, %v6572
        %v6574 = vpop.f32.mrb[0].mxu0
        %6575 = vdwg.mxu0
        %v6576 = vlaneseq
        %v6577 = vand.u32 %v6576, 127
        %v6578 = vsub.f32 0.0, %v6506
        %v6579 = vsub.f32 0.0, %v6509
        %v6580 = vsub.f32 0.0, %v6514
        %v6581 = vsub.f32 0.0, %v6517
        %v6582 = vsub.f32 0.0, %v6522
        %v6583 = vsub.f32 0.0, %v6525
        %v6584 = vsub.f32 0.0, %v6530
        %v6585 = vsub.f32 0.0, %v6533
        %v6586 = vsub.f32 0.0, %v6538
        %v6587 = vsub.f32 0.0, %v6541
        %v6588 = vsub.f32 0.0, %v6546
        %v6589 = vsub.f32 0.0, %v6549
        %v6590 = vsub.f32 0.0, %v6554
        %v6591 = vsub.f32 0.0, %v6557
        %v6592 = vsub.f32 0.0, %v6562
        %v6593 = vsub.f32 0.0, %v6565
        %v6594 = vsub.f32 0.0, %v6570
        %v6595 = vsub.f32 0.0, %v6573
        %v6596 = vmul.f32 %v6578, 1.442695
        %v6597 = vpow.pop %v6596
        %v6598 = vmul.f32 %v6579, 1.442695
        %v6599 = vpow.pop %v6598
        %v6600 = vmul.f32 %v6580, 1.442695
        %v6601 = vpow.pop %v6600
        %v6602 = vmul.f32 %v6581, 1.442695
        %v6603 = vpow.pop %v6602
        %v6604 = vmul.f32 %v6582, 1.442695
        %v6605 = vpow.pop %v6604
        %v6606 = vmul.f32 %v6583, 1.442695
        %v6607 = vpow.pop %v6606
        %v6608 = vmul.f32 %v6584, 1.442695
        %v6609 = vpow.pop %v6608
        %v6610 = vmul.f32 %v6585, 1.442695
        %v6611 = vpow.pop %v6610
        %v6612 = vmul.f32 %v6586, 1.442695
        %v6613 = vpow.pop %v6612
        %v6614 = vmul.f32 %v6587, 1.442695
        %v6615 = vpow.pop %v6614
        %v6616 = vmul.f32 %v6588, 1.442695
        %v6617 = vpow.pop %v6616
        %v6618 = vmul.f32 %v6589, 1.442695
        %v6619 = vpow.pop %v6618
        %v6620 = vmul.f32 %v6590, 1.442695
        %v6621 = vpow.pop %v6620
        %v6622 = vmul.f32 %v6591, 1.442695
        %v6623 = vpow.pop %v6622
        %v6624 = vmul.f32 %v6592, 1.442695
        %v6625 = vpow.pop %v6624
        %v6626 = vmul.f32 %v6593, 1.442695
        %v6627 = vpow.pop %v6626
        %v6628 = vmul.f32 %v6594, 1.442695
        %v6629 = vpow.pop %v6628
        %v6630 = vmul.f32 %v6595, 1.442695
        %v6631 = vpow.pop %v6630
        %v6632 = vadd.f32 %v6597, 1.0
        %v6633 = vadd.f32 %v6599, 1.0
        %v6634 = vadd.f32 %v6601, 1.0
        %v6635 = vadd.f32 %v6603, 1.0
        %v6636 = vadd.f32 %v6605, 1.0
        %v6637 = vadd.f32 %v6607, 1.0
        %v6638 = vadd.f32 %v6609, 1.0
        %v6639 = vadd.f32 %v6611, 1.0
        %v6640 = vadd.f32 %v6613, 1.0
        %v6641 = vadd.f32 %v6615, 1.0
        %v6642 = vadd.f32 %v6617, 1.0
        %v6643 = vadd.f32 %v6619, 1.0
        %v6644 = vadd.f32 %v6621, 1.0
        %v6645 = vadd.f32 %v6623, 1.0
        %v6646 = vadd.f32 %v6625, 1.0
        %v6647 = vadd.f32 %v6627, 1.0
        %v6648 = vadd.f32 %v6629, 1.0
        %v6649 = vadd.f32 %v6631, 1.0
        %v6650 = vrcp.pop %v6632
        %v6651 = vrcp.pop %v6633
        %v6652 = vrcp.pop %v6634
        %v6653 = vrcp.pop %v6635
        %v6654 = vrcp.pop %v6636
        %v6655 = vrcp.pop %v6637
        %v6656 = vrcp.pop %v6638
        %v6657 = vrcp.pop %v6639
        %v6658 = vrcp.pop %v6640
        %v6659 = vrcp.pop %v6641
        %v6660 = vrcp.pop %v6642
        %v6661 = vrcp.pop %v6643
        %v6662 = vrcp.pop %v6644
        %v6663 = vrcp.pop %v6645
        %v6664 = vrcp.pop %v6646
        %v6665 = vrcp.pop %v6647
        %v6666 = vrcp.pop %v6648
        %v6667 = vrcp.pop %v6649
        %vm6668 = vcmp.ge.s32.totalorder %v6577, 54
        %vm6669 = vcmp.lt.s32.totalorder %v6577, 63
        %vm6670 = vmand %vm6668, %vm6669
        %v6671 = vsel %vm6670, %v6650, %v6506
        %v6672 = vsel %vm6670, %v6651, %v6509
        %v6673 = vsel %vm6670, %v6652, %v6514
        %v6674 = vsel %vm6670, %v6653, %v6517
        %v6675 = vsel %vm6670, %v6654, %v6522
        %v6676 = vsel %vm6670, %v6655, %v6525
        %v6677 = vsel %vm6670, %v6656, %v6530
        %v6678 = vsel %vm6670, %v6657, %v6533
        %v6679 = vsel %vm6670, %v6658, %v6538
        %v6680 = vsel %vm6670, %v6659, %v6541
        %v6681 = vsel %vm6670, %v6660, %v6546
        %v6682 = vsel %vm6670, %v6661, %v6549
        %v6683 = vsel %vm6670, %v6662, %v6554
        %v6684 = vsel %vm6670, %v6663, %v6557
        %v6685 = vsel %vm6670, %v6664, %v6562
        %v6686 = vsel %vm6670, %v6665, %v6565
        %v6687 = vsel %vm6670, %v6666, %v6570
        %v6688 = vsel %vm6670, %v6667, %v6573
        %6689 = vst.msk [vmem:[%s219] sm:$0xff] %vm491, %v6671
        %6690 = vst.msk [vmem:[%s219 + $0x8] sm:$0xff] %vm491, %v6672
        %6691 = vst.msk [vmem:[%s219 + $0x10] sm:$0xff] %vm491, %v6673
        %6692 = vst.msk [vmem:[%s219 + $0x18] sm:$0xff] %vm491, %v6674
        %6693 = vst.msk [vmem:[%s219 + $0x20] sm:$0xff] %vm491, %v6675
        %6694 = vst.msk [vmem:[%s219 + $0x28] sm:$0xff] %vm491, %v6676
        %6695 = vst.msk [vmem:[%s219 + $0x30] sm:$0xff] %vm491, %v6677
        %6696 = vst.msk [vmem:[%s219 + $0x38] sm:$0xff] %vm491, %v6678
        %6697 = vst.msk [vmem:[%s219 + $0x40] sm:$0xff] %vm491, %v6679
        %6698 = vst.msk [vmem:[%s219 + $0x48] sm:$0xff] %vm491, %v6680
        %6699 = vst.msk [vmem:[%s219 + $0x50] sm:$0xff] %vm491, %v6681
        %6700 = vst.msk [vmem:[%s219 + $0x58] sm:$0xff] %vm491, %v6682
        %6701 = vst.msk [vmem:[%s219 + $0x60] sm:$0xff] %vm491, %v6683
        %6702 = vst.msk [vmem:[%s219 + $0x68] sm:$0xff] %vm491, %v6684
        %6703 = vst.msk [vmem:[%s219 + $0x70] sm:$0xff] %vm491, %v6685
        %6704 = vst.msk [vmem:[%s219 + $0x78] sm:$0xff] %vm491, %v6686
        %6705 = vst.msk [vmem:[%s219 + $0x80] sm:$0xff] %vm491, %v6687
        %6706 = vst.msk [vmem:[%s219 + $0x88] sm:$0xff] %vm491, %v6688
        %s6707 = smul.u32 18, %s17
        %p6708 = scmp.lt.s32.totalorder %s6707, 35
        %s6709 = scalar_select %p6708, %s6707, 35
        %s6710 = smul.addr %s6709, 8
        %s6711 = scalar_lea.vmem %s5, %s6710
        // Predicated region
        $region45: #{tpu_custom_call.1} parent=39 // pred_check
          %p6712 = pneg %p140
        $region46: #{tpu_custom_call.1} parent=39 // pred_check_branch
          %6714 = sbr.rel (%p6712) target = $region48
        $region47: #{tpu_custom_call.1} parent=39 // pred_region
          %s6715 = smul.u32 18, %s17
        $region48: #{tpu_custom_call.1} parent=39 // pred_fallthru
          _
      $region40: #{tpu_custom_call.1} parent=5 // pred_fallthru
        _
      %p6716 = scmp.le.s32.totalorder 2, %s12
      // Predicated region
      $region49: #{tpu_custom_call.1} parent=5 // pred_check
        %p6717 = pneg %p6716
      $region50: #{tpu_custom_call.1} parent=5 // pred_check_branch
        %6719 = sbr.rel (%p6717) target = $region52
      $region51: #{tpu_custom_call.1} parent=5 // pred_region
        %s6720 = ssub.s32 %s12, 2
        // Predicated region
        $region53: #{tpu_custom_call.1} parent=51 // pred_check
          %p6721 = pneg %p146
        $region54: #{tpu_custom_call.1} parent=51 // pred_check_branch
          %6723 = sbr.rel (%p6721) target = $region56
        $region55: #{tpu_custom_call.1} parent=51 // pred_region
          %s6724 = smul.u32 18, %s18
          %p6725 = scmp.lt.s32.totalorder %s6724, 35
          %s6726 = scalar_select %p6725, %s6724, 35
          %s6727 = smul.addr %s6726, 8
          %s6728 = scalar_lea.vmem %s5, %s6727
        $region56: #{tpu_custom_call.1} parent=51 // pred_fallthru
          _
      $region52: #{tpu_custom_call.1} parent=5 // pred_fallthru
        _
    $region6: #{tpu_custom_call.1} parent=1 // loop_footer
      %s16 = sadd.s32 1, %s12
    $region7: #{tpu_custom_call.1} parent=1 // loop_footer_branch
      %11 = sbr.rel target = $region3
    $region8: #{tpu_custom_call.1} parent=1 // loop_exit
      _
    %6729 = vsyncpa [#allocation4], 1
    %s6730 = scalar_lea.sflag [#allocation4], 1
    %6731 = vsyncpa %s6730, 1

</llo_original>
